<compile_context>
chip_gen: v7x
topology: tpu7x:2x2x1
jax: 0.10.0
libtpu: 0.0.40
codegen_flags: <defaults>
</compile_context>

<pallas_src>
import functools
import math

import jax
import jax.numpy as jnp
import numpy as np
from jax.experimental import pallas as pl
from jax.experimental.pallas import tpu as pltpu

LN_EPS = 1e-5
NEG_INF = -1e30  # keep finite & f32: fully-masked entries must not NaN after row-max sub


# ----------------------------------------------------------------------------
# Small in-kernel helpers (operate on values, not refs)
# ----------------------------------------------------------------------------
def _dot(a, b):
    return jnp.dot(a, b, preferred_element_type=jnp.float32)


def _dot_nt(a, b):
    # a @ b.T without materializing a transpose (contract last dims).
    return jax.lax.dot_general(
        a, b, (((1,), (1,)), ((), ())), preferred_element_type=jnp.float32
    )


def _layer_norm(x, g, b):
    mu = jnp.mean(x, axis=-1, keepdims=True)
    var = jnp.mean((x - mu) ** 2, axis=-1, keepdims=True)
    return (x - mu) * jax.lax.rsqrt(var + LN_EPS) * g + b


# ----------------------------------------------------------------------------
# Fused Pallas kernel: whole OCVPSeq forward, P batch elements per grid step
# ----------------------------------------------------------------------------
def _ocvp_fused_kernel(
    slots_ref, pe_ref, obj_mask_ref, time_mask_ref, head_mask_ref,
    w_in_ref, b_in_ref, w_out_ref, b_out_ref,
    ln1g_ref, ln1b_ref, wqkv_ref, bqkv_ref, wo_ref, bo_ref,
    ln2g_ref, ln2b_ref, w1_ref, b1_ref, w2_ref, b2_ref,
    o_ref, *, n_heads, num_layers, T, S, P, residual,
):
    D = w_in_ref.shape[1]
    R = T * S                     # rows (tokens) per batch element
    M = P * R                     # rows per grid step

    slots2d = slots_ref[...]                                   # (M, Dslot)
    # mlp_in + slot positional encoding (PE pre-broadcast/tiled to rows on host)
    x = _dot(slots2d, w_in_ref[...]) + b_in_ref[...]           # (M, D)
    x = x + pe_ref[...]

    for layer in range(num_layers):
        for which in range(2):                                 # 0: object attn, 1: time attn
            blk = 2 * layer + which
            # Load the needed (R, R) additive mask near its use (vld slot has slack;
            # avoids pinning both masks live across the whole unrolled body).
            mask = obj_mask_ref[...] if which == 0 else time_mask_ref[...]

            # ---- self-attention block (norm_first) ----
            xn = _layer_norm(x, ln1g_ref[blk], ln1b_ref[blk])
            qkv = _dot(xn, wqkv_ref[blk]) + bqkv_ref[blk]      # (M, 3D); 1/sqrt(hd) folded into Q
            q = qkv[:, :D]
            k = qkv[:, D:2 * D]
            v = qkv[:, 2 * D:]

            wo = wo_ref[blk]                                   # (D, D)

            attn_parts = []
            for p in range(P):                                 # per packed batch element
                rows = slice(p * R, (p + 1) * R)
                q_p, k_p, v_p = q[rows], k[rows], v[rows]

                # Head-stacked K / V: row-block h = tensor zero-masked to head-h columns.
                k_stack = jnp.concatenate(
                    [k_p * head_mask_ref[h] for h in range(n_heads)], axis=0)   # (HR, D)
                v_stack = jnp.concatenate(
                    [v_p * head_mask_ref[h] for h in range(n_heads)], axis=0)   # (HR, D)

                # All-head scores in one MXU push: (R, D) x (HR, D)^T -> (R, HR).
                s_all = _dot_nt(q_p, k_stack)

                # Per-head softmax over each R-lane segment (+ additive mask).
                p_blocks = []
                for h in range(n_heads):
                    seg = s_all[:, h * R:(h + 1) * R] + mask
                    seg = seg - jnp.max(seg, axis=-1, keepdims=True)
                    e = jnp.exp(seg)
                    inv = pl.reciprocal(jnp.sum(e, axis=-1, keepdims=True), approx=False)
                    p_blocks.append(e * inv)
                p_cat = jnp.concatenate(p_blocks, axis=-1)     # (R, HR)

                # Fold the per-head output projection: V_hat[h*R+j,:] = V_h[j,:] @ Wo[h-block,:]
                v_hat = _dot(v_stack, wo)                      # (HR, D), single matmul
                attn_parts.append(_dot(p_cat, v_hat))          # (R, D), single matmul

            attn = attn_parts[0] if P == 1 else jnp.concatenate(attn_parts, axis=0)
            x = x + attn + bo_ref[blk]

            # ---- feed-forward block (norm_first, ReLU) ----
            xn2 = _layer_norm(x, ln2g_ref[blk], ln2b_ref[blk])
            hid = jnp.maximum(_dot(xn2, w1_ref[blk]) + b1_ref[blk], 0.0)
            x = x + _dot(hid, w2_ref[blk]) + b2_ref[blk]

    # mlp_out on the last time step of every packed batch element
    # (rows p*R + (T-1)*S .. p*R + T*S - 1 are t = T-1, slot-ordered).
    last = [x[p * R + (T - 1) * S: p * R + T * S, :] for p in range(P)]
    x_last = last[0] if P == 1 else jnp.concatenate(last, axis=0)       # (P*S, D)
    out = _dot(x_last, w_out_ref[...]) + b_out_ref[...]                 # (P*S, Dslot)
    if residual:
        sl = [slots2d[p * R + (T - 1) * S: p * R + T * S, :] for p in range(P)]
        out = out + (sl[0] if P == 1 else jnp.concatenate(sl, axis=0))
    o_ref[...] = out


# ----------------------------------------------------------------------------
# Host-side constants (cached across calls)
# ----------------------------------------------------------------------------
def sinusoidal_pe_np(max_len, d_model):
    pos = np.arange(max_len, dtype=np.float32)[:, None]
    div = np.exp(np.arange(0, d_model, 2, dtype=np.float32) * (-math.log(10000.0) / d_model))
    pe = np.zeros((max_len, d_model), np.float32)
    pe[:, 0::2] = np.sin(pos * div)
    pe[:, 1::2] = np.cos(pos * div)
    return pe  # (max_len, d_model), shared across batch and slots


@functools.lru_cache(maxsize=None)
def _ocvp_constants(T, S, D, input_buffer_size, n_heads, P):
    R = T * S
    pe_rows = np.repeat(sinusoidal_pe_np(input_buffer_size, D)[:T], S, axis=0)  # (R, D)
    pe_slab = np.tile(pe_rows, (P, 1))                                           # (P*R, D)
    r = np.arange(R)
    # object attention: rows may attend iff same time step; time attention: iff same slot.
    obj_mask = np.where((r[:, None] // S) == (r[None, :] // S), 0.0, NEG_INF).astype(np.float32)
    time_mask = np.where((r[:, None] % S) == (r[None, :] % S), 0.0, NEG_INF).astype(np.float32)
    hd = D // n_heads
    head_mask = np.zeros((n_heads, 1, D), np.float32)
    for h in range(n_heads):
        head_mask[h, 0, h * hd:(h + 1) * hd] = 1.0
    return (jnp.asarray(pe_slab), jnp.asarray(obj_mask),
            jnp.asarray(time_mask), jnp.asarray(head_mask))


# ----------------------------------------------------------------------------
# Wrapper
# ----------------------------------------------------------------------------
def ocvp_seq_forward(slots, params, *, n_heads, input_buffer_size, residual=False,
                     batch_per_step=1):
    B, T, S, Dslot = slots.shape
    D = params["w_in_t"].shape[1]
    assert D % n_heads == 0, "token_dim must be divisible by n_heads"
    num_blocks = params["wqkv_t"].shape[0]
    num_layers = num_blocks // 2
    R = T * S
    P = batch_per_step
    assert B % P == 0, "batch_per_step must divide the batch size"
    G = B // P
    M = P * R

    hd = D // n_heads
    scale = 1.0 / math.sqrt(hd)
    # Fold the softmax scale into the Q columns of the QKV projection (host-side).
    wqkv = params["wqkv_t"].at[:, :, :D].multiply(scale)
    bqkv = params["bqkv"].at[:, :, :D].multiply(scale)

    pe_slab, obj_mask, time_mask, head_mask = _ocvp_constants(
        T, S, D, input_buffer_size, n_heads, P)

    # Flatten tokens: row r = (b*T + t)*S + s (batch-major, t-major).  Free reshape.
    slots_flat = slots.reshape(B * R, Dslot)

    const_inputs = (
        pe_slab, obj_mask, time_mask, head_mask,
        params["w_in_t"], params["b_in"], params["w_out_t"], params["b_out"],
        params["ln1_g"], params["ln1_b"], wqkv, bqkv,
        params["wo_t"], params["bo"], params["ln2_g"], params["ln2_b"],
        params["w1_t"], params["b1"], params["w2_t"], params["b2"],
    )

    def const_spec(a):
        nd = a.ndim
        return pl.BlockSpec(a.shape, lambda b, _nd=nd: (0,) * _nd)

    out_flat = pl.pallas_call(
        functools.partial(
            _ocvp_fused_kernel, n_heads=n_heads, num_layers=num_layers,
            T=T, S=S, P=P, residual=residual,
        ),
        out_shape=jax.ShapeDtypeStruct((B * S, Dslot), jnp.float32),
        grid=(G,),
        in_specs=[pl.BlockSpec((M, Dslot), lambda b: (b, 0))]
        + [const_spec(a) for a in const_inputs],
        out_specs=pl.BlockSpec((P * S, Dslot), lambda b: (b, 0)),
        compiler_params=pltpu.CompilerParams(dimension_semantics=("parallel",)),
    )(slots_flat, *const_inputs)
    return out_flat.reshape(B, S, Dslot)


# ----------------------------------------------------------------------------
# Parameter construction (deterministic, synthetic); weights stored pre-transposed
# as (Din, Dout) and stacked across the 2*num_layers encoder blocks
# (block order: [layer0.obj, layer0.time, layer1.obj, layer1.time, ...]).
# ----------------------------------------------------------------------------
def make_ocvp_params(key, slot_dim, token_dim, hidden_dim, num_layers):
    num_blocks = 2 * num_layers
    keys = jax.random.split(key, 4 + 8 * num_blocks)
    s = 0.05
    nrm = jax.random.normal

    def bk(i, j):
        return keys[4 + 8 * i + j]

    def stack(shape, j):
        return jnp.stack([s * nrm(bk(i, j), shape, jnp.float32) for i in range(num_blocks)])

    return {
        "w_in_t": s * nrm(keys[0], (slot_dim, token_dim), jnp.float32),
        "b_in": s * nrm(keys[1], (1, token_dim), jnp.float32),
        "w_out_t": s * nrm(keys[2], (token_dim, slot_dim), jnp.float32),
        "b_out": s * nrm(keys[3], (1, slot_dim), jnp.float32),
        "ln1_g": jnp.ones((num_blocks, 1, token_dim), jnp.float32),
        "ln1_b": jnp.zeros((num_blocks, 1, token_dim), jnp.float32),
        "ln2_g": jnp.ones((num_blocks, 1, token_dim), jnp.float32),
        "ln2_b": jnp.zeros((num_blocks, 1, token_dim), jnp.float32),
        "wqkv_t": stack((token_dim, 3 * token_dim), 0),
        "bqkv": stack((1, 3 * token_dim), 1),
        "wo_t": stack((token_dim, token_dim), 2),
        "bo": stack((1, token_dim), 3),
        "w1_t": stack((token_dim, hidden_dim), 4),
        "b1": stack((1, hidden_dim), 5),
        "w2_t": stack((hidden_dim, token_dim), 6),
        "b2": stack((1, token_dim), 7),
    }


# ----------------------------------------------------------------------------
# Pure-JAX reference (standard per-sequence multi-head attention) for checking
# ----------------------------------------------------------------------------
def _ref_layer_norm(x, g, b):
    mu = jnp.mean(x, axis=-1, keepdims=True)
    var = jnp.mean((x - mu) ** 2, axis=-1, keepdims=True)
    return (x - mu) * jax.lax.rsqrt(var + LN_EPS) * g + b


def _ref_encoder_layer(x, p, blk, n_heads):
    N, L, D = x.shape
    hd = D // n_heads
    xn = _ref_layer_norm(x, p["ln1_g"][blk], p["ln1_b"][blk])
    qkv = xn @ p["wqkv_t"][blk] + p["bqkv"][blk]
    q, k, v = qkv[..., :D], qkv[..., D:2 * D], qkv[..., 2 * D:]
    q = q.reshape(N, L, n_heads, hd).transpose(0, 2, 1, 3) / math.sqrt(hd)
    k = k.reshape(N, L, n_heads, hd).transpose(0, 2, 1, 3)
    v = v.reshape(N, L, n_heads, hd).transpose(0, 2, 1, 3)
    s = jnp.einsum("nhld,nhmd->nhlm", q, k)
    s = s - jnp.max(s, axis=-1, keepdims=True)
    pattn = jnp.exp(s)
    pattn = pattn / jnp.sum(pattn, axis=-1, keepdims=True)
    a = jnp.einsum("nhlm,nhmd->nhld", pattn, v)
    a = a.transpose(0, 2, 1, 3).reshape(N, L, D)
    x = x + a @ p["wo_t"][blk] + p["bo"][blk]
    xn2 = _ref_layer_norm(x, p["ln2_g"][blk], p["ln2_b"][blk])
    hid = jnp.maximum(xn2 @ p["w1_t"][blk] + p["b1"][blk], 0.0)
    return x + hid @ p["w2_t"][blk] + p["b2"][blk]


def ocvp_seq_reference(slots, params, *, n_heads, input_buffer_size, residual=False):
    B, T, S, Dslot = slots.shape
    D = params["w_in_t"].shape[1]
    num_layers = params["wqkv_t"].shape[0] // 2
    x = slots @ params["w_in_t"] + params["b_in"][0]
    x = x + jnp.asarray(sinusoidal_pe_np(input_buffer_size, D))[None, :T, None, :]
    for layer in range(num_layers):
        y = _ref_encoder_layer(x.reshape(B * T, S, D), params, 2 * layer, n_heads)
        y = y.reshape(B, T, S, D)
        y = jnp.transpose(y, (0, 2, 1, 3)).reshape(B * S, T, D)
        y = _ref_encoder_layer(y, params, 2 * layer + 1, n_heads).reshape(B, S, T, D)
        x = jnp.transpose(y, (0, 2, 1, 3))
    out = x[:, -1] @ params["w_out_t"] + params["b_out"][0]
    if residual:
        out = out + slots[:, -1]
    return out


# ----------------------------------------------------------------------------
if __name__ == "__main__":
    # Small configuration consistent with the module's forward pass.
    B = 2
    num_imgs = 8           # input_buffer_size
    num_slots = 8
    slot_dim = 16
    token_dim = 32
    hidden_dim = 64
    n_heads = 4
    num_layers = 2

    key = jax.random.PRNGKey(0)
    k_param, k_data = jax.random.split(key)
    params = make_ocvp_params(k_param, slot_dim, token_dim, hidden_dim, num_layers)
    slots = jax.random.normal(k_data, (B, num_imgs, num_slots, slot_dim), jnp.float32)

    ref = jax.block_until_ready(ocvp_seq_reference(
        slots, params, n_heads=n_heads, input_buffer_size=num_imgs, residual=False))

    # Default: one batch element per grid step (feeds both v7x TensorCores).
    fwd = jax.jit(functools.partial(
        ocvp_seq_forward, n_heads=n_heads, input_buffer_size=num_imgs,
        residual=False, batch_per_step=1))
    out = jax.block_until_ready(fwd(slots, params))
    assert out.shape == (B, num_slots, slot_dim)
    np.testing.assert_allclose(np.asarray(out), np.asarray(ref), rtol=3e-4, atol=3e-4)

    # Batch-packed variant (grid=(1,)) for single-TensorCore v5e / v6e.
    fwd_packed = jax.jit(functools.partial(
        ocvp_seq_forward, n_heads=n_heads, input_buffer_size=num_imgs,
        residual=False, batch_per_step=B))
    out_packed = jax.block_until_ready(fwd_packed(slots, params))
    np.testing.assert_allclose(np.asarray(out_packed), np.asarray(ref), rtol=3e-4, atol=3e-4)

    print("KERNEL_OK")
</pallas_src>

<mosaic_0001>
module attributes {stable_mosaic.version = 11 : i64} {
  func.func @_ocvp_fused_kernel(%arg0: i32, %arg1: memref<64x16xf32, #tpu.memory_space<vmem>>, %arg2: memref<64x32xf32, #tpu.memory_space<vmem>>, %arg3: memref<64x64xf32, #tpu.memory_space<vmem>>, %arg4: memref<64x64xf32, #tpu.memory_space<vmem>>, %arg5: memref<4x1x32xf32, #tpu.memory_space<vmem>>, %arg6: memref<16x32xf32, #tpu.memory_space<vmem>>, %arg7: memref<1x32xf32, #tpu.memory_space<vmem>>, %arg8: memref<32x16xf32, #tpu.memory_space<vmem>>, %arg9: memref<1x16xf32, #tpu.memory_space<vmem>>, %arg10: memref<4x1x32xf32, #tpu.memory_space<vmem>>, %arg11: memref<4x1x32xf32, #tpu.memory_space<vmem>>, %arg12: memref<4x32x96xf32, #tpu.memory_space<vmem>>, %arg13: memref<4x1x96xf32, #tpu.memory_space<vmem>>, %arg14: memref<4x32x32xf32, #tpu.memory_space<vmem>>, %arg15: memref<4x1x32xf32, #tpu.memory_space<vmem>>, %arg16: memref<4x1x32xf32, #tpu.memory_space<vmem>>, %arg17: memref<4x1x32xf32, #tpu.memory_space<vmem>>, %arg18: memref<4x32x64xf32, #tpu.memory_space<vmem>>, %arg19: memref<4x1x64xf32, #tpu.memory_space<vmem>>, %arg20: memref<4x64x32xf32, #tpu.memory_space<vmem>>, %arg21: memref<4x1x32xf32, #tpu.memory_space<vmem>>, %arg22: memref<8x16xf32, #tpu.memory_space<vmem>>) attributes {dimension_semantics = [#tpu.dimension_semantics<parallel>], iteration_bounds = array<i64: 2>, scalar_prefetch = 0 : i64, scratch_operands = 0 : i64, tpu.core_type = #tpu.core_type<tc>, window_params = [{transform_indices = @transform_0, window_bounds = array<i64: 64, 16>}, {pipeline_mode = #tpu.pipeline_mode<synchronous>, transform_indices = @transform_1, window_bounds = array<i64: 64, 32>}, {pipeline_mode = #tpu.pipeline_mode<synchronous>, transform_indices = @transform_2, window_bounds = array<i64: 64, 64>}, {pipeline_mode = #tpu.pipeline_mode<synchronous>, transform_indices = @transform_3, window_bounds = array<i64: 64, 64>}, {pipeline_mode = #tpu.pipeline_mode<synchronous>, transform_indices = @transform_4, window_bounds = array<i64: 4, 1, 32>}, {pipeline_mode = #tpu.pipeline_mode<synchronous>, transform_indices = @transform_5, window_bounds = array<i64: 16, 32>}, {pipeline_mode = #tpu.pipeline_mode<synchronous>, transform_indices = @transform_6, window_bounds = array<i64: 1, 32>}, {pipeline_mode = #tpu.pipeline_mode<synchronous>, transform_indices = @transform_7, window_bounds = array<i64: 32, 16>}, {pipeline_mode = #tpu.pipeline_mode<synchronous>, transform_indices = @transform_8, window_bounds = array<i64: 1, 16>}, {pipeline_mode = #tpu.pipeline_mode<synchronous>, transform_indices = @transform_9, window_bounds = array<i64: 4, 1, 32>}, {pipeline_mode = #tpu.pipeline_mode<synchronous>, transform_indices = @transform_10, window_bounds = array<i64: 4, 1, 32>}, {pipeline_mode = #tpu.pipeline_mode<synchronous>, transform_indices = @transform_11, window_bounds = array<i64: 4, 32, 96>}, {pipeline_mode = #tpu.pipeline_mode<synchronous>, transform_indices = @transform_12, window_bounds = array<i64: 4, 1, 96>}, {pipeline_mode = #tpu.pipeline_mode<synchronous>, transform_indices = @transform_13, window_bounds = array<i64: 4, 32, 32>}, {pipeline_mode = #tpu.pipeline_mode<synchronous>, transform_indices = @transform_14, window_bounds = array<i64: 4, 1, 32>}, {pipeline_mode = #tpu.pipeline_mode<synchronous>, transform_indices = @transform_15, window_bounds = array<i64: 4, 1, 32>}, {pipeline_mode = #tpu.pipeline_mode<synchronous>, transform_indices = @transform_16, window_bounds = array<i64: 4, 1, 32>}, {pipeline_mode = #tpu.pipeline_mode<synchronous>, transform_indices = @transform_17, window_bounds = array<i64: 4, 32, 64>}, {pipeline_mode = #tpu.pipeline_mode<synchronous>, transform_indices = @transform_18, window_bounds = array<i64: 4, 1, 64>}, {pipeline_mode = #tpu.pipeline_mode<synchronous>, transform_indices = @transform_19, window_bounds = array<i64: 4, 64, 32>}, {pipeline_mode = #tpu.pipeline_mode<synchronous>, transform_indices = @transform_20, window_bounds = array<i64: 4, 1, 32>}, {transform_indices = @transform_21, window_bounds = array<i64: 8, 16>}]} {
    %c0 = arith.constant 0 : index
    %c0_0 = arith.constant 0 : index
    %0 = vector.load %arg1[%c0, %c0_0] : memref<64x16xf32, #tpu.memory_space<vmem>>, vector<64x16xf32>
    %c0_1 = arith.constant 0 : index
    %c0_2 = arith.constant 0 : index
    %1 = vector.load %arg6[%c0_1, %c0_2] : memref<16x32xf32, #tpu.memory_space<vmem>>, vector<16x32xf32>
    %cst = arith.constant dense<0.000000e+00> : vector<64x32xf32>
    %2 = tpu.matmul %0, %1, %cst {dimension_numbers = #tpu.dot_dimension_numbers<[1], [0], [0], [1], [0, 0, 1, 1], [], []>} : vector<64x16xf32>, vector<16x32xf32>, vector<64x32xf32> -> vector<64x32xf32>
    %c0_3 = arith.constant 0 : index
    %c0_4 = arith.constant 0 : index
    %3 = vector.load %arg7[%c0_3, %c0_4] : memref<1x32xf32, #tpu.memory_space<vmem>>, vector<1x32xf32>
    %4 = vector.broadcast %3 : vector<1x32xf32> to vector<64x32xf32>
    %5 = arith.addf %2, %4 : vector<64x32xf32>
    %c0_5 = arith.constant 0 : index
    %c0_6 = arith.constant 0 : index
    %6 = vector.load %arg2[%c0_5, %c0_6] : memref<64x32xf32, #tpu.memory_space<vmem>>, vector<64x32xf32>
    %7 = arith.addf %5, %6 : vector<64x32xf32>
    %c0_7 = arith.constant 0 : index
    %c0_8 = arith.constant 0 : index
    %8 = vector.load %arg3[%c0_7, %c0_8] : memref<64x64xf32, #tpu.memory_space<vmem>>, vector<64x64xf32>
    %c0_9 = arith.constant 0 : index
    %c0_10 = arith.constant 0 : index
    %c0_11 = arith.constant 0 : index
    %9 = vector.load %arg10[%c0_9, %c0_10, %c0_11] : memref<4x1x32xf32, #tpu.memory_space<vmem>>, vector<1x1x32xf32>
    %10 = vector.shape_cast %9 : vector<1x1x32xf32> to vector<1x32xf32>
    %c0_12 = arith.constant 0 : index
    %c0_13 = arith.constant 0 : index
    %c0_14 = arith.constant 0 : index
    %11 = vector.load %arg11[%c0_12, %c0_13, %c0_14] : memref<4x1x32xf32, #tpu.memory_space<vmem>>, vector<1x1x32xf32>
    %12 = vector.shape_cast %11 : vector<1x1x32xf32> to vector<1x32xf32>
    %cst_15 = arith.constant dense<0.000000e+00> : vector<64xf32>
    %13 = vector.multi_reduction <add>, %7, %cst_15 [1] : vector<64x32xf32> to vector<64xf32>
    %14 = vector.shape_cast %13 : vector<64xf32> to vector<64x1xf32>
    %cst_16 = arith.constant 3.200000e+01 : f32
    %15 = vector.broadcast %cst_16 : f32 to vector<64x1xf32>
    %16 = arith.divf %14, %15 : vector<64x1xf32>
    %17 = vector.broadcast %16 : vector<64x1xf32> to vector<64x32xf32>
    %18 = arith.subf %7, %17 : vector<64x32xf32>
    %19 = arith.mulf %18, %18 : vector<64x32xf32>
    %cst_17 = arith.constant dense<0.000000e+00> : vector<64xf32>
    %20 = vector.multi_reduction <add>, %19, %cst_17 [1] : vector<64x32xf32> to vector<64xf32>
    %21 = vector.shape_cast %20 : vector<64xf32> to vector<64x1xf32>
    %cst_18 = arith.constant 3.200000e+01 : f32
    %22 = vector.broadcast %cst_18 : f32 to vector<64x1xf32>
    %23 = arith.divf %21, %22 : vector<64x1xf32>
    %24 = vector.broadcast %16 : vector<64x1xf32> to vector<64x32xf32>
    %25 = arith.subf %7, %24 : vector<64x32xf32>
    %cst_19 = arith.constant 9.99999974E-6 : f32
    %26 = vector.broadcast %cst_19 : f32 to vector<64x1xf32>
    %27 = arith.addf %23, %26 : vector<64x1xf32>
    %28 = math.rsqrt %27 : vector<64x1xf32>
    %29 = vector.broadcast %28 : vector<64x1xf32> to vector<64x32xf32>
    %30 = arith.mulf %25, %29 : vector<64x32xf32>
    %31 = vector.broadcast %10 : vector<1x32xf32> to vector<64x32xf32>
    %32 = arith.mulf %30, %31 : vector<64x32xf32>
    %33 = vector.broadcast %12 : vector<1x32xf32> to vector<64x32xf32>
    %34 = arith.addf %32, %33 : vector<64x32xf32>
    %c0_20 = arith.constant 0 : index
    %c0_21 = arith.constant 0 : index
    %c0_22 = arith.constant 0 : index
    %35 = vector.load %arg12[%c0_20, %c0_21, %c0_22] : memref<4x32x96xf32, #tpu.memory_space<vmem>>, vector<1x32x96xf32>
    %36 = vector.shape_cast %35 : vector<1x32x96xf32> to vector<32x96xf32>
    %cst_23 = arith.constant dense<0.000000e+00> : vector<64x96xf32>
    %37 = tpu.matmul %34, %36, %cst_23 {dimension_numbers = #tpu.dot_dimension_numbers<[1], [0], [0], [1], [0, 0, 1, 1], [], []>} : vector<64x32xf32>, vector<32x96xf32>, vector<64x96xf32> -> vector<64x96xf32>
    %c0_24 = arith.constant 0 : index
    %c0_25 = arith.constant 0 : index
    %c0_26 = arith.constant 0 : index
    %38 = vector.load %arg13[%c0_24, %c0_25, %c0_26] : memref<4x1x96xf32, #tpu.memory_space<vmem>>, vector<1x1x96xf32>
    %39 = vector.shape_cast %38 : vector<1x1x96xf32> to vector<1x96xf32>
    %40 = vector.broadcast %39 : vector<1x96xf32> to vector<64x96xf32>
    %41 = arith.addf %37, %40 : vector<64x96xf32>
    %42 = vector.extract_strided_slice %41 {offsets = [0, 0], sizes = [64, 32], strides = [1, 1]} : vector<64x96xf32> to vector<64x32xf32>
    %43 = vector.extract_strided_slice %41 {offsets = [0, 32], sizes = [64, 32], strides = [1, 1]} : vector<64x96xf32> to vector<64x32xf32>
    %44 = vector.extract_strided_slice %41 {offsets = [0, 64], sizes = [64, 32], strides = [1, 1]} : vector<64x96xf32> to vector<64x32xf32>
    %c0_27 = arith.constant 0 : index
    %c0_28 = arith.constant 0 : index
    %c0_29 = arith.constant 0 : index
    %45 = vector.load %arg14[%c0_27, %c0_28, %c0_29] : memref<4x32x32xf32, #tpu.memory_space<vmem>>, vector<1x32x32xf32>
    %46 = vector.shape_cast %45 : vector<1x32x32xf32> to vector<32x32xf32>
    %c0_30 = arith.constant 0 : index
    %c0_31 = arith.constant 0 : index
    %c0_32 = arith.constant 0 : index
    %47 = vector.load %arg5[%c0_30, %c0_31, %c0_32] : memref<4x1x32xf32, #tpu.memory_space<vmem>>, vector<1x1x32xf32>
    %48 = vector.shape_cast %47 : vector<1x1x32xf32> to vector<1x32xf32>
    %49 = vector.broadcast %48 : vector<1x32xf32> to vector<64x32xf32>
    %50 = arith.mulf %43, %49 : vector<64x32xf32>
    %c1 = arith.constant 1 : index
    %c0_33 = arith.constant 0 : index
    %c0_34 = arith.constant 0 : index
    %51 = vector.load %arg5[%c1, %c0_33, %c0_34] : memref<4x1x32xf32, #tpu.memory_space<vmem>>, vector<1x1x32xf32>
    %52 = vector.shape_cast %51 : vector<1x1x32xf32> to vector<1x32xf32>
    %53 = vector.broadcast %52 : vector<1x32xf32> to vector<64x32xf32>
    %54 = arith.mulf %43, %53 : vector<64x32xf32>
    %c2 = arith.constant 2 : index
    %c0_35 = arith.constant 0 : index
    %c0_36 = arith.constant 0 : index
    %55 = vector.load %arg5[%c2, %c0_35, %c0_36] : memref<4x1x32xf32, #tpu.memory_space<vmem>>, vector<1x1x32xf32>
    %56 = vector.shape_cast %55 : vector<1x1x32xf32> to vector<1x32xf32>
    %57 = vector.broadcast %56 : vector<1x32xf32> to vector<64x32xf32>
    %58 = arith.mulf %43, %57 : vector<64x32xf32>
    %c3 = arith.constant 3 : index
    %c0_37 = arith.constant 0 : index
    %c0_38 = arith.constant 0 : index
    %59 = vector.load %arg5[%c3, %c0_37, %c0_38] : memref<4x1x32xf32, #tpu.memory_space<vmem>>, vector<1x1x32xf32>
    %60 = vector.shape_cast %59 : vector<1x1x32xf32> to vector<1x32xf32>
    %61 = vector.broadcast %60 : vector<1x32xf32> to vector<64x32xf32>
    %62 = arith.mulf %43, %61 : vector<64x32xf32>
    %63 = tpu.concatenate %50, %54, %58, %62 in 0 : vector<64x32xf32>, vector<64x32xf32>, vector<64x32xf32>, vector<64x32xf32> -> vector<256x32xf32>
    %c0_39 = arith.constant 0 : index
    %c0_40 = arith.constant 0 : index
    %c0_41 = arith.constant 0 : index
    %64 = vector.load %arg5[%c0_39, %c0_40, %c0_41] : memref<4x1x32xf32, #tpu.memory_space<vmem>>, vector<1x1x32xf32>
    %65 = vector.shape_cast %64 : vector<1x1x32xf32> to vector<1x32xf32>
    %66 = vector.broadcast %65 : vector<1x32xf32> to vector<64x32xf32>
    %67 = arith.mulf %44, %66 : vector<64x32xf32>
    %c1_42 = arith.constant 1 : index
    %c0_43 = arith.constant 0 : index
    %c0_44 = arith.constant 0 : index
    %68 = vector.load %arg5[%c1_42, %c0_43, %c0_44] : memref<4x1x32xf32, #tpu.memory_space<vmem>>, vector<1x1x32xf32>
    %69 = vector.shape_cast %68 : vector<1x1x32xf32> to vector<1x32xf32>
    %70 = vector.broadcast %69 : vector<1x32xf32> to vector<64x32xf32>
    %71 = arith.mulf %44, %70 : vector<64x32xf32>
    %c2_45 = arith.constant 2 : index
    %c0_46 = arith.constant 0 : index
    %c0_47 = arith.constant 0 : index
    %72 = vector.load %arg5[%c2_45, %c0_46, %c0_47] : memref<4x1x32xf32, #tpu.memory_space<vmem>>, vector<1x1x32xf32>
    %73 = vector.shape_cast %72 : vector<1x1x32xf32> to vector<1x32xf32>
    %74 = vector.broadcast %73 : vector<1x32xf32> to vector<64x32xf32>
    %75 = arith.mulf %44, %74 : vector<64x32xf32>
    %c3_48 = arith.constant 3 : index
    %c0_49 = arith.constant 0 : index
    %c0_50 = arith.constant 0 : index
    %76 = vector.load %arg5[%c3_48, %c0_49, %c0_50] : memref<4x1x32xf32, #tpu.memory_space<vmem>>, vector<1x1x32xf32>
    %77 = vector.shape_cast %76 : vector<1x1x32xf32> to vector<1x32xf32>
    %78 = vector.broadcast %77 : vector<1x32xf32> to vector<64x32xf32>
    %79 = arith.mulf %44, %78 : vector<64x32xf32>
    %80 = tpu.concatenate %67, %71, %75, %79 in 0 : vector<64x32xf32>, vector<64x32xf32>, vector<64x32xf32>, vector<64x32xf32> -> vector<256x32xf32>
    %cst_51 = arith.constant dense<0.000000e+00> : vector<64x256xf32>
    %81 = tpu.matmul %42, %63, %cst_51 {dimension_numbers = #tpu.dot_dimension_numbers<[1], [1], [0], [0], [0, 0, 1, 0], [], []>} : vector<64x32xf32>, vector<256x32xf32>, vector<64x256xf32> -> vector<64x256xf32>
    %82 = vector.extract_strided_slice %81 {offsets = [0, 0], sizes = [64, 64], strides = [1, 1]} : vector<64x256xf32> to vector<64x64xf32>
    %83 = arith.addf %82, %8 : vector<64x64xf32>
    %cst_52 = arith.constant dense<0xFF800000> : vector<64xf32>
    %84 = vector.multi_reduction <maximumf>, %83, %cst_52 [1] : vector<64x64xf32> to vector<64xf32>
    %85 = vector.shape_cast %84 : vector<64xf32> to vector<64x1xf32>
    %86 = vector.broadcast %85 : vector<64x1xf32> to vector<64x64xf32>
    %87 = arith.subf %83, %86 : vector<64x64xf32>
    %88 = math.exp %87 : vector<64x64xf32>
    %cst_53 = arith.constant dense<0.000000e+00> : vector<64xf32>
    %89 = vector.multi_reduction <add>, %88, %cst_53 [1] : vector<64x64xf32> to vector<64xf32>
    %90 = vector.shape_cast %89 : vector<64xf32> to vector<64x1xf32>
    %91 = tpu.reciprocal %90 : vector<64x1xf32> -> vector<64x1xf32>
    %92 = vector.broadcast %91 : vector<64x1xf32> to vector<64x64xf32>
    %93 = arith.mulf %88, %92 : vector<64x64xf32>
    %94 = vector.extract_strided_slice %81 {offsets = [0, 64], sizes = [64, 64], strides = [1, 1]} : vector<64x256xf32> to vector<64x64xf32>
    %95 = arith.addf %94, %8 : vector<64x64xf32>
    %cst_54 = arith.constant dense<0xFF800000> : vector<64xf32>
    %96 = vector.multi_reduction <maximumf>, %95, %cst_54 [1] : vector<64x64xf32> to vector<64xf32>
    %97 = vector.shape_cast %96 : vector<64xf32> to vector<64x1xf32>
    %98 = vector.broadcast %97 : vector<64x1xf32> to vector<64x64xf32>
    %99 = arith.subf %95, %98 : vector<64x64xf32>
    %100 = math.exp %99 : vector<64x64xf32>
    %cst_55 = arith.constant dense<0.000000e+00> : vector<64xf32>
    %101 = vector.multi_reduction <add>, %100, %cst_55 [1] : vector<64x64xf32> to vector<64xf32>
    %102 = vector.shape_cast %101 : vector<64xf32> to vector<64x1xf32>
    %103 = tpu.reciprocal %102 : vector<64x1xf32> -> vector<64x1xf32>
    %104 = vector.broadcast %103 : vector<64x1xf32> to vector<64x64xf32>
    %105 = arith.mulf %100, %104 : vector<64x64xf32>
    %106 = vector.extract_strided_slice %81 {offsets = [0, 128], sizes = [64, 64], strides = [1, 1]} : vector<64x256xf32> to vector<64x64xf32>
    %107 = arith.addf %106, %8 : vector<64x64xf32>
    %cst_56 = arith.constant dense<0xFF800000> : vector<64xf32>
    %108 = vector.multi_reduction <maximumf>, %107, %cst_56 [1] : vector<64x64xf32> to vector<64xf32>
    %109 = vector.shape_cast %108 : vector<64xf32> to vector<64x1xf32>
    %110 = vector.broadcast %109 : vector<64x1xf32> to vector<64x64xf32>
    %111 = arith.subf %107, %110 : vector<64x64xf32>
    %112 = math.exp %111 : vector<64x64xf32>
    %cst_57 = arith.constant dense<0.000000e+00> : vector<64xf32>
    %113 = vector.multi_reduction <add>, %112, %cst_57 [1] : vector<64x64xf32> to vector<64xf32>
    %114 = vector.shape_cast %113 : vector<64xf32> to vector<64x1xf32>
    %115 = tpu.reciprocal %114 : vector<64x1xf32> -> vector<64x1xf32>
    %116 = vector.broadcast %115 : vector<64x1xf32> to vector<64x64xf32>
    %117 = arith.mulf %112, %116 : vector<64x64xf32>
    %118 = vector.extract_strided_slice %81 {offsets = [0, 192], sizes = [64, 64], strides = [1, 1]} : vector<64x256xf32> to vector<64x64xf32>
    %119 = arith.addf %118, %8 : vector<64x64xf32>
    %cst_58 = arith.constant dense<0xFF800000> : vector<64xf32>
    %120 = vector.multi_reduction <maximumf>, %119, %cst_58 [1] : vector<64x64xf32> to vector<64xf32>
    %121 = vector.shape_cast %120 : vector<64xf32> to vector<64x1xf32>
    %122 = vector.broadcast %121 : vector<64x1xf32> to vector<64x64xf32>
    %123 = arith.subf %119, %122 : vector<64x64xf32>
    %124 = math.exp %123 : vector<64x64xf32>
    %cst_59 = arith.constant dense<0.000000e+00> : vector<64xf32>
    %125 = vector.multi_reduction <add>, %124, %cst_59 [1] : vector<64x64xf32> to vector<64xf32>
    %126 = vector.shape_cast %125 : vector<64xf32> to vector<64x1xf32>
    %127 = tpu.reciprocal %126 : vector<64x1xf32> -> vector<64x1xf32>
    %128 = vector.broadcast %127 : vector<64x1xf32> to vector<64x64xf32>
    %129 = arith.mulf %124, %128 : vector<64x64xf32>
    %130 = tpu.concatenate %93, %105, %117, %129 in 1 : vector<64x64xf32>, vector<64x64xf32>, vector<64x64xf32>, vector<64x64xf32> -> vector<64x256xf32>
    %cst_60 = arith.constant dense<0.000000e+00> : vector<256x32xf32>
    %131 = tpu.matmul %80, %46, %cst_60 {dimension_numbers = #tpu.dot_dimension_numbers<[1], [0], [0], [1], [0, 0, 1, 1], [], []>} : vector<256x32xf32>, vector<32x32xf32>, vector<256x32xf32> -> vector<256x32xf32>
    %cst_61 = arith.constant dense<0.000000e+00> : vector<64x32xf32>
    %132 = tpu.matmul %130, %131, %cst_61 {dimension_numbers = #tpu.dot_dimension_numbers<[1], [0], [0], [1], [0, 0, 1, 1], [], []>} : vector<64x256xf32>, vector<256x32xf32>, vector<64x32xf32> -> vector<64x32xf32>
    %133 = arith.addf %7, %132 : vector<64x32xf32>
    %c0_62 = arith.constant 0 : index
    %c0_63 = arith.constant 0 : index
    %c0_64 = arith.constant 0 : index
    %134 = vector.load %arg15[%c0_62, %c0_63, %c0_64] : memref<4x1x32xf32, #tpu.memory_space<vmem>>, vector<1x1x32xf32>
    %135 = vector.shape_cast %134 : vector<1x1x32xf32> to vector<1x32xf32>
    %136 = vector.broadcast %135 : vector<1x32xf32> to vector<64x32xf32>
    %137 = arith.addf %133, %136 : vector<64x32xf32>
    %c0_65 = arith.constant 0 : index
    %c0_66 = arith.constant 0 : index
    %c0_67 = arith.constant 0 : index
    %138 = vector.load %arg16[%c0_65, %c0_66, %c0_67] : memref<4x1x32xf32, #tpu.memory_space<vmem>>, vector<1x1x32xf32>
    %139 = vector.shape_cast %138 : vector<1x1x32xf32> to vector<1x32xf32>
    %c0_68 = arith.constant 0 : index
    %c0_69 = arith.constant 0 : index
    %c0_70 = arith.constant 0 : index
    %140 = vector.load %arg17[%c0_68, %c0_69, %c0_70] : memref<4x1x32xf32, #tpu.memory_space<vmem>>, vector<1x1x32xf32>
    %141 = vector.shape_cast %140 : vector<1x1x32xf32> to vector<1x32xf32>
    %cst_71 = arith.constant dense<0.000000e+00> : vector<64xf32>
    %142 = vector.multi_reduction <add>, %137, %cst_71 [1] : vector<64x32xf32> to vector<64xf32>
    %143 = vector.shape_cast %142 : vector<64xf32> to vector<64x1xf32>
    %cst_72 = arith.constant 3.200000e+01 : f32
    %144 = vector.broadcast %cst_72 : f32 to vector<64x1xf32>
    %145 = arith.divf %143, %144 : vector<64x1xf32>
    %146 = vector.broadcast %145 : vector<64x1xf32> to vector<64x32xf32>
    %147 = arith.subf %137, %146 : vector<64x32xf32>
    %148 = arith.mulf %147, %147 : vector<64x32xf32>
    %cst_73 = arith.constant dense<0.000000e+00> : vector<64xf32>
    %149 = vector.multi_reduction <add>, %148, %cst_73 [1] : vector<64x32xf32> to vector<64xf32>
    %150 = vector.shape_cast %149 : vector<64xf32> to vector<64x1xf32>
    %cst_74 = arith.constant 3.200000e+01 : f32
    %151 = vector.broadcast %cst_74 : f32 to vector<64x1xf32>
    %152 = arith.divf %150, %151 : vector<64x1xf32>
    %153 = vector.broadcast %145 : vector<64x1xf32> to vector<64x32xf32>
    %154 = arith.subf %137, %153 : vector<64x32xf32>
    %cst_75 = arith.constant 9.99999974E-6 : f32
    %155 = vector.broadcast %cst_75 : f32 to vector<64x1xf32>
    %156 = arith.addf %152, %155 : vector<64x1xf32>
    %157 = math.rsqrt %156 : vector<64x1xf32>
    %158 = vector.broadcast %157 : vector<64x1xf32> to vector<64x32xf32>
    %159 = arith.mulf %154, %158 : vector<64x32xf32>
    %160 = vector.broadcast %139 : vector<1x32xf32> to vector<64x32xf32>
    %161 = arith.mulf %159, %160 : vector<64x32xf32>
    %162 = vector.broadcast %141 : vector<1x32xf32> to vector<64x32xf32>
    %163 = arith.addf %161, %162 : vector<64x32xf32>
    %c0_76 = arith.constant 0 : index
    %c0_77 = arith.constant 0 : index
    %c0_78 = arith.constant 0 : index
    %164 = vector.load %arg18[%c0_76, %c0_77, %c0_78] : memref<4x32x64xf32, #tpu.memory_space<vmem>>, vector<1x32x64xf32>
    %165 = vector.shape_cast %164 : vector<1x32x64xf32> to vector<32x64xf32>
    %cst_79 = arith.constant dense<0.000000e+00> : vector<64x64xf32>
    %166 = tpu.matmul %163, %165, %cst_79 {dimension_numbers = #tpu.dot_dimension_numbers<[1], [0], [0], [1], [0, 0, 1, 1], [], []>} : vector<64x32xf32>, vector<32x64xf32>, vector<64x64xf32> -> vector<64x64xf32>
    %c0_80 = arith.constant 0 : index
    %c0_81 = arith.constant 0 : index
    %c0_82 = arith.constant 0 : index
    %167 = vector.load %arg19[%c0_80, %c0_81, %c0_82] : memref<4x1x64xf32, #tpu.memory_space<vmem>>, vector<1x1x64xf32>
    %168 = vector.shape_cast %167 : vector<1x1x64xf32> to vector<1x64xf32>
    %169 = vector.broadcast %168 : vector<1x64xf32> to vector<64x64xf32>
    %170 = arith.addf %166, %169 : vector<64x64xf32>
    %cst_83 = arith.constant 0.000000e+00 : f32
    %171 = vector.broadcast %cst_83 : f32 to vector<64x64xf32>
    %172 = arith.maximumf %170, %171 : vector<64x64xf32>
    %c0_84 = arith.constant 0 : index
    %c0_85 = arith.constant 0 : index
    %c0_86 = arith.constant 0 : index
    %173 = vector.load %arg20[%c0_84, %c0_85, %c0_86] : memref<4x64x32xf32, #tpu.memory_space<vmem>>, vector<1x64x32xf32>
    %174 = vector.shape_cast %173 : vector<1x64x32xf32> to vector<64x32xf32>
    %cst_87 = arith.constant dense<0.000000e+00> : vector<64x32xf32>
    %175 = tpu.matmul %172, %174, %cst_87 {dimension_numbers = #tpu.dot_dimension_numbers<[1], [0], [0], [1], [0, 0, 1, 1], [], []>} : vector<64x64xf32>, vector<64x32xf32>, vector<64x32xf32> -> vector<64x32xf32>
    %176 = arith.addf %137, %175 : vector<64x32xf32>
    %c0_88 = arith.constant 0 : index
    %c0_89 = arith.constant 0 : index
    %c0_90 = arith.constant 0 : index
    %177 = vector.load %arg21[%c0_88, %c0_89, %c0_90] : memref<4x1x32xf32, #tpu.memory_space<vmem>>, vector<1x1x32xf32>
    %178 = vector.shape_cast %177 : vector<1x1x32xf32> to vector<1x32xf32>
    %179 = vector.broadcast %178 : vector<1x32xf32> to vector<64x32xf32>
    %180 = arith.addf %176, %179 : vector<64x32xf32>
    %c0_91 = arith.constant 0 : index
    %c0_92 = arith.constant 0 : index
    %181 = vector.load %arg4[%c0_91, %c0_92] : memref<64x64xf32, #tpu.memory_space<vmem>>, vector<64x64xf32>
    %c1_93 = arith.constant 1 : index
    %c0_94 = arith.constant 0 : index
    %c0_95 = arith.constant 0 : index
    %182 = vector.load %arg10[%c1_93, %c0_94, %c0_95] : memref<4x1x32xf32, #tpu.memory_space<vmem>>, vector<1x1x32xf32>
    %183 = vector.shape_cast %182 : vector<1x1x32xf32> to vector<1x32xf32>
    %c1_96 = arith.constant 1 : index
    %c0_97 = arith.constant 0 : index
    %c0_98 = arith.constant 0 : index
    %184 = vector.load %arg11[%c1_96, %c0_97, %c0_98] : memref<4x1x32xf32, #tpu.memory_space<vmem>>, vector<1x1x32xf32>
    %185 = vector.shape_cast %184 : vector<1x1x32xf32> to vector<1x32xf32>
    %cst_99 = arith.constant dense<0.000000e+00> : vector<64xf32>
    %186 = vector.multi_reduction <add>, %180, %cst_99 [1] : vector<64x32xf32> to vector<64xf32>
    %187 = vector.shape_cast %186 : vector<64xf32> to vector<64x1xf32>
    %cst_100 = arith.constant 3.200000e+01 : f32
    %188 = vector.broadcast %cst_100 : f32 to vector<64x1xf32>
    %189 = arith.divf %187, %188 : vector<64x1xf32>
    %190 = vector.broadcast %189 : vector<64x1xf32> to vector<64x32xf32>
    %191 = arith.subf %180, %190 : vector<64x32xf32>
    %192 = arith.mulf %191, %191 : vector<64x32xf32>
    %cst_101 = arith.constant dense<0.000000e+00> : vector<64xf32>
    %193 = vector.multi_reduction <add>, %192, %cst_101 [1] : vector<64x32xf32> to vector<64xf32>
    %194 = vector.shape_cast %193 : vector<64xf32> to vector<64x1xf32>
    %cst_102 = arith.constant 3.200000e+01 : f32
    %195 = vector.broadcast %cst_102 : f32 to vector<64x1xf32>
    %196 = arith.divf %194, %195 : vector<64x1xf32>
    %197 = vector.broadcast %189 : vector<64x1xf32> to vector<64x32xf32>
    %198 = arith.subf %180, %197 : vector<64x32xf32>
    %cst_103 = arith.constant 9.99999974E-6 : f32
    %199 = vector.broadcast %cst_103 : f32 to vector<64x1xf32>
    %200 = arith.addf %196, %199 : vector<64x1xf32>
    %201 = math.rsqrt %200 : vector<64x1xf32>
    %202 = vector.broadcast %201 : vector<64x1xf32> to vector<64x32xf32>
    %203 = arith.mulf %198, %202 : vector<64x32xf32>
    %204 = vector.broadcast %183 : vector<1x32xf32> to vector<64x32xf32>
    %205 = arith.mulf %203, %204 : vector<64x32xf32>
    %206 = vector.broadcast %185 : vector<1x32xf32> to vector<64x32xf32>
    %207 = arith.addf %205, %206 : vector<64x32xf32>
    %c1_104 = arith.constant 1 : index
    %c0_105 = arith.constant 0 : index
    %c0_106 = arith.constant 0 : index
    %208 = vector.load %arg12[%c1_104, %c0_105, %c0_106] : memref<4x32x96xf32, #tpu.memory_space<vmem>>, vector<1x32x96xf32>
    %209 = vector.shape_cast %208 : vector<1x32x96xf32> to vector<32x96xf32>
    %cst_107 = arith.constant dense<0.000000e+00> : vector<64x96xf32>
    %210 = tpu.matmul %207, %209, %cst_107 {dimension_numbers = #tpu.dot_dimension_numbers<[1], [0], [0], [1], [0, 0, 1, 1], [], []>} : vector<64x32xf32>, vector<32x96xf32>, vector<64x96xf32> -> vector<64x96xf32>
    %c1_108 = arith.constant 1 : index
    %c0_109 = arith.constant 0 : index
    %c0_110 = arith.constant 0 : index
    %211 = vector.load %arg13[%c1_108, %c0_109, %c0_110] : memref<4x1x96xf32, #tpu.memory_space<vmem>>, vector<1x1x96xf32>
    %212 = vector.shape_cast %211 : vector<1x1x96xf32> to vector<1x96xf32>
    %213 = vector.broadcast %212 : vector<1x96xf32> to vector<64x96xf32>
    %214 = arith.addf %210, %213 : vector<64x96xf32>
    %215 = vector.extract_strided_slice %214 {offsets = [0, 0], sizes = [64, 32], strides = [1, 1]} : vector<64x96xf32> to vector<64x32xf32>
    %216 = vector.extract_strided_slice %214 {offsets = [0, 32], sizes = [64, 32], strides = [1, 1]} : vector<64x96xf32> to vector<64x32xf32>
    %217 = vector.extract_strided_slice %214 {offsets = [0, 64], sizes = [64, 32], strides = [1, 1]} : vector<64x96xf32> to vector<64x32xf32>
    %c1_111 = arith.constant 1 : index
    %c0_112 = arith.constant 0 : index
    %c0_113 = arith.constant 0 : index
    %218 = vector.load %arg14[%c1_111, %c0_112, %c0_113] : memref<4x32x32xf32, #tpu.memory_space<vmem>>, vector<1x32x32xf32>
    %219 = vector.shape_cast %218 : vector<1x32x32xf32> to vector<32x32xf32>
    %c0_114 = arith.constant 0 : index
    %c0_115 = arith.constant 0 : index
    %c0_116 = arith.constant 0 : index
    %220 = vector.load %arg5[%c0_114, %c0_115, %c0_116] : memref<4x1x32xf32, #tpu.memory_space<vmem>>, vector<1x1x32xf32>
    %221 = vector.shape_cast %220 : vector<1x1x32xf32> to vector<1x32xf32>
    %222 = vector.broadcast %221 : vector<1x32xf32> to vector<64x32xf32>
    %223 = arith.mulf %216, %222 : vector<64x32xf32>
    %c1_117 = arith.constant 1 : index
    %c0_118 = arith.constant 0 : index
    %c0_119 = arith.constant 0 : index
    %224 = vector.load %arg5[%c1_117, %c0_118, %c0_119] : memref<4x1x32xf32, #tpu.memory_space<vmem>>, vector<1x1x32xf32>
    %225 = vector.shape_cast %224 : vector<1x1x32xf32> to vector<1x32xf32>
    %226 = vector.broadcast %225 : vector<1x32xf32> to vector<64x32xf32>
    %227 = arith.mulf %216, %226 : vector<64x32xf32>
    %c2_120 = arith.constant 2 : index
    %c0_121 = arith.constant 0 : index
    %c0_122 = arith.constant 0 : index
    %228 = vector.load %arg5[%c2_120, %c0_121, %c0_122] : memref<4x1x32xf32, #tpu.memory_space<vmem>>, vector<1x1x32xf32>
    %229 = vector.shape_cast %228 : vector<1x1x32xf32> to vector<1x32xf32>
    %230 = vector.broadcast %229 : vector<1x32xf32> to vector<64x32xf32>
    %231 = arith.mulf %216, %230 : vector<64x32xf32>
    %c3_123 = arith.constant 3 : index
    %c0_124 = arith.constant 0 : index
    %c0_125 = arith.constant 0 : index
    %232 = vector.load %arg5[%c3_123, %c0_124, %c0_125] : memref<4x1x32xf32, #tpu.memory_space<vmem>>, vector<1x1x32xf32>
    %233 = vector.shape_cast %232 : vector<1x1x32xf32> to vector<1x32xf32>
    %234 = vector.broadcast %233 : vector<1x32xf32> to vector<64x32xf32>
    %235 = arith.mulf %216, %234 : vector<64x32xf32>
    %236 = tpu.concatenate %223, %227, %231, %235 in 0 : vector<64x32xf32>, vector<64x32xf32>, vector<64x32xf32>, vector<64x32xf32> -> vector<256x32xf32>
    %c0_126 = arith.constant 0 : index
    %c0_127 = arith.constant 0 : index
    %c0_128 = arith.constant 0 : index
    %237 = vector.load %arg5[%c0_126, %c0_127, %c0_128] : memref<4x1x32xf32, #tpu.memory_space<vmem>>, vector<1x1x32xf32>
    %238 = vector.shape_cast %237 : vector<1x1x32xf32> to vector<1x32xf32>
    %239 = vector.broadcast %238 : vector<1x32xf32> to vector<64x32xf32>
    %240 = arith.mulf %217, %239 : vector<64x32xf32>
    %c1_129 = arith.constant 1 : index
    %c0_130 = arith.constant 0 : index
    %c0_131 = arith.constant 0 : index
    %241 = vector.load %arg5[%c1_129, %c0_130, %c0_131] : memref<4x1x32xf32, #tpu.memory_space<vmem>>, vector<1x1x32xf32>
    %242 = vector.shape_cast %241 : vector<1x1x32xf32> to vector<1x32xf32>
    %243 = vector.broadcast %242 : vector<1x32xf32> to vector<64x32xf32>
    %244 = arith.mulf %217, %243 : vector<64x32xf32>
    %c2_132 = arith.constant 2 : index
    %c0_133 = arith.constant 0 : index
    %c0_134 = arith.constant 0 : index
    %245 = vector.load %arg5[%c2_132, %c0_133, %c0_134] : memref<4x1x32xf32, #tpu.memory_space<vmem>>, vector<1x1x32xf32>
    %246 = vector.shape_cast %245 : vector<1x1x32xf32> to vector<1x32xf32>
    %247 = vector.broadcast %246 : vector<1x32xf32> to vector<64x32xf32>
    %248 = arith.mulf %217, %247 : vector<64x32xf32>
    %c3_135 = arith.constant 3 : index
    %c0_136 = arith.constant 0 : index
    %c0_137 = arith.constant 0 : index
    %249 = vector.load %arg5[%c3_135, %c0_136, %c0_137] : memref<4x1x32xf32, #tpu.memory_space<vmem>>, vector<1x1x32xf32>
    %250 = vector.shape_cast %249 : vector<1x1x32xf32> to vector<1x32xf32>
    %251 = vector.broadcast %250 : vector<1x32xf32> to vector<64x32xf32>
    %252 = arith.mulf %217, %251 : vector<64x32xf32>
    %253 = tpu.concatenate %240, %244, %248, %252 in 0 : vector<64x32xf32>, vector<64x32xf32>, vector<64x32xf32>, vector<64x32xf32> -> vector<256x32xf32>
    %cst_138 = arith.constant dense<0.000000e+00> : vector<64x256xf32>
    %254 = tpu.matmul %215, %236, %cst_138 {dimension_numbers = #tpu.dot_dimension_numbers<[1], [1], [0], [0], [0, 0, 1, 0], [], []>} : vector<64x32xf32>, vector<256x32xf32>, vector<64x256xf32> -> vector<64x256xf32>
    %255 = vector.extract_strided_slice %254 {offsets = [0, 0], sizes = [64, 64], strides = [1, 1]} : vector<64x256xf32> to vector<64x64xf32>
    %256 = arith.addf %255, %181 : vector<64x64xf32>
    %cst_139 = arith.constant dense<0xFF800000> : vector<64xf32>
    %257 = vector.multi_reduction <maximumf>, %256, %cst_139 [1] : vector<64x64xf32> to vector<64xf32>
    %258 = vector.shape_cast %257 : vector<64xf32> to vector<64x1xf32>
    %259 = vector.broadcast %258 : vector<64x1xf32> to vector<64x64xf32>
    %260 = arith.subf %256, %259 : vector<64x64xf32>
    %261 = math.exp %260 : vector<64x64xf32>
    %cst_140 = arith.constant dense<0.000000e+00> : vector<64xf32>
    %262 = vector.multi_reduction <add>, %261, %cst_140 [1] : vector<64x64xf32> to vector<64xf32>
    %263 = vector.shape_cast %262 : vector<64xf32> to vector<64x1xf32>
    %264 = tpu.reciprocal %263 : vector<64x1xf32> -> vector<64x1xf32>
    %265 = vector.broadcast %264 : vector<64x1xf32> to vector<64x64xf32>
    %266 = arith.mulf %261, %265 : vector<64x64xf32>
    %267 = vector.extract_strided_slice %254 {offsets = [0, 64], sizes = [64, 64], strides = [1, 1]} : vector<64x256xf32> to vector<64x64xf32>
    %268 = arith.addf %267, %181 : vector<64x64xf32>
    %cst_141 = arith.constant dense<0xFF800000> : vector<64xf32>
    %269 = vector.multi_reduction <maximumf>, %268, %cst_141 [1] : vector<64x64xf32> to vector<64xf32>
    %270 = vector.shape_cast %269 : vector<64xf32> to vector<64x1xf32>
    %271 = vector.broadcast %270 : vector<64x1xf32> to vector<64x64xf32>
    %272 = arith.subf %268, %271 : vector<64x64xf32>
    %273 = math.exp %272 : vector<64x64xf32>
    %cst_142 = arith.constant dense<0.000000e+00> : vector<64xf32>
    %274 = vector.multi_reduction <add>, %273, %cst_142 [1] : vector<64x64xf32> to vector<64xf32>
    %275 = vector.shape_cast %274 : vector<64xf32> to vector<64x1xf32>
    %276 = tpu.reciprocal %275 : vector<64x1xf32> -> vector<64x1xf32>
    %277 = vector.broadcast %276 : vector<64x1xf32> to vector<64x64xf32>
    %278 = arith.mulf %273, %277 : vector<64x64xf32>
    %279 = vector.extract_strided_slice %254 {offsets = [0, 128], sizes = [64, 64], strides = [1, 1]} : vector<64x256xf32> to vector<64x64xf32>
    %280 = arith.addf %279, %181 : vector<64x64xf32>
    %cst_143 = arith.constant dense<0xFF800000> : vector<64xf32>
    %281 = vector.multi_reduction <maximumf>, %280, %cst_143 [1] : vector<64x64xf32> to vector<64xf32>
    %282 = vector.shape_cast %281 : vector<64xf32> to vector<64x1xf32>
    %283 = vector.broadcast %282 : vector<64x1xf32> to vector<64x64xf32>
    %284 = arith.subf %280, %283 : vector<64x64xf32>
    %285 = math.exp %284 : vector<64x64xf32>
    %cst_144 = arith.constant dense<0.000000e+00> : vector<64xf32>
    %286 = vector.multi_reduction <add>, %285, %cst_144 [1] : vector<64x64xf32> to vector<64xf32>
    %287 = vector.shape_cast %286 : vector<64xf32> to vector<64x1xf32>
    %288 = tpu.reciprocal %287 : vector<64x1xf32> -> vector<64x1xf32>
    %289 = vector.broadcast %288 : vector<64x1xf32> to vector<64x64xf32>
    %290 = arith.mulf %285, %289 : vector<64x64xf32>
    %291 = vector.extract_strided_slice %254 {offsets = [0, 192], sizes = [64, 64], strides = [1, 1]} : vector<64x256xf32> to vector<64x64xf32>
    %292 = arith.addf %291, %181 : vector<64x64xf32>
    %cst_145 = arith.constant dense<0xFF800000> : vector<64xf32>
    %293 = vector.multi_reduction <maximumf>, %292, %cst_145 [1] : vector<64x64xf32> to vector<64xf32>
    %294 = vector.shape_cast %293 : vector<64xf32> to vector<64x1xf32>
    %295 = vector.broadcast %294 : vector<64x1xf32> to vector<64x64xf32>
    %296 = arith.subf %292, %295 : vector<64x64xf32>
    %297 = math.exp %296 : vector<64x64xf32>
    %cst_146 = arith.constant dense<0.000000e+00> : vector<64xf32>
    %298 = vector.multi_reduction <add>, %297, %cst_146 [1] : vector<64x64xf32> to vector<64xf32>
    %299 = vector.shape_cast %298 : vector<64xf32> to vector<64x1xf32>
    %300 = tpu.reciprocal %299 : vector<64x1xf32> -> vector<64x1xf32>
    %301 = vector.broadcast %300 : vector<64x1xf32> to vector<64x64xf32>
    %302 = arith.mulf %297, %301 : vector<64x64xf32>
    %303 = tpu.concatenate %266, %278, %290, %302 in 1 : vector<64x64xf32>, vector<64x64xf32>, vector<64x64xf32>, vector<64x64xf32> -> vector<64x256xf32>
    %cst_147 = arith.constant dense<0.000000e+00> : vector<256x32xf32>
    %304 = tpu.matmul %253, %219, %cst_147 {dimension_numbers = #tpu.dot_dimension_numbers<[1], [0], [0], [1], [0, 0, 1, 1], [], []>} : vector<256x32xf32>, vector<32x32xf32>, vector<256x32xf32> -> vector<256x32xf32>
    %cst_148 = arith.constant dense<0.000000e+00> : vector<64x32xf32>
    %305 = tpu.matmul %303, %304, %cst_148 {dimension_numbers = #tpu.dot_dimension_numbers<[1], [0], [0], [1], [0, 0, 1, 1], [], []>} : vector<64x256xf32>, vector<256x32xf32>, vector<64x32xf32> -> vector<64x32xf32>
    %306 = arith.addf %180, %305 : vector<64x32xf32>
    %c1_149 = arith.constant 1 : index
    %c0_150 = arith.constant 0 : index
    %c0_151 = arith.constant 0 : index
    %307 = vector.load %arg15[%c1_149, %c0_150, %c0_151] : memref<4x1x32xf32, #tpu.memory_space<vmem>>, vector<1x1x32xf32>
    %308 = vector.shape_cast %307 : vector<1x1x32xf32> to vector<1x32xf32>
    %309 = vector.broadcast %308 : vector<1x32xf32> to vector<64x32xf32>
    %310 = arith.addf %306, %309 : vector<64x32xf32>
    %c1_152 = arith.constant 1 : index
    %c0_153 = arith.constant 0 : index
    %c0_154 = arith.constant 0 : index
    %311 = vector.load %arg16[%c1_152, %c0_153, %c0_154] : memref<4x1x32xf32, #tpu.memory_space<vmem>>, vector<1x1x32xf32>
    %312 = vector.shape_cast %311 : vector<1x1x32xf32> to vector<1x32xf32>
    %c1_155 = arith.constant 1 : index
    %c0_156 = arith.constant 0 : index
    %c0_157 = arith.constant 0 : index
    %313 = vector.load %arg17[%c1_155, %c0_156, %c0_157] : memref<4x1x32xf32, #tpu.memory_space<vmem>>, vector<1x1x32xf32>
    %314 = vector.shape_cast %313 : vector<1x1x32xf32> to vector<1x32xf32>
    %cst_158 = arith.constant dense<0.000000e+00> : vector<64xf32>
    %315 = vector.multi_reduction <add>, %310, %cst_158 [1] : vector<64x32xf32> to vector<64xf32>
    %316 = vector.shape_cast %315 : vector<64xf32> to vector<64x1xf32>
    %cst_159 = arith.constant 3.200000e+01 : f32
    %317 = vector.broadcast %cst_159 : f32 to vector<64x1xf32>
    %318 = arith.divf %316, %317 : vector<64x1xf32>
    %319 = vector.broadcast %318 : vector<64x1xf32> to vector<64x32xf32>
    %320 = arith.subf %310, %319 : vector<64x32xf32>
    %321 = arith.mulf %320, %320 : vector<64x32xf32>
    %cst_160 = arith.constant dense<0.000000e+00> : vector<64xf32>
    %322 = vector.multi_reduction <add>, %321, %cst_160 [1] : vector<64x32xf32> to vector<64xf32>
    %323 = vector.shape_cast %322 : vector<64xf32> to vector<64x1xf32>
    %cst_161 = arith.constant 3.200000e+01 : f32
    %324 = vector.broadcast %cst_161 : f32 to vector<64x1xf32>
    %325 = arith.divf %323, %324 : vector<64x1xf32>
    %326 = vector.broadcast %318 : vector<64x1xf32> to vector<64x32xf32>
    %327 = arith.subf %310, %326 : vector<64x32xf32>
    %cst_162 = arith.constant 9.99999974E-6 : f32
    %328 = vector.broadcast %cst_162 : f32 to vector<64x1xf32>
    %329 = arith.addf %325, %328 : vector<64x1xf32>
    %330 = math.rsqrt %329 : vector<64x1xf32>
    %331 = vector.broadcast %330 : vector<64x1xf32> to vector<64x32xf32>
    %332 = arith.mulf %327, %331 : vector<64x32xf32>
    %333 = vector.broadcast %312 : vector<1x32xf32> to vector<64x32xf32>
    %334 = arith.mulf %332, %333 : vector<64x32xf32>
    %335 = vector.broadcast %314 : vector<1x32xf32> to vector<64x32xf32>
    %336 = arith.addf %334, %335 : vector<64x32xf32>
    %c1_163 = arith.constant 1 : index
    %c0_164 = arith.constant 0 : index
    %c0_165 = arith.constant 0 : index
    %337 = vector.load %arg18[%c1_163, %c0_164, %c0_165] : memref<4x32x64xf32, #tpu.memory_space<vmem>>, vector<1x32x64xf32>
    %338 = vector.shape_cast %337 : vector<1x32x64xf32> to vector<32x64xf32>
    %cst_166 = arith.constant dense<0.000000e+00> : vector<64x64xf32>
    %339 = tpu.matmul %336, %338, %cst_166 {dimension_numbers = #tpu.dot_dimension_numbers<[1], [0], [0], [1], [0, 0, 1, 1], [], []>} : vector<64x32xf32>, vector<32x64xf32>, vector<64x64xf32> -> vector<64x64xf32>
    %c1_167 = arith.constant 1 : index
    %c0_168 = arith.constant 0 : index
    %c0_169 = arith.constant 0 : index
    %340 = vector.load %arg19[%c1_167, %c0_168, %c0_169] : memref<4x1x64xf32, #tpu.memory_space<vmem>>, vector<1x1x64xf32>
    %341 = vector.shape_cast %340 : vector<1x1x64xf32> to vector<1x64xf32>
    %342 = vector.broadcast %341 : vector<1x64xf32> to vector<64x64xf32>
    %343 = arith.addf %339, %342 : vector<64x64xf32>
    %cst_170 = arith.constant 0.000000e+00 : f32
    %344 = vector.broadcast %cst_170 : f32 to vector<64x64xf32>
    %345 = arith.maximumf %343, %344 : vector<64x64xf32>
    %c1_171 = arith.constant 1 : index
    %c0_172 = arith.constant 0 : index
    %c0_173 = arith.constant 0 : index
    %346 = vector.load %arg20[%c1_171, %c0_172, %c0_173] : memref<4x64x32xf32, #tpu.memory_space<vmem>>, vector<1x64x32xf32>
    %347 = vector.shape_cast %346 : vector<1x64x32xf32> to vector<64x32xf32>
    %cst_174 = arith.constant dense<0.000000e+00> : vector<64x32xf32>
    %348 = tpu.matmul %345, %347, %cst_174 {dimension_numbers = #tpu.dot_dimension_numbers<[1], [0], [0], [1], [0, 0, 1, 1], [], []>} : vector<64x64xf32>, vector<64x32xf32>, vector<64x32xf32> -> vector<64x32xf32>
    %349 = arith.addf %310, %348 : vector<64x32xf32>
    %c1_175 = arith.constant 1 : index
    %c0_176 = arith.constant 0 : index
    %c0_177 = arith.constant 0 : index
    %350 = vector.load %arg21[%c1_175, %c0_176, %c0_177] : memref<4x1x32xf32, #tpu.memory_space<vmem>>, vector<1x1x32xf32>
    %351 = vector.shape_cast %350 : vector<1x1x32xf32> to vector<1x32xf32>
    %352 = vector.broadcast %351 : vector<1x32xf32> to vector<64x32xf32>
    %353 = arith.addf %349, %352 : vector<64x32xf32>
    %c0_178 = arith.constant 0 : index
    %c0_179 = arith.constant 0 : index
    %354 = vector.load %arg3[%c0_178, %c0_179] : memref<64x64xf32, #tpu.memory_space<vmem>>, vector<64x64xf32>
    %c2_180 = arith.constant 2 : index
    %c0_181 = arith.constant 0 : index
    %c0_182 = arith.constant 0 : index
    %355 = vector.load %arg10[%c2_180, %c0_181, %c0_182] : memref<4x1x32xf32, #tpu.memory_space<vmem>>, vector<1x1x32xf32>
    %356 = vector.shape_cast %355 : vector<1x1x32xf32> to vector<1x32xf32>
    %c2_183 = arith.constant 2 : index
    %c0_184 = arith.constant 0 : index
    %c0_185 = arith.constant 0 : index
    %357 = vector.load %arg11[%c2_183, %c0_184, %c0_185] : memref<4x1x32xf32, #tpu.memory_space<vmem>>, vector<1x1x32xf32>
    %358 = vector.shape_cast %357 : vector<1x1x32xf32> to vector<1x32xf32>
    %cst_186 = arith.constant dense<0.000000e+00> : vector<64xf32>
    %359 = vector.multi_reduction <add>, %353, %cst_186 [1] : vector<64x32xf32> to vector<64xf32>
    %360 = vector.shape_cast %359 : vector<64xf32> to vector<64x1xf32>
    %cst_187 = arith.constant 3.200000e+01 : f32
    %361 = vector.broadcast %cst_187 : f32 to vector<64x1xf32>
    %362 = arith.divf %360, %361 : vector<64x1xf32>
    %363 = vector.broadcast %362 : vector<64x1xf32> to vector<64x32xf32>
    %364 = arith.subf %353, %363 : vector<64x32xf32>
    %365 = arith.mulf %364, %364 : vector<64x32xf32>
    %cst_188 = arith.constant dense<0.000000e+00> : vector<64xf32>
    %366 = vector.multi_reduction <add>, %365, %cst_188 [1] : vector<64x32xf32> to vector<64xf32>
    %367 = vector.shape_cast %366 : vector<64xf32> to vector<64x1xf32>
    %cst_189 = arith.constant 3.200000e+01 : f32
    %368 = vector.broadcast %cst_189 : f32 to vector<64x1xf32>
    %369 = arith.divf %367, %368 : vector<64x1xf32>
    %370 = vector.broadcast %362 : vector<64x1xf32> to vector<64x32xf32>
    %371 = arith.subf %353, %370 : vector<64x32xf32>
    %cst_190 = arith.constant 9.99999974E-6 : f32
    %372 = vector.broadcast %cst_190 : f32 to vector<64x1xf32>
    %373 = arith.addf %369, %372 : vector<64x1xf32>
    %374 = math.rsqrt %373 : vector<64x1xf32>
    %375 = vector.broadcast %374 : vector<64x1xf32> to vector<64x32xf32>
    %376 = arith.mulf %371, %375 : vector<64x32xf32>
    %377 = vector.broadcast %356 : vector<1x32xf32> to vector<64x32xf32>
    %378 = arith.mulf %376, %377 : vector<64x32xf32>
    %379 = vector.broadcast %358 : vector<1x32xf32> to vector<64x32xf32>
    %380 = arith.addf %378, %379 : vector<64x32xf32>
    %c2_191 = arith.constant 2 : index
    %c0_192 = arith.constant 0 : index
    %c0_193 = arith.constant 0 : index
    %381 = vector.load %arg12[%c2_191, %c0_192, %c0_193] : memref<4x32x96xf32, #tpu.memory_space<vmem>>, vector<1x32x96xf32>
    %382 = vector.shape_cast %381 : vector<1x32x96xf32> to vector<32x96xf32>
    %cst_194 = arith.constant dense<0.000000e+00> : vector<64x96xf32>
    %383 = tpu.matmul %380, %382, %cst_194 {dimension_numbers = #tpu.dot_dimension_numbers<[1], [0], [0], [1], [0, 0, 1, 1], [], []>} : vector<64x32xf32>, vector<32x96xf32>, vector<64x96xf32> -> vector<64x96xf32>
    %c2_195 = arith.constant 2 : index
    %c0_196 = arith.constant 0 : index
    %c0_197 = arith.constant 0 : index
    %384 = vector.load %arg13[%c2_195, %c0_196, %c0_197] : memref<4x1x96xf32, #tpu.memory_space<vmem>>, vector<1x1x96xf32>
    %385 = vector.shape_cast %384 : vector<1x1x96xf32> to vector<1x96xf32>
    %386 = vector.broadcast %385 : vector<1x96xf32> to vector<64x96xf32>
    %387 = arith.addf %383, %386 : vector<64x96xf32>
    %388 = vector.extract_strided_slice %387 {offsets = [0, 0], sizes = [64, 32], strides = [1, 1]} : vector<64x96xf32> to vector<64x32xf32>
    %389 = vector.extract_strided_slice %387 {offsets = [0, 32], sizes = [64, 32], strides = [1, 1]} : vector<64x96xf32> to vector<64x32xf32>
    %390 = vector.extract_strided_slice %387 {offsets = [0, 64], sizes = [64, 32], strides = [1, 1]} : vector<64x96xf32> to vector<64x32xf32>
    %c2_198 = arith.constant 2 : index
    %c0_199 = arith.constant 0 : index
    %c0_200 = arith.constant 0 : index
    %391 = vector.load %arg14[%c2_198, %c0_199, %c0_200] : memref<4x32x32xf32, #tpu.memory_space<vmem>>, vector<1x32x32xf32>
    %392 = vector.shape_cast %391 : vector<1x32x32xf32> to vector<32x32xf32>
    %c0_201 = arith.constant 0 : index
    %c0_202 = arith.constant 0 : index
    %c0_203 = arith.constant 0 : index
    %393 = vector.load %arg5[%c0_201, %c0_202, %c0_203] : memref<4x1x32xf32, #tpu.memory_space<vmem>>, vector<1x1x32xf32>
    %394 = vector.shape_cast %393 : vector<1x1x32xf32> to vector<1x32xf32>
    %395 = vector.broadcast %394 : vector<1x32xf32> to vector<64x32xf32>
    %396 = arith.mulf %389, %395 : vector<64x32xf32>
    %c1_204 = arith.constant 1 : index
    %c0_205 = arith.constant 0 : index
    %c0_206 = arith.constant 0 : index
    %397 = vector.load %arg5[%c1_204, %c0_205, %c0_206] : memref<4x1x32xf32, #tpu.memory_space<vmem>>, vector<1x1x32xf32>
    %398 = vector.shape_cast %397 : vector<1x1x32xf32> to vector<1x32xf32>
    %399 = vector.broadcast %398 : vector<1x32xf32> to vector<64x32xf32>
    %400 = arith.mulf %389, %399 : vector<64x32xf32>
    %c2_207 = arith.constant 2 : index
    %c0_208 = arith.constant 0 : index
    %c0_209 = arith.constant 0 : index
    %401 = vector.load %arg5[%c2_207, %c0_208, %c0_209] : memref<4x1x32xf32, #tpu.memory_space<vmem>>, vector<1x1x32xf32>
    %402 = vector.shape_cast %401 : vector<1x1x32xf32> to vector<1x32xf32>
    %403 = vector.broadcast %402 : vector<1x32xf32> to vector<64x32xf32>
    %404 = arith.mulf %389, %403 : vector<64x32xf32>
    %c3_210 = arith.constant 3 : index
    %c0_211 = arith.constant 0 : index
    %c0_212 = arith.constant 0 : index
    %405 = vector.load %arg5[%c3_210, %c0_211, %c0_212] : memref<4x1x32xf32, #tpu.memory_space<vmem>>, vector<1x1x32xf32>
    %406 = vector.shape_cast %405 : vector<1x1x32xf32> to vector<1x32xf32>
    %407 = vector.broadcast %406 : vector<1x32xf32> to vector<64x32xf32>
    %408 = arith.mulf %389, %407 : vector<64x32xf32>
    %409 = tpu.concatenate %396, %400, %404, %408 in 0 : vector<64x32xf32>, vector<64x32xf32>, vector<64x32xf32>, vector<64x32xf32> -> vector<256x32xf32>
    %c0_213 = arith.constant 0 : index
    %c0_214 = arith.constant 0 : index
    %c0_215 = arith.constant 0 : index
    %410 = vector.load %arg5[%c0_213, %c0_214, %c0_215] : memref<4x1x32xf32, #tpu.memory_space<vmem>>, vector<1x1x32xf32>
    %411 = vector.shape_cast %410 : vector<1x1x32xf32> to vector<1x32xf32>
    %412 = vector.broadcast %411 : vector<1x32xf32> to vector<64x32xf32>
    %413 = arith.mulf %390, %412 : vector<64x32xf32>
    %c1_216 = arith.constant 1 : index
    %c0_217 = arith.constant 0 : index
    %c0_218 = arith.constant 0 : index
    %414 = vector.load %arg5[%c1_216, %c0_217, %c0_218] : memref<4x1x32xf32, #tpu.memory_space<vmem>>, vector<1x1x32xf32>
    %415 = vector.shape_cast %414 : vector<1x1x32xf32> to vector<1x32xf32>
    %416 = vector.broadcast %415 : vector<1x32xf32> to vector<64x32xf32>
    %417 = arith.mulf %390, %416 : vector<64x32xf32>
    %c2_219 = arith.constant 2 : index
    %c0_220 = arith.constant 0 : index
    %c0_221 = arith.constant 0 : index
    %418 = vector.load %arg5[%c2_219, %c0_220, %c0_221] : memref<4x1x32xf32, #tpu.memory_space<vmem>>, vector<1x1x32xf32>
    %419 = vector.shape_cast %418 : vector<1x1x32xf32> to vector<1x32xf32>
    %420 = vector.broadcast %419 : vector<1x32xf32> to vector<64x32xf32>
    %421 = arith.mulf %390, %420 : vector<64x32xf32>
    %c3_222 = arith.constant 3 : index
    %c0_223 = arith.constant 0 : index
    %c0_224 = arith.constant 0 : index
    %422 = vector.load %arg5[%c3_222, %c0_223, %c0_224] : memref<4x1x32xf32, #tpu.memory_space<vmem>>, vector<1x1x32xf32>
    %423 = vector.shape_cast %422 : vector<1x1x32xf32> to vector<1x32xf32>
    %424 = vector.broadcast %423 : vector<1x32xf32> to vector<64x32xf32>
    %425 = arith.mulf %390, %424 : vector<64x32xf32>
    %426 = tpu.concatenate %413, %417, %421, %425 in 0 : vector<64x32xf32>, vector<64x32xf32>, vector<64x32xf32>, vector<64x32xf32> -> vector<256x32xf32>
    %cst_225 = arith.constant dense<0.000000e+00> : vector<64x256xf32>
    %427 = tpu.matmul %388, %409, %cst_225 {dimension_numbers = #tpu.dot_dimension_numbers<[1], [1], [0], [0], [0, 0, 1, 0], [], []>} : vector<64x32xf32>, vector<256x32xf32>, vector<64x256xf32> -> vector<64x256xf32>
    %428 = vector.extract_strided_slice %427 {offsets = [0, 0], sizes = [64, 64], strides = [1, 1]} : vector<64x256xf32> to vector<64x64xf32>
    %429 = arith.addf %428, %354 : vector<64x64xf32>
    %cst_226 = arith.constant dense<0xFF800000> : vector<64xf32>
    %430 = vector.multi_reduction <maximumf>, %429, %cst_226 [1] : vector<64x64xf32> to vector<64xf32>
    %431 = vector.shape_cast %430 : vector<64xf32> to vector<64x1xf32>
    %432 = vector.broadcast %431 : vector<64x1xf32> to vector<64x64xf32>
    %433 = arith.subf %429, %432 : vector<64x64xf32>
    %434 = math.exp %433 : vector<64x64xf32>
    %cst_227 = arith.constant dense<0.000000e+00> : vector<64xf32>
    %435 = vector.multi_reduction <add>, %434, %cst_227 [1] : vector<64x64xf32> to vector<64xf32>
    %436 = vector.shape_cast %435 : vector<64xf32> to vector<64x1xf32>
    %437 = tpu.reciprocal %436 : vector<64x1xf32> -> vector<64x1xf32>
    %438 = vector.broadcast %437 : vector<64x1xf32> to vector<64x64xf32>
    %439 = arith.mulf %434, %438 : vector<64x64xf32>
    %440 = vector.extract_strided_slice %427 {offsets = [0, 64], sizes = [64, 64], strides = [1, 1]} : vector<64x256xf32> to vector<64x64xf32>
    %441 = arith.addf %440, %354 : vector<64x64xf32>
    %cst_228 = arith.constant dense<0xFF800000> : vector<64xf32>
    %442 = vector.multi_reduction <maximumf>, %441, %cst_228 [1] : vector<64x64xf32> to vector<64xf32>
    %443 = vector.shape_cast %442 : vector<64xf32> to vector<64x1xf32>
    %444 = vector.broadcast %443 : vector<64x1xf32> to vector<64x64xf32>
    %445 = arith.subf %441, %444 : vector<64x64xf32>
    %446 = math.exp %445 : vector<64x64xf32>
    %cst_229 = arith.constant dense<0.000000e+00> : vector<64xf32>
    %447 = vector.multi_reduction <add>, %446, %cst_229 [1] : vector<64x64xf32> to vector<64xf32>
    %448 = vector.shape_cast %447 : vector<64xf32> to vector<64x1xf32>
    %449 = tpu.reciprocal %448 : vector<64x1xf32> -> vector<64x1xf32>
    %450 = vector.broadcast %449 : vector<64x1xf32> to vector<64x64xf32>
    %451 = arith.mulf %446, %450 : vector<64x64xf32>
    %452 = vector.extract_strided_slice %427 {offsets = [0, 128], sizes = [64, 64], strides = [1, 1]} : vector<64x256xf32> to vector<64x64xf32>
    %453 = arith.addf %452, %354 : vector<64x64xf32>
    %cst_230 = arith.constant dense<0xFF800000> : vector<64xf32>
    %454 = vector.multi_reduction <maximumf>, %453, %cst_230 [1] : vector<64x64xf32> to vector<64xf32>
    %455 = vector.shape_cast %454 : vector<64xf32> to vector<64x1xf32>
    %456 = vector.broadcast %455 : vector<64x1xf32> to vector<64x64xf32>
    %457 = arith.subf %453, %456 : vector<64x64xf32>
    %458 = math.exp %457 : vector<64x64xf32>
    %cst_231 = arith.constant dense<0.000000e+00> : vector<64xf32>
    %459 = vector.multi_reduction <add>, %458, %cst_231 [1] : vector<64x64xf32> to vector<64xf32>
    %460 = vector.shape_cast %459 : vector<64xf32> to vector<64x1xf32>
    %461 = tpu.reciprocal %460 : vector<64x1xf32> -> vector<64x1xf32>
    %462 = vector.broadcast %461 : vector<64x1xf32> to vector<64x64xf32>
    %463 = arith.mulf %458, %462 : vector<64x64xf32>
    %464 = vector.extract_strided_slice %427 {offsets = [0, 192], sizes = [64, 64], strides = [1, 1]} : vector<64x256xf32> to vector<64x64xf32>
    %465 = arith.addf %464, %354 : vector<64x64xf32>
    %cst_232 = arith.constant dense<0xFF800000> : vector<64xf32>
    %466 = vector.multi_reduction <maximumf>, %465, %cst_232 [1] : vector<64x64xf32> to vector<64xf32>
    %467 = vector.shape_cast %466 : vector<64xf32> to vector<64x1xf32>
    %468 = vector.broadcast %467 : vector<64x1xf32> to vector<64x64xf32>
    %469 = arith.subf %465, %468 : vector<64x64xf32>
    %470 = math.exp %469 : vector<64x64xf32>
    %cst_233 = arith.constant dense<0.000000e+00> : vector<64xf32>
    %471 = vector.multi_reduction <add>, %470, %cst_233 [1] : vector<64x64xf32> to vector<64xf32>
    %472 = vector.shape_cast %471 : vector<64xf32> to vector<64x1xf32>
    %473 = tpu.reciprocal %472 : vector<64x1xf32> -> vector<64x1xf32>
    %474 = vector.broadcast %473 : vector<64x1xf32> to vector<64x64xf32>
    %475 = arith.mulf %470, %474 : vector<64x64xf32>
    %476 = tpu.concatenate %439, %451, %463, %475 in 1 : vector<64x64xf32>, vector<64x64xf32>, vector<64x64xf32>, vector<64x64xf32> -> vector<64x256xf32>
    %cst_234 = arith.constant dense<0.000000e+00> : vector<256x32xf32>
    %477 = tpu.matmul %426, %392, %cst_234 {dimension_numbers = #tpu.dot_dimension_numbers<[1], [0], [0], [1], [0, 0, 1, 1], [], []>} : vector<256x32xf32>, vector<32x32xf32>, vector<256x32xf32> -> vector<256x32xf32>
    %cst_235 = arith.constant dense<0.000000e+00> : vector<64x32xf32>
    %478 = tpu.matmul %476, %477, %cst_235 {dimension_numbers = #tpu.dot_dimension_numbers<[1], [0], [0], [1], [0, 0, 1, 1], [], []>} : vector<64x256xf32>, vector<256x32xf32>, vector<64x32xf32> -> vector<64x32xf32>
    %479 = arith.addf %353, %478 : vector<64x32xf32>
    %c2_236 = arith.constant 2 : index
    %c0_237 = arith.constant 0 : index
    %c0_238 = arith.constant 0 : index
    %480 = vector.load %arg15[%c2_236, %c0_237, %c0_238] : memref<4x1x32xf32, #tpu.memory_space<vmem>>, vector<1x1x32xf32>
    %481 = vector.shape_cast %480 : vector<1x1x32xf32> to vector<1x32xf32>
    %482 = vector.broadcast %481 : vector<1x32xf32> to vector<64x32xf32>
    %483 = arith.addf %479, %482 : vector<64x32xf32>
    %c2_239 = arith.constant 2 : index
    %c0_240 = arith.constant 0 : index
    %c0_241 = arith.constant 0 : index
    %484 = vector.load %arg16[%c2_239, %c0_240, %c0_241] : memref<4x1x32xf32, #tpu.memory_space<vmem>>, vector<1x1x32xf32>
    %485 = vector.shape_cast %484 : vector<1x1x32xf32> to vector<1x32xf32>
    %c2_242 = arith.constant 2 : index
    %c0_243 = arith.constant 0 : index
    %c0_244 = arith.constant 0 : index
    %486 = vector.load %arg17[%c2_242, %c0_243, %c0_244] : memref<4x1x32xf32, #tpu.memory_space<vmem>>, vector<1x1x32xf32>
    %487 = vector.shape_cast %486 : vector<1x1x32xf32> to vector<1x32xf32>
    %cst_245 = arith.constant dense<0.000000e+00> : vector<64xf32>
    %488 = vector.multi_reduction <add>, %483, %cst_245 [1] : vector<64x32xf32> to vector<64xf32>
    %489 = vector.shape_cast %488 : vector<64xf32> to vector<64x1xf32>
    %cst_246 = arith.constant 3.200000e+01 : f32
    %490 = vector.broadcast %cst_246 : f32 to vector<64x1xf32>
    %491 = arith.divf %489, %490 : vector<64x1xf32>
    %492 = vector.broadcast %491 : vector<64x1xf32> to vector<64x32xf32>
    %493 = arith.subf %483, %492 : vector<64x32xf32>
    %494 = arith.mulf %493, %493 : vector<64x32xf32>
    %cst_247 = arith.constant dense<0.000000e+00> : vector<64xf32>
    %495 = vector.multi_reduction <add>, %494, %cst_247 [1] : vector<64x32xf32> to vector<64xf32>
    %496 = vector.shape_cast %495 : vector<64xf32> to vector<64x1xf32>
    %cst_248 = arith.constant 3.200000e+01 : f32
    %497 = vector.broadcast %cst_248 : f32 to vector<64x1xf32>
    %498 = arith.divf %496, %497 : vector<64x1xf32>
    %499 = vector.broadcast %491 : vector<64x1xf32> to vector<64x32xf32>
    %500 = arith.subf %483, %499 : vector<64x32xf32>
    %cst_249 = arith.constant 9.99999974E-6 : f32
    %501 = vector.broadcast %cst_249 : f32 to vector<64x1xf32>
    %502 = arith.addf %498, %501 : vector<64x1xf32>
    %503 = math.rsqrt %502 : vector<64x1xf32>
    %504 = vector.broadcast %503 : vector<64x1xf32> to vector<64x32xf32>
    %505 = arith.mulf %500, %504 : vector<64x32xf32>
    %506 = vector.broadcast %485 : vector<1x32xf32> to vector<64x32xf32>
    %507 = arith.mulf %505, %506 : vector<64x32xf32>
    %508 = vector.broadcast %487 : vector<1x32xf32> to vector<64x32xf32>
    %509 = arith.addf %507, %508 : vector<64x32xf32>
    %c2_250 = arith.constant 2 : index
    %c0_251 = arith.constant 0 : index
    %c0_252 = arith.constant 0 : index
    %510 = vector.load %arg18[%c2_250, %c0_251, %c0_252] : memref<4x32x64xf32, #tpu.memory_space<vmem>>, vector<1x32x64xf32>
    %511 = vector.shape_cast %510 : vector<1x32x64xf32> to vector<32x64xf32>
    %cst_253 = arith.constant dense<0.000000e+00> : vector<64x64xf32>
    %512 = tpu.matmul %509, %511, %cst_253 {dimension_numbers = #tpu.dot_dimension_numbers<[1], [0], [0], [1], [0, 0, 1, 1], [], []>} : vector<64x32xf32>, vector<32x64xf32>, vector<64x64xf32> -> vector<64x64xf32>
    %c2_254 = arith.constant 2 : index
    %c0_255 = arith.constant 0 : index
    %c0_256 = arith.constant 0 : index
    %513 = vector.load %arg19[%c2_254, %c0_255, %c0_256] : memref<4x1x64xf32, #tpu.memory_space<vmem>>, vector<1x1x64xf32>
    %514 = vector.shape_cast %513 : vector<1x1x64xf32> to vector<1x64xf32>
    %515 = vector.broadcast %514 : vector<1x64xf32> to vector<64x64xf32>
    %516 = arith.addf %512, %515 : vector<64x64xf32>
    %cst_257 = arith.constant 0.000000e+00 : f32
    %517 = vector.broadcast %cst_257 : f32 to vector<64x64xf32>
    %518 = arith.maximumf %516, %517 : vector<64x64xf32>
    %c2_258 = arith.constant 2 : index
    %c0_259 = arith.constant 0 : index
    %c0_260 = arith.constant 0 : index
    %519 = vector.load %arg20[%c2_258, %c0_259, %c0_260] : memref<4x64x32xf32, #tpu.memory_space<vmem>>, vector<1x64x32xf32>
    %520 = vector.shape_cast %519 : vector<1x64x32xf32> to vector<64x32xf32>
    %cst_261 = arith.constant dense<0.000000e+00> : vector<64x32xf32>
    %521 = tpu.matmul %518, %520, %cst_261 {dimension_numbers = #tpu.dot_dimension_numbers<[1], [0], [0], [1], [0, 0, 1, 1], [], []>} : vector<64x64xf32>, vector<64x32xf32>, vector<64x32xf32> -> vector<64x32xf32>
    %522 = arith.addf %483, %521 : vector<64x32xf32>
    %c2_262 = arith.constant 2 : index
    %c0_263 = arith.constant 0 : index
    %c0_264 = arith.constant 0 : index
    %523 = vector.load %arg21[%c2_262, %c0_263, %c0_264] : memref<4x1x32xf32, #tpu.memory_space<vmem>>, vector<1x1x32xf32>
    %524 = vector.shape_cast %523 : vector<1x1x32xf32> to vector<1x32xf32>
    %525 = vector.broadcast %524 : vector<1x32xf32> to vector<64x32xf32>
    %526 = arith.addf %522, %525 : vector<64x32xf32>
    %c0_265 = arith.constant 0 : index
    %c0_266 = arith.constant 0 : index
    %527 = vector.load %arg4[%c0_265, %c0_266] : memref<64x64xf32, #tpu.memory_space<vmem>>, vector<64x64xf32>
    %c3_267 = arith.constant 3 : index
    %c0_268 = arith.constant 0 : index
    %c0_269 = arith.constant 0 : index
    %528 = vector.load %arg10[%c3_267, %c0_268, %c0_269] : memref<4x1x32xf32, #tpu.memory_space<vmem>>, vector<1x1x32xf32>
    %529 = vector.shape_cast %528 : vector<1x1x32xf32> to vector<1x32xf32>
    %c3_270 = arith.constant 3 : index
    %c0_271 = arith.constant 0 : index
    %c0_272 = arith.constant 0 : index
    %530 = vector.load %arg11[%c3_270, %c0_271, %c0_272] : memref<4x1x32xf32, #tpu.memory_space<vmem>>, vector<1x1x32xf32>
    %531 = vector.shape_cast %530 : vector<1x1x32xf32> to vector<1x32xf32>
    %cst_273 = arith.constant dense<0.000000e+00> : vector<64xf32>
    %532 = vector.multi_reduction <add>, %526, %cst_273 [1] : vector<64x32xf32> to vector<64xf32>
    %533 = vector.shape_cast %532 : vector<64xf32> to vector<64x1xf32>
    %cst_274 = arith.constant 3.200000e+01 : f32
    %534 = vector.broadcast %cst_274 : f32 to vector<64x1xf32>
    %535 = arith.divf %533, %534 : vector<64x1xf32>
    %536 = vector.broadcast %535 : vector<64x1xf32> to vector<64x32xf32>
    %537 = arith.subf %526, %536 : vector<64x32xf32>
    %538 = arith.mulf %537, %537 : vector<64x32xf32>
    %cst_275 = arith.constant dense<0.000000e+00> : vector<64xf32>
    %539 = vector.multi_reduction <add>, %538, %cst_275 [1] : vector<64x32xf32> to vector<64xf32>
    %540 = vector.shape_cast %539 : vector<64xf32> to vector<64x1xf32>
    %cst_276 = arith.constant 3.200000e+01 : f32
    %541 = vector.broadcast %cst_276 : f32 to vector<64x1xf32>
    %542 = arith.divf %540, %541 : vector<64x1xf32>
    %543 = vector.broadcast %535 : vector<64x1xf32> to vector<64x32xf32>
    %544 = arith.subf %526, %543 : vector<64x32xf32>
    %cst_277 = arith.constant 9.99999974E-6 : f32
    %545 = vector.broadcast %cst_277 : f32 to vector<64x1xf32>
    %546 = arith.addf %542, %545 : vector<64x1xf32>
    %547 = math.rsqrt %546 : vector<64x1xf32>
    %548 = vector.broadcast %547 : vector<64x1xf32> to vector<64x32xf32>
    %549 = arith.mulf %544, %548 : vector<64x32xf32>
    %550 = vector.broadcast %529 : vector<1x32xf32> to vector<64x32xf32>
    %551 = arith.mulf %549, %550 : vector<64x32xf32>
    %552 = vector.broadcast %531 : vector<1x32xf32> to vector<64x32xf32>
    %553 = arith.addf %551, %552 : vector<64x32xf32>
    %c3_278 = arith.constant 3 : index
    %c0_279 = arith.constant 0 : index
    %c0_280 = arith.constant 0 : index
    %554 = vector.load %arg12[%c3_278, %c0_279, %c0_280] : memref<4x32x96xf32, #tpu.memory_space<vmem>>, vector<1x32x96xf32>
    %555 = vector.shape_cast %554 : vector<1x32x96xf32> to vector<32x96xf32>
    %cst_281 = arith.constant dense<0.000000e+00> : vector<64x96xf32>
    %556 = tpu.matmul %553, %555, %cst_281 {dimension_numbers = #tpu.dot_dimension_numbers<[1], [0], [0], [1], [0, 0, 1, 1], [], []>} : vector<64x32xf32>, vector<32x96xf32>, vector<64x96xf32> -> vector<64x96xf32>
    %c3_282 = arith.constant 3 : index
    %c0_283 = arith.constant 0 : index
    %c0_284 = arith.constant 0 : index
    %557 = vector.load %arg13[%c3_282, %c0_283, %c0_284] : memref<4x1x96xf32, #tpu.memory_space<vmem>>, vector<1x1x96xf32>
    %558 = vector.shape_cast %557 : vector<1x1x96xf32> to vector<1x96xf32>
    %559 = vector.broadcast %558 : vector<1x96xf32> to vector<64x96xf32>
    %560 = arith.addf %556, %559 : vector<64x96xf32>
    %561 = vector.extract_strided_slice %560 {offsets = [0, 0], sizes = [64, 32], strides = [1, 1]} : vector<64x96xf32> to vector<64x32xf32>
    %562 = vector.extract_strided_slice %560 {offsets = [0, 32], sizes = [64, 32], strides = [1, 1]} : vector<64x96xf32> to vector<64x32xf32>
    %563 = vector.extract_strided_slice %560 {offsets = [0, 64], sizes = [64, 32], strides = [1, 1]} : vector<64x96xf32> to vector<64x32xf32>
    %c3_285 = arith.constant 3 : index
    %c0_286 = arith.constant 0 : index
    %c0_287 = arith.constant 0 : index
    %564 = vector.load %arg14[%c3_285, %c0_286, %c0_287] : memref<4x32x32xf32, #tpu.memory_space<vmem>>, vector<1x32x32xf32>
    %565 = vector.shape_cast %564 : vector<1x32x32xf32> to vector<32x32xf32>
    %c0_288 = arith.constant 0 : index
    %c0_289 = arith.constant 0 : index
    %c0_290 = arith.constant 0 : index
    %566 = vector.load %arg5[%c0_288, %c0_289, %c0_290] : memref<4x1x32xf32, #tpu.memory_space<vmem>>, vector<1x1x32xf32>
    %567 = vector.shape_cast %566 : vector<1x1x32xf32> to vector<1x32xf32>
    %568 = vector.broadcast %567 : vector<1x32xf32> to vector<64x32xf32>
    %569 = arith.mulf %562, %568 : vector<64x32xf32>
    %c1_291 = arith.constant 1 : index
    %c0_292 = arith.constant 0 : index
    %c0_293 = arith.constant 0 : index
    %570 = vector.load %arg5[%c1_291, %c0_292, %c0_293] : memref<4x1x32xf32, #tpu.memory_space<vmem>>, vector<1x1x32xf32>
    %571 = vector.shape_cast %570 : vector<1x1x32xf32> to vector<1x32xf32>
    %572 = vector.broadcast %571 : vector<1x32xf32> to vector<64x32xf32>
    %573 = arith.mulf %562, %572 : vector<64x32xf32>
    %c2_294 = arith.constant 2 : index
    %c0_295 = arith.constant 0 : index
    %c0_296 = arith.constant 0 : index
    %574 = vector.load %arg5[%c2_294, %c0_295, %c0_296] : memref<4x1x32xf32, #tpu.memory_space<vmem>>, vector<1x1x32xf32>
    %575 = vector.shape_cast %574 : vector<1x1x32xf32> to vector<1x32xf32>
    %576 = vector.broadcast %575 : vector<1x32xf32> to vector<64x32xf32>
    %577 = arith.mulf %562, %576 : vector<64x32xf32>
    %c3_297 = arith.constant 3 : index
    %c0_298 = arith.constant 0 : index
    %c0_299 = arith.constant 0 : index
    %578 = vector.load %arg5[%c3_297, %c0_298, %c0_299] : memref<4x1x32xf32, #tpu.memory_space<vmem>>, vector<1x1x32xf32>
    %579 = vector.shape_cast %578 : vector<1x1x32xf32> to vector<1x32xf32>
    %580 = vector.broadcast %579 : vector<1x32xf32> to vector<64x32xf32>
    %581 = arith.mulf %562, %580 : vector<64x32xf32>
    %582 = tpu.concatenate %569, %573, %577, %581 in 0 : vector<64x32xf32>, vector<64x32xf32>, vector<64x32xf32>, vector<64x32xf32> -> vector<256x32xf32>
    %c0_300 = arith.constant 0 : index
    %c0_301 = arith.constant 0 : index
    %c0_302 = arith.constant 0 : index
    %583 = vector.load %arg5[%c0_300, %c0_301, %c0_302] : memref<4x1x32xf32, #tpu.memory_space<vmem>>, vector<1x1x32xf32>
    %584 = vector.shape_cast %583 : vector<1x1x32xf32> to vector<1x32xf32>
    %585 = vector.broadcast %584 : vector<1x32xf32> to vector<64x32xf32>
    %586 = arith.mulf %563, %585 : vector<64x32xf32>
    %c1_303 = arith.constant 1 : index
    %c0_304 = arith.constant 0 : index
    %c0_305 = arith.constant 0 : index
    %587 = vector.load %arg5[%c1_303, %c0_304, %c0_305] : memref<4x1x32xf32, #tpu.memory_space<vmem>>, vector<1x1x32xf32>
    %588 = vector.shape_cast %587 : vector<1x1x32xf32> to vector<1x32xf32>
    %589 = vector.broadcast %588 : vector<1x32xf32> to vector<64x32xf32>
    %590 = arith.mulf %563, %589 : vector<64x32xf32>
    %c2_306 = arith.constant 2 : index
    %c0_307 = arith.constant 0 : index
    %c0_308 = arith.constant 0 : index
    %591 = vector.load %arg5[%c2_306, %c0_307, %c0_308] : memref<4x1x32xf32, #tpu.memory_space<vmem>>, vector<1x1x32xf32>
    %592 = vector.shape_cast %591 : vector<1x1x32xf32> to vector<1x32xf32>
    %593 = vector.broadcast %592 : vector<1x32xf32> to vector<64x32xf32>
    %594 = arith.mulf %563, %593 : vector<64x32xf32>
    %c3_309 = arith.constant 3 : index
    %c0_310 = arith.constant 0 : index
    %c0_311 = arith.constant 0 : index
    %595 = vector.load %arg5[%c3_309, %c0_310, %c0_311] : memref<4x1x32xf32, #tpu.memory_space<vmem>>, vector<1x1x32xf32>
    %596 = vector.shape_cast %595 : vector<1x1x32xf32> to vector<1x32xf32>
    %597 = vector.broadcast %596 : vector<1x32xf32> to vector<64x32xf32>
    %598 = arith.mulf %563, %597 : vector<64x32xf32>
    %599 = tpu.concatenate %586, %590, %594, %598 in 0 : vector<64x32xf32>, vector<64x32xf32>, vector<64x32xf32>, vector<64x32xf32> -> vector<256x32xf32>
    %cst_312 = arith.constant dense<0.000000e+00> : vector<64x256xf32>
    %600 = tpu.matmul %561, %582, %cst_312 {dimension_numbers = #tpu.dot_dimension_numbers<[1], [1], [0], [0], [0, 0, 1, 0], [], []>} : vector<64x32xf32>, vector<256x32xf32>, vector<64x256xf32> -> vector<64x256xf32>
    %601 = vector.extract_strided_slice %600 {offsets = [0, 0], sizes = [64, 64], strides = [1, 1]} : vector<64x256xf32> to vector<64x64xf32>
    %602 = arith.addf %601, %527 : vector<64x64xf32>
    %cst_313 = arith.constant dense<0xFF800000> : vector<64xf32>
    %603 = vector.multi_reduction <maximumf>, %602, %cst_313 [1] : vector<64x64xf32> to vector<64xf32>
    %604 = vector.shape_cast %603 : vector<64xf32> to vector<64x1xf32>
    %605 = vector.broadcast %604 : vector<64x1xf32> to vector<64x64xf32>
    %606 = arith.subf %602, %605 : vector<64x64xf32>
    %607 = math.exp %606 : vector<64x64xf32>
    %cst_314 = arith.constant dense<0.000000e+00> : vector<64xf32>
    %608 = vector.multi_reduction <add>, %607, %cst_314 [1] : vector<64x64xf32> to vector<64xf32>
    %609 = vector.shape_cast %608 : vector<64xf32> to vector<64x1xf32>
    %610 = tpu.reciprocal %609 : vector<64x1xf32> -> vector<64x1xf32>
    %611 = vector.broadcast %610 : vector<64x1xf32> to vector<64x64xf32>
    %612 = arith.mulf %607, %611 : vector<64x64xf32>
    %613 = vector.extract_strided_slice %600 {offsets = [0, 64], sizes = [64, 64], strides = [1, 1]} : vector<64x256xf32> to vector<64x64xf32>
    %614 = arith.addf %613, %527 : vector<64x64xf32>
    %cst_315 = arith.constant dense<0xFF800000> : vector<64xf32>
    %615 = vector.multi_reduction <maximumf>, %614, %cst_315 [1] : vector<64x64xf32> to vector<64xf32>
    %616 = vector.shape_cast %615 : vector<64xf32> to vector<64x1xf32>
    %617 = vector.broadcast %616 : vector<64x1xf32> to vector<64x64xf32>
    %618 = arith.subf %614, %617 : vector<64x64xf32>
    %619 = math.exp %618 : vector<64x64xf32>
    %cst_316 = arith.constant dense<0.000000e+00> : vector<64xf32>
    %620 = vector.multi_reduction <add>, %619, %cst_316 [1] : vector<64x64xf32> to vector<64xf32>
    %621 = vector.shape_cast %620 : vector<64xf32> to vector<64x1xf32>
    %622 = tpu.reciprocal %621 : vector<64x1xf32> -> vector<64x1xf32>
    %623 = vector.broadcast %622 : vector<64x1xf32> to vector<64x64xf32>
    %624 = arith.mulf %619, %623 : vector<64x64xf32>
    %625 = vector.extract_strided_slice %600 {offsets = [0, 128], sizes = [64, 64], strides = [1, 1]} : vector<64x256xf32> to vector<64x64xf32>
    %626 = arith.addf %625, %527 : vector<64x64xf32>
    %cst_317 = arith.constant dense<0xFF800000> : vector<64xf32>
    %627 = vector.multi_reduction <maximumf>, %626, %cst_317 [1] : vector<64x64xf32> to vector<64xf32>
    %628 = vector.shape_cast %627 : vector<64xf32> to vector<64x1xf32>
    %629 = vector.broadcast %628 : vector<64x1xf32> to vector<64x64xf32>
    %630 = arith.subf %626, %629 : vector<64x64xf32>
    %631 = math.exp %630 : vector<64x64xf32>
    %cst_318 = arith.constant dense<0.000000e+00> : vector<64xf32>
    %632 = vector.multi_reduction <add>, %631, %cst_318 [1] : vector<64x64xf32> to vector<64xf32>
    %633 = vector.shape_cast %632 : vector<64xf32> to vector<64x1xf32>
    %634 = tpu.reciprocal %633 : vector<64x1xf32> -> vector<64x1xf32>
    %635 = vector.broadcast %634 : vector<64x1xf32> to vector<64x64xf32>
    %636 = arith.mulf %631, %635 : vector<64x64xf32>
    %637 = vector.extract_strided_slice %600 {offsets = [0, 192], sizes = [64, 64], strides = [1, 1]} : vector<64x256xf32> to vector<64x64xf32>
    %638 = arith.addf %637, %527 : vector<64x64xf32>
    %cst_319 = arith.constant dense<0xFF800000> : vector<64xf32>
    %639 = vector.multi_reduction <maximumf>, %638, %cst_319 [1] : vector<64x64xf32> to vector<64xf32>
    %640 = vector.shape_cast %639 : vector<64xf32> to vector<64x1xf32>
    %641 = vector.broadcast %640 : vector<64x1xf32> to vector<64x64xf32>
    %642 = arith.subf %638, %641 : vector<64x64xf32>
    %643 = math.exp %642 : vector<64x64xf32>
    %cst_320 = arith.constant dense<0.000000e+00> : vector<64xf32>
    %644 = vector.multi_reduction <add>, %643, %cst_320 [1] : vector<64x64xf32> to vector<64xf32>
    %645 = vector.shape_cast %644 : vector<64xf32> to vector<64x1xf32>
    %646 = tpu.reciprocal %645 : vector<64x1xf32> -> vector<64x1xf32>
    %647 = vector.broadcast %646 : vector<64x1xf32> to vector<64x64xf32>
    %648 = arith.mulf %643, %647 : vector<64x64xf32>
    %649 = tpu.concatenate %612, %624, %636, %648 in 1 : vector<64x64xf32>, vector<64x64xf32>, vector<64x64xf32>, vector<64x64xf32> -> vector<64x256xf32>
    %cst_321 = arith.constant dense<0.000000e+00> : vector<256x32xf32>
    %650 = tpu.matmul %599, %565, %cst_321 {dimension_numbers = #tpu.dot_dimension_numbers<[1], [0], [0], [1], [0, 0, 1, 1], [], []>} : vector<256x32xf32>, vector<32x32xf32>, vector<256x32xf32> -> vector<256x32xf32>
    %cst_322 = arith.constant dense<0.000000e+00> : vector<64x32xf32>
    %651 = tpu.matmul %649, %650, %cst_322 {dimension_numbers = #tpu.dot_dimension_numbers<[1], [0], [0], [1], [0, 0, 1, 1], [], []>} : vector<64x256xf32>, vector<256x32xf32>, vector<64x32xf32> -> vector<64x32xf32>
    %652 = arith.addf %526, %651 : vector<64x32xf32>
    %c3_323 = arith.constant 3 : index
    %c0_324 = arith.constant 0 : index
    %c0_325 = arith.constant 0 : index
    %653 = vector.load %arg15[%c3_323, %c0_324, %c0_325] : memref<4x1x32xf32, #tpu.memory_space<vmem>>, vector<1x1x32xf32>
    %654 = vector.shape_cast %653 : vector<1x1x32xf32> to vector<1x32xf32>
    %655 = vector.broadcast %654 : vector<1x32xf32> to vector<64x32xf32>
    %656 = arith.addf %652, %655 : vector<64x32xf32>
    %c3_326 = arith.constant 3 : index
    %c0_327 = arith.constant 0 : index
    %c0_328 = arith.constant 0 : index
    %657 = vector.load %arg16[%c3_326, %c0_327, %c0_328] : memref<4x1x32xf32, #tpu.memory_space<vmem>>, vector<1x1x32xf32>
    %658 = vector.shape_cast %657 : vector<1x1x32xf32> to vector<1x32xf32>
    %c3_329 = arith.constant 3 : index
    %c0_330 = arith.constant 0 : index
    %c0_331 = arith.constant 0 : index
    %659 = vector.load %arg17[%c3_329, %c0_330, %c0_331] : memref<4x1x32xf32, #tpu.memory_space<vmem>>, vector<1x1x32xf32>
    %660 = vector.shape_cast %659 : vector<1x1x32xf32> to vector<1x32xf32>
    %cst_332 = arith.constant dense<0.000000e+00> : vector<64xf32>
    %661 = vector.multi_reduction <add>, %656, %cst_332 [1] : vector<64x32xf32> to vector<64xf32>
    %662 = vector.shape_cast %661 : vector<64xf32> to vector<64x1xf32>
    %cst_333 = arith.constant 3.200000e+01 : f32
    %663 = vector.broadcast %cst_333 : f32 to vector<64x1xf32>
    %664 = arith.divf %662, %663 : vector<64x1xf32>
    %665 = vector.broadcast %664 : vector<64x1xf32> to vector<64x32xf32>
    %666 = arith.subf %656, %665 : vector<64x32xf32>
    %667 = arith.mulf %666, %666 : vector<64x32xf32>
    %cst_334 = arith.constant dense<0.000000e+00> : vector<64xf32>
    %668 = vector.multi_reduction <add>, %667, %cst_334 [1] : vector<64x32xf32> to vector<64xf32>
    %669 = vector.shape_cast %668 : vector<64xf32> to vector<64x1xf32>
    %cst_335 = arith.constant 3.200000e+01 : f32
    %670 = vector.broadcast %cst_335 : f32 to vector<64x1xf32>
    %671 = arith.divf %669, %670 : vector<64x1xf32>
    %672 = vector.broadcast %664 : vector<64x1xf32> to vector<64x32xf32>
    %673 = arith.subf %656, %672 : vector<64x32xf32>
    %cst_336 = arith.constant 9.99999974E-6 : f32
    %674 = vector.broadcast %cst_336 : f32 to vector<64x1xf32>
    %675 = arith.addf %671, %674 : vector<64x1xf32>
    %676 = math.rsqrt %675 : vector<64x1xf32>
    %677 = vector.broadcast %676 : vector<64x1xf32> to vector<64x32xf32>
    %678 = arith.mulf %673, %677 : vector<64x32xf32>
    %679 = vector.broadcast %658 : vector<1x32xf32> to vector<64x32xf32>
    %680 = arith.mulf %678, %679 : vector<64x32xf32>
    %681 = vector.broadcast %660 : vector<1x32xf32> to vector<64x32xf32>
    %682 = arith.addf %680, %681 : vector<64x32xf32>
    %c3_337 = arith.constant 3 : index
    %c0_338 = arith.constant 0 : index
    %c0_339 = arith.constant 0 : index
    %683 = vector.load %arg18[%c3_337, %c0_338, %c0_339] : memref<4x32x64xf32, #tpu.memory_space<vmem>>, vector<1x32x64xf32>
    %684 = vector.shape_cast %683 : vector<1x32x64xf32> to vector<32x64xf32>
    %cst_340 = arith.constant dense<0.000000e+00> : vector<64x64xf32>
    %685 = tpu.matmul %682, %684, %cst_340 {dimension_numbers = #tpu.dot_dimension_numbers<[1], [0], [0], [1], [0, 0, 1, 1], [], []>} : vector<64x32xf32>, vector<32x64xf32>, vector<64x64xf32> -> vector<64x64xf32>
    %c3_341 = arith.constant 3 : index
    %c0_342 = arith.constant 0 : index
    %c0_343 = arith.constant 0 : index
    %686 = vector.load %arg19[%c3_341, %c0_342, %c0_343] : memref<4x1x64xf32, #tpu.memory_space<vmem>>, vector<1x1x64xf32>
    %687 = vector.shape_cast %686 : vector<1x1x64xf32> to vector<1x64xf32>
    %688 = vector.broadcast %687 : vector<1x64xf32> to vector<64x64xf32>
    %689 = arith.addf %685, %688 : vector<64x64xf32>
    %cst_344 = arith.constant 0.000000e+00 : f32
    %690 = vector.broadcast %cst_344 : f32 to vector<64x64xf32>
    %691 = arith.maximumf %689, %690 : vector<64x64xf32>
    %c3_345 = arith.constant 3 : index
    %c0_346 = arith.constant 0 : index
    %c0_347 = arith.constant 0 : index
    %692 = vector.load %arg20[%c3_345, %c0_346, %c0_347] : memref<4x64x32xf32, #tpu.memory_space<vmem>>, vector<1x64x32xf32>
    %693 = vector.shape_cast %692 : vector<1x64x32xf32> to vector<64x32xf32>
    %cst_348 = arith.constant dense<0.000000e+00> : vector<64x32xf32>
    %694 = tpu.matmul %691, %693, %cst_348 {dimension_numbers = #tpu.dot_dimension_numbers<[1], [0], [0], [1], [0, 0, 1, 1], [], []>} : vector<64x64xf32>, vector<64x32xf32>, vector<64x32xf32> -> vector<64x32xf32>
    %695 = arith.addf %656, %694 : vector<64x32xf32>
    %c3_349 = arith.constant 3 : index
    %c0_350 = arith.constant 0 : index
    %c0_351 = arith.constant 0 : index
    %696 = vector.load %arg21[%c3_349, %c0_350, %c0_351] : memref<4x1x32xf32, #tpu.memory_space<vmem>>, vector<1x1x32xf32>
    %697 = vector.shape_cast %696 : vector<1x1x32xf32> to vector<1x32xf32>
    %698 = vector.broadcast %697 : vector<1x32xf32> to vector<64x32xf32>
    %699 = arith.addf %695, %698 : vector<64x32xf32>
    %700 = vector.extract_strided_slice %699 {offsets = [56, 0], sizes = [8, 32], strides = [1, 1]} : vector<64x32xf32> to vector<8x32xf32>
    %c0_352 = arith.constant 0 : index
    %c0_353 = arith.constant 0 : index
    %701 = vector.load %arg8[%c0_352, %c0_353] : memref<32x16xf32, #tpu.memory_space<vmem>>, vector<32x16xf32>
    %cst_354 = arith.constant dense<0.000000e+00> : vector<8x16xf32>
    %702 = tpu.matmul %700, %701, %cst_354 {dimension_numbers = #tpu.dot_dimension_numbers<[1], [0], [0], [1], [0, 0, 1, 1], [], []>} : vector<8x32xf32>, vector<32x16xf32>, vector<8x16xf32> -> vector<8x16xf32>
    %c0_355 = arith.constant 0 : index
    %c0_356 = arith.constant 0 : index
    %703 = vector.load %arg9[%c0_355, %c0_356] : memref<1x16xf32, #tpu.memory_space<vmem>>, vector<1x16xf32>
    %704 = vector.broadcast %703 : vector<1x16xf32> to vector<8x16xf32>
    %705 = arith.addf %702, %704 : vector<8x16xf32>
    %c0_357 = arith.constant 0 : index
    %c0_358 = arith.constant 0 : index
    %706 = vector.load %arg22[%c0_357, %c0_358] : memref<8x16xf32, #tpu.memory_space<vmem>>, vector<8x16xf32>
    tpu.vector_store %arg22[%c0_357, %c0_358], %705 {strides = array<i32>} : memref<8x16xf32, #tpu.memory_space<vmem>>, vector<8x16xf32>,
    return
  }
  func.func @transform_0(%arg0: i32) -> (i32, i32) {
    %c0_i32 = arith.constant 0 : i32
    %c0_i32_0 = arith.constant 0 : i32
    return %arg0, %c0_i32 : i32, i32
  }
  func.func @transform_1(%arg0: i32) -> (i32, i32) {
    %c0_i32 = arith.constant 0 : i32
    %c0_i32_0 = arith.constant 0 : i32
    %c0_i32_1 = arith.constant 0 : i32
    return %c0_i32, %c0_i32_0 : i32, i32
  }
  func.func @transform_2(%arg0: i32) -> (i32, i32) {
    %c0_i32 = arith.constant 0 : i32
    %c0_i32_0 = arith.constant 0 : i32
    %c0_i32_1 = arith.constant 0 : i32
    return %c0_i32, %c0_i32_0 : i32, i32
  }
  func.func @transform_3(%arg0: i32) -> (i32, i32) {
    %c0_i32 = arith.constant 0 : i32
    %c0_i32_0 = arith.constant 0 : i32
    %c0_i32_1 = arith.constant 0 : i32
    return %c0_i32, %c0_i32_0 : i32, i32
  }
  func.func @transform_4(%arg0: i32) -> (i32, i32, i32) {
    %c0_i32 = arith.constant 0 : i32
    %c0_i32_0 = arith.constant 0 : i32
    %c0_i32_1 = arith.constant 0 : i32
    %c0_i32_2 = arith.constant 0 : i32
    return %c0_i32, %c0_i32_0, %c0_i32_1 : i32, i32, i32
  }
  func.func @transform_5(%arg0: i32) -> (i32, i32) {
    %c0_i32 = arith.constant 0 : i32
    %c0_i32_0 = arith.constant 0 : i32
    %c0_i32_1 = arith.constant 0 : i32
    return %c0_i32, %c0_i32_0 : i32, i32
  }
  func.func @transform_6(%arg0: i32) -> (i32, i32) {
    %c0_i32 = arith.constant 0 : i32
    %c0_i32_0 = arith.constant 0 : i32
    %c0_i32_1 = arith.constant 0 : i32
    return %c0_i32, %c0_i32_0 : i32, i32
  }
  func.func @transform_7(%arg0: i32) -> (i32, i32) {
    %c0_i32 = arith.constant 0 : i32
    %c0_i32_0 = arith.constant 0 : i32
    %c0_i32_1 = arith.constant 0 : i32
    return %c0_i32, %c0_i32_0 : i32, i32
  }
  func.func @transform_8(%arg0: i32) -> (i32, i32) {
    %c0_i32 = arith.constant 0 : i32
    %c0_i32_0 = arith.constant 0 : i32
    %c0_i32_1 = arith.constant 0 : i32
    return %c0_i32, %c0_i32_0 : i32, i32
  }
  func.func @transform_9(%arg0: i32) -> (i32, i32, i32) {
    %c0_i32 = arith.constant 0 : i32
    %c0_i32_0 = arith.constant 0 : i32
    %c0_i32_1 = arith.constant 0 : i32
    %c0_i32_2 = arith.constant 0 : i32
    return %c0_i32, %c0_i32_0, %c0_i32_1 : i32, i32, i32
  }
  func.func @transform_10(%arg0: i32) -> (i32, i32, i32) {
    %c0_i32 = arith.constant 0 : i32
    %c0_i32_0 = arith.constant 0 : i32
    %c0_i32_1 = arith.constant 0 : i32
    %c0_i32_2 = arith.constant 0 : i32
    return %c0_i32, %c0_i32_0, %c0_i32_1 : i32, i32, i32
  }
  func.func @transform_11(%arg0: i32) -> (i32, i32, i32) {
    %c0_i32 = arith.constant 0 : i32
    %c0_i32_0 = arith.constant 0 : i32
    %c0_i32_1 = arith.constant 0 : i32
    %c0_i32_2 = arith.constant 0 : i32
    return %c0_i32, %c0_i32_0, %c0_i32_1 : i32, i32, i32
  }
  func.func @transform_12(%arg0: i32) -> (i32, i32, i32) {
    %c0_i32 = arith.constant 0 : i32
    %c0_i32_0 = arith.constant 0 : i32
    %c0_i32_1 = arith.constant 0 : i32
    %c0_i32_2 = arith.constant 0 : i32
    return %c0_i32, %c0_i32_0, %c0_i32_1 : i32, i32, i32
  }
  func.func @transform_13(%arg0: i32) -> (i32, i32, i32) {
    %c0_i32 = arith.constant 0 : i32
    %c0_i32_0 = arith.constant 0 : i32
    %c0_i32_1 = arith.constant 0 : i32
    %c0_i32_2 = arith.constant 0 : i32
    return %c0_i32, %c0_i32_0, %c0_i32_1 : i32, i32, i32
  }
  func.func @transform_14(%arg0: i32) -> (i32, i32, i32) {
    %c0_i32 = arith.constant 0 : i32
    %c0_i32_0 = arith.constant 0 : i32
    %c0_i32_1 = arith.constant 0 : i32
    %c0_i32_2 = arith.constant 0 : i32
    return %c0_i32, %c0_i32_0, %c0_i32_1 : i32, i32, i32
  }
  func.func @transform_15(%arg0: i32) -> (i32, i32, i32) {
    %c0_i32 = arith.constant 0 : i32
    %c0_i32_0 = arith.constant 0 : i32
    %c0_i32_1 = arith.constant 0 : i32
    %c0_i32_2 = arith.constant 0 : i32
    return %c0_i32, %c0_i32_0, %c0_i32_1 : i32, i32, i32
  }
  func.func @transform_16(%arg0: i32) -> (i32, i32, i32) {
    %c0_i32 = arith.constant 0 : i32
    %c0_i32_0 = arith.constant 0 : i32
    %c0_i32_1 = arith.constant 0 : i32
    %c0_i32_2 = arith.constant 0 : i32
    return %c0_i32, %c0_i32_0, %c0_i32_1 : i32, i32, i32
  }
  func.func @transform_17(%arg0: i32) -> (i32, i32, i32) {
    %c0_i32 = arith.constant 0 : i32
    %c0_i32_0 = arith.constant 0 : i32
    %c0_i32_1 = arith.constant 0 : i32
    %c0_i32_2 = arith.constant 0 : i32
    return %c0_i32, %c0_i32_0, %c0_i32_1 : i32, i32, i32
  }
  func.func @transform_18(%arg0: i32) -> (i32, i32, i32) {
    %c0_i32 = arith.constant 0 : i32
    %c0_i32_0 = arith.constant 0 : i32
    %c0_i32_1 = arith.constant 0 : i32
    %c0_i32_2 = arith.constant 0 : i32
    return %c0_i32, %c0_i32_0, %c0_i32_1 : i32, i32, i32
  }
  func.func @transform_19(%arg0: i32) -> (i32, i32, i32) {
    %c0_i32 = arith.constant 0 : i32
    %c0_i32_0 = arith.constant 0 : i32
    %c0_i32_1 = arith.constant 0 : i32
    %c0_i32_2 = arith.constant 0 : i32
    return %c0_i32, %c0_i32_0, %c0_i32_1 : i32, i32, i32
  }
  func.func @transform_20(%arg0: i32) -> (i32, i32, i32) {
    %c0_i32 = arith.constant 0 : i32
    %c0_i32_0 = arith.constant 0 : i32
    %c0_i32_1 = arith.constant 0 : i32
    %c0_i32_2 = arith.constant 0 : i32
    return %c0_i32, %c0_i32_0, %c0_i32_1 : i32, i32, i32
  }
  func.func @transform_21(%arg0: i32) -> (i32, i32) {
    %c0_i32 = arith.constant 0 : i32
    %c0_i32_0 = arith.constant 0 : i32
    return %arg0, %c0_i32 : i32, i32
  }
}

</mosaic_0001>

<llo_original>
// kernel: ocvp_seq_forward.1
$region0: #{ocvp_seq_forward.1}
  #allocation0 [shape = 'u32[]', space=smem, size = 0x4, offset = 0x4, fixed_abs, tag = 'smem constant byte address 0x4 - core index']
  #allocation1 [shape = 'u32[144,128]{1,0:T(1,128)}', space=vmem, size = 0x12000, scoped, tag = 'internal scratch']
  %s0 = inlined_call_operand.vmem [shape: f32[128,16], index: 0, kind: input, shape index: {}]
  %s1 = inlined_call_operand.vmem [shape: f32[64,32], index: 1, kind: input, shape index: {}]
  %s2 = inlined_call_operand.vmem [shape: f32[64,64], index: 2, kind: input, shape index: {}]
  %s3 = inlined_call_operand.vmem [shape: f32[64,64], index: 3, kind: input, shape index: {}]
  %s4 = inlined_call_operand.vmem [shape: f32[4,1,32], index: 4, kind: input, shape index: {}]
  %s5 = inlined_call_operand.vmem [shape: f32[16,32], index: 5, kind: input, shape index: {}]
  %s6 = inlined_call_operand.vmem [shape: f32[1,32], index: 6, kind: input, shape index: {}]
  %s7 = inlined_call_operand.vmem [shape: f32[32,16], index: 7, kind: input, shape index: {}]
  %s8 = inlined_call_operand.vmem [shape: f32[1,16], index: 8, kind: input, shape index: {}]
  %s9 = inlined_call_operand.vmem [shape: f32[4,1,32], index: 9, kind: input, shape index: {}]
  %s10 = inlined_call_operand.vmem [shape: f32[4,1,32], index: 10, kind: input, shape index: {}]
  %s11 = inlined_call_operand.vmem [shape: f32[4,32,96], index: 11, kind: input, shape index: {}]
  %s12 = inlined_call_operand.vmem [shape: f32[4,1,96], index: 12, kind: input, shape index: {}]
  %s13 = inlined_call_operand.vmem [shape: f32[4,32,32], index: 13, kind: input, shape index: {}]
  %s14 = inlined_call_operand.vmem [shape: f32[4,1,32], index: 14, kind: input, shape index: {}]
  %s15 = inlined_call_operand.vmem [shape: f32[4,1,32], index: 15, kind: input, shape index: {}]
  %s16 = inlined_call_operand.vmem [shape: f32[4,1,32], index: 16, kind: input, shape index: {}]
  %s17 = inlined_call_operand.vmem [shape: f32[4,32,64], index: 17, kind: input, shape index: {}]
  %s18 = inlined_call_operand.vmem [shape: f32[4,1,64], index: 18, kind: input, shape index: {}]
  %s19 = inlined_call_operand.vmem [shape: f32[4,64,32], index: 19, kind: input, shape index: {}]
  %s20 = inlined_call_operand.vmem [shape: f32[4,1,32], index: 20, kind: input, shape index: {}]
  %s21 = inlined_call_operand.hbm [shape: f32[16,16], index: 21, kind: output, shape index: {}]
  %s22 = sld [smem:[#allocation0]]
  $region117: #{ocvp_seq_forward.1} parent=0
    _
  %s24 = ssub.s32 1, %s22
  %s25 = scalar_select 0, %s24, %s22
  $region1: #{ocvp_seq_forward.1} parent=0
    #allocation2 [shape = 'u8[8192]{0}', space=vmem, size = 0x2000, scoped, tag = 'output window, operand 0']
    #allocation3 [shape = 's32[2]{0}', space=sflag, size = 0x8, scoped, tag = 'scoped memory for ocvp_seq_forward.1']
    %26 = vsyncpa [#allocation3], 0
    %s27 = scalar_lea.sflag [#allocation3], 1
    %28 = vsyncpa %s27, 0
    loop: start=0, step=1, limit=4
    $region2: #{ocvp_seq_forward.1} parent=1 // loop_pre_header
      _
    $region3: #{ocvp_seq_forward.1} parent=1 // loop_header
      %s30 = sphi 0, %s34
      %p31 = scmp.ge.s32.totalorder %s30, 4
      %s40 = sphi 0, %s42
      %s43 = sphi 0, %s40
      %s44 = sphi 0, %s43
      %s60 = sphi 0, %s44
      %s64 = sphi 0, %s64
      %s66 = sphi 0, %s64
      %s67 = sphi 0, %s66
      %s81 = sphi 0, %s67
      %s85 = sphi 0, %s85
      %s87 = sphi 0, %s85
      %s88 = sphi 0, %s87
      %s102 = sphi 0, %s88
      %s106 = sphi 0, %s106
      %s108 = sphi 0, %s106
      %s109 = sphi 0, %s108
      %s123 = sphi 0, %s109
      %s127 = sphi 0, %s127
      %s129 = sphi 0, %s127
      %s130 = sphi 0, %s129
      %s144 = sphi 0, %s130
      %s148 = sphi 0, %s148
      %s150 = sphi 0, %s148
      %s151 = sphi 0, %s150
      %s165 = sphi 0, %s151
      %s169 = sphi 0, %s169
      %s171 = sphi 0, %s169
      %s172 = sphi 0, %s171
      %s186 = sphi 0, %s172
      %s190 = sphi 0, %s190
      %s192 = sphi 0, %s190
      %s193 = sphi 0, %s192
      %s207 = sphi 0, %s193
      %s211 = sphi 0, %s211
      %s213 = sphi 0, %s211
      %s214 = sphi 0, %s213
      %s228 = sphi 0, %s214
      %s232 = sphi 0, %s232
      %s234 = sphi 0, %s232
      %s235 = sphi 0, %s234
      %s249 = sphi 0, %s235
      %s253 = sphi 0, %s253
      %s255 = sphi 0, %s253
      %s256 = sphi 0, %s255
      %s270 = sphi 0, %s256
      %s274 = sphi 0, %s274
      %s276 = sphi 0, %s274
      %s277 = sphi 0, %s276
      %s291 = sphi 0, %s277
      %s295 = sphi 0, %s295
      %s297 = sphi 0, %s295
      %s298 = sphi 0, %s297
      %s312 = sphi 0, %s298
      %s316 = sphi 0, %s316
      %s318 = sphi 0, %s316
      %s319 = sphi 0, %s318
      %s333 = sphi 0, %s319
      %s337 = sphi 0, %s337
      %s339 = sphi 0, %s337
      %s340 = sphi 0, %s339
      %s354 = sphi 0, %s340
      %s358 = sphi 0, %s358
      %s360 = sphi 0, %s358
      %s361 = sphi 0, %s360
      %s375 = sphi 0, %s361
      %s379 = sphi 0, %s379
      %s381 = sphi 0, %s379
      %s382 = sphi 0, %s381
      %s396 = sphi 0, %s382
      %s400 = sphi 0, %s400
      %s402 = sphi 0, %s400
      %s403 = sphi 0, %s402
      %s417 = sphi 0, %s403
      %s421 = sphi 0, %s421
      %s423 = sphi 0, %s421
      %s424 = sphi 0, %s423
      %s438 = sphi 0, %s424
      %s442 = sphi 0, %s442
      %s444 = sphi 0, %s442
      %s445 = sphi 0, %s444
      %s459 = sphi 0, %s445
      %s463 = sphi 0, %s463
      %s465 = sphi 0, %s463
      %s466 = sphi 0, %s465
      %s480 = sphi 0, %s466
      %s486 = sphi 0, %s488
      %s489 = sphi 0, %s486
      %s490 = sphi 0, %s489
      %s506 = sphi 0, %s490
    $region4: #{ocvp_seq_forward.1} parent=1 // loop_header_branch
      %33 = sbr.rel (%p31) target = $region8
    $region5: #{ocvp_seq_forward.1} parent=1 // loop_body
      %s35 = ssub.s32 %s30, 1
      %s36 = ssub.s32 %s30, 2
      %s37 = sadd.s32 %s30, 1
      %s38 = ssub.s32 %s30, %s37
      %p39 = scmp.eq.s32.totalorder %s38, 0
      %s41 = sadd.s32 %s40, 1
      %s42 = scalar_select %p39, %s40, %s41
      %p45 = pneg %p39
      %p46 = scmp.eq.s32.totalorder %s30, 1
      %p47 = por %p45, %p46
      %p48 = scmp.ne.s32.totalorder %s40, %s43
      %p49 = scmp.eq.s32.totalorder %s30, 0
      %p50 = por %p48, %p49
      %p51 = scmp.ne.s32.totalorder %s40, %s43
      %p52 = scmp.eq.s32.totalorder %s35, 1
      %p53 = por %p51, %p52
      %p54 = scmp.ne.s32.totalorder %s43, %s44
      %p55 = scmp.eq.s32.totalorder %s35, 0
      %p56 = por %p54, %p55
      %p57 = scmp.ne.s32.totalorder %s43, %s44
      %p58 = scmp.eq.s32.totalorder %s36, 1
      %p59 = por %p57, %p58
      %p61 = scmp.ne.s32.totalorder %s44, %s60
      %p62 = scmp.eq.s32.totalorder %s36, 0
      %p63 = por %p61, %p62
      %s65 = sadd.s32 %s64, 1
      %p68 = scmp.eq.s32.totalorder %s30, 1
      %p69 = scmp.ne.s32.totalorder %s64, %s66
      %p70 = scmp.eq.s32.totalorder %s30, 0
      %p71 = por %p69, %p70
      %p72 = scmp.ne.s32.totalorder %s64, %s66
      %p73 = scmp.eq.s32.totalorder %s35, 1
      %p74 = por %p72, %p73
      %p75 = scmp.ne.s32.totalorder %s66, %s67
      %p76 = scmp.eq.s32.totalorder %s35, 0
      %p77 = por %p75, %p76
      %p78 = scmp.ne.s32.totalorder %s66, %s67
      %p79 = scmp.eq.s32.totalorder %s36, 1
      %p80 = por %p78, %p79
      %p82 = scmp.ne.s32.totalorder %s67, %s81
      %p83 = scmp.eq.s32.totalorder %s36, 0
      %p84 = por %p82, %p83
      %s86 = sadd.s32 %s85, 1
      %p89 = scmp.eq.s32.totalorder %s30, 1
      %p90 = scmp.ne.s32.totalorder %s85, %s87
      %p91 = scmp.eq.s32.totalorder %s30, 0
      %p92 = por %p90, %p91
      %p93 = scmp.ne.s32.totalorder %s85, %s87
      %p94 = scmp.eq.s32.totalorder %s35, 1
      %p95 = por %p93, %p94
      %p96 = scmp.ne.s32.totalorder %s87, %s88
      %p97 = scmp.eq.s32.totalorder %s35, 0
      %p98 = por %p96, %p97
      %p99 = scmp.ne.s32.totalorder %s87, %s88
      %p100 = scmp.eq.s32.totalorder %s36, 1
      %p101 = por %p99, %p100
      %p103 = scmp.ne.s32.totalorder %s88, %s102
      %p104 = scmp.eq.s32.totalorder %s36, 0
      %p105 = por %p103, %p104
      %s107 = sadd.s32 %s106, 1
      %p110 = scmp.eq.s32.totalorder %s30, 1
      %p111 = scmp.ne.s32.totalorder %s106, %s108
      %p112 = scmp.eq.s32.totalorder %s30, 0
      %p113 = por %p111, %p112
      %p114 = scmp.ne.s32.totalorder %s106, %s108
      %p115 = scmp.eq.s32.totalorder %s35, 1
      %p116 = por %p114, %p115
      %p117 = scmp.ne.s32.totalorder %s108, %s109
      %p118 = scmp.eq.s32.totalorder %s35, 0
      %p119 = por %p117, %p118
      %p120 = scmp.ne.s32.totalorder %s108, %s109
      %p121 = scmp.eq.s32.totalorder %s36, 1
      %p122 = por %p120, %p121
      %p124 = scmp.ne.s32.totalorder %s109, %s123
      %p125 = scmp.eq.s32.totalorder %s36, 0
      %p126 = por %p124, %p125
      %s128 = sadd.s32 %s127, 1
      %p131 = scmp.eq.s32.totalorder %s30, 1
      %p132 = scmp.ne.s32.totalorder %s127, %s129
      %p133 = scmp.eq.s32.totalorder %s30, 0
      %p134 = por %p132, %p133
      %p135 = scmp.ne.s32.totalorder %s127, %s129
      %p136 = scmp.eq.s32.totalorder %s35, 1
      %p137 = por %p135, %p136
      %p138 = scmp.ne.s32.totalorder %s129, %s130
      %p139 = scmp.eq.s32.totalorder %s35, 0
      %p140 = por %p138, %p139
      %p141 = scmp.ne.s32.totalorder %s129, %s130
      %p142 = scmp.eq.s32.totalorder %s36, 1
      %p143 = por %p141, %p142
      %p145 = scmp.ne.s32.totalorder %s130, %s144
      %p146 = scmp.eq.s32.totalorder %s36, 0
      %p147 = por %p145, %p146
      %s149 = sadd.s32 %s148, 1
      %p152 = scmp.eq.s32.totalorder %s30, 1
      %p153 = scmp.ne.s32.totalorder %s148, %s150
      %p154 = scmp.eq.s32.totalorder %s30, 0
      %p155 = por %p153, %p154
      %p156 = scmp.ne.s32.totalorder %s148, %s150
      %p157 = scmp.eq.s32.totalorder %s35, 1
      %p158 = por %p156, %p157
      %p159 = scmp.ne.s32.totalorder %s150, %s151
      %p160 = scmp.eq.s32.totalorder %s35, 0
      %p161 = por %p159, %p160
      %p162 = scmp.ne.s32.totalorder %s150, %s151
      %p163 = scmp.eq.s32.totalorder %s36, 1
      %p164 = por %p162, %p163
      %p166 = scmp.ne.s32.totalorder %s151, %s165
      %p167 = scmp.eq.s32.totalorder %s36, 0
      %p168 = por %p166, %p167
      %s170 = sadd.s32 %s169, 1
      %p173 = scmp.eq.s32.totalorder %s30, 1
      %p174 = scmp.ne.s32.totalorder %s169, %s171
      %p175 = scmp.eq.s32.totalorder %s30, 0
      %p176 = por %p174, %p175
      %p177 = scmp.ne.s32.totalorder %s169, %s171
      %p178 = scmp.eq.s32.totalorder %s35, 1
      %p179 = por %p177, %p178
      %p180 = scmp.ne.s32.totalorder %s171, %s172
      %p181 = scmp.eq.s32.totalorder %s35, 0
      %p182 = por %p180, %p181
      %p183 = scmp.ne.s32.totalorder %s171, %s172
      %p184 = scmp.eq.s32.totalorder %s36, 1
      %p185 = por %p183, %p184
      %p187 = scmp.ne.s32.totalorder %s172, %s186
      %p188 = scmp.eq.s32.totalorder %s36, 0
      %p189 = por %p187, %p188
      %s191 = sadd.s32 %s190, 1
      %p194 = scmp.eq.s32.totalorder %s30, 1
      %p195 = scmp.ne.s32.totalorder %s190, %s192
      %p196 = scmp.eq.s32.totalorder %s30, 0
      %p197 = por %p195, %p196
      %p198 = scmp.ne.s32.totalorder %s190, %s192
      %p199 = scmp.eq.s32.totalorder %s35, 1
      %p200 = por %p198, %p199
      %p201 = scmp.ne.s32.totalorder %s192, %s193
      %p202 = scmp.eq.s32.totalorder %s35, 0
      %p203 = por %p201, %p202
      %p204 = scmp.ne.s32.totalorder %s192, %s193
      %p205 = scmp.eq.s32.totalorder %s36, 1
      %p206 = por %p204, %p205
      %p208 = scmp.ne.s32.totalorder %s193, %s207
      %p209 = scmp.eq.s32.totalorder %s36, 0
      %p210 = por %p208, %p209
      %s212 = sadd.s32 %s211, 1
      %p215 = scmp.eq.s32.totalorder %s30, 1
      %p216 = scmp.ne.s32.totalorder %s211, %s213
      %p217 = scmp.eq.s32.totalorder %s30, 0
      %p218 = por %p216, %p217
      %p219 = scmp.ne.s32.totalorder %s211, %s213
      %p220 = scmp.eq.s32.totalorder %s35, 1
      %p221 = por %p219, %p220
      %p222 = scmp.ne.s32.totalorder %s213, %s214
      %p223 = scmp.eq.s32.totalorder %s35, 0
      %p224 = por %p222, %p223
      %p225 = scmp.ne.s32.totalorder %s213, %s214
      %p226 = scmp.eq.s32.totalorder %s36, 1
      %p227 = por %p225, %p226
      %p229 = scmp.ne.s32.totalorder %s214, %s228
      %p230 = scmp.eq.s32.totalorder %s36, 0
      %p231 = por %p229, %p230
      %s233 = sadd.s32 %s232, 1
      %p236 = scmp.eq.s32.totalorder %s30, 1
      %p237 = scmp.ne.s32.totalorder %s232, %s234
      %p238 = scmp.eq.s32.totalorder %s30, 0
      %p239 = por %p237, %p238
      %p240 = scmp.ne.s32.totalorder %s232, %s234
      %p241 = scmp.eq.s32.totalorder %s35, 1
      %p242 = por %p240, %p241
      %p243 = scmp.ne.s32.totalorder %s234, %s235
      %p244 = scmp.eq.s32.totalorder %s35, 0
      %p245 = por %p243, %p244
      %p246 = scmp.ne.s32.totalorder %s234, %s235
      %p247 = scmp.eq.s32.totalorder %s36, 1
      %p248 = por %p246, %p247
      %p250 = scmp.ne.s32.totalorder %s235, %s249
      %p251 = scmp.eq.s32.totalorder %s36, 0
      %p252 = por %p250, %p251
      %s254 = sadd.s32 %s253, 1
      %p257 = scmp.eq.s32.totalorder %s30, 1
      %p258 = scmp.ne.s32.totalorder %s253, %s255
      %p259 = scmp.eq.s32.totalorder %s30, 0
      %p260 = por %p258, %p259
      %p261 = scmp.ne.s32.totalorder %s253, %s255
      %p262 = scmp.eq.s32.totalorder %s35, 1
      %p263 = por %p261, %p262
      %p264 = scmp.ne.s32.totalorder %s255, %s256
      %p265 = scmp.eq.s32.totalorder %s35, 0
      %p266 = por %p264, %p265
      %p267 = scmp.ne.s32.totalorder %s255, %s256
      %p268 = scmp.eq.s32.totalorder %s36, 1
      %p269 = por %p267, %p268
      %p271 = scmp.ne.s32.totalorder %s256, %s270
      %p272 = scmp.eq.s32.totalorder %s36, 0
      %p273 = por %p271, %p272
      %s275 = sadd.s32 %s274, 1
      %p278 = scmp.eq.s32.totalorder %s30, 1
      %p279 = scmp.ne.s32.totalorder %s274, %s276
      %p280 = scmp.eq.s32.totalorder %s30, 0
      %p281 = por %p279, %p280
      %p282 = scmp.ne.s32.totalorder %s274, %s276
      %p283 = scmp.eq.s32.totalorder %s35, 1
      %p284 = por %p282, %p283
      %p285 = scmp.ne.s32.totalorder %s276, %s277
      %p286 = scmp.eq.s32.totalorder %s35, 0
      %p287 = por %p285, %p286
      %p288 = scmp.ne.s32.totalorder %s276, %s277
      %p289 = scmp.eq.s32.totalorder %s36, 1
      %p290 = por %p288, %p289
      %p292 = scmp.ne.s32.totalorder %s277, %s291
      %p293 = scmp.eq.s32.totalorder %s36, 0
      %p294 = por %p292, %p293
      %s296 = sadd.s32 %s295, 1
      %p299 = scmp.eq.s32.totalorder %s30, 1
      %p300 = scmp.ne.s32.totalorder %s295, %s297
      %p301 = scmp.eq.s32.totalorder %s30, 0
      %p302 = por %p300, %p301
      %p303 = scmp.ne.s32.totalorder %s295, %s297
      %p304 = scmp.eq.s32.totalorder %s35, 1
      %p305 = por %p303, %p304
      %p306 = scmp.ne.s32.totalorder %s297, %s298
      %p307 = scmp.eq.s32.totalorder %s35, 0
      %p308 = por %p306, %p307
      %p309 = scmp.ne.s32.totalorder %s297, %s298
      %p310 = scmp.eq.s32.totalorder %s36, 1
      %p311 = por %p309, %p310
      %p313 = scmp.ne.s32.totalorder %s298, %s312
      %p314 = scmp.eq.s32.totalorder %s36, 0
      %p315 = por %p313, %p314
      %s317 = sadd.s32 %s316, 1
      %p320 = scmp.eq.s32.totalorder %s30, 1
      %p321 = scmp.ne.s32.totalorder %s316, %s318
      %p322 = scmp.eq.s32.totalorder %s30, 0
      %p323 = por %p321, %p322
      %p324 = scmp.ne.s32.totalorder %s316, %s318
      %p325 = scmp.eq.s32.totalorder %s35, 1
      %p326 = por %p324, %p325
      %p327 = scmp.ne.s32.totalorder %s318, %s319
      %p328 = scmp.eq.s32.totalorder %s35, 0
      %p329 = por %p327, %p328
      %p330 = scmp.ne.s32.totalorder %s318, %s319
      %p331 = scmp.eq.s32.totalorder %s36, 1
      %p332 = por %p330, %p331
      %p334 = scmp.ne.s32.totalorder %s319, %s333
      %p335 = scmp.eq.s32.totalorder %s36, 0
      %p336 = por %p334, %p335
      %s338 = sadd.s32 %s337, 1
      %p341 = scmp.eq.s32.totalorder %s30, 1
      %p342 = scmp.ne.s32.totalorder %s337, %s339
      %p343 = scmp.eq.s32.totalorder %s30, 0
      %p344 = por %p342, %p343
      %p345 = scmp.ne.s32.totalorder %s337, %s339
      %p346 = scmp.eq.s32.totalorder %s35, 1
      %p347 = por %p345, %p346
      %p348 = scmp.ne.s32.totalorder %s339, %s340
      %p349 = scmp.eq.s32.totalorder %s35, 0
      %p350 = por %p348, %p349
      %p351 = scmp.ne.s32.totalorder %s339, %s340
      %p352 = scmp.eq.s32.totalorder %s36, 1
      %p353 = por %p351, %p352
      %p355 = scmp.ne.s32.totalorder %s340, %s354
      %p356 = scmp.eq.s32.totalorder %s36, 0
      %p357 = por %p355, %p356
      %s359 = sadd.s32 %s358, 1
      %p362 = scmp.eq.s32.totalorder %s30, 1
      %p363 = scmp.ne.s32.totalorder %s358, %s360
      %p364 = scmp.eq.s32.totalorder %s30, 0
      %p365 = por %p363, %p364
      %p366 = scmp.ne.s32.totalorder %s358, %s360
      %p367 = scmp.eq.s32.totalorder %s35, 1
      %p368 = por %p366, %p367
      %p369 = scmp.ne.s32.totalorder %s360, %s361
      %p370 = scmp.eq.s32.totalorder %s35, 0
      %p371 = por %p369, %p370
      %p372 = scmp.ne.s32.totalorder %s360, %s361
      %p373 = scmp.eq.s32.totalorder %s36, 1
      %p374 = por %p372, %p373
      %p376 = scmp.ne.s32.totalorder %s361, %s375
      %p377 = scmp.eq.s32.totalorder %s36, 0
      %p378 = por %p376, %p377
      %s380 = sadd.s32 %s379, 1
      %p383 = scmp.eq.s32.totalorder %s30, 1
      %p384 = scmp.ne.s32.totalorder %s379, %s381
      %p385 = scmp.eq.s32.totalorder %s30, 0
      %p386 = por %p384, %p385
      %p387 = scmp.ne.s32.totalorder %s379, %s381
      %p388 = scmp.eq.s32.totalorder %s35, 1
      %p389 = por %p387, %p388
      %p390 = scmp.ne.s32.totalorder %s381, %s382
      %p391 = scmp.eq.s32.totalorder %s35, 0
      %p392 = por %p390, %p391
      %p393 = scmp.ne.s32.totalorder %s381, %s382
      %p394 = scmp.eq.s32.totalorder %s36, 1
      %p395 = por %p393, %p394
      %p397 = scmp.ne.s32.totalorder %s382, %s396
      %p398 = scmp.eq.s32.totalorder %s36, 0
      %p399 = por %p397, %p398
      %s401 = sadd.s32 %s400, 1
      %p404 = scmp.eq.s32.totalorder %s30, 1
      %p405 = scmp.ne.s32.totalorder %s400, %s402
      %p406 = scmp.eq.s32.totalorder %s30, 0
      %p407 = por %p405, %p406
      %p408 = scmp.ne.s32.totalorder %s400, %s402
      %p409 = scmp.eq.s32.totalorder %s35, 1
      %p410 = por %p408, %p409
      %p411 = scmp.ne.s32.totalorder %s402, %s403
      %p412 = scmp.eq.s32.totalorder %s35, 0
      %p413 = por %p411, %p412
      %p414 = scmp.ne.s32.totalorder %s402, %s403
      %p415 = scmp.eq.s32.totalorder %s36, 1
      %p416 = por %p414, %p415
      %p418 = scmp.ne.s32.totalorder %s403, %s417
      %p419 = scmp.eq.s32.totalorder %s36, 0
      %p420 = por %p418, %p419
      %s422 = sadd.s32 %s421, 1
      %p425 = scmp.eq.s32.totalorder %s30, 1
      %p426 = scmp.ne.s32.totalorder %s421, %s423
      %p427 = scmp.eq.s32.totalorder %s30, 0
      %p428 = por %p426, %p427
      %p429 = scmp.ne.s32.totalorder %s421, %s423
      %p430 = scmp.eq.s32.totalorder %s35, 1
      %p431 = por %p429, %p430
      %p432 = scmp.ne.s32.totalorder %s423, %s424
      %p433 = scmp.eq.s32.totalorder %s35, 0
      %p434 = por %p432, %p433
      %p435 = scmp.ne.s32.totalorder %s423, %s424
      %p436 = scmp.eq.s32.totalorder %s36, 1
      %p437 = por %p435, %p436
      %p439 = scmp.ne.s32.totalorder %s424, %s438
      %p440 = scmp.eq.s32.totalorder %s36, 0
      %p441 = por %p439, %p440
      %s443 = sadd.s32 %s442, 1
      %p446 = scmp.eq.s32.totalorder %s30, 1
      %p447 = scmp.ne.s32.totalorder %s442, %s444
      %p448 = scmp.eq.s32.totalorder %s30, 0
      %p449 = por %p447, %p448
      %p450 = scmp.ne.s32.totalorder %s442, %s444
      %p451 = scmp.eq.s32.totalorder %s35, 1
      %p452 = por %p450, %p451
      %p453 = scmp.ne.s32.totalorder %s444, %s445
      %p454 = scmp.eq.s32.totalorder %s35, 0
      %p455 = por %p453, %p454
      %p456 = scmp.ne.s32.totalorder %s444, %s445
      %p457 = scmp.eq.s32.totalorder %s36, 1
      %p458 = por %p456, %p457
      %p460 = scmp.ne.s32.totalorder %s445, %s459
      %p461 = scmp.eq.s32.totalorder %s36, 0
      %p462 = por %p460, %p461
      %s464 = sadd.s32 %s463, 1
      %p467 = scmp.eq.s32.totalorder %s30, 1
      %p468 = scmp.ne.s32.totalorder %s463, %s465
      %p469 = scmp.eq.s32.totalorder %s30, 0
      %p470 = por %p468, %p469
      %p471 = scmp.ne.s32.totalorder %s463, %s465
      %p472 = scmp.eq.s32.totalorder %s35, 1
      %p473 = por %p471, %p472
      %p474 = scmp.ne.s32.totalorder %s465, %s466
      %p475 = scmp.eq.s32.totalorder %s35, 0
      %p476 = por %p474, %p475
      %p477 = scmp.ne.s32.totalorder %s465, %s466
      %p478 = scmp.eq.s32.totalorder %s36, 1
      %p479 = por %p477, %p478
      %p481 = scmp.ne.s32.totalorder %s466, %s480
      %p482 = scmp.eq.s32.totalorder %s36, 0
      %p483 = por %p481, %p482
      %s484 = ssub.s32 %s30, %s37
      %p485 = scmp.eq.s32.totalorder %s484, 0
      %s487 = sadd.s32 %s486, 1
      %s488 = scalar_select %p485, %s486, %s487
      %p491 = pneg %p485
      %p492 = scmp.eq.s32.totalorder %s30, 1
      %p493 = por %p491, %p492
      %p494 = scmp.ne.s32.totalorder %s486, %s489
      %p495 = scmp.eq.s32.totalorder %s30, 0
      %p496 = por %p494, %p495
      %p497 = scmp.ne.s32.totalorder %s486, %s489
      %p498 = scmp.eq.s32.totalorder %s35, 1
      %p499 = por %p497, %p498
      %p500 = scmp.ne.s32.totalorder %s489, %s490
      %p501 = scmp.eq.s32.totalorder %s35, 0
      %p502 = por %p500, %p501
      %p503 = scmp.ne.s32.totalorder %s489, %s490
      %p504 = scmp.eq.s32.totalorder %s36, 1
      %p505 = por %p503, %p504
      %p507 = scmp.ne.s32.totalorder %s490, %s506
      %p508 = scmp.eq.s32.totalorder %s36, 0
      %p509 = por %p507, %p508
      %p510 = scmp.le.s32.totalorder 1, %s30
      %p511 = scmp.lt.s32.totalorder %s30, 3
      %p512 = pnand %p510, %p511
      %p513 = pneg %p512
      // Predicated region
      $region9: #{ocvp_seq_forward.1} parent=5 // pred_check
        _
      $region10: #{ocvp_seq_forward.1} parent=5 // pred_check_branch
        %515 = sbr.rel (%p512) target = $region12
      $region11: #{ocvp_seq_forward.1} parent=5 // pred_region
        %s516 = ssub.s32 %s30, 1
        // Predicated region
        $region13: #{ocvp_seq_forward.1} parent=11 // pred_check
          %p517 = pneg %p77
        $region14: #{ocvp_seq_forward.1} parent=11 // pred_check_branch
          %519 = sbr.rel (%p517) target = $region16
        $region15: #{ocvp_seq_forward.1} parent=11 // pred_region
          _
        $region16: #{ocvp_seq_forward.1} parent=11 // pred_fallthru
          _
        // Predicated region
        $region17: #{ocvp_seq_forward.1} parent=11 // pred_check
          %p520 = pneg %p98
        $region18: #{ocvp_seq_forward.1} parent=11 // pred_check_branch
          %522 = sbr.rel (%p520) target = $region20
        $region19: #{ocvp_seq_forward.1} parent=11 // pred_region
          _
        $region20: #{ocvp_seq_forward.1} parent=11 // pred_fallthru
          _
        // Predicated region
        $region21: #{ocvp_seq_forward.1} parent=11 // pred_check
          %p523 = pneg %p119
        $region22: #{ocvp_seq_forward.1} parent=11 // pred_check_branch
          %525 = sbr.rel (%p523) target = $region24
        $region23: #{ocvp_seq_forward.1} parent=11 // pred_region
          _
        $region24: #{ocvp_seq_forward.1} parent=11 // pred_fallthru
          _
        // Predicated region
        $region25: #{ocvp_seq_forward.1} parent=11 // pred_check
          %p526 = pneg %p140
        $region26: #{ocvp_seq_forward.1} parent=11 // pred_check_branch
          %528 = sbr.rel (%p526) target = $region28
        $region27: #{ocvp_seq_forward.1} parent=11 // pred_region
          _
        $region28: #{ocvp_seq_forward.1} parent=11 // pred_fallthru
          _
        // Predicated region
        $region29: #{ocvp_seq_forward.1} parent=11 // pred_check
          %p529 = pneg %p161
        $region30: #{ocvp_seq_forward.1} parent=11 // pred_check_branch
          %531 = sbr.rel (%p529) target = $region32
        $region31: #{ocvp_seq_forward.1} parent=11 // pred_region
          _
        $region32: #{ocvp_seq_forward.1} parent=11 // pred_fallthru
          _
        // Predicated region
        $region33: #{ocvp_seq_forward.1} parent=11 // pred_check
          %p532 = pneg %p182
        $region34: #{ocvp_seq_forward.1} parent=11 // pred_check_branch
          %534 = sbr.rel (%p532) target = $region36
        $region35: #{ocvp_seq_forward.1} parent=11 // pred_region
          _
        $region36: #{ocvp_seq_forward.1} parent=11 // pred_fallthru
          _
        // Predicated region
        $region37: #{ocvp_seq_forward.1} parent=11 // pred_check
          %p535 = pneg %p203
        $region38: #{ocvp_seq_forward.1} parent=11 // pred_check_branch
          %537 = sbr.rel (%p535) target = $region40
        $region39: #{ocvp_seq_forward.1} parent=11 // pred_region
          _
        $region40: #{ocvp_seq_forward.1} parent=11 // pred_fallthru
          _
        // Predicated region
        $region41: #{ocvp_seq_forward.1} parent=11 // pred_check
          %p538 = pneg %p224
        $region42: #{ocvp_seq_forward.1} parent=11 // pred_check_branch
          %540 = sbr.rel (%p538) target = $region44
        $region43: #{ocvp_seq_forward.1} parent=11 // pred_region
          _
        $region44: #{ocvp_seq_forward.1} parent=11 // pred_fallthru
          _
        // Predicated region
        $region45: #{ocvp_seq_forward.1} parent=11 // pred_check
          %p541 = pneg %p245
        $region46: #{ocvp_seq_forward.1} parent=11 // pred_check_branch
          %543 = sbr.rel (%p541) target = $region48
        $region47: #{ocvp_seq_forward.1} parent=11 // pred_region
          _
        $region48: #{ocvp_seq_forward.1} parent=11 // pred_fallthru
          _
        // Predicated region
        $region49: #{ocvp_seq_forward.1} parent=11 // pred_check
          %p544 = pneg %p266
        $region50: #{ocvp_seq_forward.1} parent=11 // pred_check_branch
          %546 = sbr.rel (%p544) target = $region52
        $region51: #{ocvp_seq_forward.1} parent=11 // pred_region
          _
        $region52: #{ocvp_seq_forward.1} parent=11 // pred_fallthru
          _
        // Predicated region
        $region53: #{ocvp_seq_forward.1} parent=11 // pred_check
          %p547 = pneg %p287
        $region54: #{ocvp_seq_forward.1} parent=11 // pred_check_branch
          %549 = sbr.rel (%p547) target = $region56
        $region55: #{ocvp_seq_forward.1} parent=11 // pred_region
          _
        $region56: #{ocvp_seq_forward.1} parent=11 // pred_fallthru
          _
        // Predicated region
        $region57: #{ocvp_seq_forward.1} parent=11 // pred_check
          %p550 = pneg %p308
        $region58: #{ocvp_seq_forward.1} parent=11 // pred_check_branch
          %552 = sbr.rel (%p550) target = $region60
        $region59: #{ocvp_seq_forward.1} parent=11 // pred_region
          _
        $region60: #{ocvp_seq_forward.1} parent=11 // pred_fallthru
          _
        // Predicated region
        $region61: #{ocvp_seq_forward.1} parent=11 // pred_check
          %p553 = pneg %p329
        $region62: #{ocvp_seq_forward.1} parent=11 // pred_check_branch
          %555 = sbr.rel (%p553) target = $region64
        $region63: #{ocvp_seq_forward.1} parent=11 // pred_region
          _
        $region64: #{ocvp_seq_forward.1} parent=11 // pred_fallthru
          _
        // Predicated region
        $region65: #{ocvp_seq_forward.1} parent=11 // pred_check
          %p556 = pneg %p350
        $region66: #{ocvp_seq_forward.1} parent=11 // pred_check_branch
          %558 = sbr.rel (%p556) target = $region68
        $region67: #{ocvp_seq_forward.1} parent=11 // pred_region
          _
        $region68: #{ocvp_seq_forward.1} parent=11 // pred_fallthru
          _
        // Predicated region
        $region69: #{ocvp_seq_forward.1} parent=11 // pred_check
          %p559 = pneg %p371
        $region70: #{ocvp_seq_forward.1} parent=11 // pred_check_branch
          %561 = sbr.rel (%p559) target = $region72
        $region71: #{ocvp_seq_forward.1} parent=11 // pred_region
          _
        $region72: #{ocvp_seq_forward.1} parent=11 // pred_fallthru
          _
        // Predicated region
        $region73: #{ocvp_seq_forward.1} parent=11 // pred_check
          %p562 = pneg %p392
        $region74: #{ocvp_seq_forward.1} parent=11 // pred_check_branch
          %564 = sbr.rel (%p562) target = $region76
        $region75: #{ocvp_seq_forward.1} parent=11 // pred_region
          _
        $region76: #{ocvp_seq_forward.1} parent=11 // pred_fallthru
          _
        // Predicated region
        $region77: #{ocvp_seq_forward.1} parent=11 // pred_check
          %p565 = pneg %p413
        $region78: #{ocvp_seq_forward.1} parent=11 // pred_check_branch
          %567 = sbr.rel (%p565) target = $region80
        $region79: #{ocvp_seq_forward.1} parent=11 // pred_region
          _
        $region80: #{ocvp_seq_forward.1} parent=11 // pred_fallthru
          _
        // Predicated region
        $region81: #{ocvp_seq_forward.1} parent=11 // pred_check
          %p568 = pneg %p434
        $region82: #{ocvp_seq_forward.1} parent=11 // pred_check_branch
          %570 = sbr.rel (%p568) target = $region84
        $region83: #{ocvp_seq_forward.1} parent=11 // pred_region
          _
        $region84: #{ocvp_seq_forward.1} parent=11 // pred_fallthru
          _
        // Predicated region
        $region85: #{ocvp_seq_forward.1} parent=11 // pred_check
          %p571 = pneg %p455
        $region86: #{ocvp_seq_forward.1} parent=11 // pred_check_branch
          %573 = sbr.rel (%p571) target = $region88
        $region87: #{ocvp_seq_forward.1} parent=11 // pred_region
          _
        $region88: #{ocvp_seq_forward.1} parent=11 // pred_fallthru
          _
        // Predicated region
        $region89: #{ocvp_seq_forward.1} parent=11 // pred_check
          %p574 = pneg %p476
        $region90: #{ocvp_seq_forward.1} parent=11 // pred_check_branch
          %576 = sbr.rel (%p574) target = $region92
        $region91: #{ocvp_seq_forward.1} parent=11 // pred_region
          _
        $region92: #{ocvp_seq_forward.1} parent=11 // pred_fallthru
          _
      $region12: #{ocvp_seq_forward.1} parent=5 // pred_fallthru
        _
      %p577 = scmp.lt.s32.totalorder %s30, 2
      // Predicated region
      $region93: #{ocvp_seq_forward.1} parent=5 // pred_check
        %p578 = pneg %p577
      $region94: #{ocvp_seq_forward.1} parent=5 // pred_check_branch
        %580 = sbr.rel (%p578) target = $region96
      $region95: #{ocvp_seq_forward.1} parent=5 // pred_region
        // Predicated region
        $region97: #{ocvp_seq_forward.1} parent=95 // pred_check
          %p581 = pneg %p50
        $region98: #{ocvp_seq_forward.1} parent=95 // pred_check_branch
          %583 = sbr.rel (%p581) target = $region100
        $region99: #{ocvp_seq_forward.1} parent=95 // pred_region
          %s584 = smul.u32 8, %s30
          %p585 = scmp.lt.s32.totalorder %s584, 15
          %s586 = scalar_select %p585, %s584, 15
          %s587 = smul.addr %s586, 8
          %s588 = scalar_lea.vmem %s0, %s587
          %s589 = smul.u32 8, %s30
        $region100: #{ocvp_seq_forward.1} parent=95 // pred_fallthru
          _
      $region96: #{ocvp_seq_forward.1} parent=5 // pred_fallthru
        _
      %p590 = scmp.le.s32.totalorder 1, %s30
      %p591 = scmp.lt.s32.totalorder %s30, 3
      %p592 = pnand %p590, %p591
      %p593 = pneg %p592
      // Predicated region
      $region101: #{ocvp_seq_forward.1} parent=5 // pred_check
        _
      $region102: #{ocvp_seq_forward.1} parent=5 // pred_check_branch
        %595 = sbr.rel (%p592) target = $region104
      $region103: #{ocvp_seq_forward.1} parent=5 // pred_region
        %s596 = ssub.s32 %s30, 1
        %s597 = smul.u32 8, %s35
        %p598 = scmp.lt.s32.totalorder %s597, 15
        %s599 = scalar_select %p598, %s597, 15
        %s600 = smul.addr %s599, 8
        %s601 = scalar_lea.vmem %s0, %s600
        %p602 = pneg %p56
        %p603 = pneg %p53
        %p604 = pneg %p77
        %p605 = pneg %p74
        %p606 = pneg %p98
        %p607 = pneg %p95
        %p608 = pneg %p119
        %p609 = pneg %p116
        %p610 = pneg %p140
        %p611 = pneg %p137
        %p612 = pneg %p161
        %p613 = pneg %p158
        %p614 = pneg %p182
        %p615 = pneg %p179
        %p616 = pneg %p203
        %p617 = pneg %p200
        %p618 = pneg %p224
        %p619 = pneg %p221
        %p620 = pneg %p245
        %p621 = pneg %p242
        %p622 = pneg %p266
        %p623 = pneg %p263
        %p624 = pneg %p287
        %p625 = pneg %p284
        %p626 = pneg %p308
        %p627 = pneg %p305
        %p628 = pneg %p329
        %p629 = pneg %p326
        %p630 = pneg %p350
        %p631 = pneg %p347
        %p632 = pneg %p371
        %p633 = pneg %p368
        %p634 = pneg %p392
        %p635 = pneg %p389
        %p636 = pneg %p413
        %p637 = pneg %p410
        %p638 = pneg %p434
        %p639 = pneg %p431
        %p640 = pneg %p455
        %p641 = pneg %p452
        %p642 = pneg %p476
        %p643 = pneg %p473
        %p644 = pneg %p502
        %p645 = pneg %p499
        %s646 = sand.u32 %s489, 1
        %s647 = scalar_lea.sflag [#allocation3], %s646
        %s648 = sand.u32 %s489, 1
        %s649 = smul.addr %s648, 8
        %s650 = scalar_lea.vmem [#allocation2], %s649
        %s651 = smul.u32 8, %s35
        %p652 = scmp.lt.s32.totalorder %s651, 15
        %s653 = scalar_select %p652, %s651, 15
        %s654 = smul.addr %s653, 8
        %s655 = scalar_lea.vmem %s0, %s654
        %s656 = smul.u32 8, %s35
        %v657 = vld [vmem:[%s655] sm:$0xff]
        %v658 = vld [vmem:[%s655 + $0x8] sm:$0xff]
        %v659 = vld [vmem:[%s655 + $0x10] sm:$0xff]
        %v660 = vld [vmem:[%s655 + $0x18] sm:$0xff]
        %v661 = vld [vmem:[%s655 + $0x20] sm:$0xff]
        %v662 = vld [vmem:[%s655 + $0x28] sm:$0xff]
        %v663 = vld [vmem:[%s655 + $0x30] sm:$0xff]
        %v664 = vld [vmem:[%s655 + $0x38] sm:$0xff]
        %v665 = vld [vmem:[%s5] sm:$0xff]
        %v666 = vld [vmem:[%s5 + $0x8] sm:$0xff]
        %v667 = vld [vmem:[%s6] sm:$0x1]
        %v669 = vlaneseq
        %v670 = vshrl.u32 %v669, 7
        %v671 = vsub.s32 0, %v670
        %v672 = vrot.slane %v667, %v671
        %vm674 = vcmask 130048
        %v676 = vsel %vm674, %v657, 0
        %v679 = vsel %vm674, %v658, 0
        %v682 = vsel %vm674, %v659, 0
        %v685 = vsel %vm674, %v660, 0
        %v688 = vsel %vm674, %v661, 0
        %v691 = vsel %vm674, %v662, 0
        %v694 = vsel %vm674, %v663, 0
        %v697 = vsel %vm674, %v664, 0
        %699 = vmatprep.subr.mxu0 0.0
        %700 = vmatpush1.msra.mxu0 %v665
        %701 = vmatprep.subr.mxu0 0.0
        %702 = vmatpush1.msra.mxu0 %v666
        %703 = vmatprep.subr.mxu0 0.0
        %704 = vmatpush1.msra.mxu0 0.0
        %705 = vmatprep.subr.mxu0 0.0
        %706 = vmatpush1.msra.mxu0 0.0
        %707 = vmatprep.subr.mxu0 0.0
        %708 = vmatpush1.msra.mxu0 0.0
        %709 = vmatprep.subr.mxu0 0.0
        %710 = vmatpush1.msra.mxu0 0.0
        %711 = vmatprep.subr.mxu0 0.0
        %712 = vmatpush1.msra.mxu0 0.0
        %713 = vmatprep.subr.mxu0 0.0
        %714 = vmatpush1.msra.mxu0 0.0
        %715 = vmatprep.subr.mxu0 0.0
        %716 = vmatpush1.msra.mxu0 0.0
        %717 = vmatprep.subr.mxu0 0.0
        %718 = vmatpush1.msra.mxu0 0.0
        %719 = vmatprep.subr.mxu0 0.0
        %720 = vmatpush1.msra.mxu0 0.0
        %721 = vmatprep.subr.mxu0 0.0
        %722 = vmatpush1.msra.mxu0 0.0
        %723 = vmatprep.subr.mxu0 0.0
        %724 = vmatpush1.msra.mxu0 0.0
        %725 = vmatprep.subr.mxu0 0.0
        %726 = vmatpush1.msra.mxu0 0.0
        %727 = vmatprep.subr.mxu0 0.0
        %728 = vmatpush1.msra.mxu0 0.0
        %729 = vmatprep.subr.mxu0 0.0
        %730 = vmatpush1.msra.mxu0 0.0
        %731 = vmatprep.subr.mxu0 0.0
        %732 = vmatpush1.msra.mxu0 0.0
        %733 = vmatprep.subr.mxu0 0.0
        %734 = vmatpush1.msra.mxu0 0.0
        %735 = vmatprep.subr.mxu0 0.0
        %736 = vmatpush1.msra.mxu0 0.0
        %737 = vmatprep.subr.mxu0 0.0
        %738 = vmatpush1.msra.mxu0 0.0
        %739 = vmatprep.subr.mxu0 0.0
        %740 = vmatpush1.msra.mxu0 0.0
        %741 = vmatprep.subr.mxu0 0.0
        %742 = vmatpush1.msra.mxu0 0.0
        %743 = vmatprep.subr.mxu0 0.0
        %744 = vmatpush1.msra.mxu0 0.0
        %745 = vmatprep.subr.mxu0 0.0
        %746 = vmatpush1.msra.mxu0 0.0
        %747 = vmatprep.subr.mxu0 0.0
        %748 = vmatpush1.msra.mxu0 0.0
        %749 = vmatprep.subr.mxu0 0.0
        %750 = vmatpush1.msra.mxu0 0.0
        %751 = vmatprep.subr.mxu0 0.0
        %752 = vmatpush1.msra.mxu0 0.0
        %753 = vmatprep.subr.mxu0 0.0
        %754 = vmatpush1.msra.mxu0 0.0
        %755 = vmatprep.subr.mxu0 0.0
        %756 = vmatpush1.msra.mxu0 0.0
        %757 = vmatprep.subr.mxu0 0.0
        %758 = vmatpush1.msra.mxu0 0.0
        %759 = vmatprep.subr.mxu0 0.0
        %760 = vmatpush1.msra.mxu0 0.0
        %761 = vmatprep.subr.mxu0 0.0
        %762 = vmatpush1.msra.mxu0 0.0
        %763 = vmatprep.mubr.f32.mxu0 0.0
        %764 = vmatmul.mubr.f32.gmra.mrb[0].mxu0 %v676
        %v765 = vpop.f32.mrb[0].mxu0
        %v766 = vadd.f32 %v672, %v765
        %v767 = vpop.f32.mrb[0].mxu0
        %768 = vmatprep.mubr.f32.mxu0 0.0
        %769 = vmatmul.mubr.f32.gmra.mrb[0].mxu0 %v679
        %v770 = vpop.f32.mrb[0].mxu0
        %v771 = vadd.f32 %v672, %v770
        %v772 = vpop.f32.mrb[0].mxu0
        %773 = vmatprep.mubr.f32.mxu0 0.0
        %774 = vmatmul.mubr.f32.gmra.mrb[0].mxu0 %v682
        %v775 = vpop.f32.mrb[0].mxu0
        %v776 = vadd.f32 %v672, %v775
        %v777 = vpop.f32.mrb[0].mxu0
        %778 = vmatprep.mubr.f32.mxu0 0.0
        %779 = vmatmul.mubr.f32.gmra.mrb[0].mxu0 %v685
        %v780 = vpop.f32.mrb[0].mxu0
        %v781 = vadd.f32 %v672, %v780
        %v782 = vpop.f32.mrb[0].mxu0
        %783 = vmatprep.mubr.f32.mxu0 0.0
        %784 = vmatmul.mubr.f32.gmra.mrb[0].mxu0 %v688
        %v785 = vpop.f32.mrb[0].mxu0
        %v786 = vadd.f32 %v672, %v785
        %v787 = vpop.f32.mrb[0].mxu0
        %788 = vmatprep.mubr.f32.mxu0 0.0
        %789 = vmatmul.mubr.f32.gmra.mrb[0].mxu0 %v691
        %v790 = vpop.f32.mrb[0].mxu0
        %v791 = vadd.f32 %v672, %v790
        %v792 = vpop.f32.mrb[0].mxu0
        %793 = vmatprep.mubr.f32.mxu0 0.0
        %794 = vmatmul.mubr.f32.gmra.mrb[0].mxu0 %v694
        %v795 = vpop.f32.mrb[0].mxu0
        %v796 = vadd.f32 %v672, %v795
        %v797 = vpop.f32.mrb[0].mxu0
        %798 = vmatprep.mubr.f32.mxu0 0.0
        %799 = vmatmul.mubr.f32.gmra.mrb[0].mxu0 %v697
        %v800 = vpop.f32.mrb[0].mxu0
        %v801 = vadd.f32 %v672, %v800
        %v802 = vpop.f32.mrb[0].mxu0
        %803 = vdwg.mxu0
        %v804 = vld [vmem:[%s1] sm:$0xff]
        %v805 = vld [vmem:[%s1 + $0x8] sm:$0xff]
        %v806 = vld [vmem:[%s1 + $0x10] sm:$0xff]
        %v807 = vld [vmem:[%s1 + $0x18] sm:$0xff]
        %v808 = vld [vmem:[%s1 + $0x20] sm:$0xff]
        %v809 = vld [vmem:[%s1 + $0x28] sm:$0xff]
        %v810 = vld [vmem:[%s1 + $0x30] sm:$0xff]
        %v811 = vld [vmem:[%s1 + $0x38] sm:$0xff]
        %v812 = vadd.f32 %v766, %v804
        %v813 = vadd.f32 %v771, %v805
        %v814 = vadd.f32 %v776, %v806
        %v815 = vadd.f32 %v781, %v807
        %v816 = vadd.f32 %v786, %v808
        %v817 = vadd.f32 %v791, %v809
        %v818 = vadd.f32 %v796, %v810
        %v819 = vadd.f32 %v801, %v811
        %v820 = vld [vmem:[%s2] sm:$0xff]
        %v821 = vld [vmem:[%s2 + $0x8] sm:$0xff]
        %v822 = vld [vmem:[%s2 + $0x10] sm:$0xff]
        %v823 = vld [vmem:[%s2 + $0x18] sm:$0xff]
        %v824 = vld [vmem:[%s2 + $0x20] sm:$0xff]
        %v825 = vld [vmem:[%s2 + $0x28] sm:$0xff]
        %v826 = vld [vmem:[%s2 + $0x30] sm:$0xff]
        %v827 = vld [vmem:[%s2 + $0x38] sm:$0xff]
        %v828 = vld [vmem:[%s9] sm:$0x1]
        %v829 = vld [vmem:[%s10] sm:$0x1]
        %vm830 = vcmask 261120
        %v831 = vsel %vm830, %v812, 0.0
        %832 = vadd.xlane.f32.xlu0 %v831
        %v833 = vpop.xlane.xlu0 %832
        %v834 = vsel %vm830, %v813, 0.0
        %835 = vadd.xlane.f32.xlu0 %v834
        %v836 = vpop.xlane.xlu0 %835
        %v837 = vsel %vm830, %v814, 0.0
        %838 = vadd.xlane.f32.xlu0 %v837
        %v839 = vpop.xlane.xlu0 %838
        %v840 = vsel %vm830, %v815, 0.0
        %841 = vadd.xlane.f32.xlu0 %v840
        %v842 = vpop.xlane.xlu0 %841
        %v843 = vsel %vm830, %v816, 0.0
        %844 = vadd.xlane.f32.xlu0 %v843
        %v845 = vpop.xlane.xlu0 %844
        %v846 = vsel %vm830, %v817, 0.0
        %847 = vadd.xlane.f32.xlu0 %v846
        %v848 = vpop.xlane.xlu0 %847
        %v849 = vsel %vm830, %v818, 0.0
        %850 = vadd.xlane.f32.xlu0 %v849
        %v851 = vpop.xlane.xlu0 %850
        %v852 = vsel %vm830, %v819, 0.0
        %853 = vadd.xlane.f32.xlu0 %v852
        %v854 = vpop.xlane.xlu0 %853
        %v855 = vrcp.pop 32.0
        %v856 = vmul.f32 %v833, %v855
        %v857 = vmul.f32 %v836, %v855
        %v858 = vmul.f32 %v839, %v855
        %v859 = vmul.f32 %v842, %v855
        %v860 = vmul.f32 %v845, %v855
        %v861 = vmul.f32 %v848, %v855
        %v862 = vmul.f32 %v851, %v855
        %v863 = vmul.f32 %v854, %v855
        %v864 = vsub.f32 %v812, %v856
        %v865 = vsub.f32 %v813, %v857
        %v866 = vsub.f32 %v814, %v858
        %v867 = vsub.f32 %v815, %v859
        %v868 = vsub.f32 %v816, %v860
        %v869 = vsub.f32 %v817, %v861
        %v870 = vsub.f32 %v818, %v862
        %v871 = vsub.f32 %v819, %v863
        %v872 = vmul.f32 %v864, %v864
        %v873 = vmul.f32 %v865, %v865
        %v874 = vmul.f32 %v866, %v866
        %v875 = vmul.f32 %v867, %v867
        %v876 = vmul.f32 %v868, %v868
        %v877 = vmul.f32 %v869, %v869
        %v878 = vmul.f32 %v870, %v870
        %v879 = vmul.f32 %v871, %v871
        %v880 = vsel %vm830, %v872, 0.0
        %881 = vadd.xlane.f32.xlu0 %v880
        %v882 = vpop.xlane.xlu0 %881
        %v883 = vsel %vm830, %v873, 0.0
        %884 = vadd.xlane.f32.xlu0 %v883
        %v885 = vpop.xlane.xlu0 %884
        %v886 = vsel %vm830, %v874, 0.0
        %887 = vadd.xlane.f32.xlu0 %v886
        %v888 = vpop.xlane.xlu0 %887
        %v889 = vsel %vm830, %v875, 0.0
        %890 = vadd.xlane.f32.xlu0 %v889
        %v891 = vpop.xlane.xlu0 %890
        %v892 = vsel %vm830, %v876, 0.0
        %893 = vadd.xlane.f32.xlu0 %v892
        %v894 = vpop.xlane.xlu0 %893
        %v895 = vsel %vm830, %v877, 0.0
        %896 = vadd.xlane.f32.xlu0 %v895
        %v897 = vpop.xlane.xlu0 %896
        %v898 = vsel %vm830, %v878, 0.0
        %899 = vadd.xlane.f32.xlu0 %v898
        %v900 = vpop.xlane.xlu0 %899
        %v901 = vsel %vm830, %v879, 0.0
        %902 = vadd.xlane.f32.xlu0 %v901
        %v903 = vpop.xlane.xlu0 %902
        %v904 = vmul.f32 %v882, %v855
        %v905 = vmul.f32 %v885, %v855
        %v906 = vmul.f32 %v888, %v855
        %v907 = vmul.f32 %v891, %v855
        %v908 = vmul.f32 %v894, %v855
        %v909 = vmul.f32 %v897, %v855
        %v910 = vmul.f32 %v900, %v855
        %v911 = vmul.f32 %v903, %v855
        %v912 = vadd.f32 %v904, 1e-05
        %v913 = vadd.f32 %v905, 1e-05
        %v914 = vadd.f32 %v906, 1e-05
        %v915 = vadd.f32 %v907, 1e-05
        %v916 = vadd.f32 %v908, 1e-05
        %v917 = vadd.f32 %v909, 1e-05
        %v918 = vadd.f32 %v910, 1e-05
        %v919 = vadd.f32 %v911, 1e-05
        %v920 = vrsqrt.pop %v912
        %v921 = vrsqrt.pop %v913
        %v922 = vrsqrt.pop %v914
        %v923 = vrsqrt.pop %v915
        %v924 = vrsqrt.pop %v916
        %v925 = vrsqrt.pop %v917
        %v926 = vrsqrt.pop %v918
        %v927 = vrsqrt.pop %v919
        %v928 = vmul.f32 %v864, %v920
        %v929 = vmul.f32 %v865, %v921
        %v930 = vmul.f32 %v866, %v922
        %v931 = vmul.f32 %v867, %v923
        %v932 = vmul.f32 %v868, %v924
        %v933 = vmul.f32 %v869, %v925
        %v934 = vmul.f32 %v870, %v926
        %v935 = vmul.f32 %v871, %v927
        %v937 = vlaneseq
        %v938 = vshrl.u32 %v937, 7
        %v939 = vsub.s32 0, %v938
        %v940 = vrot.slane %v828, %v939
        %v942 = vmul.f32 %v928, %v940
        %v943 = vmul.f32 %v929, %v940
        %v944 = vmul.f32 %v930, %v940
        %v945 = vmul.f32 %v931, %v940
        %v946 = vmul.f32 %v932, %v940
        %v947 = vmul.f32 %v933, %v940
        %v948 = vmul.f32 %v934, %v940
        %v949 = vmul.f32 %v935, %v940
        %v951 = vlaneseq
        %v952 = vshrl.u32 %v951, 7
        %v953 = vsub.s32 0, %v952
        %v954 = vrot.slane %v829, %v953
        %v956 = vadd.f32 %v942, %v954
        %v957 = vadd.f32 %v943, %v954
        %v958 = vadd.f32 %v944, %v954
        %v959 = vadd.f32 %v945, %v954
        %v960 = vadd.f32 %v946, %v954
        %v961 = vadd.f32 %v947, %v954
        %v962 = vadd.f32 %v948, %v954
        %v963 = vadd.f32 %v949, %v954
        %v964 = vld [vmem:[%s11] sm:$0xff]
        %v965 = vld [vmem:[%s11 + $0x8] sm:$0xff]
        %v966 = vld [vmem:[%s11 + $0x10] sm:$0xff]
        %v967 = vld [vmem:[%s11 + $0x18] sm:$0xff]
        %v968 = vld [vmem:[%s12] sm:$0x1]
        %v970 = vlaneseq
        %v971 = vshrl.u32 %v970, 7
        %v972 = vsub.s32 0, %v971
        %v973 = vrot.slane %v968, %v972
        %v976 = vsel %vm830, %v956, 0
        %v979 = vsel %vm830, %v957, 0
        %v982 = vsel %vm830, %v958, 0
        %v985 = vsel %vm830, %v959, 0
        %v988 = vsel %vm830, %v960, 0
        %v991 = vsel %vm830, %v961, 0
        %v994 = vsel %vm830, %v962, 0
        %v997 = vsel %vm830, %v963, 0
        %999 = vmatprep.subr.mxu0 0.0
        %1000 = vmatpush1.msra.mxu0 %v964
        %1001 = vmatprep.subr.mxu0 0.0
        %1002 = vmatpush1.msra.mxu0 %v965
        %1003 = vmatprep.subr.mxu0 0.0
        %1004 = vmatpush1.msra.mxu0 %v966
        %1005 = vmatprep.subr.mxu0 0.0
        %1006 = vmatpush1.msra.mxu0 %v967
        %1007 = vmatprep.subr.mxu0 0.0
        %1008 = vmatpush1.msra.mxu0 0.0
        %1009 = vmatprep.subr.mxu0 0.0
        %1010 = vmatpush1.msra.mxu0 0.0
        %1011 = vmatprep.subr.mxu0 0.0
        %1012 = vmatpush1.msra.mxu0 0.0
        %1013 = vmatprep.subr.mxu0 0.0
        %1014 = vmatpush1.msra.mxu0 0.0
        %1015 = vmatprep.subr.mxu0 0.0
        %1016 = vmatpush1.msra.mxu0 0.0
        %1017 = vmatprep.subr.mxu0 0.0
        %1018 = vmatpush1.msra.mxu0 0.0
        %1019 = vmatprep.subr.mxu0 0.0
        %1020 = vmatpush1.msra.mxu0 0.0
        %1021 = vmatprep.subr.mxu0 0.0
        %1022 = vmatpush1.msra.mxu0 0.0
        %1023 = vmatprep.subr.mxu0 0.0
        %1024 = vmatpush1.msra.mxu0 0.0
        %1025 = vmatprep.subr.mxu0 0.0
        %1026 = vmatpush1.msra.mxu0 0.0
        %1027 = vmatprep.subr.mxu0 0.0
        %1028 = vmatpush1.msra.mxu0 0.0
        %1029 = vmatprep.subr.mxu0 0.0
        %1030 = vmatpush1.msra.mxu0 0.0
        %1031 = vmatprep.subr.mxu0 0.0
        %1032 = vmatpush1.msra.mxu0 0.0
        %1033 = vmatprep.subr.mxu0 0.0
        %1034 = vmatpush1.msra.mxu0 0.0
        %1035 = vmatprep.subr.mxu0 0.0
        %1036 = vmatpush1.msra.mxu0 0.0
        %1037 = vmatprep.subr.mxu0 0.0
        %1038 = vmatpush1.msra.mxu0 0.0
        %1039 = vmatprep.subr.mxu0 0.0
        %1040 = vmatpush1.msra.mxu0 0.0
        %1041 = vmatprep.subr.mxu0 0.0
        %1042 = vmatpush1.msra.mxu0 0.0
        %1043 = vmatprep.subr.mxu0 0.0
        %1044 = vmatpush1.msra.mxu0 0.0
        %1045 = vmatprep.subr.mxu0 0.0
        %1046 = vmatpush1.msra.mxu0 0.0
        %1047 = vmatprep.subr.mxu0 0.0
        %1048 = vmatpush1.msra.mxu0 0.0
        %1049 = vmatprep.subr.mxu0 0.0
        %1050 = vmatpush1.msra.mxu0 0.0
        %1051 = vmatprep.subr.mxu0 0.0
        %1052 = vmatpush1.msra.mxu0 0.0
        %1053 = vmatprep.subr.mxu0 0.0
        %1054 = vmatpush1.msra.mxu0 0.0
        %1055 = vmatprep.subr.mxu0 0.0
        %1056 = vmatpush1.msra.mxu0 0.0
        %1057 = vmatprep.subr.mxu0 0.0
        %1058 = vmatpush1.msra.mxu0 0.0
        %1059 = vmatprep.subr.mxu0 0.0
        %1060 = vmatpush1.msra.mxu0 0.0
        %1061 = vmatprep.subr.mxu0 0.0
        %1062 = vmatpush1.msra.mxu0 0.0
        %1063 = vmatprep.mubr.f32.mxu0 0.0
        %1064 = vmatmul.mubr.f32.gmra.mrb[0].mxu0 %v976
        %v1065 = vpop.f32.mrb[0].mxu0
        %v1066 = vadd.f32 %v973, %v1065
        %v1067 = vpop.f32.mrb[0].mxu0
        %1068 = vmatprep.mubr.f32.mxu0 0.0
        %1069 = vmatmul.mubr.f32.gmra.mrb[0].mxu0 %v979
        %v1070 = vpop.f32.mrb[0].mxu0
        %v1071 = vadd.f32 %v973, %v1070
        %v1072 = vpop.f32.mrb[0].mxu0
        %1073 = vmatprep.mubr.f32.mxu0 0.0
        %1074 = vmatmul.mubr.f32.gmra.mrb[0].mxu0 %v982
        %v1075 = vpop.f32.mrb[0].mxu0
        %v1076 = vadd.f32 %v973, %v1075
        %v1077 = vpop.f32.mrb[0].mxu0
        %1078 = vmatprep.mubr.f32.mxu0 0.0
        %1079 = vmatmul.mubr.f32.gmra.mrb[0].mxu0 %v985
        %v1080 = vpop.f32.mrb[0].mxu0
        %v1081 = vadd.f32 %v973, %v1080
        %v1082 = vpop.f32.mrb[0].mxu0
        %1083 = vmatprep.mubr.f32.mxu0 0.0
        %1084 = vmatmul.mubr.f32.gmra.mrb[0].mxu0 %v988
        %v1085 = vpop.f32.mrb[0].mxu0
        %v1086 = vadd.f32 %v973, %v1085
        %v1087 = vpop.f32.mrb[0].mxu0
        %1088 = vmatprep.mubr.f32.mxu0 0.0
        %1089 = vmatmul.mubr.f32.gmra.mrb[0].mxu0 %v991
        %v1090 = vpop.f32.mrb[0].mxu0
        %v1091 = vadd.f32 %v973, %v1090
        %v1092 = vpop.f32.mrb[0].mxu0
        %1093 = vmatprep.mubr.f32.mxu0 0.0
        %1094 = vmatmul.mubr.f32.gmra.mrb[0].mxu0 %v994
        %v1095 = vpop.f32.mrb[0].mxu0
        %v1096 = vadd.f32 %v973, %v1095
        %v1097 = vpop.f32.mrb[0].mxu0
        %1098 = vmatprep.mubr.f32.mxu0 0.0
        %1099 = vmatmul.mubr.f32.gmra.mrb[0].mxu0 %v997
        %v1100 = vpop.f32.mrb[0].mxu0
        %v1101 = vadd.f32 %v973, %v1100
        %v1102 = vpop.f32.mrb[0].mxu0
        %1103 = vdwg.mxu0
        %v1104 = vld [vmem:[%s13] sm:$0xff]
        %v1105 = vld [vmem:[%s13 + $0x8] sm:$0xff]
        %v1106 = vld [vmem:[%s13 + $0x10] sm:$0xff]
        %v1107 = vld [vmem:[%s13 + $0x18] sm:$0xff]
        %v1108 = vld [vmem:[%s4] sm:$0x1]
        %v1110 = vlaneseq
        %v1111 = vshrl.u32 %v1110, 7
        %v1112 = vsub.s32 0, %v1111
        %v1113 = vrot.slane %v1108, %v1112
        %1114 = vrot.lane.b32.xlu0 %v1113, 32
        %v1115 = vpop.permute.xlu0 %1114
        %v1117 = vmul.f32 %v1066, %v1115
        %v1118 = vmul.f32 %v1071, %v1115
        %v1119 = vmul.f32 %v1076, %v1115
        %v1120 = vmul.f32 %v1081, %v1115
        %v1121 = vmul.f32 %v1086, %v1115
        %v1122 = vmul.f32 %v1091, %v1115
        %v1123 = vmul.f32 %v1096, %v1115
        %v1124 = vmul.f32 %v1101, %v1115
        %s1125 = scalar_lea.vmem %s4, 1
        %v1126 = vld [vmem:[%s1125] sm:$0x1]
        %v1128 = vlaneseq
        %v1129 = vshrl.u32 %v1128, 7
        %v1130 = vsub.s32 0, %v1129
        %v1131 = vrot.slane %v1126, %v1130
        %1132 = vrot.lane.b32.xlu0 %v1131, 32
        %v1133 = vpop.permute.xlu0 %1132
        %v1135 = vmul.f32 %v1066, %v1133
        %v1136 = vmul.f32 %v1071, %v1133
        %v1137 = vmul.f32 %v1076, %v1133
        %v1138 = vmul.f32 %v1081, %v1133
        %v1139 = vmul.f32 %v1086, %v1133
        %v1140 = vmul.f32 %v1091, %v1133
        %v1141 = vmul.f32 %v1096, %v1133
        %v1142 = vmul.f32 %v1101, %v1133
        %s1143 = scalar_lea.vmem %s4, 2
        %v1144 = vld [vmem:[%s1143] sm:$0x1]
        %v1146 = vlaneseq
        %v1147 = vshrl.u32 %v1146, 7
        %v1148 = vsub.s32 0, %v1147
        %v1149 = vrot.slane %v1144, %v1148
        %1150 = vrot.lane.b32.xlu0 %v1149, 32
        %v1151 = vpop.permute.xlu0 %1150
        %v1153 = vmul.f32 %v1066, %v1151
        %v1154 = vmul.f32 %v1071, %v1151
        %v1155 = vmul.f32 %v1076, %v1151
        %v1156 = vmul.f32 %v1081, %v1151
        %v1157 = vmul.f32 %v1086, %v1151
        %v1158 = vmul.f32 %v1091, %v1151
        %v1159 = vmul.f32 %v1096, %v1151
        %v1160 = vmul.f32 %v1101, %v1151
        %s1161 = scalar_lea.vmem %s4, 3
        %v1162 = vld [vmem:[%s1161] sm:$0x1]
        %v1164 = vlaneseq
        %v1165 = vshrl.u32 %v1164, 7
        %v1166 = vsub.s32 0, %v1165
        %v1167 = vrot.slane %v1162, %v1166
        %1168 = vrot.lane.b32.xlu0 %v1167, 32
        %v1169 = vpop.permute.xlu0 %1168
        %v1171 = vmul.f32 %v1066, %v1169
        %v1172 = vmul.f32 %v1071, %v1169
        %v1173 = vmul.f32 %v1076, %v1169
        %v1174 = vmul.f32 %v1081, %v1169
        %v1175 = vmul.f32 %v1086, %v1169
        %v1176 = vmul.f32 %v1091, %v1169
        %v1177 = vmul.f32 %v1096, %v1169
        %v1178 = vmul.f32 %v1101, %v1169
        %1179 = vrot.lane.b32.xlu0 %v1113, 64
        %v1180 = vpop.permute.xlu0 %1179
        %v1182 = vmul.f32 %v1066, %v1180
        %v1183 = vmul.f32 %v1071, %v1180
        %v1184 = vmul.f32 %v1076, %v1180
        %v1185 = vmul.f32 %v1081, %v1180
        %v1186 = vmul.f32 %v1086, %v1180
        %v1187 = vmul.f32 %v1091, %v1180
        %v1188 = vmul.f32 %v1096, %v1180
        %v1189 = vmul.f32 %v1101, %v1180
        %1190 = vrot.lane.b32.xlu0 %v1131, 64
        %v1191 = vpop.permute.xlu0 %1190
        %v1193 = vmul.f32 %v1066, %v1191
        %v1194 = vmul.f32 %v1071, %v1191
        %v1195 = vmul.f32 %v1076, %v1191
        %v1196 = vmul.f32 %v1081, %v1191
        %v1197 = vmul.f32 %v1086, %v1191
        %v1198 = vmul.f32 %v1091, %v1191
        %v1199 = vmul.f32 %v1096, %v1191
        %v1200 = vmul.f32 %v1101, %v1191
        %1201 = vrot.lane.b32.xlu0 %v1149, 64
        %v1202 = vpop.permute.xlu0 %1201
        %v1204 = vmul.f32 %v1066, %v1202
        %v1205 = vmul.f32 %v1071, %v1202
        %v1206 = vmul.f32 %v1076, %v1202
        %v1207 = vmul.f32 %v1081, %v1202
        %v1208 = vmul.f32 %v1086, %v1202
        %v1209 = vmul.f32 %v1091, %v1202
        %v1210 = vmul.f32 %v1096, %v1202
        %v1211 = vmul.f32 %v1101, %v1202
        %1212 = vrot.lane.b32.xlu0 %v1167, 64
        %v1213 = vpop.permute.xlu0 %1212
        %v1215 = vmul.f32 %v1066, %v1213
        %v1216 = vmul.f32 %v1071, %v1213
        %v1217 = vmul.f32 %v1076, %v1213
        %v1218 = vmul.f32 %v1081, %v1213
        %v1219 = vmul.f32 %v1086, %v1213
        %v1220 = vmul.f32 %v1091, %v1213
        %v1221 = vmul.f32 %v1096, %v1213
        %v1222 = vmul.f32 %v1101, %v1213
        %1255 = vrot.lane.b32.xlu0 %v1117, 96
        %v1256 = vpop.permute.xlu0 %1255
        %1257 = vrot.lane.b32.xlu0 %v1118, 96
        %v1258 = vpop.permute.xlu0 %1257
        %1259 = vrot.lane.b32.xlu0 %v1119, 96
        %v1260 = vpop.permute.xlu0 %1259
        %1261 = vrot.lane.b32.xlu0 %v1120, 96
        %v1262 = vpop.permute.xlu0 %1261
        %1263 = vrot.lane.b32.xlu0 %v1121, 96
        %v1264 = vpop.permute.xlu0 %1263
        %1265 = vrot.lane.b32.xlu0 %v1122, 96
        %v1266 = vpop.permute.xlu0 %1265
        %1267 = vrot.lane.b32.xlu0 %v1123, 96
        %v1268 = vpop.permute.xlu0 %1267
        %1269 = vrot.lane.b32.xlu0 %v1124, 96
        %v1270 = vpop.permute.xlu0 %1269
        %1271 = vrot.lane.b32.xlu0 %v1135, 96
        %v1272 = vpop.permute.xlu0 %1271
        %1273 = vrot.lane.b32.xlu0 %v1136, 96
        %v1274 = vpop.permute.xlu0 %1273
        %1275 = vrot.lane.b32.xlu0 %v1137, 96
        %v1276 = vpop.permute.xlu0 %1275
        %1277 = vrot.lane.b32.xlu0 %v1138, 96
        %v1278 = vpop.permute.xlu0 %1277
        %1279 = vrot.lane.b32.xlu0 %v1139, 96
        %v1280 = vpop.permute.xlu0 %1279
        %1281 = vrot.lane.b32.xlu0 %v1140, 96
        %v1282 = vpop.permute.xlu0 %1281
        %1283 = vrot.lane.b32.xlu0 %v1141, 96
        %v1284 = vpop.permute.xlu0 %1283
        %1285 = vrot.lane.b32.xlu0 %v1142, 96
        %v1286 = vpop.permute.xlu0 %1285
        %1287 = vrot.lane.b32.xlu0 %v1153, 96
        %v1288 = vpop.permute.xlu0 %1287
        %1289 = vrot.lane.b32.xlu0 %v1154, 96
        %v1290 = vpop.permute.xlu0 %1289
        %1291 = vrot.lane.b32.xlu0 %v1155, 96
        %v1292 = vpop.permute.xlu0 %1291
        %1293 = vrot.lane.b32.xlu0 %v1156, 96
        %v1294 = vpop.permute.xlu0 %1293
        %1295 = vrot.lane.b32.xlu0 %v1157, 96
        %v1296 = vpop.permute.xlu0 %1295
        %1297 = vrot.lane.b32.xlu0 %v1158, 96
        %v1298 = vpop.permute.xlu0 %1297
        %1299 = vrot.lane.b32.xlu0 %v1159, 96
        %v1300 = vpop.permute.xlu0 %1299
        %1301 = vrot.lane.b32.xlu0 %v1160, 96
        %v1302 = vpop.permute.xlu0 %1301
        %1303 = vrot.lane.b32.xlu0 %v1171, 96
        %v1304 = vpop.permute.xlu0 %1303
        %1305 = vrot.lane.b32.xlu0 %v1172, 96
        %v1306 = vpop.permute.xlu0 %1305
        %1307 = vrot.lane.b32.xlu0 %v1173, 96
        %v1308 = vpop.permute.xlu0 %1307
        %1309 = vrot.lane.b32.xlu0 %v1174, 96
        %v1310 = vpop.permute.xlu0 %1309
        %1311 = vrot.lane.b32.xlu0 %v1175, 96
        %v1312 = vpop.permute.xlu0 %1311
        %1313 = vrot.lane.b32.xlu0 %v1176, 96
        %v1314 = vpop.permute.xlu0 %1313
        %1315 = vrot.lane.b32.xlu0 %v1177, 96
        %v1316 = vpop.permute.xlu0 %1315
        %1317 = vrot.lane.b32.xlu0 %v1178, 96
        %v1318 = vpop.permute.xlu0 %1317
        %v1320 = vsel %vm830, %v1066, 0
        %v1323 = vsel %vm830, %v1071, 0
        %v1326 = vsel %vm830, %v1076, 0
        %v1329 = vsel %vm830, %v1081, 0
        %v1332 = vsel %vm830, %v1086, 0
        %v1335 = vsel %vm830, %v1091, 0
        %v1338 = vsel %vm830, %v1096, 0
        %v1341 = vsel %vm830, %v1101, 0
        %v1343 = vsel %vm830, %v1256, 0
        %v1345 = vsel %vm830, %v1258, 0
        %v1347 = vsel %vm830, %v1260, 0
        %v1349 = vsel %vm830, %v1262, 0
        %v1351 = vsel %vm830, %v1264, 0
        %v1353 = vsel %vm830, %v1266, 0
        %v1355 = vsel %vm830, %v1268, 0
        %v1357 = vsel %vm830, %v1270, 0
        %v1359 = vsel %vm830, %v1272, 0
        %v1361 = vsel %vm830, %v1274, 0
        %v1363 = vsel %vm830, %v1276, 0
        %v1365 = vsel %vm830, %v1278, 0
        %v1367 = vsel %vm830, %v1280, 0
        %v1369 = vsel %vm830, %v1282, 0
        %v1371 = vsel %vm830, %v1284, 0
        %v1373 = vsel %vm830, %v1286, 0
        %v1375 = vsel %vm830, %v1288, 0
        %v1377 = vsel %vm830, %v1290, 0
        %v1379 = vsel %vm830, %v1292, 0
        %v1381 = vsel %vm830, %v1294, 0
        %v1383 = vsel %vm830, %v1296, 0
        %v1385 = vsel %vm830, %v1298, 0
        %v1387 = vsel %vm830, %v1300, 0
        %v1389 = vsel %vm830, %v1302, 0
        %v1391 = vsel %vm830, %v1304, 0
        %v1393 = vsel %vm830, %v1306, 0
        %v1395 = vsel %vm830, %v1308, 0
        %v1397 = vsel %vm830, %v1310, 0
        %v1399 = vsel %vm830, %v1312, 0
        %v1401 = vsel %vm830, %v1314, 0
        %v1403 = vsel %vm830, %v1316, 0
        %v1405 = vsel %vm830, %v1318, 0
        %1407 = vmatprep.subr.mxu0 0.0
        %1408 = vmatpush1.xpose.msra.mxu0 %v1343
        %1409 = vmatprep.subr.mxu0 0.0
        %1410 = vmatpush1.xpose.msra.mxu0 %v1345
        %1411 = vmatprep.subr.mxu0 0.0
        %1412 = vmatpush1.xpose.msra.mxu0 %v1347
        %1413 = vmatprep.subr.mxu0 0.0
        %1414 = vmatpush1.xpose.msra.mxu0 %v1349
        %1415 = vmatprep.subr.mxu0 0.0
        %1416 = vmatpush1.xpose.msra.mxu0 %v1351
        %1417 = vmatprep.subr.mxu0 0.0
        %1418 = vmatpush1.xpose.msra.mxu0 %v1353
        %1419 = vmatprep.subr.mxu0 0.0
        %1420 = vmatpush1.xpose.msra.mxu0 %v1355
        %1421 = vmatprep.subr.mxu0 0.0
        %1422 = vmatpush1.xpose.msra.mxu0 %v1357
        %1423 = vmatprep.subr.mxu0 0.0
        %1424 = vmatpush1.xpose.msra.mxu0 %v1359
        %1425 = vmatprep.subr.mxu0 0.0
        %1426 = vmatpush1.xpose.msra.mxu0 %v1361
        %1427 = vmatprep.subr.mxu0 0.0
        %1428 = vmatpush1.xpose.msra.mxu0 %v1363
        %1429 = vmatprep.subr.mxu0 0.0
        %1430 = vmatpush1.xpose.msra.mxu0 %v1365
        %1431 = vmatprep.subr.mxu0 0.0
        %1432 = vmatpush1.xpose.msra.mxu0 %v1367
        %1433 = vmatprep.subr.mxu0 0.0
        %1434 = vmatpush1.xpose.msra.mxu0 %v1369
        %1435 = vmatprep.subr.mxu0 0.0
        %1436 = vmatpush1.xpose.msra.mxu0 %v1371
        %1437 = vmatprep.subr.mxu0 0.0
        %1438 = vmatpush1.xpose.msra.mxu0 %v1373
        %1439 = vmatprep.subr.mxu0 0.0
        %1440 = vmatpush1.xpose.msra.mxu0 %v1375
        %1441 = vmatprep.subr.mxu0 0.0
        %1442 = vmatpush1.xpose.msra.mxu0 %v1377
        %1443 = vmatprep.subr.mxu0 0.0
        %1444 = vmatpush1.xpose.msra.mxu0 %v1379
        %1445 = vmatprep.subr.mxu0 0.0
        %1446 = vmatpush1.xpose.msra.mxu0 %v1381
        %1447 = vmatprep.subr.mxu0 0.0
        %1448 = vmatpush1.xpose.msra.mxu0 %v1383
        %1449 = vmatprep.subr.mxu0 0.0
        %1450 = vmatpush1.xpose.msra.mxu0 %v1385
        %1451 = vmatprep.subr.mxu0 0.0
        %1452 = vmatpush1.xpose.msra.mxu0 %v1387
        %1453 = vmatprep.subr.mxu0 0.0
        %1454 = vmatpush1.xpose.msra.mxu0 %v1389
        %1455 = vmatprep.subr.mxu0 0.0
        %1456 = vmatpush1.xpose.msra.mxu0 %v1391
        %1457 = vmatprep.subr.mxu0 0.0
        %1458 = vmatpush1.xpose.msra.mxu0 %v1393
        %1459 = vmatprep.subr.mxu0 0.0
        %1460 = vmatpush1.xpose.msra.mxu0 %v1395
        %1461 = vmatprep.subr.mxu0 0.0
        %1462 = vmatpush1.xpose.msra.mxu0 %v1397
        %1463 = vmatprep.subr.mxu0 0.0
        %1464 = vmatpush1.xpose.msra.mxu0 %v1399
        %1465 = vmatprep.subr.mxu0 0.0
        %1466 = vmatpush1.xpose.msra.mxu0 %v1401
        %1467 = vmatprep.subr.mxu0 0.0
        %1468 = vmatpush1.xpose.msra.mxu0 %v1403
        %1469 = vmatprep.subr.mxu0 0.0
        %1470 = vmatpush1.xpose.msra.mxu0 %v1405
        %1471 = vmatprep.mubr.f32.mxu0 0.0
        %1472 = vmatmul.mubr.f32.gmra.mrb[0].mxu0 %v1320
        %v1473 = vpop.f32.mrb[0].mxu0
        %v1474 = vadd.f32 0.0, %v1473
        %v1475 = vpop.f32.mrb[0].mxu0
        %v1476 = vadd.f32 0.0, %v1475
        %1477 = vmatprep.mubr.f32.mxu0 0.0
        %1478 = vmatmul.mubr.f32.gmra.mrb[0].mxu0 %v1323
        %v1479 = vpop.f32.mrb[0].mxu0
        %v1480 = vadd.f32 0.0, %v1479
        %v1481 = vpop.f32.mrb[0].mxu0
        %v1482 = vadd.f32 0.0, %v1481
        %1483 = vmatprep.mubr.f32.mxu0 0.0
        %1484 = vmatmul.mubr.f32.gmra.mrb[0].mxu0 %v1326
        %v1485 = vpop.f32.mrb[0].mxu0
        %v1486 = vadd.f32 0.0, %v1485
        %v1487 = vpop.f32.mrb[0].mxu0
        %v1488 = vadd.f32 0.0, %v1487
        %1489 = vmatprep.mubr.f32.mxu0 0.0
        %1490 = vmatmul.mubr.f32.gmra.mrb[0].mxu0 %v1329
        %v1491 = vpop.f32.mrb[0].mxu0
        %v1492 = vadd.f32 0.0, %v1491
        %v1493 = vpop.f32.mrb[0].mxu0
        %v1494 = vadd.f32 0.0, %v1493
        %1495 = vmatprep.mubr.f32.mxu0 0.0
        %1496 = vmatmul.mubr.f32.gmra.mrb[0].mxu0 %v1332
        %v1497 = vpop.f32.mrb[0].mxu0
        %v1498 = vadd.f32 0.0, %v1497
        %v1499 = vpop.f32.mrb[0].mxu0
        %v1500 = vadd.f32 0.0, %v1499
        %1501 = vmatprep.mubr.f32.mxu0 0.0
        %1502 = vmatmul.mubr.f32.gmra.mrb[0].mxu0 %v1335
        %v1503 = vpop.f32.mrb[0].mxu0
        %v1504 = vadd.f32 0.0, %v1503
        %v1505 = vpop.f32.mrb[0].mxu0
        %v1506 = vadd.f32 0.0, %v1505
        %1507 = vmatprep.mubr.f32.mxu0 0.0
        %1508 = vmatmul.mubr.f32.gmra.mrb[0].mxu0 %v1338
        %v1509 = vpop.f32.mrb[0].mxu0
        %v1510 = vadd.f32 0.0, %v1509
        %v1511 = vpop.f32.mrb[0].mxu0
        %v1512 = vadd.f32 0.0, %v1511
        %1513 = vmatprep.mubr.f32.mxu0 0.0
        %1514 = vmatmul.mubr.f32.gmra.mrb[0].mxu0 %v1341
        %v1515 = vpop.f32.mrb[0].mxu0
        %v1516 = vadd.f32 0.0, %v1515
        %v1517 = vpop.f32.mrb[0].mxu0
        %v1518 = vadd.f32 0.0, %v1517
        %1519 = vdwg.mxu0
        %v1520 = vadd.f32 %v1474, %v820
        %v1521 = vadd.f32 %v1480, %v821
        %v1522 = vadd.f32 %v1486, %v822
        %v1523 = vadd.f32 %v1492, %v823
        %v1524 = vadd.f32 %v1498, %v824
        %v1525 = vadd.f32 %v1504, %v825
        %v1526 = vadd.f32 %v1510, %v826
        %v1527 = vadd.f32 %v1516, %v827
        %vm1528 = vcmask 523264
        %v1529 = vsel %vm1528, %v1520, -inf
        %1530 = vmax.xlane.f32.xlu0 %v1529
        %v1531 = vpop.xlane.xlu0 %1530
        %v1532 = vsel %vm1528, %v1521, -inf
        %1533 = vmax.xlane.f32.xlu0 %v1532
        %v1534 = vpop.xlane.xlu0 %1533
        %v1535 = vsel %vm1528, %v1522, -inf
        %1536 = vmax.xlane.f32.xlu0 %v1535
        %v1537 = vpop.xlane.xlu0 %1536
        %v1538 = vsel %vm1528, %v1523, -inf
        %1539 = vmax.xlane.f32.xlu0 %v1538
        %v1540 = vpop.xlane.xlu0 %1539
        %v1541 = vsel %vm1528, %v1524, -inf
        %1542 = vmax.xlane.f32.xlu0 %v1541
        %v1543 = vpop.xlane.xlu0 %1542
        %v1544 = vsel %vm1528, %v1525, -inf
        %1545 = vmax.xlane.f32.xlu0 %v1544
        %v1546 = vpop.xlane.xlu0 %1545
        %v1547 = vsel %vm1528, %v1526, -inf
        %1548 = vmax.xlane.f32.xlu0 %v1547
        %v1549 = vpop.xlane.xlu0 %1548
        %v1550 = vsel %vm1528, %v1527, -inf
        %1551 = vmax.xlane.f32.xlu0 %v1550
        %v1552 = vpop.xlane.xlu0 %1551
        %v1553 = vsub.f32 %v1520, %v1531
        %v1554 = vsub.f32 %v1521, %v1534
        %v1555 = vsub.f32 %v1522, %v1537
        %v1556 = vsub.f32 %v1523, %v1540
        %v1557 = vsub.f32 %v1524, %v1543
        %v1558 = vsub.f32 %v1525, %v1546
        %v1559 = vsub.f32 %v1526, %v1549
        %v1560 = vsub.f32 %v1527, %v1552
        %v1561 = vmul.f32 %v1553, 1.442695
        %v1562 = vpow.pop %v1561
        %v1563 = vmul.f32 %v1554, 1.442695
        %v1564 = vpow.pop %v1563
        %v1565 = vmul.f32 %v1555, 1.442695
        %v1566 = vpow.pop %v1565
        %v1567 = vmul.f32 %v1556, 1.442695
        %v1568 = vpow.pop %v1567
        %v1569 = vmul.f32 %v1557, 1.442695
        %v1570 = vpow.pop %v1569
        %v1571 = vmul.f32 %v1558, 1.442695
        %v1572 = vpow.pop %v1571
        %v1573 = vmul.f32 %v1559, 1.442695
        %v1574 = vpow.pop %v1573
        %v1575 = vmul.f32 %v1560, 1.442695
        %v1576 = vpow.pop %v1575
        %v1577 = vsel %vm1528, %v1562, 0.0
        %1578 = vadd.xlane.f32.xlu0 %v1577
        %v1579 = vpop.xlane.xlu0 %1578
        %v1580 = vsel %vm1528, %v1564, 0.0
        %1581 = vadd.xlane.f32.xlu0 %v1580
        %v1582 = vpop.xlane.xlu0 %1581
        %v1583 = vsel %vm1528, %v1566, 0.0
        %1584 = vadd.xlane.f32.xlu0 %v1583
        %v1585 = vpop.xlane.xlu0 %1584
        %v1586 = vsel %vm1528, %v1568, 0.0
        %1587 = vadd.xlane.f32.xlu0 %v1586
        %v1588 = vpop.xlane.xlu0 %1587
        %v1589 = vsel %vm1528, %v1570, 0.0
        %1590 = vadd.xlane.f32.xlu0 %v1589
        %v1591 = vpop.xlane.xlu0 %1590
        %v1592 = vsel %vm1528, %v1572, 0.0
        %1593 = vadd.xlane.f32.xlu0 %v1592
        %v1594 = vpop.xlane.xlu0 %1593
        %v1595 = vsel %vm1528, %v1574, 0.0
        %1596 = vadd.xlane.f32.xlu0 %v1595
        %v1597 = vpop.xlane.xlu0 %1596
        %v1598 = vsel %vm1528, %v1576, 0.0
        %1599 = vadd.xlane.f32.xlu0 %v1598
        %v1600 = vpop.xlane.xlu0 %1599
        %v1601 = vrcp.pop %v1579
        %v1602 = vrcp.pop %v1582
        %v1603 = vrcp.pop %v1585
        %v1604 = vrcp.pop %v1588
        %v1605 = vrcp.pop %v1591
        %v1606 = vrcp.pop %v1594
        %v1607 = vrcp.pop %v1597
        %v1608 = vrcp.pop %v1600
        %v1609 = vmul.f32 %v1562, %v1601
        %v1610 = vmul.f32 %v1564, %v1602
        %v1611 = vmul.f32 %v1566, %v1603
        %v1612 = vmul.f32 %v1568, %v1604
        %v1613 = vmul.f32 %v1570, %v1605
        %v1614 = vmul.f32 %v1572, %v1606
        %v1615 = vmul.f32 %v1574, %v1607
        %v1616 = vmul.f32 %v1576, %v1608
        %1625 = vrot.lane.b32.xlu0 %v820, 64
        %v1626 = vpop.permute.xlu0 %1625
        %1627 = vrot.lane.b32.xlu0 %v821, 64
        %v1628 = vpop.permute.xlu0 %1627
        %1629 = vrot.lane.b32.xlu0 %v822, 64
        %v1630 = vpop.permute.xlu0 %1629
        %1631 = vrot.lane.b32.xlu0 %v823, 64
        %v1632 = vpop.permute.xlu0 %1631
        %1633 = vrot.lane.b32.xlu0 %v824, 64
        %v1634 = vpop.permute.xlu0 %1633
        %1635 = vrot.lane.b32.xlu0 %v825, 64
        %v1636 = vpop.permute.xlu0 %1635
        %1637 = vrot.lane.b32.xlu0 %v826, 64
        %v1638 = vpop.permute.xlu0 %1637
        %1639 = vrot.lane.b32.xlu0 %v827, 64
        %v1640 = vpop.permute.xlu0 %1639
        %v1649 = vadd.f32 %v1474, %v1626
        %v1650 = vadd.f32 %v1480, %v1628
        %v1651 = vadd.f32 %v1486, %v1630
        %v1652 = vadd.f32 %v1492, %v1632
        %v1653 = vadd.f32 %v1498, %v1634
        %v1654 = vadd.f32 %v1504, %v1636
        %v1655 = vadd.f32 %v1510, %v1638
        %v1656 = vadd.f32 %v1516, %v1640
        %vm1657 = vcmask 1048064
        %v1658 = vsel %vm1657, %v1649, -inf
        %1659 = vmax.xlane.f32.xlu0 %v1658
        %v1660 = vpop.xlane.xlu0 %1659
        %v1661 = vsel %vm1657, %v1650, -inf
        %1662 = vmax.xlane.f32.xlu0 %v1661
        %v1663 = vpop.xlane.xlu0 %1662
        %v1664 = vsel %vm1657, %v1651, -inf
        %1665 = vmax.xlane.f32.xlu0 %v1664
        %v1666 = vpop.xlane.xlu0 %1665
        %v1667 = vsel %vm1657, %v1652, -inf
        %1668 = vmax.xlane.f32.xlu0 %v1667
        %v1669 = vpop.xlane.xlu0 %1668
        %v1670 = vsel %vm1657, %v1653, -inf
        %1671 = vmax.xlane.f32.xlu0 %v1670
        %v1672 = vpop.xlane.xlu0 %1671
        %v1673 = vsel %vm1657, %v1654, -inf
        %1674 = vmax.xlane.f32.xlu0 %v1673
        %v1675 = vpop.xlane.xlu0 %1674
        %v1676 = vsel %vm1657, %v1655, -inf
        %1677 = vmax.xlane.f32.xlu0 %v1676
        %v1678 = vpop.xlane.xlu0 %1677
        %v1679 = vsel %vm1657, %v1656, -inf
        %1680 = vmax.xlane.f32.xlu0 %v1679
        %v1681 = vpop.xlane.xlu0 %1680
        %v1682 = vsub.f32 %v1649, %v1660
        %v1683 = vsub.f32 %v1650, %v1663
        %v1684 = vsub.f32 %v1651, %v1666
        %v1685 = vsub.f32 %v1652, %v1669
        %v1686 = vsub.f32 %v1653, %v1672
        %v1687 = vsub.f32 %v1654, %v1675
        %v1688 = vsub.f32 %v1655, %v1678
        %v1689 = vsub.f32 %v1656, %v1681
        %v1690 = vmul.f32 %v1682, 1.442695
        %v1691 = vpow.pop %v1690
        %v1692 = vmul.f32 %v1683, 1.442695
        %v1693 = vpow.pop %v1692
        %v1694 = vmul.f32 %v1684, 1.442695
        %v1695 = vpow.pop %v1694
        %v1696 = vmul.f32 %v1685, 1.442695
        %v1697 = vpow.pop %v1696
        %v1698 = vmul.f32 %v1686, 1.442695
        %v1699 = vpow.pop %v1698
        %v1700 = vmul.f32 %v1687, 1.442695
        %v1701 = vpow.pop %v1700
        %v1702 = vmul.f32 %v1688, 1.442695
        %v1703 = vpow.pop %v1702
        %v1704 = vmul.f32 %v1689, 1.442695
        %v1705 = vpow.pop %v1704
        %1714 = vrot.lane.b32.xlu0 %v1691, 64
        %v1715 = vpop.permute.xlu0 %1714
        %1716 = vrot.lane.b32.xlu0 %v1693, 64
        %v1717 = vpop.permute.xlu0 %1716
        %1718 = vrot.lane.b32.xlu0 %v1695, 64
        %v1719 = vpop.permute.xlu0 %1718
        %1720 = vrot.lane.b32.xlu0 %v1697, 64
        %v1721 = vpop.permute.xlu0 %1720
        %1722 = vrot.lane.b32.xlu0 %v1699, 64
        %v1723 = vpop.permute.xlu0 %1722
        %1724 = vrot.lane.b32.xlu0 %v1701, 64
        %v1725 = vpop.permute.xlu0 %1724
        %1726 = vrot.lane.b32.xlu0 %v1703, 64
        %v1727 = vpop.permute.xlu0 %1726
        %1728 = vrot.lane.b32.xlu0 %v1705, 64
        %v1729 = vpop.permute.xlu0 %1728
        %v1738 = vsel %vm1528, %v1715, 0.0
        %1739 = vadd.xlane.f32.xlu0 %v1738
        %v1740 = vpop.xlane.xlu0 %1739
        %v1741 = vsel %vm1528, %v1717, 0.0
        %1742 = vadd.xlane.f32.xlu0 %v1741
        %v1743 = vpop.xlane.xlu0 %1742
        %v1744 = vsel %vm1528, %v1719, 0.0
        %1745 = vadd.xlane.f32.xlu0 %v1744
        %v1746 = vpop.xlane.xlu0 %1745
        %v1747 = vsel %vm1528, %v1721, 0.0
        %1748 = vadd.xlane.f32.xlu0 %v1747
        %v1749 = vpop.xlane.xlu0 %1748
        %v1750 = vsel %vm1528, %v1723, 0.0
        %1751 = vadd.xlane.f32.xlu0 %v1750
        %v1752 = vpop.xlane.xlu0 %1751
        %v1753 = vsel %vm1528, %v1725, 0.0
        %1754 = vadd.xlane.f32.xlu0 %v1753
        %v1755 = vpop.xlane.xlu0 %1754
        %v1756 = vsel %vm1528, %v1727, 0.0
        %1757 = vadd.xlane.f32.xlu0 %v1756
        %v1758 = vpop.xlane.xlu0 %1757
        %v1759 = vsel %vm1528, %v1729, 0.0
        %1760 = vadd.xlane.f32.xlu0 %v1759
        %v1761 = vpop.xlane.xlu0 %1760
        %v1762 = vrcp.pop %v1740
        %v1763 = vrcp.pop %v1743
        %v1764 = vrcp.pop %v1746
        %v1765 = vrcp.pop %v1749
        %v1766 = vrcp.pop %v1752
        %v1767 = vrcp.pop %v1755
        %v1768 = vrcp.pop %v1758
        %v1769 = vrcp.pop %v1761
        %v1770 = vmul.f32 %v1691, %v1762
        %v1771 = vmul.f32 %v1693, %v1763
        %v1772 = vmul.f32 %v1695, %v1764
        %v1773 = vmul.f32 %v1697, %v1765
        %v1774 = vmul.f32 %v1699, %v1766
        %v1775 = vmul.f32 %v1701, %v1767
        %v1776 = vmul.f32 %v1703, %v1768
        %v1777 = vmul.f32 %v1705, %v1769
        %v1778 = vadd.f32 %v1476, %v820
        %v1779 = vadd.f32 %v1482, %v821
        %v1780 = vadd.f32 %v1488, %v822
        %v1781 = vadd.f32 %v1494, %v823
        %v1782 = vadd.f32 %v1500, %v824
        %v1783 = vadd.f32 %v1506, %v825
        %v1784 = vadd.f32 %v1512, %v826
        %v1785 = vadd.f32 %v1518, %v827
        %v1786 = vsel %vm1528, %v1778, -inf
        %1787 = vmax.xlane.f32.xlu0 %v1786
        %v1788 = vpop.xlane.xlu0 %1787
        %v1789 = vsel %vm1528, %v1779, -inf
        %1790 = vmax.xlane.f32.xlu0 %v1789
        %v1791 = vpop.xlane.xlu0 %1790
        %v1792 = vsel %vm1528, %v1780, -inf
        %1793 = vmax.xlane.f32.xlu0 %v1792
        %v1794 = vpop.xlane.xlu0 %1793
        %v1795 = vsel %vm1528, %v1781, -inf
        %1796 = vmax.xlane.f32.xlu0 %v1795
        %v1797 = vpop.xlane.xlu0 %1796
        %v1798 = vsel %vm1528, %v1782, -inf
        %1799 = vmax.xlane.f32.xlu0 %v1798
        %v1800 = vpop.xlane.xlu0 %1799
        %v1801 = vsel %vm1528, %v1783, -inf
        %1802 = vmax.xlane.f32.xlu0 %v1801
        %v1803 = vpop.xlane.xlu0 %1802
        %v1804 = vsel %vm1528, %v1784, -inf
        %1805 = vmax.xlane.f32.xlu0 %v1804
        %v1806 = vpop.xlane.xlu0 %1805
        %v1807 = vsel %vm1528, %v1785, -inf
        %1808 = vmax.xlane.f32.xlu0 %v1807
        %v1809 = vpop.xlane.xlu0 %1808
        %v1810 = vsub.f32 %v1778, %v1788
        %v1811 = vsub.f32 %v1779, %v1791
        %v1812 = vsub.f32 %v1780, %v1794
        %v1813 = vsub.f32 %v1781, %v1797
        %v1814 = vsub.f32 %v1782, %v1800
        %v1815 = vsub.f32 %v1783, %v1803
        %v1816 = vsub.f32 %v1784, %v1806
        %v1817 = vsub.f32 %v1785, %v1809
        %v1818 = vmul.f32 %v1810, 1.442695
        %v1819 = vpow.pop %v1818
        %v1820 = vmul.f32 %v1811, 1.442695
        %v1821 = vpow.pop %v1820
        %v1822 = vmul.f32 %v1812, 1.442695
        %v1823 = vpow.pop %v1822
        %v1824 = vmul.f32 %v1813, 1.442695
        %v1825 = vpow.pop %v1824
        %v1826 = vmul.f32 %v1814, 1.442695
        %v1827 = vpow.pop %v1826
        %v1828 = vmul.f32 %v1815, 1.442695
        %v1829 = vpow.pop %v1828
        %v1830 = vmul.f32 %v1816, 1.442695
        %v1831 = vpow.pop %v1830
        %v1832 = vmul.f32 %v1817, 1.442695
        %v1833 = vpow.pop %v1832
        %v1834 = vsel %vm1528, %v1819, 0.0
        %1835 = vadd.xlane.f32.xlu0 %v1834
        %v1836 = vpop.xlane.xlu0 %1835
        %v1837 = vsel %vm1528, %v1821, 0.0
        %1838 = vadd.xlane.f32.xlu0 %v1837
        %v1839 = vpop.xlane.xlu0 %1838
        %v1840 = vsel %vm1528, %v1823, 0.0
        %1841 = vadd.xlane.f32.xlu0 %v1840
        %v1842 = vpop.xlane.xlu0 %1841
        %v1843 = vsel %vm1528, %v1825, 0.0
        %1844 = vadd.xlane.f32.xlu0 %v1843
        %v1845 = vpop.xlane.xlu0 %1844
        %v1846 = vsel %vm1528, %v1827, 0.0
        %1847 = vadd.xlane.f32.xlu0 %v1846
        %v1848 = vpop.xlane.xlu0 %1847
        %v1849 = vsel %vm1528, %v1829, 0.0
        %1850 = vadd.xlane.f32.xlu0 %v1849
        %v1851 = vpop.xlane.xlu0 %1850
        %v1852 = vsel %vm1528, %v1831, 0.0
        %1853 = vadd.xlane.f32.xlu0 %v1852
        %v1854 = vpop.xlane.xlu0 %1853
        %v1855 = vsel %vm1528, %v1833, 0.0
        %1856 = vadd.xlane.f32.xlu0 %v1855
        %v1857 = vpop.xlane.xlu0 %1856
        %v1858 = vrcp.pop %v1836
        %v1859 = vrcp.pop %v1839
        %v1860 = vrcp.pop %v1842
        %v1861 = vrcp.pop %v1845
        %v1862 = vrcp.pop %v1848
        %v1863 = vrcp.pop %v1851
        %v1864 = vrcp.pop %v1854
        %v1865 = vrcp.pop %v1857
        %v1866 = vmul.f32 %v1819, %v1858
        %v1867 = vmul.f32 %v1821, %v1859
        %v1868 = vmul.f32 %v1823, %v1860
        %v1869 = vmul.f32 %v1825, %v1861
        %v1870 = vmul.f32 %v1827, %v1862
        %v1871 = vmul.f32 %v1829, %v1863
        %v1872 = vmul.f32 %v1831, %v1864
        %v1873 = vmul.f32 %v1833, %v1865
        %v1874 = vadd.f32 %v1476, %v1626
        %v1875 = vadd.f32 %v1482, %v1628
        %v1876 = vadd.f32 %v1488, %v1630
        %v1877 = vadd.f32 %v1494, %v1632
        %v1878 = vadd.f32 %v1500, %v1634
        %v1879 = vadd.f32 %v1506, %v1636
        %v1880 = vadd.f32 %v1512, %v1638
        %v1881 = vadd.f32 %v1518, %v1640
        %v1882 = vsel %vm1657, %v1874, -inf
        %1883 = vmax.xlane.f32.xlu0 %v1882
        %v1884 = vpop.xlane.xlu0 %1883
        %v1885 = vsel %vm1657, %v1875, -inf
        %1886 = vmax.xlane.f32.xlu0 %v1885
        %v1887 = vpop.xlane.xlu0 %1886
        %v1888 = vsel %vm1657, %v1876, -inf
        %1889 = vmax.xlane.f32.xlu0 %v1888
        %v1890 = vpop.xlane.xlu0 %1889
        %v1891 = vsel %vm1657, %v1877, -inf
        %1892 = vmax.xlane.f32.xlu0 %v1891
        %v1893 = vpop.xlane.xlu0 %1892
        %v1894 = vsel %vm1657, %v1878, -inf
        %1895 = vmax.xlane.f32.xlu0 %v1894
        %v1896 = vpop.xlane.xlu0 %1895
        %v1897 = vsel %vm1657, %v1879, -inf
        %1898 = vmax.xlane.f32.xlu0 %v1897
        %v1899 = vpop.xlane.xlu0 %1898
        %v1900 = vsel %vm1657, %v1880, -inf
        %1901 = vmax.xlane.f32.xlu0 %v1900
        %v1902 = vpop.xlane.xlu0 %1901
        %v1903 = vsel %vm1657, %v1881, -inf
        %1904 = vmax.xlane.f32.xlu0 %v1903
        %v1905 = vpop.xlane.xlu0 %1904
        %v1906 = vsub.f32 %v1874, %v1884
        %v1907 = vsub.f32 %v1875, %v1887
        %v1908 = vsub.f32 %v1876, %v1890
        %v1909 = vsub.f32 %v1877, %v1893
        %v1910 = vsub.f32 %v1878, %v1896
        %v1911 = vsub.f32 %v1879, %v1899
        %v1912 = vsub.f32 %v1880, %v1902
        %v1913 = vsub.f32 %v1881, %v1905
        %v1914 = vmul.f32 %v1906, 1.442695
        %v1915 = vpow.pop %v1914
        %v1916 = vmul.f32 %v1907, 1.442695
        %v1917 = vpow.pop %v1916
        %v1918 = vmul.f32 %v1908, 1.442695
        %v1919 = vpow.pop %v1918
        %v1920 = vmul.f32 %v1909, 1.442695
        %v1921 = vpow.pop %v1920
        %v1922 = vmul.f32 %v1910, 1.442695
        %v1923 = vpow.pop %v1922
        %v1924 = vmul.f32 %v1911, 1.442695
        %v1925 = vpow.pop %v1924
        %v1926 = vmul.f32 %v1912, 1.442695
        %v1927 = vpow.pop %v1926
        %v1928 = vmul.f32 %v1913, 1.442695
        %v1929 = vpow.pop %v1928
        %1938 = vrot.lane.b32.xlu0 %v1915, 64
        %v1939 = vpop.permute.xlu0 %1938
        %1940 = vrot.lane.b32.xlu0 %v1917, 64
        %v1941 = vpop.permute.xlu0 %1940
        %1942 = vrot.lane.b32.xlu0 %v1919, 64
        %v1943 = vpop.permute.xlu0 %1942
        %1944 = vrot.lane.b32.xlu0 %v1921, 64
        %v1945 = vpop.permute.xlu0 %1944
        %1946 = vrot.lane.b32.xlu0 %v1923, 64
        %v1947 = vpop.permute.xlu0 %1946
        %1948 = vrot.lane.b32.xlu0 %v1925, 64
        %v1949 = vpop.permute.xlu0 %1948
        %1950 = vrot.lane.b32.xlu0 %v1927, 64
        %v1951 = vpop.permute.xlu0 %1950
        %1952 = vrot.lane.b32.xlu0 %v1929, 64
        %v1953 = vpop.permute.xlu0 %1952
        %v1962 = vsel %vm1528, %v1939, 0.0
        %1963 = vadd.xlane.f32.xlu0 %v1962
        %v1964 = vpop.xlane.xlu0 %1963
        %v1965 = vsel %vm1528, %v1941, 0.0
        %1966 = vadd.xlane.f32.xlu0 %v1965
        %v1967 = vpop.xlane.xlu0 %1966
        %v1968 = vsel %vm1528, %v1943, 0.0
        %1969 = vadd.xlane.f32.xlu0 %v1968
        %v1970 = vpop.xlane.xlu0 %1969
        %v1971 = vsel %vm1528, %v1945, 0.0
        %1972 = vadd.xlane.f32.xlu0 %v1971
        %v1973 = vpop.xlane.xlu0 %1972
        %v1974 = vsel %vm1528, %v1947, 0.0
        %1975 = vadd.xlane.f32.xlu0 %v1974
        %v1976 = vpop.xlane.xlu0 %1975
        %v1977 = vsel %vm1528, %v1949, 0.0
        %1978 = vadd.xlane.f32.xlu0 %v1977
        %v1979 = vpop.xlane.xlu0 %1978
        %v1980 = vsel %vm1528, %v1951, 0.0
        %1981 = vadd.xlane.f32.xlu0 %v1980
        %v1982 = vpop.xlane.xlu0 %1981
        %v1983 = vsel %vm1528, %v1953, 0.0
        %1984 = vadd.xlane.f32.xlu0 %v1983
        %v1985 = vpop.xlane.xlu0 %1984
        %v1986 = vrcp.pop %v1964
        %v1987 = vrcp.pop %v1967
        %v1988 = vrcp.pop %v1970
        %v1989 = vrcp.pop %v1973
        %v1990 = vrcp.pop %v1976
        %v1991 = vrcp.pop %v1979
        %v1992 = vrcp.pop %v1982
        %v1993 = vrcp.pop %v1985
        %v1994 = vmul.f32 %v1915, %v1986
        %v1995 = vmul.f32 %v1917, %v1987
        %v1996 = vmul.f32 %v1919, %v1988
        %v1997 = vmul.f32 %v1921, %v1989
        %v1998 = vmul.f32 %v1923, %v1990
        %v1999 = vmul.f32 %v1925, %v1991
        %v2000 = vmul.f32 %v1927, %v1992
        %v2001 = vmul.f32 %v1929, %v1993
        %v2002 = vsel %vm1528, %v1609, %v1770
        %v2003 = vsel %vm1528, %v1610, %v1771
        %v2004 = vsel %vm1528, %v1611, %v1772
        %v2005 = vsel %vm1528, %v1612, %v1773
        %v2006 = vsel %vm1528, %v1613, %v1774
        %v2007 = vsel %vm1528, %v1614, %v1775
        %v2008 = vsel %vm1528, %v1615, %v1776
        %v2009 = vsel %vm1528, %v1616, %v1777
        %v2010 = vsel %vm1528, %v1866, %v1994
        %v2011 = vsel %vm1528, %v1867, %v1995
        %v2012 = vsel %vm1528, %v1868, %v1996
        %v2013 = vsel %vm1528, %v1869, %v1997
        %v2014 = vsel %vm1528, %v1870, %v1998
        %v2015 = vsel %vm1528, %v1871, %v1999
        %v2016 = vsel %vm1528, %v1872, %v2000
        %v2017 = vsel %vm1528, %v1873, %v2001
        %2050 = vrot.lane.b32.xlu0 %v1182, 64
        %v2051 = vpop.permute.xlu0 %2050
        %2052 = vrot.lane.b32.xlu0 %v1183, 64
        %v2053 = vpop.permute.xlu0 %2052
        %2054 = vrot.lane.b32.xlu0 %v1184, 64
        %v2055 = vpop.permute.xlu0 %2054
        %2056 = vrot.lane.b32.xlu0 %v1185, 64
        %v2057 = vpop.permute.xlu0 %2056
        %2058 = vrot.lane.b32.xlu0 %v1186, 64
        %v2059 = vpop.permute.xlu0 %2058
        %2060 = vrot.lane.b32.xlu0 %v1187, 64
        %v2061 = vpop.permute.xlu0 %2060
        %2062 = vrot.lane.b32.xlu0 %v1188, 64
        %v2063 = vpop.permute.xlu0 %2062
        %2064 = vrot.lane.b32.xlu0 %v1189, 64
        %v2065 = vpop.permute.xlu0 %2064
        %2066 = vrot.lane.b32.xlu0 %v1193, 64
        %v2067 = vpop.permute.xlu0 %2066
        %2068 = vrot.lane.b32.xlu0 %v1194, 64
        %v2069 = vpop.permute.xlu0 %2068
        %2070 = vrot.lane.b32.xlu0 %v1195, 64
        %v2071 = vpop.permute.xlu0 %2070
        %2072 = vrot.lane.b32.xlu0 %v1196, 64
        %v2073 = vpop.permute.xlu0 %2072
        %2074 = vrot.lane.b32.xlu0 %v1197, 64
        %v2075 = vpop.permute.xlu0 %2074
        %2076 = vrot.lane.b32.xlu0 %v1198, 64
        %v2077 = vpop.permute.xlu0 %2076
        %2078 = vrot.lane.b32.xlu0 %v1199, 64
        %v2079 = vpop.permute.xlu0 %2078
        %2080 = vrot.lane.b32.xlu0 %v1200, 64
        %v2081 = vpop.permute.xlu0 %2080
        %2082 = vrot.lane.b32.xlu0 %v1204, 64
        %v2083 = vpop.permute.xlu0 %2082
        %2084 = vrot.lane.b32.xlu0 %v1205, 64
        %v2085 = vpop.permute.xlu0 %2084
        %2086 = vrot.lane.b32.xlu0 %v1206, 64
        %v2087 = vpop.permute.xlu0 %2086
        %2088 = vrot.lane.b32.xlu0 %v1207, 64
        %v2089 = vpop.permute.xlu0 %2088
        %2090 = vrot.lane.b32.xlu0 %v1208, 64
        %v2091 = vpop.permute.xlu0 %2090
        %2092 = vrot.lane.b32.xlu0 %v1209, 64
        %v2093 = vpop.permute.xlu0 %2092
        %2094 = vrot.lane.b32.xlu0 %v1210, 64
        %v2095 = vpop.permute.xlu0 %2094
        %2096 = vrot.lane.b32.xlu0 %v1211, 64
        %v2097 = vpop.permute.xlu0 %2096
        %2098 = vrot.lane.b32.xlu0 %v1215, 64
        %v2099 = vpop.permute.xlu0 %2098
        %2100 = vrot.lane.b32.xlu0 %v1216, 64
        %v2101 = vpop.permute.xlu0 %2100
        %2102 = vrot.lane.b32.xlu0 %v1217, 64
        %v2103 = vpop.permute.xlu0 %2102
        %2104 = vrot.lane.b32.xlu0 %v1218, 64
        %v2105 = vpop.permute.xlu0 %2104
        %2106 = vrot.lane.b32.xlu0 %v1219, 64
        %v2107 = vpop.permute.xlu0 %2106
        %2108 = vrot.lane.b32.xlu0 %v1220, 64
        %v2109 = vpop.permute.xlu0 %2108
        %2110 = vrot.lane.b32.xlu0 %v1221, 64
        %v2111 = vpop.permute.xlu0 %2110
        %2112 = vrot.lane.b32.xlu0 %v1222, 64
        %v2113 = vpop.permute.xlu0 %2112
        %v2114 = vsel %vm830, %v2051, 0
        %v2116 = vsel %vm830, %v2053, 0
        %v2118 = vsel %vm830, %v2055, 0
        %v2120 = vsel %vm830, %v2057, 0
        %v2122 = vsel %vm830, %v2059, 0
        %v2124 = vsel %vm830, %v2061, 0
        %v2126 = vsel %vm830, %v2063, 0
        %v2128 = vsel %vm830, %v2065, 0
        %v2130 = vsel %vm830, %v2067, 0
        %v2132 = vsel %vm830, %v2069, 0
        %v2134 = vsel %vm830, %v2071, 0
        %v2136 = vsel %vm830, %v2073, 0
        %v2138 = vsel %vm830, %v2075, 0
        %v2140 = vsel %vm830, %v2077, 0
        %v2142 = vsel %vm830, %v2079, 0
        %v2144 = vsel %vm830, %v2081, 0
        %v2146 = vsel %vm830, %v2083, 0
        %v2148 = vsel %vm830, %v2085, 0
        %v2150 = vsel %vm830, %v2087, 0
        %v2152 = vsel %vm830, %v2089, 0
        %v2154 = vsel %vm830, %v2091, 0
        %v2156 = vsel %vm830, %v2093, 0
        %v2158 = vsel %vm830, %v2095, 0
        %v2160 = vsel %vm830, %v2097, 0
        %v2162 = vsel %vm830, %v2099, 0
        %v2164 = vsel %vm830, %v2101, 0
        %v2166 = vsel %vm830, %v2103, 0
        %v2168 = vsel %vm830, %v2105, 0
        %v2170 = vsel %vm830, %v2107, 0
        %v2172 = vsel %vm830, %v2109, 0
        %v2174 = vsel %vm830, %v2111, 0
        %v2176 = vsel %vm830, %v2113, 0
        %2178 = vmatprep.subr.mxu0 0.0
        %2179 = vmatpush1.msra.mxu0 %v1104
        %2180 = vmatprep.subr.mxu0 0.0
        %2181 = vmatpush1.msra.mxu0 %v1105
        %2182 = vmatprep.subr.mxu0 0.0
        %2183 = vmatpush1.msra.mxu0 %v1106
        %2184 = vmatprep.subr.mxu0 0.0
        %2185 = vmatpush1.msra.mxu0 %v1107
        %2186 = vmatprep.subr.mxu0 0.0
        %2187 = vmatpush1.msra.mxu0 0.0
        %2188 = vmatprep.subr.mxu0 0.0
        %2189 = vmatpush1.msra.mxu0 0.0
        %2190 = vmatprep.subr.mxu0 0.0
        %2191 = vmatpush1.msra.mxu0 0.0
        %2192 = vmatprep.subr.mxu0 0.0
        %2193 = vmatpush1.msra.mxu0 0.0
        %2194 = vmatprep.subr.mxu0 0.0
        %2195 = vmatpush1.msra.mxu0 0.0
        %2196 = vmatprep.subr.mxu0 0.0
        %2197 = vmatpush1.msra.mxu0 0.0
        %2198 = vmatprep.subr.mxu0 0.0
        %2199 = vmatpush1.msra.mxu0 0.0
        %2200 = vmatprep.subr.mxu0 0.0
        %2201 = vmatpush1.msra.mxu0 0.0
        %2202 = vmatprep.subr.mxu0 0.0
        %2203 = vmatpush1.msra.mxu0 0.0
        %2204 = vmatprep.subr.mxu0 0.0
        %2205 = vmatpush1.msra.mxu0 0.0
        %2206 = vmatprep.subr.mxu0 0.0
        %2207 = vmatpush1.msra.mxu0 0.0
        %2208 = vmatprep.subr.mxu0 0.0
        %2209 = vmatpush1.msra.mxu0 0.0
        %2210 = vmatprep.subr.mxu0 0.0
        %2211 = vmatpush1.msra.mxu0 0.0
        %2212 = vmatprep.subr.mxu0 0.0
        %2213 = vmatpush1.msra.mxu0 0.0
        %2214 = vmatprep.subr.mxu0 0.0
        %2215 = vmatpush1.msra.mxu0 0.0
        %2216 = vmatprep.subr.mxu0 0.0
        %2217 = vmatpush1.msra.mxu0 0.0
        %2218 = vmatprep.subr.mxu0 0.0
        %2219 = vmatpush1.msra.mxu0 0.0
        %2220 = vmatprep.subr.mxu0 0.0
        %2221 = vmatpush1.msra.mxu0 0.0
        %2222 = vmatprep.subr.mxu0 0.0
        %2223 = vmatpush1.msra.mxu0 0.0
        %2224 = vmatprep.subr.mxu0 0.0
        %2225 = vmatpush1.msra.mxu0 0.0
        %2226 = vmatprep.subr.mxu0 0.0
        %2227 = vmatpush1.msra.mxu0 0.0
        %2228 = vmatprep.subr.mxu0 0.0
        %2229 = vmatpush1.msra.mxu0 0.0
        %2230 = vmatprep.subr.mxu0 0.0
        %2231 = vmatpush1.msra.mxu0 0.0
        %2232 = vmatprep.subr.mxu0 0.0
        %2233 = vmatpush1.msra.mxu0 0.0
        %2234 = vmatprep.subr.mxu0 0.0
        %2235 = vmatpush1.msra.mxu0 0.0
        %2236 = vmatprep.subr.mxu0 0.0
        %2237 = vmatpush1.msra.mxu0 0.0
        %2238 = vmatprep.subr.mxu0 0.0
        %2239 = vmatpush1.msra.mxu0 0.0
        %2240 = vmatprep.subr.mxu0 0.0
        %2241 = vmatpush1.msra.mxu0 0.0
        %2242 = vmatprep.mubr.f32.mxu0 0.0
        %2243 = vmatmul.mubr.f32.gmra.mrb[0].mxu0 %v2114
        %v2244 = vpop.f32.mrb[0].mxu0
        %v2245 = vadd.f32 0.0, %v2244
        %v2246 = vpop.f32.mrb[0].mxu0
        %2247 = vmatprep.mubr.f32.mxu0 0.0
        %2248 = vmatmul.mubr.f32.gmra.mrb[0].mxu0 %v2116
        %v2249 = vpop.f32.mrb[0].mxu0
        %v2250 = vadd.f32 0.0, %v2249
        %v2251 = vpop.f32.mrb[0].mxu0
        %2252 = vmatprep.mubr.f32.mxu0 0.0
        %2253 = vmatmul.mubr.f32.gmra.mrb[0].mxu0 %v2118
        %v2254 = vpop.f32.mrb[0].mxu0
        %v2255 = vadd.f32 0.0, %v2254
        %v2256 = vpop.f32.mrb[0].mxu0
        %2257 = vmatprep.mubr.f32.mxu0 0.0
        %2258 = vmatmul.mubr.f32.gmra.mrb[0].mxu0 %v2120
        %v2259 = vpop.f32.mrb[0].mxu0
        %v2260 = vadd.f32 0.0, %v2259
        %v2261 = vpop.f32.mrb[0].mxu0
        %2262 = vmatprep.mubr.f32.mxu0 0.0
        %2263 = vmatmul.mubr.f32.gmra.mrb[0].mxu0 %v2122
        %v2264 = vpop.f32.mrb[0].mxu0
        %v2265 = vadd.f32 0.0, %v2264
        %v2266 = vpop.f32.mrb[0].mxu0
        %2267 = vmatprep.mubr.f32.mxu0 0.0
        %2268 = vmatmul.mubr.f32.gmra.mrb[0].mxu0 %v2124
        %v2269 = vpop.f32.mrb[0].mxu0
        %v2270 = vadd.f32 0.0, %v2269
        %v2271 = vpop.f32.mrb[0].mxu0
        %2272 = vmatprep.mubr.f32.mxu0 0.0
        %2273 = vmatmul.mubr.f32.gmra.mrb[0].mxu0 %v2126
        %v2274 = vpop.f32.mrb[0].mxu0
        %v2275 = vadd.f32 0.0, %v2274
        %v2276 = vpop.f32.mrb[0].mxu0
        %2277 = vmatprep.mubr.f32.mxu0 0.0
        %2278 = vmatmul.mubr.f32.gmra.mrb[0].mxu0 %v2128
        %v2279 = vpop.f32.mrb[0].mxu0
        %v2280 = vadd.f32 0.0, %v2279
        %v2281 = vpop.f32.mrb[0].mxu0
        %2282 = vmatprep.mubr.f32.mxu0 0.0
        %2283 = vmatmul.mubr.f32.gmra.mrb[0].mxu0 %v2130
        %v2284 = vpop.f32.mrb[0].mxu0
        %v2285 = vadd.f32 0.0, %v2284
        %v2286 = vpop.f32.mrb[0].mxu0
        %2287 = vmatprep.mubr.f32.mxu0 0.0
        %2288 = vmatmul.mubr.f32.gmra.mrb[0].mxu0 %v2132
        %v2289 = vpop.f32.mrb[0].mxu0
        %v2290 = vadd.f32 0.0, %v2289
        %v2291 = vpop.f32.mrb[0].mxu0
        %2292 = vmatprep.mubr.f32.mxu0 0.0
        %2293 = vmatmul.mubr.f32.gmra.mrb[0].mxu0 %v2134
        %v2294 = vpop.f32.mrb[0].mxu0
        %v2295 = vadd.f32 0.0, %v2294
        %v2296 = vpop.f32.mrb[0].mxu0
        %2297 = vmatprep.mubr.f32.mxu0 0.0
        %2298 = vmatmul.mubr.f32.gmra.mrb[0].mxu0 %v2136
        %v2299 = vpop.f32.mrb[0].mxu0
        %v2300 = vadd.f32 0.0, %v2299
        %v2301 = vpop.f32.mrb[0].mxu0
        %2302 = vmatprep.mubr.f32.mxu0 0.0
        %2303 = vmatmul.mubr.f32.gmra.mrb[0].mxu0 %v2138
        %v2304 = vpop.f32.mrb[0].mxu0
        %v2305 = vadd.f32 0.0, %v2304
        %v2306 = vpop.f32.mrb[0].mxu0
        %2307 = vmatprep.mubr.f32.mxu0 0.0
        %2308 = vmatmul.mubr.f32.gmra.mrb[0].mxu0 %v2140
        %v2309 = vpop.f32.mrb[0].mxu0
        %v2310 = vadd.f32 0.0, %v2309
        %v2311 = vpop.f32.mrb[0].mxu0
        %2312 = vmatprep.mubr.f32.mxu0 0.0
        %2313 = vmatmul.mubr.f32.gmra.mrb[0].mxu0 %v2142
        %v2314 = vpop.f32.mrb[0].mxu0
        %v2315 = vadd.f32 0.0, %v2314
        %v2316 = vpop.f32.mrb[0].mxu0
        %2317 = vmatprep.mubr.f32.mxu0 0.0
        %2318 = vmatmul.mubr.f32.gmra.mrb[0].mxu0 %v2144
        %v2319 = vpop.f32.mrb[0].mxu0
        %v2320 = vadd.f32 0.0, %v2319
        %v2321 = vpop.f32.mrb[0].mxu0
        %2322 = vmatprep.mubr.f32.mxu0 0.0
        %2323 = vmatmul.mubr.f32.gmra.mrb[0].mxu0 %v2146
        %v2324 = vpop.f32.mrb[0].mxu0
        %v2325 = vadd.f32 0.0, %v2324
        %v2326 = vpop.f32.mrb[0].mxu0
        %2327 = vmatprep.mubr.f32.mxu0 0.0
        %2328 = vmatmul.mubr.f32.gmra.mrb[0].mxu0 %v2148
        %v2329 = vpop.f32.mrb[0].mxu0
        %v2330 = vadd.f32 0.0, %v2329
        %v2331 = vpop.f32.mrb[0].mxu0
        %2332 = vmatprep.mubr.f32.mxu0 0.0
        %2333 = vmatmul.mubr.f32.gmra.mrb[0].mxu0 %v2150
        %v2334 = vpop.f32.mrb[0].mxu0
        %v2335 = vadd.f32 0.0, %v2334
        %v2336 = vpop.f32.mrb[0].mxu0
        %2337 = vmatprep.mubr.f32.mxu0 0.0
        %2338 = vmatmul.mubr.f32.gmra.mrb[0].mxu0 %v2152
        %v2339 = vpop.f32.mrb[0].mxu0
        %v2340 = vadd.f32 0.0, %v2339
        %v2341 = vpop.f32.mrb[0].mxu0
        %2342 = vmatprep.mubr.f32.mxu0 0.0
        %2343 = vmatmul.mubr.f32.gmra.mrb[0].mxu0 %v2154
        %v2344 = vpop.f32.mrb[0].mxu0
        %v2345 = vadd.f32 0.0, %v2344
        %v2346 = vpop.f32.mrb[0].mxu0
        %2347 = vmatprep.mubr.f32.mxu0 0.0
        %2348 = vmatmul.mubr.f32.gmra.mrb[0].mxu0 %v2156
        %v2349 = vpop.f32.mrb[0].mxu0
        %v2350 = vadd.f32 0.0, %v2349
        %v2351 = vpop.f32.mrb[0].mxu0
        %2352 = vmatprep.mubr.f32.mxu0 0.0
        %2353 = vmatmul.mubr.f32.gmra.mrb[0].mxu0 %v2158
        %v2354 = vpop.f32.mrb[0].mxu0
        %v2355 = vadd.f32 0.0, %v2354
        %v2356 = vpop.f32.mrb[0].mxu0
        %2357 = vmatprep.mubr.f32.mxu0 0.0
        %2358 = vmatmul.mubr.f32.gmra.mrb[0].mxu0 %v2160
        %v2359 = vpop.f32.mrb[0].mxu0
        %v2360 = vadd.f32 0.0, %v2359
        %v2361 = vpop.f32.mrb[0].mxu0
        %2362 = vmatprep.mubr.f32.mxu0 0.0
        %2363 = vmatmul.mubr.f32.gmra.mrb[0].mxu0 %v2162
        %v2364 = vpop.f32.mrb[0].mxu0
        %v2365 = vadd.f32 0.0, %v2364
        %v2366 = vpop.f32.mrb[0].mxu0
        %2367 = vmatprep.mubr.f32.mxu0 0.0
        %2368 = vmatmul.mubr.f32.gmra.mrb[0].mxu0 %v2164
        %v2369 = vpop.f32.mrb[0].mxu0
        %v2370 = vadd.f32 0.0, %v2369
        %v2371 = vpop.f32.mrb[0].mxu0
        %2372 = vmatprep.mubr.f32.mxu0 0.0
        %2373 = vmatmul.mubr.f32.gmra.mrb[0].mxu0 %v2166
        %v2374 = vpop.f32.mrb[0].mxu0
        %v2375 = vadd.f32 0.0, %v2374
        %v2376 = vpop.f32.mrb[0].mxu0
        %2377 = vmatprep.mubr.f32.mxu0 0.0
        %2378 = vmatmul.mubr.f32.gmra.mrb[0].mxu0 %v2168
        %v2379 = vpop.f32.mrb[0].mxu0
        %v2380 = vadd.f32 0.0, %v2379
        %v2381 = vpop.f32.mrb[0].mxu0
        %2382 = vmatprep.mubr.f32.mxu0 0.0
        %2383 = vmatmul.mubr.f32.gmra.mrb[0].mxu0 %v2170
        %v2384 = vpop.f32.mrb[0].mxu0
        %v2385 = vadd.f32 0.0, %v2384
        %v2386 = vpop.f32.mrb[0].mxu0
        %2387 = vmatprep.mubr.f32.mxu0 0.0
        %2388 = vmatmul.mubr.f32.gmra.mrb[0].mxu0 %v2172
        %v2389 = vpop.f32.mrb[0].mxu0
        %v2390 = vadd.f32 0.0, %v2389
        %v2391 = vpop.f32.mrb[0].mxu0
        %2392 = vmatprep.mubr.f32.mxu0 0.0
        %2393 = vmatmul.mubr.f32.gmra.mrb[0].mxu0 %v2174
        %v2394 = vpop.f32.mrb[0].mxu0
        %v2395 = vadd.f32 0.0, %v2394
        %v2396 = vpop.f32.mrb[0].mxu0
        %2397 = vmatprep.mubr.f32.mxu0 0.0
        %2398 = vmatmul.mubr.f32.gmra.mrb[0].mxu0 %v2176
        %v2399 = vpop.f32.mrb[0].mxu0
        %v2400 = vadd.f32 0.0, %v2399
        %v2401 = vpop.f32.mrb[0].mxu0
        %2402 = vdwg.mxu0
        %2403 = vmatprep.subr.mxu0 0.0
        %2404 = vmatpush1.msra.mxu0 %v2245
        %2405 = vmatprep.subr.mxu0 0.0
        %2406 = vmatpush1.msra.mxu0 %v2250
        %2407 = vmatprep.subr.mxu0 0.0
        %2408 = vmatpush1.msra.mxu0 %v2255
        %2409 = vmatprep.subr.mxu0 0.0
        %2410 = vmatpush1.msra.mxu0 %v2260
        %2411 = vmatprep.subr.mxu0 0.0
        %2412 = vmatpush1.msra.mxu0 %v2265
        %2413 = vmatprep.subr.mxu0 0.0
        %2414 = vmatpush1.msra.mxu0 %v2270
        %2415 = vmatprep.subr.mxu0 0.0
        %2416 = vmatpush1.msra.mxu0 %v2275
        %2417 = vmatprep.subr.mxu0 0.0
        %2418 = vmatpush1.msra.mxu0 %v2280
        %2419 = vmatprep.subr.mxu0 0.0
        %2420 = vmatpush1.msra.mxu0 %v2285
        %2421 = vmatprep.subr.mxu0 0.0
        %2422 = vmatpush1.msra.mxu0 %v2290
        %2423 = vmatprep.subr.mxu0 0.0
        %2424 = vmatpush1.msra.mxu0 %v2295
        %2425 = vmatprep.subr.mxu0 0.0
        %2426 = vmatpush1.msra.mxu0 %v2300
        %2427 = vmatprep.subr.mxu0 0.0
        %2428 = vmatpush1.msra.mxu0 %v2305
        %2429 = vmatprep.subr.mxu0 0.0
        %2430 = vmatpush1.msra.mxu0 %v2310
        %2431 = vmatprep.subr.mxu0 0.0
        %2432 = vmatpush1.msra.mxu0 %v2315
        %2433 = vmatprep.subr.mxu0 0.0
        %2434 = vmatpush1.msra.mxu0 %v2320
        %2435 = vmatprep.subr.mxu0 0.0
        %2436 = vmatpush1.msra.mxu0 %v2325
        %2437 = vmatprep.subr.mxu0 0.0
        %2438 = vmatpush1.msra.mxu0 %v2330
        %2439 = vmatprep.subr.mxu0 0.0
        %2440 = vmatpush1.msra.mxu0 %v2335
        %2441 = vmatprep.subr.mxu0 0.0
        %2442 = vmatpush1.msra.mxu0 %v2340
        %2443 = vmatprep.subr.mxu0 0.0
        %2444 = vmatpush1.msra.mxu0 %v2345
        %2445 = vmatprep.subr.mxu0 0.0
        %2446 = vmatpush1.msra.mxu0 %v2350
        %2447 = vmatprep.subr.mxu0 0.0
        %2448 = vmatpush1.msra.mxu0 %v2355
        %2449 = vmatprep.subr.mxu0 0.0
        %2450 = vmatpush1.msra.mxu0 %v2360
        %2451 = vmatprep.subr.mxu0 0.0
        %2452 = vmatpush1.msra.mxu0 %v2365
        %2453 = vmatprep.subr.mxu0 0.0
        %2454 = vmatpush1.msra.mxu0 %v2370
        %2455 = vmatprep.subr.mxu0 0.0
        %2456 = vmatpush1.msra.mxu0 %v2375
        %2457 = vmatprep.subr.mxu0 0.0
        %2458 = vmatpush1.msra.mxu0 %v2380
        %2459 = vmatprep.subr.mxu0 0.0
        %2460 = vmatpush1.msra.mxu0 %v2385
        %2461 = vmatprep.subr.mxu0 0.0
        %2462 = vmatpush1.msra.mxu0 %v2390
        %2463 = vmatprep.subr.mxu0 0.0
        %2464 = vmatpush1.msra.mxu0 %v2395
        %2465 = vmatprep.subr.mxu0 0.0
        %2466 = vmatpush1.msra.mxu0 %v2400
        %2467 = vmatprep.mubr.f32.mxu0 %v2010
        %2468 = vmatmul.mubr.f32.gmra.mrb[0].mxu0 %v2002
        %v2469 = vpop.f32.mrb[0].mxu0
        %v2470 = vadd.f32 0.0, %v2469
        %v2471 = vpop.f32.mrb[0].mxu0
        %2472 = vmatprep.mubr.f32.mxu0 %v2011
        %2473 = vmatmul.mubr.f32.gmra.mrb[0].mxu0 %v2003
        %v2474 = vpop.f32.mrb[0].mxu0
        %v2475 = vadd.f32 0.0, %v2474
        %v2476 = vpop.f32.mrb[0].mxu0
        %2477 = vmatprep.mubr.f32.mxu0 %v2012
        %2478 = vmatmul.mubr.f32.gmra.mrb[0].mxu0 %v2004
        %v2479 = vpop.f32.mrb[0].mxu0
        %v2480 = vadd.f32 0.0, %v2479
        %v2481 = vpop.f32.mrb[0].mxu0
        %2482 = vmatprep.mubr.f32.mxu0 %v2013
        %2483 = vmatmul.mubr.f32.gmra.mrb[0].mxu0 %v2005
        %v2484 = vpop.f32.mrb[0].mxu0
        %v2485 = vadd.f32 0.0, %v2484
        %v2486 = vpop.f32.mrb[0].mxu0
        %2487 = vmatprep.mubr.f32.mxu0 %v2014
        %2488 = vmatmul.mubr.f32.gmra.mrb[0].mxu0 %v2006
        %v2489 = vpop.f32.mrb[0].mxu0
        %v2490 = vadd.f32 0.0, %v2489
        %v2491 = vpop.f32.mrb[0].mxu0
        %2492 = vmatprep.mubr.f32.mxu0 %v2015
        %2493 = vmatmul.mubr.f32.gmra.mrb[0].mxu0 %v2007
        %v2494 = vpop.f32.mrb[0].mxu0
        %v2495 = vadd.f32 0.0, %v2494
        %v2496 = vpop.f32.mrb[0].mxu0
        %2497 = vmatprep.mubr.f32.mxu0 %v2016
        %2498 = vmatmul.mubr.f32.gmra.mrb[0].mxu0 %v2008
        %v2499 = vpop.f32.mrb[0].mxu0
        %v2500 = vadd.f32 0.0, %v2499
        %v2501 = vpop.f32.mrb[0].mxu0
        %2502 = vmatprep.mubr.f32.mxu0 %v2017
        %2503 = vmatmul.mubr.f32.gmra.mrb[0].mxu0 %v2009
        %v2504 = vpop.f32.mrb[0].mxu0
        %v2505 = vadd.f32 0.0, %v2504
        %v2506 = vpop.f32.mrb[0].mxu0
        %2507 = vdwg.mxu0
        %v2508 = vadd.f32 %v812, %v2470
        %v2509 = vadd.f32 %v813, %v2475
        %v2510 = vadd.f32 %v814, %v2480
        %v2511 = vadd.f32 %v815, %v2485
        %v2512 = vadd.f32 %v816, %v2490
        %v2513 = vadd.f32 %v817, %v2495
        %v2514 = vadd.f32 %v818, %v2500
        %v2515 = vadd.f32 %v819, %v2505
        %v2516 = vld [vmem:[%s14] sm:$0x1]
        %v2518 = vlaneseq
        %v2519 = vshrl.u32 %v2518, 7
        %v2520 = vsub.s32 0, %v2519
        %v2521 = vrot.slane %v2516, %v2520
        %v2523 = vadd.f32 %v2508, %v2521
        %v2524 = vadd.f32 %v2509, %v2521
        %v2525 = vadd.f32 %v2510, %v2521
        %v2526 = vadd.f32 %v2511, %v2521
        %v2527 = vadd.f32 %v2512, %v2521
        %v2528 = vadd.f32 %v2513, %v2521
        %v2529 = vadd.f32 %v2514, %v2521
        %v2530 = vadd.f32 %v2515, %v2521
        %v2531 = vld [vmem:[%s15] sm:$0x1]
        %v2532 = vld [vmem:[%s16] sm:$0x1]
        %v2533 = vsel %vm830, %v2523, 0.0
        %2534 = vadd.xlane.f32.xlu0 %v2533
        %v2535 = vpop.xlane.xlu0 %2534
        %v2536 = vsel %vm830, %v2524, 0.0
        %2537 = vadd.xlane.f32.xlu0 %v2536
        %v2538 = vpop.xlane.xlu0 %2537
        %v2539 = vsel %vm830, %v2525, 0.0
        %2540 = vadd.xlane.f32.xlu0 %v2539
        %v2541 = vpop.xlane.xlu0 %2540
        %v2542 = vsel %vm830, %v2526, 0.0
        %2543 = vadd.xlane.f32.xlu0 %v2542
        %v2544 = vpop.xlane.xlu0 %2543
        %v2545 = vsel %vm830, %v2527, 0.0
        %2546 = vadd.xlane.f32.xlu0 %v2545
        %v2547 = vpop.xlane.xlu0 %2546
        %v2548 = vsel %vm830, %v2528, 0.0
        %2549 = vadd.xlane.f32.xlu0 %v2548
        %v2550 = vpop.xlane.xlu0 %2549
        %v2551 = vsel %vm830, %v2529, 0.0
        %2552 = vadd.xlane.f32.xlu0 %v2551
        %v2553 = vpop.xlane.xlu0 %2552
        %v2554 = vsel %vm830, %v2530, 0.0
        %2555 = vadd.xlane.f32.xlu0 %v2554
        %v2556 = vpop.xlane.xlu0 %2555
        %v2557 = vmul.f32 %v2535, %v855
        %v2558 = vmul.f32 %v2538, %v855
        %v2559 = vmul.f32 %v2541, %v855
        %v2560 = vmul.f32 %v2544, %v855
        %v2561 = vmul.f32 %v2547, %v855
        %v2562 = vmul.f32 %v2550, %v855
        %v2563 = vmul.f32 %v2553, %v855
        %v2564 = vmul.f32 %v2556, %v855
        %v2565 = vsub.f32 %v2523, %v2557
        %v2566 = vsub.f32 %v2524, %v2558
        %v2567 = vsub.f32 %v2525, %v2559
        %v2568 = vsub.f32 %v2526, %v2560
        %v2569 = vsub.f32 %v2527, %v2561
        %v2570 = vsub.f32 %v2528, %v2562
        %v2571 = vsub.f32 %v2529, %v2563
        %v2572 = vsub.f32 %v2530, %v2564
        %v2573 = vmul.f32 %v2565, %v2565
        %v2574 = vmul.f32 %v2566, %v2566
        %v2575 = vmul.f32 %v2567, %v2567
        %v2576 = vmul.f32 %v2568, %v2568
        %v2577 = vmul.f32 %v2569, %v2569
        %v2578 = vmul.f32 %v2570, %v2570
        %v2579 = vmul.f32 %v2571, %v2571
        %v2580 = vmul.f32 %v2572, %v2572
        %v2581 = vsel %vm830, %v2573, 0.0
        %2582 = vadd.xlane.f32.xlu0 %v2581
        %v2583 = vpop.xlane.xlu0 %2582
        %v2584 = vsel %vm830, %v2574, 0.0
        %2585 = vadd.xlane.f32.xlu0 %v2584
        %v2586 = vpop.xlane.xlu0 %2585
        %v2587 = vsel %vm830, %v2575, 0.0
        %2588 = vadd.xlane.f32.xlu0 %v2587
        %v2589 = vpop.xlane.xlu0 %2588
        %v2590 = vsel %vm830, %v2576, 0.0
        %2591 = vadd.xlane.f32.xlu0 %v2590
        %v2592 = vpop.xlane.xlu0 %2591
        %v2593 = vsel %vm830, %v2577, 0.0
        %2594 = vadd.xlane.f32.xlu0 %v2593
        %v2595 = vpop.xlane.xlu0 %2594
        %v2596 = vsel %vm830, %v2578, 0.0
        %2597 = vadd.xlane.f32.xlu0 %v2596
        %v2598 = vpop.xlane.xlu0 %2597
        %v2599 = vsel %vm830, %v2579, 0.0
        %2600 = vadd.xlane.f32.xlu0 %v2599
        %v2601 = vpop.xlane.xlu0 %2600
        %v2602 = vsel %vm830, %v2580, 0.0
        %2603 = vadd.xlane.f32.xlu0 %v2602
        %v2604 = vpop.xlane.xlu0 %2603
        %v2605 = vmul.f32 %v2583, %v855
        %v2606 = vmul.f32 %v2586, %v855
        %v2607 = vmul.f32 %v2589, %v855
        %v2608 = vmul.f32 %v2592, %v855
        %v2609 = vmul.f32 %v2595, %v855
        %v2610 = vmul.f32 %v2598, %v855
        %v2611 = vmul.f32 %v2601, %v855
        %v2612 = vmul.f32 %v2604, %v855
        %v2613 = vadd.f32 %v2605, 1e-05
        %v2614 = vadd.f32 %v2606, 1e-05
        %v2615 = vadd.f32 %v2607, 1e-05
        %v2616 = vadd.f32 %v2608, 1e-05
        %v2617 = vadd.f32 %v2609, 1e-05
        %v2618 = vadd.f32 %v2610, 1e-05
        %v2619 = vadd.f32 %v2611, 1e-05
        %v2620 = vadd.f32 %v2612, 1e-05
        %v2621 = vrsqrt.pop %v2613
        %v2622 = vrsqrt.pop %v2614
        %v2623 = vrsqrt.pop %v2615
        %v2624 = vrsqrt.pop %v2616
        %v2625 = vrsqrt.pop %v2617
        %v2626 = vrsqrt.pop %v2618
        %v2627 = vrsqrt.pop %v2619
        %v2628 = vrsqrt.pop %v2620
        %v2629 = vmul.f32 %v2565, %v2621
        %v2630 = vmul.f32 %v2566, %v2622
        %v2631 = vmul.f32 %v2567, %v2623
        %v2632 = vmul.f32 %v2568, %v2624
        %v2633 = vmul.f32 %v2569, %v2625
        %v2634 = vmul.f32 %v2570, %v2626
        %v2635 = vmul.f32 %v2571, %v2627
        %v2636 = vmul.f32 %v2572, %v2628
        %v2638 = vlaneseq
        %v2639 = vshrl.u32 %v2638, 7
        %v2640 = vsub.s32 0, %v2639
        %v2641 = vrot.slane %v2531, %v2640
        %v2643 = vmul.f32 %v2629, %v2641
        %v2644 = vmul.f32 %v2630, %v2641
        %v2645 = vmul.f32 %v2631, %v2641
        %v2646 = vmul.f32 %v2632, %v2641
        %v2647 = vmul.f32 %v2633, %v2641
        %v2648 = vmul.f32 %v2634, %v2641
        %v2649 = vmul.f32 %v2635, %v2641
        %v2650 = vmul.f32 %v2636, %v2641
        %v2652 = vlaneseq
        %v2653 = vshrl.u32 %v2652, 7
        %v2654 = vsub.s32 0, %v2653
        %v2655 = vrot.slane %v2532, %v2654
        %v2657 = vadd.f32 %v2643, %v2655
        %v2658 = vadd.f32 %v2644, %v2655
        %v2659 = vadd.f32 %v2645, %v2655
        %v2660 = vadd.f32 %v2646, %v2655
        %v2661 = vadd.f32 %v2647, %v2655
        %v2662 = vadd.f32 %v2648, %v2655
        %v2663 = vadd.f32 %v2649, %v2655
        %v2664 = vadd.f32 %v2650, %v2655
        %v2665 = vld [vmem:[%s17] sm:$0xff]
        %v2666 = vld [vmem:[%s17 + $0x8] sm:$0xff]
        %v2667 = vld [vmem:[%s17 + $0x10] sm:$0xff]
        %v2668 = vld [vmem:[%s17 + $0x18] sm:$0xff]
        %v2669 = vld [vmem:[%s18] sm:$0x1]
        %v2671 = vlaneseq
        %v2672 = vshrl.u32 %v2671, 7
        %v2673 = vsub.s32 0, %v2672
        %v2674 = vrot.slane %v2669, %v2673
        %v2677 = vsel %vm830, %v2657, 0
        %v2680 = vsel %vm830, %v2658, 0
        %v2683 = vsel %vm830, %v2659, 0
        %v2686 = vsel %vm830, %v2660, 0
        %v2689 = vsel %vm830, %v2661, 0
        %v2692 = vsel %vm830, %v2662, 0
        %v2695 = vsel %vm830, %v2663, 0
        %v2698 = vsel %vm830, %v2664, 0
        %2700 = vmatprep.subr.mxu0 0.0
        %2701 = vmatpush1.msra.mxu0 %v2665
        %2702 = vmatprep.subr.mxu0 0.0
        %2703 = vmatpush1.msra.mxu0 %v2666
        %2704 = vmatprep.subr.mxu0 0.0
        %2705 = vmatpush1.msra.mxu0 %v2667
        %2706 = vmatprep.subr.mxu0 0.0
        %2707 = vmatpush1.msra.mxu0 %v2668
        %2708 = vmatprep.subr.mxu0 0.0
        %2709 = vmatpush1.msra.mxu0 0.0
        %2710 = vmatprep.subr.mxu0 0.0
        %2711 = vmatpush1.msra.mxu0 0.0
        %2712 = vmatprep.subr.mxu0 0.0
        %2713 = vmatpush1.msra.mxu0 0.0
        %2714 = vmatprep.subr.mxu0 0.0
        %2715 = vmatpush1.msra.mxu0 0.0
        %2716 = vmatprep.subr.mxu0 0.0
        %2717 = vmatpush1.msra.mxu0 0.0
        %2718 = vmatprep.subr.mxu0 0.0
        %2719 = vmatpush1.msra.mxu0 0.0
        %2720 = vmatprep.subr.mxu0 0.0
        %2721 = vmatpush1.msra.mxu0 0.0
        %2722 = vmatprep.subr.mxu0 0.0
        %2723 = vmatpush1.msra.mxu0 0.0
        %2724 = vmatprep.subr.mxu0 0.0
        %2725 = vmatpush1.msra.mxu0 0.0
        %2726 = vmatprep.subr.mxu0 0.0
        %2727 = vmatpush1.msra.mxu0 0.0
        %2728 = vmatprep.subr.mxu0 0.0
        %2729 = vmatpush1.msra.mxu0 0.0
        %2730 = vmatprep.subr.mxu0 0.0
        %2731 = vmatpush1.msra.mxu0 0.0
        %2732 = vmatprep.subr.mxu0 0.0
        %2733 = vmatpush1.msra.mxu0 0.0
        %2734 = vmatprep.subr.mxu0 0.0
        %2735 = vmatpush1.msra.mxu0 0.0
        %2736 = vmatprep.subr.mxu0 0.0
        %2737 = vmatpush1.msra.mxu0 0.0
        %2738 = vmatprep.subr.mxu0 0.0
        %2739 = vmatpush1.msra.mxu0 0.0
        %2740 = vmatprep.subr.mxu0 0.0
        %2741 = vmatpush1.msra.mxu0 0.0
        %2742 = vmatprep.subr.mxu0 0.0
        %2743 = vmatpush1.msra.mxu0 0.0
        %2744 = vmatprep.subr.mxu0 0.0
        %2745 = vmatpush1.msra.mxu0 0.0
        %2746 = vmatprep.subr.mxu0 0.0
        %2747 = vmatpush1.msra.mxu0 0.0
        %2748 = vmatprep.subr.mxu0 0.0
        %2749 = vmatpush1.msra.mxu0 0.0
        %2750 = vmatprep.subr.mxu0 0.0
        %2751 = vmatpush1.msra.mxu0 0.0
        %2752 = vmatprep.subr.mxu0 0.0
        %2753 = vmatpush1.msra.mxu0 0.0
        %2754 = vmatprep.subr.mxu0 0.0
        %2755 = vmatpush1.msra.mxu0 0.0
        %2756 = vmatprep.subr.mxu0 0.0
        %2757 = vmatpush1.msra.mxu0 0.0
        %2758 = vmatprep.subr.mxu0 0.0
        %2759 = vmatpush1.msra.mxu0 0.0
        %2760 = vmatprep.subr.mxu0 0.0
        %2761 = vmatpush1.msra.mxu0 0.0
        %2762 = vmatprep.subr.mxu0 0.0
        %2763 = vmatpush1.msra.mxu0 0.0
        %2764 = vmatprep.mubr.f32.mxu0 0.0
        %2765 = vmatmul.mubr.f32.gmra.mrb[0].mxu0 %v2677
        %v2766 = vpop.f32.mrb[0].mxu0
        %v2767 = vadd.f32 %v2674, %v2766
        %v2768 = vpop.f32.mrb[0].mxu0
        %2769 = vmatprep.mubr.f32.mxu0 0.0
        %2770 = vmatmul.mubr.f32.gmra.mrb[0].mxu0 %v2680
        %v2771 = vpop.f32.mrb[0].mxu0
        %v2772 = vadd.f32 %v2674, %v2771
        %v2773 = vpop.f32.mrb[0].mxu0
        %2774 = vmatprep.mubr.f32.mxu0 0.0
        %2775 = vmatmul.mubr.f32.gmra.mrb[0].mxu0 %v2683
        %v2776 = vpop.f32.mrb[0].mxu0
        %v2777 = vadd.f32 %v2674, %v2776
        %v2778 = vpop.f32.mrb[0].mxu0
        %2779 = vmatprep.mubr.f32.mxu0 0.0
        %2780 = vmatmul.mubr.f32.gmra.mrb[0].mxu0 %v2686
        %v2781 = vpop.f32.mrb[0].mxu0
        %v2782 = vadd.f32 %v2674, %v2781
        %v2783 = vpop.f32.mrb[0].mxu0
        %2784 = vmatprep.mubr.f32.mxu0 0.0
        %2785 = vmatmul.mubr.f32.gmra.mrb[0].mxu0 %v2689
        %v2786 = vpop.f32.mrb[0].mxu0
        %v2787 = vadd.f32 %v2674, %v2786
        %v2788 = vpop.f32.mrb[0].mxu0
        %2789 = vmatprep.mubr.f32.mxu0 0.0
        %2790 = vmatmul.mubr.f32.gmra.mrb[0].mxu0 %v2692
        %v2791 = vpop.f32.mrb[0].mxu0
        %v2792 = vadd.f32 %v2674, %v2791
        %v2793 = vpop.f32.mrb[0].mxu0
        %2794 = vmatprep.mubr.f32.mxu0 0.0
        %2795 = vmatmul.mubr.f32.gmra.mrb[0].mxu0 %v2695
        %v2796 = vpop.f32.mrb[0].mxu0
        %v2797 = vadd.f32 %v2674, %v2796
        %v2798 = vpop.f32.mrb[0].mxu0
        %2799 = vmatprep.mubr.f32.mxu0 0.0
        %2800 = vmatmul.mubr.f32.gmra.mrb[0].mxu0 %v2698
        %v2801 = vpop.f32.mrb[0].mxu0
        %v2802 = vadd.f32 %v2674, %v2801
        %v2803 = vpop.f32.mrb[0].mxu0
        %2804 = vdwg.mxu0
        %v2805 = vmax.f32 %v2767, 0.0
        %v2806 = vmax.f32 %v2772, 0.0
        %v2807 = vmax.f32 %v2777, 0.0
        %v2808 = vmax.f32 %v2782, 0.0
        %v2809 = vmax.f32 %v2787, 0.0
        %v2810 = vmax.f32 %v2792, 0.0
        %v2811 = vmax.f32 %v2797, 0.0
        %v2812 = vmax.f32 %v2802, 0.0
        %v2813 = vld [vmem:[%s19] sm:$0xff]
        %v2814 = vld [vmem:[%s19 + $0x8] sm:$0xff]
        %v2815 = vld [vmem:[%s19 + $0x10] sm:$0xff]
        %v2816 = vld [vmem:[%s19 + $0x18] sm:$0xff]
        %v2817 = vld [vmem:[%s19 + $0x20] sm:$0xff]
        %v2818 = vld [vmem:[%s19 + $0x28] sm:$0xff]
        %v2819 = vld [vmem:[%s19 + $0x30] sm:$0xff]
        %v2820 = vld [vmem:[%s19 + $0x38] sm:$0xff]
        %v2822 = vsel %vm1528, %v2805, 0
        %v2825 = vsel %vm1528, %v2806, 0
        %v2828 = vsel %vm1528, %v2807, 0
        %v2831 = vsel %vm1528, %v2808, 0
        %v2834 = vsel %vm1528, %v2809, 0
        %v2837 = vsel %vm1528, %v2810, 0
        %v2840 = vsel %vm1528, %v2811, 0
        %v2843 = vsel %vm1528, %v2812, 0
        %2845 = vmatprep.subr.mxu0 0.0
        %2846 = vmatpush1.msra.mxu0 %v2813
        %2847 = vmatprep.subr.mxu0 0.0
        %2848 = vmatpush1.msra.mxu0 %v2814
        %2849 = vmatprep.subr.mxu0 0.0
        %2850 = vmatpush1.msra.mxu0 %v2815
        %2851 = vmatprep.subr.mxu0 0.0
        %2852 = vmatpush1.msra.mxu0 %v2816
        %2853 = vmatprep.subr.mxu0 0.0
        %2854 = vmatpush1.msra.mxu0 %v2817
        %2855 = vmatprep.subr.mxu0 0.0
        %2856 = vmatpush1.msra.mxu0 %v2818
        %2857 = vmatprep.subr.mxu0 0.0
        %2858 = vmatpush1.msra.mxu0 %v2819
        %2859 = vmatprep.subr.mxu0 0.0
        %2860 = vmatpush1.msra.mxu0 %v2820
        %2861 = vmatprep.subr.mxu0 0.0
        %2862 = vmatpush1.msra.mxu0 0.0
        %2863 = vmatprep.subr.mxu0 0.0
        %2864 = vmatpush1.msra.mxu0 0.0
        %2865 = vmatprep.subr.mxu0 0.0
        %2866 = vmatpush1.msra.mxu0 0.0
        %2867 = vmatprep.subr.mxu0 0.0
        %2868 = vmatpush1.msra.mxu0 0.0
        %2869 = vmatprep.subr.mxu0 0.0
        %2870 = vmatpush1.msra.mxu0 0.0
        %2871 = vmatprep.subr.mxu0 0.0
        %2872 = vmatpush1.msra.mxu0 0.0
        %2873 = vmatprep.subr.mxu0 0.0
        %2874 = vmatpush1.msra.mxu0 0.0
        %2875 = vmatprep.subr.mxu0 0.0
        %2876 = vmatpush1.msra.mxu0 0.0
        %2877 = vmatprep.subr.mxu0 0.0
        %2878 = vmatpush1.msra.mxu0 0.0
        %2879 = vmatprep.subr.mxu0 0.0
        %2880 = vmatpush1.msra.mxu0 0.0
        %2881 = vmatprep.subr.mxu0 0.0
        %2882 = vmatpush1.msra.mxu0 0.0
        %2883 = vmatprep.subr.mxu0 0.0
        %2884 = vmatpush1.msra.mxu0 0.0
        %2885 = vmatprep.subr.mxu0 0.0
        %2886 = vmatpush1.msra.mxu0 0.0
        %2887 = vmatprep.subr.mxu0 0.0
        %2888 = vmatpush1.msra.mxu0 0.0
        %2889 = vmatprep.subr.mxu0 0.0
        %2890 = vmatpush1.msra.mxu0 0.0
        %2891 = vmatprep.subr.mxu0 0.0
        %2892 = vmatpush1.msra.mxu0 0.0
        %2893 = vmatprep.subr.mxu0 0.0
        %2894 = vmatpush1.msra.mxu0 0.0
        %2895 = vmatprep.subr.mxu0 0.0
        %2896 = vmatpush1.msra.mxu0 0.0
        %2897 = vmatprep.subr.mxu0 0.0
        %2898 = vmatpush1.msra.mxu0 0.0
        %2899 = vmatprep.subr.mxu0 0.0
        %2900 = vmatpush1.msra.mxu0 0.0
        %2901 = vmatprep.subr.mxu0 0.0
        %2902 = vmatpush1.msra.mxu0 0.0
        %2903 = vmatprep.subr.mxu0 0.0
        %2904 = vmatpush1.msra.mxu0 0.0
        %2905 = vmatprep.subr.mxu0 0.0
        %2906 = vmatpush1.msra.mxu0 0.0
        %2907 = vmatprep.subr.mxu0 0.0
        %2908 = vmatpush1.msra.mxu0 0.0
        %2909 = vmatprep.mubr.f32.mxu0 0.0
        %2910 = vmatmul.mubr.f32.gmra.mrb[0].mxu0 %v2822
        %v2911 = vpop.f32.mrb[0].mxu0
        %v2912 = vadd.f32 0.0, %v2911
        %v2913 = vpop.f32.mrb[0].mxu0
        %2914 = vmatprep.mubr.f32.mxu0 0.0
        %2915 = vmatmul.mubr.f32.gmra.mrb[0].mxu0 %v2825
        %v2916 = vpop.f32.mrb[0].mxu0
        %v2917 = vadd.f32 0.0, %v2916
        %v2918 = vpop.f32.mrb[0].mxu0
        %2919 = vmatprep.mubr.f32.mxu0 0.0
        %2920 = vmatmul.mubr.f32.gmra.mrb[0].mxu0 %v2828
        %v2921 = vpop.f32.mrb[0].mxu0
        %v2922 = vadd.f32 0.0, %v2921
        %v2923 = vpop.f32.mrb[0].mxu0
        %2924 = vmatprep.mubr.f32.mxu0 0.0
        %2925 = vmatmul.mubr.f32.gmra.mrb[0].mxu0 %v2831
        %v2926 = vpop.f32.mrb[0].mxu0
        %v2927 = vadd.f32 0.0, %v2926
        %v2928 = vpop.f32.mrb[0].mxu0
        %2929 = vmatprep.mubr.f32.mxu0 0.0
        %2930 = vmatmul.mubr.f32.gmra.mrb[0].mxu0 %v2834
        %v2931 = vpop.f32.mrb[0].mxu0
        %v2932 = vadd.f32 0.0, %v2931
        %v2933 = vpop.f32.mrb[0].mxu0
        %2934 = vmatprep.mubr.f32.mxu0 0.0
        %2935 = vmatmul.mubr.f32.gmra.mrb[0].mxu0 %v2837
        %v2936 = vpop.f32.mrb[0].mxu0
        %v2937 = vadd.f32 0.0, %v2936
        %v2938 = vpop.f32.mrb[0].mxu0
        %2939 = vmatprep.mubr.f32.mxu0 0.0
        %2940 = vmatmul.mubr.f32.gmra.mrb[0].mxu0 %v2840
        %v2941 = vpop.f32.mrb[0].mxu0
        %v2942 = vadd.f32 0.0, %v2941
        %v2943 = vpop.f32.mrb[0].mxu0
        %2944 = vmatprep.mubr.f32.mxu0 0.0
        %2945 = vmatmul.mubr.f32.gmra.mrb[0].mxu0 %v2843
        %v2946 = vpop.f32.mrb[0].mxu0
        %v2947 = vadd.f32 0.0, %v2946
        %v2948 = vpop.f32.mrb[0].mxu0
        %2949 = vdwg.mxu0
        %v2950 = vadd.f32 %v2523, %v2912
        %v2951 = vadd.f32 %v2524, %v2917
        %v2952 = vadd.f32 %v2525, %v2922
        %v2953 = vadd.f32 %v2526, %v2927
        %v2954 = vadd.f32 %v2527, %v2932
        %v2955 = vadd.f32 %v2528, %v2937
        %v2956 = vadd.f32 %v2529, %v2942
        %v2957 = vadd.f32 %v2530, %v2947
        %v2958 = vld [vmem:[%s20] sm:$0x1]
        %v2960 = vlaneseq
        %v2961 = vshrl.u32 %v2960, 7
        %v2962 = vsub.s32 0, %v2961
        %v2963 = vrot.slane %v2958, %v2962
        %v2965 = vadd.f32 %v2950, %v2963
        %v2966 = vadd.f32 %v2951, %v2963
        %v2967 = vadd.f32 %v2952, %v2963
        %v2968 = vadd.f32 %v2953, %v2963
        %v2969 = vadd.f32 %v2954, %v2963
        %v2970 = vadd.f32 %v2955, %v2963
        %v2971 = vadd.f32 %v2956, %v2963
        %v2972 = vadd.f32 %v2957, %v2963
        %v2973 = vld [vmem:[%s3] sm:$0xff]
        %v2974 = vld [vmem:[%s3 + $0x8] sm:$0xff]
        %v2975 = vld [vmem:[%s3 + $0x10] sm:$0xff]
        %v2976 = vld [vmem:[%s3 + $0x18] sm:$0xff]
        %v2977 = vld [vmem:[%s3 + $0x20] sm:$0xff]
        %v2978 = vld [vmem:[%s3 + $0x28] sm:$0xff]
        %v2979 = vld [vmem:[%s3 + $0x30] sm:$0xff]
        %v2980 = vld [vmem:[%s3 + $0x38] sm:$0xff]
        %s2981 = scalar_lea.vmem %s9, 1
        %v2982 = vld [vmem:[%s2981] sm:$0x1]
        %s2983 = scalar_lea.vmem %s10, 1
        %v2984 = vld [vmem:[%s2983] sm:$0x1]
        %v2985 = vsel %vm830, %v2965, 0.0
        %2986 = vadd.xlane.f32.xlu0 %v2985
        %v2987 = vpop.xlane.xlu0 %2986
        %v2988 = vsel %vm830, %v2966, 0.0
        %2989 = vadd.xlane.f32.xlu0 %v2988
        %v2990 = vpop.xlane.xlu0 %2989
        %v2991 = vsel %vm830, %v2967, 0.0
        %2992 = vadd.xlane.f32.xlu0 %v2991
        %v2993 = vpop.xlane.xlu0 %2992
        %v2994 = vsel %vm830, %v2968, 0.0
        %2995 = vadd.xlane.f32.xlu0 %v2994
        %v2996 = vpop.xlane.xlu0 %2995
        %v2997 = vsel %vm830, %v2969, 0.0
        %2998 = vadd.xlane.f32.xlu0 %v2997
        %v2999 = vpop.xlane.xlu0 %2998
        %v3000 = vsel %vm830, %v2970, 0.0
        %3001 = vadd.xlane.f32.xlu0 %v3000
        %v3002 = vpop.xlane.xlu0 %3001
        %v3003 = vsel %vm830, %v2971, 0.0
        %3004 = vadd.xlane.f32.xlu0 %v3003
        %v3005 = vpop.xlane.xlu0 %3004
        %v3006 = vsel %vm830, %v2972, 0.0
        %3007 = vadd.xlane.f32.xlu0 %v3006
        %v3008 = vpop.xlane.xlu0 %3007
        %v3009 = vmul.f32 %v2987, %v855
        %v3010 = vmul.f32 %v2990, %v855
        %v3011 = vmul.f32 %v2993, %v855
        %v3012 = vmul.f32 %v2996, %v855
        %v3013 = vmul.f32 %v2999, %v855
        %v3014 = vmul.f32 %v3002, %v855
        %v3015 = vmul.f32 %v3005, %v855
        %v3016 = vmul.f32 %v3008, %v855
        %v3017 = vsub.f32 %v2965, %v3009
        %v3018 = vsub.f32 %v2966, %v3010
        %v3019 = vsub.f32 %v2967, %v3011
        %v3020 = vsub.f32 %v2968, %v3012
        %v3021 = vsub.f32 %v2969, %v3013
        %v3022 = vsub.f32 %v2970, %v3014
        %v3023 = vsub.f32 %v2971, %v3015
        %v3024 = vsub.f32 %v2972, %v3016
        %v3025 = vmul.f32 %v3017, %v3017
        %v3026 = vmul.f32 %v3018, %v3018
        %v3027 = vmul.f32 %v3019, %v3019
        %v3028 = vmul.f32 %v3020, %v3020
        %v3029 = vmul.f32 %v3021, %v3021
        %v3030 = vmul.f32 %v3022, %v3022
        %v3031 = vmul.f32 %v3023, %v3023
        %v3032 = vmul.f32 %v3024, %v3024
        %v3033 = vsel %vm830, %v3025, 0.0
        %3034 = vadd.xlane.f32.xlu0 %v3033
        %v3035 = vpop.xlane.xlu0 %3034
        %v3036 = vsel %vm830, %v3026, 0.0
        %3037 = vadd.xlane.f32.xlu0 %v3036
        %v3038 = vpop.xlane.xlu0 %3037
        %v3039 = vsel %vm830, %v3027, 0.0
        %3040 = vadd.xlane.f32.xlu0 %v3039
        %v3041 = vpop.xlane.xlu0 %3040
        %v3042 = vsel %vm830, %v3028, 0.0
        %3043 = vadd.xlane.f32.xlu0 %v3042
        %v3044 = vpop.xlane.xlu0 %3043
        %v3045 = vsel %vm830, %v3029, 0.0
        %3046 = vadd.xlane.f32.xlu0 %v3045
        %v3047 = vpop.xlane.xlu0 %3046
        %v3048 = vsel %vm830, %v3030, 0.0
        %3049 = vadd.xlane.f32.xlu0 %v3048
        %v3050 = vpop.xlane.xlu0 %3049
        %v3051 = vsel %vm830, %v3031, 0.0
        %3052 = vadd.xlane.f32.xlu0 %v3051
        %v3053 = vpop.xlane.xlu0 %3052
        %v3054 = vsel %vm830, %v3032, 0.0
        %3055 = vadd.xlane.f32.xlu0 %v3054
        %v3056 = vpop.xlane.xlu0 %3055
        %v3057 = vmul.f32 %v3035, %v855
        %v3058 = vmul.f32 %v3038, %v855
        %v3059 = vmul.f32 %v3041, %v855
        %v3060 = vmul.f32 %v3044, %v855
        %v3061 = vmul.f32 %v3047, %v855
        %v3062 = vmul.f32 %v3050, %v855
        %v3063 = vmul.f32 %v3053, %v855
        %v3064 = vmul.f32 %v3056, %v855
        %v3065 = vadd.f32 %v3057, 1e-05
        %v3066 = vadd.f32 %v3058, 1e-05
        %v3067 = vadd.f32 %v3059, 1e-05
        %v3068 = vadd.f32 %v3060, 1e-05
        %v3069 = vadd.f32 %v3061, 1e-05
        %v3070 = vadd.f32 %v3062, 1e-05
        %v3071 = vadd.f32 %v3063, 1e-05
        %v3072 = vadd.f32 %v3064, 1e-05
        %v3073 = vrsqrt.pop %v3065
        %v3074 = vrsqrt.pop %v3066
        %v3075 = vrsqrt.pop %v3067
        %v3076 = vrsqrt.pop %v3068
        %v3077 = vrsqrt.pop %v3069
        %v3078 = vrsqrt.pop %v3070
        %v3079 = vrsqrt.pop %v3071
        %v3080 = vrsqrt.pop %v3072
        %v3081 = vmul.f32 %v3017, %v3073
        %v3082 = vmul.f32 %v3018, %v3074
        %v3083 = vmul.f32 %v3019, %v3075
        %v3084 = vmul.f32 %v3020, %v3076
        %v3085 = vmul.f32 %v3021, %v3077
        %v3086 = vmul.f32 %v3022, %v3078
        %v3087 = vmul.f32 %v3023, %v3079
        %v3088 = vmul.f32 %v3024, %v3080
        %v3090 = vlaneseq
        %v3091 = vshrl.u32 %v3090, 7
        %v3092 = vsub.s32 0, %v3091
        %v3093 = vrot.slane %v2982, %v3092
        %v3095 = vmul.f32 %v3081, %v3093
        %v3096 = vmul.f32 %v3082, %v3093
        %v3097 = vmul.f32 %v3083, %v3093
        %v3098 = vmul.f32 %v3084, %v3093
        %v3099 = vmul.f32 %v3085, %v3093
        %v3100 = vmul.f32 %v3086, %v3093
        %v3101 = vmul.f32 %v3087, %v3093
        %v3102 = vmul.f32 %v3088, %v3093
        %v3104 = vlaneseq
        %v3105 = vshrl.u32 %v3104, 7
        %v3106 = vsub.s32 0, %v3105
        %v3107 = vrot.slane %v2984, %v3106
        %v3109 = vadd.f32 %v3095, %v3107
        %v3110 = vadd.f32 %v3096, %v3107
        %v3111 = vadd.f32 %v3097, %v3107
        %v3112 = vadd.f32 %v3098, %v3107
        %v3113 = vadd.f32 %v3099, %v3107
        %v3114 = vadd.f32 %v3100, %v3107
        %v3115 = vadd.f32 %v3101, %v3107
        %v3116 = vadd.f32 %v3102, %v3107
        %s3117 = scalar_lea.vmem %s11, 32
        %v3118 = vld [vmem:[%s3117] sm:$0xff]
        %v3119 = vld [vmem:[%s3117 + $0x8] sm:$0xff]
        %v3120 = vld [vmem:[%s3117 + $0x10] sm:$0xff]
        %v3121 = vld [vmem:[%s3117 + $0x18] sm:$0xff]
        %s3122 = scalar_lea.vmem %s12, 1
        %v3123 = vld [vmem:[%s3122] sm:$0x1]
        %v3125 = vlaneseq
        %v3126 = vshrl.u32 %v3125, 7
        %v3127 = vsub.s32 0, %v3126
        %v3128 = vrot.slane %v3123, %v3127
        %v3131 = vsel %vm830, %v3109, 0
        %v3134 = vsel %vm830, %v3110, 0
        %v3137 = vsel %vm830, %v3111, 0
        %v3140 = vsel %vm830, %v3112, 0
        %v3143 = vsel %vm830, %v3113, 0
        %v3146 = vsel %vm830, %v3114, 0
        %v3149 = vsel %vm830, %v3115, 0
        %v3152 = vsel %vm830, %v3116, 0
        %3154 = vmatprep.subr.mxu0 0.0
        %3155 = vmatpush1.msra.mxu0 %v3118
        %3156 = vmatprep.subr.mxu0 0.0
        %3157 = vmatpush1.msra.mxu0 %v3119
        %3158 = vmatprep.subr.mxu0 0.0
        %3159 = vmatpush1.msra.mxu0 %v3120
        %3160 = vmatprep.subr.mxu0 0.0
        %3161 = vmatpush1.msra.mxu0 %v3121
        %3162 = vmatprep.subr.mxu0 0.0
        %3163 = vmatpush1.msra.mxu0 0.0
        %3164 = vmatprep.subr.mxu0 0.0
        %3165 = vmatpush1.msra.mxu0 0.0
        %3166 = vmatprep.subr.mxu0 0.0
        %3167 = vmatpush1.msra.mxu0 0.0
        %3168 = vmatprep.subr.mxu0 0.0
        %3169 = vmatpush1.msra.mxu0 0.0
        %3170 = vmatprep.subr.mxu0 0.0
        %3171 = vmatpush1.msra.mxu0 0.0
        %3172 = vmatprep.subr.mxu0 0.0
        %3173 = vmatpush1.msra.mxu0 0.0
        %3174 = vmatprep.subr.mxu0 0.0
        %3175 = vmatpush1.msra.mxu0 0.0
        %3176 = vmatprep.subr.mxu0 0.0
        %3177 = vmatpush1.msra.mxu0 0.0
        %3178 = vmatprep.subr.mxu0 0.0
        %3179 = vmatpush1.msra.mxu0 0.0
        %3180 = vmatprep.subr.mxu0 0.0
        %3181 = vmatpush1.msra.mxu0 0.0
        %3182 = vmatprep.subr.mxu0 0.0
        %3183 = vmatpush1.msra.mxu0 0.0
        %3184 = vmatprep.subr.mxu0 0.0
        %3185 = vmatpush1.msra.mxu0 0.0
        %3186 = vmatprep.subr.mxu0 0.0
        %3187 = vmatpush1.msra.mxu0 0.0
        %3188 = vmatprep.subr.mxu0 0.0
        %3189 = vmatpush1.msra.mxu0 0.0
        %3190 = vmatprep.subr.mxu0 0.0
        %3191 = vmatpush1.msra.mxu0 0.0
        %3192 = vmatprep.subr.mxu0 0.0
        %3193 = vmatpush1.msra.mxu0 0.0
        %3194 = vmatprep.subr.mxu0 0.0
        %3195 = vmatpush1.msra.mxu0 0.0
        %3196 = vmatprep.subr.mxu0 0.0
        %3197 = vmatpush1.msra.mxu0 0.0
        %3198 = vmatprep.subr.mxu0 0.0
        %3199 = vmatpush1.msra.mxu0 0.0
        %3200 = vmatprep.subr.mxu0 0.0
        %3201 = vmatpush1.msra.mxu0 0.0
        %3202 = vmatprep.subr.mxu0 0.0
        %3203 = vmatpush1.msra.mxu0 0.0
        %3204 = vmatprep.subr.mxu0 0.0
        %3205 = vmatpush1.msra.mxu0 0.0
        %3206 = vmatprep.subr.mxu0 0.0
        %3207 = vmatpush1.msra.mxu0 0.0
        %3208 = vmatprep.subr.mxu0 0.0
        %3209 = vmatpush1.msra.mxu0 0.0
        %3210 = vmatprep.subr.mxu0 0.0
        %3211 = vmatpush1.msra.mxu0 0.0
        %3212 = vmatprep.subr.mxu0 0.0
        %3213 = vmatpush1.msra.mxu0 0.0
        %3214 = vmatprep.subr.mxu0 0.0
        %3215 = vmatpush1.msra.mxu0 0.0
        %3216 = vmatprep.subr.mxu0 0.0
        %3217 = vmatpush1.msra.mxu0 0.0
        %3218 = vmatprep.mubr.f32.mxu0 0.0
        %3219 = vmatmul.mubr.f32.gmra.mrb[0].mxu0 %v3131
        %v3220 = vpop.f32.mrb[0].mxu0
        %v3221 = vadd.f32 %v3128, %v3220
        %v3222 = vpop.f32.mrb[0].mxu0
        %3223 = vmatprep.mubr.f32.mxu0 0.0
        %3224 = vmatmul.mubr.f32.gmra.mrb[0].mxu0 %v3134
        %v3225 = vpop.f32.mrb[0].mxu0
        %v3226 = vadd.f32 %v3128, %v3225
        %v3227 = vpop.f32.mrb[0].mxu0
        %3228 = vmatprep.mubr.f32.mxu0 0.0
        %3229 = vmatmul.mubr.f32.gmra.mrb[0].mxu0 %v3137
        %v3230 = vpop.f32.mrb[0].mxu0
        %v3231 = vadd.f32 %v3128, %v3230
        %v3232 = vpop.f32.mrb[0].mxu0
        %3233 = vmatprep.mubr.f32.mxu0 0.0
        %3234 = vmatmul.mubr.f32.gmra.mrb[0].mxu0 %v3140
        %v3235 = vpop.f32.mrb[0].mxu0
        %v3236 = vadd.f32 %v3128, %v3235
        %v3237 = vpop.f32.mrb[0].mxu0
        %3238 = vmatprep.mubr.f32.mxu0 0.0
        %3239 = vmatmul.mubr.f32.gmra.mrb[0].mxu0 %v3143
        %v3240 = vpop.f32.mrb[0].mxu0
        %v3241 = vadd.f32 %v3128, %v3240
        %v3242 = vpop.f32.mrb[0].mxu0
        %3243 = vmatprep.mubr.f32.mxu0 0.0
        %3244 = vmatmul.mubr.f32.gmra.mrb[0].mxu0 %v3146
        %v3245 = vpop.f32.mrb[0].mxu0
        %v3246 = vadd.f32 %v3128, %v3245
        %v3247 = vpop.f32.mrb[0].mxu0
        %3248 = vmatprep.mubr.f32.mxu0 0.0
        %3249 = vmatmul.mubr.f32.gmra.mrb[0].mxu0 %v3149
        %v3250 = vpop.f32.mrb[0].mxu0
        %v3251 = vadd.f32 %v3128, %v3250
        %v3252 = vpop.f32.mrb[0].mxu0
        %3253 = vmatprep.mubr.f32.mxu0 0.0
        %3254 = vmatmul.mubr.f32.gmra.mrb[0].mxu0 %v3152
        %v3255 = vpop.f32.mrb[0].mxu0
        %v3256 = vadd.f32 %v3128, %v3255
        %v3257 = vpop.f32.mrb[0].mxu0
        %3258 = vdwg.mxu0
        %s3259 = scalar_lea.vmem %s13, 32
        %v3260 = vld [vmem:[%s3259] sm:$0xff]
        %v3261 = vld [vmem:[%s3259 + $0x8] sm:$0xff]
        %v3262 = vld [vmem:[%s3259 + $0x10] sm:$0xff]
        %v3263 = vld [vmem:[%s3259 + $0x18] sm:$0xff]
        %v3264 = vmul.f32 %v3221, %v1115
        %v3265 = vmul.f32 %v3226, %v1115
        %v3266 = vmul.f32 %v3231, %v1115
        %v3267 = vmul.f32 %v3236, %v1115
        %v3268 = vmul.f32 %v3241, %v1115
        %v3269 = vmul.f32 %v3246, %v1115
        %v3270 = vmul.f32 %v3251, %v1115
        %v3271 = vmul.f32 %v3256, %v1115
        %v3272 = vmul.f32 %v3221, %v1133
        %v3273 = vmul.f32 %v3226, %v1133
        %v3274 = vmul.f32 %v3231, %v1133
        %v3275 = vmul.f32 %v3236, %v1133
        %v3276 = vmul.f32 %v3241, %v1133
        %v3277 = vmul.f32 %v3246, %v1133
        %v3278 = vmul.f32 %v3251, %v1133
        %v3279 = vmul.f32 %v3256, %v1133
        %v3280 = vmul.f32 %v3221, %v1151
        %v3281 = vmul.f32 %v3226, %v1151
        %v3282 = vmul.f32 %v3231, %v1151
        %v3283 = vmul.f32 %v3236, %v1151
        %v3284 = vmul.f32 %v3241, %v1151
        %v3285 = vmul.f32 %v3246, %v1151
        %v3286 = vmul.f32 %v3251, %v1151
        %v3287 = vmul.f32 %v3256, %v1151
        %v3288 = vmul.f32 %v3221, %v1169
        %v3289 = vmul.f32 %v3226, %v1169
        %v3290 = vmul.f32 %v3231, %v1169
        %v3291 = vmul.f32 %v3236, %v1169
        %v3292 = vmul.f32 %v3241, %v1169
        %v3293 = vmul.f32 %v3246, %v1169
        %v3294 = vmul.f32 %v3251, %v1169
        %v3295 = vmul.f32 %v3256, %v1169
        %v3296 = vmul.f32 %v3221, %v1180
        %v3297 = vmul.f32 %v3226, %v1180
        %v3298 = vmul.f32 %v3231, %v1180
        %v3299 = vmul.f32 %v3236, %v1180
        %v3300 = vmul.f32 %v3241, %v1180
        %v3301 = vmul.f32 %v3246, %v1180
        %v3302 = vmul.f32 %v3251, %v1180
        %v3303 = vmul.f32 %v3256, %v1180
        %v3304 = vmul.f32 %v3221, %v1191
        %v3305 = vmul.f32 %v3226, %v1191
        %v3306 = vmul.f32 %v3231, %v1191
        %v3307 = vmul.f32 %v3236, %v1191
        %v3308 = vmul.f32 %v3241, %v1191
        %v3309 = vmul.f32 %v3246, %v1191
        %v3310 = vmul.f32 %v3251, %v1191
        %v3311 = vmul.f32 %v3256, %v1191
        %v3312 = vmul.f32 %v3221, %v1202
        %v3313 = vmul.f32 %v3226, %v1202
        %v3314 = vmul.f32 %v3231, %v1202
        %v3315 = vmul.f32 %v3236, %v1202
        %v3316 = vmul.f32 %v3241, %v1202
        %v3317 = vmul.f32 %v3246, %v1202
        %v3318 = vmul.f32 %v3251, %v1202
        %v3319 = vmul.f32 %v3256, %v1202
        %v3320 = vmul.f32 %v3221, %v1213
        %v3321 = vmul.f32 %v3226, %v1213
        %v3322 = vmul.f32 %v3231, %v1213
        %v3323 = vmul.f32 %v3236, %v1213
        %v3324 = vmul.f32 %v3241, %v1213
        %v3325 = vmul.f32 %v3246, %v1213
        %v3326 = vmul.f32 %v3251, %v1213
        %v3327 = vmul.f32 %v3256, %v1213
        %3360 = vrot.lane.b32.xlu0 %v3264, 96
        %v3361 = vpop.permute.xlu0 %3360
        %3362 = vrot.lane.b32.xlu0 %v3265, 96
        %v3363 = vpop.permute.xlu0 %3362
        %3364 = vrot.lane.b32.xlu0 %v3266, 96
        %v3365 = vpop.permute.xlu0 %3364
        %3366 = vrot.lane.b32.xlu0 %v3267, 96
        %v3367 = vpop.permute.xlu0 %3366
        %3368 = vrot.lane.b32.xlu0 %v3268, 96
        %v3369 = vpop.permute.xlu0 %3368
        %3370 = vrot.lane.b32.xlu0 %v3269, 96
        %v3371 = vpop.permute.xlu0 %3370
        %3372 = vrot.lane.b32.xlu0 %v3270, 96
        %v3373 = vpop.permute.xlu0 %3372
        %3374 = vrot.lane.b32.xlu0 %v3271, 96
        %v3375 = vpop.permute.xlu0 %3374
        %3376 = vrot.lane.b32.xlu0 %v3272, 96
        %v3377 = vpop.permute.xlu0 %3376
        %3378 = vrot.lane.b32.xlu0 %v3273, 96
        %v3379 = vpop.permute.xlu0 %3378
        %3380 = vrot.lane.b32.xlu0 %v3274, 96
        %v3381 = vpop.permute.xlu0 %3380
        %3382 = vrot.lane.b32.xlu0 %v3275, 96
        %v3383 = vpop.permute.xlu0 %3382
        %3384 = vrot.lane.b32.xlu0 %v3276, 96
        %v3385 = vpop.permute.xlu0 %3384
        %3386 = vrot.lane.b32.xlu0 %v3277, 96
        %v3387 = vpop.permute.xlu0 %3386
        %3388 = vrot.lane.b32.xlu0 %v3278, 96
        %v3389 = vpop.permute.xlu0 %3388
        %3390 = vrot.lane.b32.xlu0 %v3279, 96
        %v3391 = vpop.permute.xlu0 %3390
        %3392 = vrot.lane.b32.xlu0 %v3280, 96
        %v3393 = vpop.permute.xlu0 %3392
        %3394 = vrot.lane.b32.xlu0 %v3281, 96
        %v3395 = vpop.permute.xlu0 %3394
        %3396 = vrot.lane.b32.xlu0 %v3282, 96
        %v3397 = vpop.permute.xlu0 %3396
        %3398 = vrot.lane.b32.xlu0 %v3283, 96
        %v3399 = vpop.permute.xlu0 %3398
        %3400 = vrot.lane.b32.xlu0 %v3284, 96
        %v3401 = vpop.permute.xlu0 %3400
        %3402 = vrot.lane.b32.xlu0 %v3285, 96
        %v3403 = vpop.permute.xlu0 %3402
        %3404 = vrot.lane.b32.xlu0 %v3286, 96
        %v3405 = vpop.permute.xlu0 %3404
        %3406 = vrot.lane.b32.xlu0 %v3287, 96
        %v3407 = vpop.permute.xlu0 %3406
        %3408 = vrot.lane.b32.xlu0 %v3288, 96
        %v3409 = vpop.permute.xlu0 %3408
        %3410 = vrot.lane.b32.xlu0 %v3289, 96
        %v3411 = vpop.permute.xlu0 %3410
        %3412 = vrot.lane.b32.xlu0 %v3290, 96
        %v3413 = vpop.permute.xlu0 %3412
        %3414 = vrot.lane.b32.xlu0 %v3291, 96
        %v3415 = vpop.permute.xlu0 %3414
        %3416 = vrot.lane.b32.xlu0 %v3292, 96
        %v3417 = vpop.permute.xlu0 %3416
        %3418 = vrot.lane.b32.xlu0 %v3293, 96
        %v3419 = vpop.permute.xlu0 %3418
        %3420 = vrot.lane.b32.xlu0 %v3294, 96
        %v3421 = vpop.permute.xlu0 %3420
        %3422 = vrot.lane.b32.xlu0 %v3295, 96
        %v3423 = vpop.permute.xlu0 %3422
        %v3425 = vsel %vm830, %v3221, 0
        %v3428 = vsel %vm830, %v3226, 0
        %v3431 = vsel %vm830, %v3231, 0
        %v3434 = vsel %vm830, %v3236, 0
        %v3437 = vsel %vm830, %v3241, 0
        %v3440 = vsel %vm830, %v3246, 0
        %v3443 = vsel %vm830, %v3251, 0
        %v3446 = vsel %vm830, %v3256, 0
        %v3448 = vsel %vm830, %v3361, 0
        %v3450 = vsel %vm830, %v3363, 0
        %v3452 = vsel %vm830, %v3365, 0
        %v3454 = vsel %vm830, %v3367, 0
        %v3456 = vsel %vm830, %v3369, 0
        %v3458 = vsel %vm830, %v3371, 0
        %v3460 = vsel %vm830, %v3373, 0
        %v3462 = vsel %vm830, %v3375, 0
        %v3464 = vsel %vm830, %v3377, 0
        %v3466 = vsel %vm830, %v3379, 0
        %v3468 = vsel %vm830, %v3381, 0
        %v3470 = vsel %vm830, %v3383, 0
        %v3472 = vsel %vm830, %v3385, 0
        %v3474 = vsel %vm830, %v3387, 0
        %v3476 = vsel %vm830, %v3389, 0
        %v3478 = vsel %vm830, %v3391, 0
        %v3480 = vsel %vm830, %v3393, 0
        %v3482 = vsel %vm830, %v3395, 0
        %v3484 = vsel %vm830, %v3397, 0
        %v3486 = vsel %vm830, %v3399, 0
        %v3488 = vsel %vm830, %v3401, 0
        %v3490 = vsel %vm830, %v3403, 0
        %v3492 = vsel %vm830, %v3405, 0
        %v3494 = vsel %vm830, %v3407, 0
        %v3496 = vsel %vm830, %v3409, 0
        %v3498 = vsel %vm830, %v3411, 0
        %v3500 = vsel %vm830, %v3413, 0
        %v3502 = vsel %vm830, %v3415, 0
        %v3504 = vsel %vm830, %v3417, 0
        %v3506 = vsel %vm830, %v3419, 0
        %v3508 = vsel %vm830, %v3421, 0
        %v3510 = vsel %vm830, %v3423, 0
        %3512 = vmatprep.subr.mxu0 0.0
        %3513 = vmatpush1.xpose.msra.mxu0 %v3448
        %3514 = vmatprep.subr.mxu0 0.0
        %3515 = vmatpush1.xpose.msra.mxu0 %v3450
        %3516 = vmatprep.subr.mxu0 0.0
        %3517 = vmatpush1.xpose.msra.mxu0 %v3452
        %3518 = vmatprep.subr.mxu0 0.0
        %3519 = vmatpush1.xpose.msra.mxu0 %v3454
        %3520 = vmatprep.subr.mxu0 0.0
        %3521 = vmatpush1.xpose.msra.mxu0 %v3456
        %3522 = vmatprep.subr.mxu0 0.0
        %3523 = vmatpush1.xpose.msra.mxu0 %v3458
        %3524 = vmatprep.subr.mxu0 0.0
        %3525 = vmatpush1.xpose.msra.mxu0 %v3460
        %3526 = vmatprep.subr.mxu0 0.0
        %3527 = vmatpush1.xpose.msra.mxu0 %v3462
        %3528 = vmatprep.subr.mxu0 0.0
        %3529 = vmatpush1.xpose.msra.mxu0 %v3464
        %3530 = vmatprep.subr.mxu0 0.0
        %3531 = vmatpush1.xpose.msra.mxu0 %v3466
        %3532 = vmatprep.subr.mxu0 0.0
        %3533 = vmatpush1.xpose.msra.mxu0 %v3468
        %3534 = vmatprep.subr.mxu0 0.0
        %3535 = vmatpush1.xpose.msra.mxu0 %v3470
        %3536 = vmatprep.subr.mxu0 0.0
        %3537 = vmatpush1.xpose.msra.mxu0 %v3472
        %3538 = vmatprep.subr.mxu0 0.0
        %3539 = vmatpush1.xpose.msra.mxu0 %v3474
        %3540 = vmatprep.subr.mxu0 0.0
        %3541 = vmatpush1.xpose.msra.mxu0 %v3476
        %3542 = vmatprep.subr.mxu0 0.0
        %3543 = vmatpush1.xpose.msra.mxu0 %v3478
        %3544 = vmatprep.subr.mxu0 0.0
        %3545 = vmatpush1.xpose.msra.mxu0 %v3480
        %3546 = vmatprep.subr.mxu0 0.0
        %3547 = vmatpush1.xpose.msra.mxu0 %v3482
        %3548 = vmatprep.subr.mxu0 0.0
        %3549 = vmatpush1.xpose.msra.mxu0 %v3484
        %3550 = vmatprep.subr.mxu0 0.0
        %3551 = vmatpush1.xpose.msra.mxu0 %v3486
        %3552 = vmatprep.subr.mxu0 0.0
        %3553 = vmatpush1.xpose.msra.mxu0 %v3488
        %3554 = vmatprep.subr.mxu0 0.0
        %3555 = vmatpush1.xpose.msra.mxu0 %v3490
        %3556 = vmatprep.subr.mxu0 0.0
        %3557 = vmatpush1.xpose.msra.mxu0 %v3492
        %3558 = vmatprep.subr.mxu0 0.0
        %3559 = vmatpush1.xpose.msra.mxu0 %v3494
        %3560 = vmatprep.subr.mxu0 0.0
        %3561 = vmatpush1.xpose.msra.mxu0 %v3496
        %3562 = vmatprep.subr.mxu0 0.0
        %3563 = vmatpush1.xpose.msra.mxu0 %v3498
        %3564 = vmatprep.subr.mxu0 0.0
        %3565 = vmatpush1.xpose.msra.mxu0 %v3500
        %3566 = vmatprep.subr.mxu0 0.0
        %3567 = vmatpush1.xpose.msra.mxu0 %v3502
        %3568 = vmatprep.subr.mxu0 0.0
        %3569 = vmatpush1.xpose.msra.mxu0 %v3504
        %3570 = vmatprep.subr.mxu0 0.0
        %3571 = vmatpush1.xpose.msra.mxu0 %v3506
        %3572 = vmatprep.subr.mxu0 0.0
        %3573 = vmatpush1.xpose.msra.mxu0 %v3508
        %3574 = vmatprep.subr.mxu0 0.0
        %3575 = vmatpush1.xpose.msra.mxu0 %v3510
        %3576 = vmatprep.mubr.f32.mxu0 0.0
        %3577 = vmatmul.mubr.f32.gmra.mrb[0].mxu0 %v3425
        %v3578 = vpop.f32.mrb[0].mxu0
        %v3579 = vadd.f32 0.0, %v3578
        %v3580 = vpop.f32.mrb[0].mxu0
        %v3581 = vadd.f32 0.0, %v3580
        %3582 = vmatprep.mubr.f32.mxu0 0.0
        %3583 = vmatmul.mubr.f32.gmra.mrb[0].mxu0 %v3428
        %v3584 = vpop.f32.mrb[0].mxu0
        %v3585 = vadd.f32 0.0, %v3584
        %v3586 = vpop.f32.mrb[0].mxu0
        %v3587 = vadd.f32 0.0, %v3586
        %3588 = vmatprep.mubr.f32.mxu0 0.0
        %3589 = vmatmul.mubr.f32.gmra.mrb[0].mxu0 %v3431
        %v3590 = vpop.f32.mrb[0].mxu0
        %v3591 = vadd.f32 0.0, %v3590
        %v3592 = vpop.f32.mrb[0].mxu0
        %v3593 = vadd.f32 0.0, %v3592
        %3594 = vmatprep.mubr.f32.mxu0 0.0
        %3595 = vmatmul.mubr.f32.gmra.mrb[0].mxu0 %v3434
        %v3596 = vpop.f32.mrb[0].mxu0
        %v3597 = vadd.f32 0.0, %v3596
        %v3598 = vpop.f32.mrb[0].mxu0
        %v3599 = vadd.f32 0.0, %v3598
        %3600 = vmatprep.mubr.f32.mxu0 0.0
        %3601 = vmatmul.mubr.f32.gmra.mrb[0].mxu0 %v3437
        %v3602 = vpop.f32.mrb[0].mxu0
        %v3603 = vadd.f32 0.0, %v3602
        %v3604 = vpop.f32.mrb[0].mxu0
        %v3605 = vadd.f32 0.0, %v3604
        %3606 = vmatprep.mubr.f32.mxu0 0.0
        %3607 = vmatmul.mubr.f32.gmra.mrb[0].mxu0 %v3440
        %v3608 = vpop.f32.mrb[0].mxu0
        %v3609 = vadd.f32 0.0, %v3608
        %v3610 = vpop.f32.mrb[0].mxu0
        %v3611 = vadd.f32 0.0, %v3610
        %3612 = vmatprep.mubr.f32.mxu0 0.0
        %3613 = vmatmul.mubr.f32.gmra.mrb[0].mxu0 %v3443
        %v3614 = vpop.f32.mrb[0].mxu0
        %v3615 = vadd.f32 0.0, %v3614
        %v3616 = vpop.f32.mrb[0].mxu0
        %v3617 = vadd.f32 0.0, %v3616
        %3618 = vmatprep.mubr.f32.mxu0 0.0
        %3619 = vmatmul.mubr.f32.gmra.mrb[0].mxu0 %v3446
        %v3620 = vpop.f32.mrb[0].mxu0
        %v3621 = vadd.f32 0.0, %v3620
        %v3622 = vpop.f32.mrb[0].mxu0
        %v3623 = vadd.f32 0.0, %v3622
        %3624 = vdwg.mxu0
        %v3625 = vadd.f32 %v3579, %v2973
        %v3626 = vadd.f32 %v3585, %v2974
        %v3627 = vadd.f32 %v3591, %v2975
        %v3628 = vadd.f32 %v3597, %v2976
        %v3629 = vadd.f32 %v3603, %v2977
        %v3630 = vadd.f32 %v3609, %v2978
        %v3631 = vadd.f32 %v3615, %v2979
        %v3632 = vadd.f32 %v3621, %v2980
        %v3633 = vsel %vm1528, %v3625, -inf
        %3634 = vmax.xlane.f32.xlu0 %v3633
        %v3635 = vpop.xlane.xlu0 %3634
        %v3636 = vsel %vm1528, %v3626, -inf
        %3637 = vmax.xlane.f32.xlu0 %v3636
        %v3638 = vpop.xlane.xlu0 %3637
        %v3639 = vsel %vm1528, %v3627, -inf
        %3640 = vmax.xlane.f32.xlu0 %v3639
        %v3641 = vpop.xlane.xlu0 %3640
        %v3642 = vsel %vm1528, %v3628, -inf
        %3643 = vmax.xlane.f32.xlu0 %v3642
        %v3644 = vpop.xlane.xlu0 %3643
        %v3645 = vsel %vm1528, %v3629, -inf
        %3646 = vmax.xlane.f32.xlu0 %v3645
        %v3647 = vpop.xlane.xlu0 %3646
        %v3648 = vsel %vm1528, %v3630, -inf
        %3649 = vmax.xlane.f32.xlu0 %v3648
        %v3650 = vpop.xlane.xlu0 %3649
        %v3651 = vsel %vm1528, %v3631, -inf
        %3652 = vmax.xlane.f32.xlu0 %v3651
        %v3653 = vpop.xlane.xlu0 %3652
        %v3654 = vsel %vm1528, %v3632, -inf
        %3655 = vmax.xlane.f32.xlu0 %v3654
        %v3656 = vpop.xlane.xlu0 %3655
        %v3657 = vsub.f32 %v3625, %v3635
        %v3658 = vsub.f32 %v3626, %v3638
        %v3659 = vsub.f32 %v3627, %v3641
        %v3660 = vsub.f32 %v3628, %v3644
        %v3661 = vsub.f32 %v3629, %v3647
        %v3662 = vsub.f32 %v3630, %v3650
        %v3663 = vsub.f32 %v3631, %v3653
        %v3664 = vsub.f32 %v3632, %v3656
        %v3665 = vmul.f32 %v3657, 1.442695
        %v3666 = vpow.pop %v3665
        %v3667 = vmul.f32 %v3658, 1.442695
        %v3668 = vpow.pop %v3667
        %v3669 = vmul.f32 %v3659, 1.442695
        %v3670 = vpow.pop %v3669
        %v3671 = vmul.f32 %v3660, 1.442695
        %v3672 = vpow.pop %v3671
        %v3673 = vmul.f32 %v3661, 1.442695
        %v3674 = vpow.pop %v3673
        %v3675 = vmul.f32 %v3662, 1.442695
        %v3676 = vpow.pop %v3675
        %v3677 = vmul.f32 %v3663, 1.442695
        %v3678 = vpow.pop %v3677
        %v3679 = vmul.f32 %v3664, 1.442695
        %v3680 = vpow.pop %v3679
        %v3681 = vsel %vm1528, %v3666, 0.0
        %3682 = vadd.xlane.f32.xlu0 %v3681
        %v3683 = vpop.xlane.xlu0 %3682
        %v3684 = vsel %vm1528, %v3668, 0.0
        %3685 = vadd.xlane.f32.xlu0 %v3684
        %v3686 = vpop.xlane.xlu0 %3685
        %v3687 = vsel %vm1528, %v3670, 0.0
        %3688 = vadd.xlane.f32.xlu0 %v3687
        %v3689 = vpop.xlane.xlu0 %3688
        %v3690 = vsel %vm1528, %v3672, 0.0
        %3691 = vadd.xlane.f32.xlu0 %v3690
        %v3692 = vpop.xlane.xlu0 %3691
        %v3693 = vsel %vm1528, %v3674, 0.0
        %3694 = vadd.xlane.f32.xlu0 %v3693
        %v3695 = vpop.xlane.xlu0 %3694
        %v3696 = vsel %vm1528, %v3676, 0.0
        %3697 = vadd.xlane.f32.xlu0 %v3696
        %v3698 = vpop.xlane.xlu0 %3697
        %v3699 = vsel %vm1528, %v3678, 0.0
        %3700 = vadd.xlane.f32.xlu0 %v3699
        %v3701 = vpop.xlane.xlu0 %3700
        %v3702 = vsel %vm1528, %v3680, 0.0
        %3703 = vadd.xlane.f32.xlu0 %v3702
        %v3704 = vpop.xlane.xlu0 %3703
        %v3705 = vrcp.pop %v3683
        %v3706 = vrcp.pop %v3686
        %v3707 = vrcp.pop %v3689
        %v3708 = vrcp.pop %v3692
        %v3709 = vrcp.pop %v3695
        %v3710 = vrcp.pop %v3698
        %v3711 = vrcp.pop %v3701
        %v3712 = vrcp.pop %v3704
        %v3713 = vmul.f32 %v3666, %v3705
        %v3714 = vmul.f32 %v3668, %v3706
        %v3715 = vmul.f32 %v3670, %v3707
        %v3716 = vmul.f32 %v3672, %v3708
        %v3717 = vmul.f32 %v3674, %v3709
        %v3718 = vmul.f32 %v3676, %v3710
        %v3719 = vmul.f32 %v3678, %v3711
        %v3720 = vmul.f32 %v3680, %v3712
        %3729 = vrot.lane.b32.xlu0 %v2973, 64
        %v3730 = vpop.permute.xlu0 %3729
        %3731 = vrot.lane.b32.xlu0 %v2974, 64
        %v3732 = vpop.permute.xlu0 %3731
        %3733 = vrot.lane.b32.xlu0 %v2975, 64
        %v3734 = vpop.permute.xlu0 %3733
        %3735 = vrot.lane.b32.xlu0 %v2976, 64
        %v3736 = vpop.permute.xlu0 %3735
        %3737 = vrot.lane.b32.xlu0 %v2977, 64
        %v3738 = vpop.permute.xlu0 %3737
        %3739 = vrot.lane.b32.xlu0 %v2978, 64
        %v3740 = vpop.permute.xlu0 %3739
        %3741 = vrot.lane.b32.xlu0 %v2979, 64
        %v3742 = vpop.permute.xlu0 %3741
        %3743 = vrot.lane.b32.xlu0 %v2980, 64
        %v3744 = vpop.permute.xlu0 %3743
        %v3753 = vadd.f32 %v3579, %v3730
        %v3754 = vadd.f32 %v3585, %v3732
        %v3755 = vadd.f32 %v3591, %v3734
        %v3756 = vadd.f32 %v3597, %v3736
        %v3757 = vadd.f32 %v3603, %v3738
        %v3758 = vadd.f32 %v3609, %v3740
        %v3759 = vadd.f32 %v3615, %v3742
        %v3760 = vadd.f32 %v3621, %v3744
        %v3761 = vsel %vm1657, %v3753, -inf
        %3762 = vmax.xlane.f32.xlu0 %v3761
        %v3763 = vpop.xlane.xlu0 %3762
        %v3764 = vsel %vm1657, %v3754, -inf
        %3765 = vmax.xlane.f32.xlu0 %v3764
        %v3766 = vpop.xlane.xlu0 %3765
        %v3767 = vsel %vm1657, %v3755, -inf
        %3768 = vmax.xlane.f32.xlu0 %v3767
        %v3769 = vpop.xlane.xlu0 %3768
        %v3770 = vsel %vm1657, %v3756, -inf
        %3771 = vmax.xlane.f32.xlu0 %v3770
        %v3772 = vpop.xlane.xlu0 %3771
        %v3773 = vsel %vm1657, %v3757, -inf
        %3774 = vmax.xlane.f32.xlu0 %v3773
        %v3775 = vpop.xlane.xlu0 %3774
        %v3776 = vsel %vm1657, %v3758, -inf
        %3777 = vmax.xlane.f32.xlu0 %v3776
        %v3778 = vpop.xlane.xlu0 %3777
        %v3779 = vsel %vm1657, %v3759, -inf
        %3780 = vmax.xlane.f32.xlu0 %v3779
        %v3781 = vpop.xlane.xlu0 %3780
        %v3782 = vsel %vm1657, %v3760, -inf
        %3783 = vmax.xlane.f32.xlu0 %v3782
        %v3784 = vpop.xlane.xlu0 %3783
        %v3785 = vsub.f32 %v3753, %v3763
        %v3786 = vsub.f32 %v3754, %v3766
        %v3787 = vsub.f32 %v3755, %v3769
        %v3788 = vsub.f32 %v3756, %v3772
        %v3789 = vsub.f32 %v3757, %v3775
        %v3790 = vsub.f32 %v3758, %v3778
        %v3791 = vsub.f32 %v3759, %v3781
        %v3792 = vsub.f32 %v3760, %v3784
        %v3793 = vmul.f32 %v3785, 1.442695
        %v3794 = vpow.pop %v3793
        %v3795 = vmul.f32 %v3786, 1.442695
        %v3796 = vpow.pop %v3795
        %v3797 = vmul.f32 %v3787, 1.442695
        %v3798 = vpow.pop %v3797
        %v3799 = vmul.f32 %v3788, 1.442695
        %v3800 = vpow.pop %v3799
        %v3801 = vmul.f32 %v3789, 1.442695
        %v3802 = vpow.pop %v3801
        %v3803 = vmul.f32 %v3790, 1.442695
        %v3804 = vpow.pop %v3803
        %v3805 = vmul.f32 %v3791, 1.442695
        %v3806 = vpow.pop %v3805
        %v3807 = vmul.f32 %v3792, 1.442695
        %v3808 = vpow.pop %v3807
        %3817 = vrot.lane.b32.xlu0 %v3794, 64
        %v3818 = vpop.permute.xlu0 %3817
        %3819 = vrot.lane.b32.xlu0 %v3796, 64
        %v3820 = vpop.permute.xlu0 %3819
        %3821 = vrot.lane.b32.xlu0 %v3798, 64
        %v3822 = vpop.permute.xlu0 %3821
        %3823 = vrot.lane.b32.xlu0 %v3800, 64
        %v3824 = vpop.permute.xlu0 %3823
        %3825 = vrot.lane.b32.xlu0 %v3802, 64
        %v3826 = vpop.permute.xlu0 %3825
        %3827 = vrot.lane.b32.xlu0 %v3804, 64
        %v3828 = vpop.permute.xlu0 %3827
        %3829 = vrot.lane.b32.xlu0 %v3806, 64
        %v3830 = vpop.permute.xlu0 %3829
        %3831 = vrot.lane.b32.xlu0 %v3808, 64
        %v3832 = vpop.permute.xlu0 %3831
        %v3841 = vsel %vm1528, %v3818, 0.0
        %3842 = vadd.xlane.f32.xlu0 %v3841
        %v3843 = vpop.xlane.xlu0 %3842
        %v3844 = vsel %vm1528, %v3820, 0.0
        %3845 = vadd.xlane.f32.xlu0 %v3844
        %v3846 = vpop.xlane.xlu0 %3845
        %v3847 = vsel %vm1528, %v3822, 0.0
        %3848 = vadd.xlane.f32.xlu0 %v3847
        %v3849 = vpop.xlane.xlu0 %3848
        %v3850 = vsel %vm1528, %v3824, 0.0
        %3851 = vadd.xlane.f32.xlu0 %v3850
        %v3852 = vpop.xlane.xlu0 %3851
        %v3853 = vsel %vm1528, %v3826, 0.0
        %3854 = vadd.xlane.f32.xlu0 %v3853
        %v3855 = vpop.xlane.xlu0 %3854
        %v3856 = vsel %vm1528, %v3828, 0.0
        %3857 = vadd.xlane.f32.xlu0 %v3856
        %v3858 = vpop.xlane.xlu0 %3857
        %v3859 = vsel %vm1528, %v3830, 0.0
        %3860 = vadd.xlane.f32.xlu0 %v3859
        %v3861 = vpop.xlane.xlu0 %3860
        %v3862 = vsel %vm1528, %v3832, 0.0
        %3863 = vadd.xlane.f32.xlu0 %v3862
        %v3864 = vpop.xlane.xlu0 %3863
        %v3865 = vrcp.pop %v3843
        %v3866 = vrcp.pop %v3846
        %v3867 = vrcp.pop %v3849
        %v3868 = vrcp.pop %v3852
        %v3869 = vrcp.pop %v3855
        %v3870 = vrcp.pop %v3858
        %v3871 = vrcp.pop %v3861
        %v3872 = vrcp.pop %v3864
        %v3873 = vmul.f32 %v3794, %v3865
        %v3874 = vmul.f32 %v3796, %v3866
        %v3875 = vmul.f32 %v3798, %v3867
        %v3876 = vmul.f32 %v3800, %v3868
        %v3877 = vmul.f32 %v3802, %v3869
        %v3878 = vmul.f32 %v3804, %v3870
        %v3879 = vmul.f32 %v3806, %v3871
        %v3880 = vmul.f32 %v3808, %v3872
        %v3881 = vadd.f32 %v3581, %v2973
        %v3882 = vadd.f32 %v3587, %v2974
        %v3883 = vadd.f32 %v3593, %v2975
        %v3884 = vadd.f32 %v3599, %v2976
        %v3885 = vadd.f32 %v3605, %v2977
        %v3886 = vadd.f32 %v3611, %v2978
        %v3887 = vadd.f32 %v3617, %v2979
        %v3888 = vadd.f32 %v3623, %v2980
        %v3889 = vsel %vm1528, %v3881, -inf
        %3890 = vmax.xlane.f32.xlu0 %v3889
        %v3891 = vpop.xlane.xlu0 %3890
        %v3892 = vsel %vm1528, %v3882, -inf
        %3893 = vmax.xlane.f32.xlu0 %v3892
        %v3894 = vpop.xlane.xlu0 %3893
        %v3895 = vsel %vm1528, %v3883, -inf
        %3896 = vmax.xlane.f32.xlu0 %v3895
        %v3897 = vpop.xlane.xlu0 %3896
        %v3898 = vsel %vm1528, %v3884, -inf
        %3899 = vmax.xlane.f32.xlu0 %v3898
        %v3900 = vpop.xlane.xlu0 %3899
        %v3901 = vsel %vm1528, %v3885, -inf
        %3902 = vmax.xlane.f32.xlu0 %v3901
        %v3903 = vpop.xlane.xlu0 %3902
        %v3904 = vsel %vm1528, %v3886, -inf
        %3905 = vmax.xlane.f32.xlu0 %v3904
        %v3906 = vpop.xlane.xlu0 %3905
        %v3907 = vsel %vm1528, %v3887, -inf
        %3908 = vmax.xlane.f32.xlu0 %v3907
        %v3909 = vpop.xlane.xlu0 %3908
        %v3910 = vsel %vm1528, %v3888, -inf
        %3911 = vmax.xlane.f32.xlu0 %v3910
        %v3912 = vpop.xlane.xlu0 %3911
        %v3913 = vsub.f32 %v3881, %v3891
        %v3914 = vsub.f32 %v3882, %v3894
        %v3915 = vsub.f32 %v3883, %v3897
        %v3916 = vsub.f32 %v3884, %v3900
        %v3917 = vsub.f32 %v3885, %v3903
        %v3918 = vsub.f32 %v3886, %v3906
        %v3919 = vsub.f32 %v3887, %v3909
        %v3920 = vsub.f32 %v3888, %v3912
        %v3921 = vmul.f32 %v3913, 1.442695
        %v3922 = vpow.pop %v3921
        %v3923 = vmul.f32 %v3914, 1.442695
        %v3924 = vpow.pop %v3923
        %v3925 = vmul.f32 %v3915, 1.442695
        %v3926 = vpow.pop %v3925
        %v3927 = vmul.f32 %v3916, 1.442695
        %v3928 = vpow.pop %v3927
        %v3929 = vmul.f32 %v3917, 1.442695
        %v3930 = vpow.pop %v3929
        %v3931 = vmul.f32 %v3918, 1.442695
        %v3932 = vpow.pop %v3931
        %v3933 = vmul.f32 %v3919, 1.442695
        %v3934 = vpow.pop %v3933
        %v3935 = vmul.f32 %v3920, 1.442695
        %v3936 = vpow.pop %v3935
        %v3937 = vsel %vm1528, %v3922, 0.0
        %3938 = vadd.xlane.f32.xlu0 %v3937
        %v3939 = vpop.xlane.xlu0 %3938
        %v3940 = vsel %vm1528, %v3924, 0.0
        %3941 = vadd.xlane.f32.xlu0 %v3940
        %v3942 = vpop.xlane.xlu0 %3941
        %v3943 = vsel %vm1528, %v3926, 0.0
        %3944 = vadd.xlane.f32.xlu0 %v3943
        %v3945 = vpop.xlane.xlu0 %3944
        %v3946 = vsel %vm1528, %v3928, 0.0
        %3947 = vadd.xlane.f32.xlu0 %v3946
        %v3948 = vpop.xlane.xlu0 %3947
        %v3949 = vsel %vm1528, %v3930, 0.0
        %3950 = vadd.xlane.f32.xlu0 %v3949
        %v3951 = vpop.xlane.xlu0 %3950
        %v3952 = vsel %vm1528, %v3932, 0.0
        %3953 = vadd.xlane.f32.xlu0 %v3952
        %v3954 = vpop.xlane.xlu0 %3953
        %v3955 = vsel %vm1528, %v3934, 0.0
        %3956 = vadd.xlane.f32.xlu0 %v3955
        %v3957 = vpop.xlane.xlu0 %3956
        %v3958 = vsel %vm1528, %v3936, 0.0
        %3959 = vadd.xlane.f32.xlu0 %v3958
        %v3960 = vpop.xlane.xlu0 %3959
        %v3961 = vrcp.pop %v3939
        %v3962 = vrcp.pop %v3942
        %v3963 = vrcp.pop %v3945
        %v3964 = vrcp.pop %v3948
        %v3965 = vrcp.pop %v3951
        %v3966 = vrcp.pop %v3954
        %v3967 = vrcp.pop %v3957
        %v3968 = vrcp.pop %v3960
        %v3969 = vmul.f32 %v3922, %v3961
        %v3970 = vmul.f32 %v3924, %v3962
        %v3971 = vmul.f32 %v3926, %v3963
        %v3972 = vmul.f32 %v3928, %v3964
        %v3973 = vmul.f32 %v3930, %v3965
        %v3974 = vmul.f32 %v3932, %v3966
        %v3975 = vmul.f32 %v3934, %v3967
        %v3976 = vmul.f32 %v3936, %v3968
        %v3977 = vadd.f32 %v3581, %v3730
        %v3978 = vadd.f32 %v3587, %v3732
        %v3979 = vadd.f32 %v3593, %v3734
        %v3980 = vadd.f32 %v3599, %v3736
        %v3981 = vadd.f32 %v3605, %v3738
        %v3982 = vadd.f32 %v3611, %v3740
        %v3983 = vadd.f32 %v3617, %v3742
        %v3984 = vadd.f32 %v3623, %v3744
        %v3985 = vsel %vm1657, %v3977, -inf
        %3986 = vmax.xlane.f32.xlu0 %v3985
        %v3987 = vpop.xlane.xlu0 %3986
        %v3988 = vsel %vm1657, %v3978, -inf
        %3989 = vmax.xlane.f32.xlu0 %v3988
        %v3990 = vpop.xlane.xlu0 %3989
        %v3991 = vsel %vm1657, %v3979, -inf
        %3992 = vmax.xlane.f32.xlu0 %v3991
        %v3993 = vpop.xlane.xlu0 %3992
        %v3994 = vsel %vm1657, %v3980, -inf
        %3995 = vmax.xlane.f32.xlu0 %v3994
        %v3996 = vpop.xlane.xlu0 %3995
        %v3997 = vsel %vm1657, %v3981, -inf
        %3998 = vmax.xlane.f32.xlu0 %v3997
        %v3999 = vpop.xlane.xlu0 %3998
        %v4000 = vsel %vm1657, %v3982, -inf
        %4001 = vmax.xlane.f32.xlu0 %v4000
        %v4002 = vpop.xlane.xlu0 %4001
        %v4003 = vsel %vm1657, %v3983, -inf
        %4004 = vmax.xlane.f32.xlu0 %v4003
        %v4005 = vpop.xlane.xlu0 %4004
        %v4006 = vsel %vm1657, %v3984, -inf
        %4007 = vmax.xlane.f32.xlu0 %v4006
        %v4008 = vpop.xlane.xlu0 %4007
        %v4009 = vsub.f32 %v3977, %v3987
        %v4010 = vsub.f32 %v3978, %v3990
        %v4011 = vsub.f32 %v3979, %v3993
        %v4012 = vsub.f32 %v3980, %v3996
        %v4013 = vsub.f32 %v3981, %v3999
        %v4014 = vsub.f32 %v3982, %v4002
        %v4015 = vsub.f32 %v3983, %v4005
        %v4016 = vsub.f32 %v3984, %v4008
        %v4017 = vmul.f32 %v4009, 1.442695
        %v4018 = vpow.pop %v4017
        %v4019 = vmul.f32 %v4010, 1.442695
        %v4020 = vpow.pop %v4019
        %v4021 = vmul.f32 %v4011, 1.442695
        %v4022 = vpow.pop %v4021
        %v4023 = vmul.f32 %v4012, 1.442695
        %v4024 = vpow.pop %v4023
        %v4025 = vmul.f32 %v4013, 1.442695
        %v4026 = vpow.pop %v4025
        %v4027 = vmul.f32 %v4014, 1.442695
        %v4028 = vpow.pop %v4027
        %v4029 = vmul.f32 %v4015, 1.442695
        %v4030 = vpow.pop %v4029
        %v4031 = vmul.f32 %v4016, 1.442695
        %v4032 = vpow.pop %v4031
        %4041 = vrot.lane.b32.xlu0 %v4018, 64
        %v4042 = vpop.permute.xlu0 %4041
        %4043 = vrot.lane.b32.xlu0 %v4020, 64
        %v4044 = vpop.permute.xlu0 %4043
        %4045 = vrot.lane.b32.xlu0 %v4022, 64
        %v4046 = vpop.permute.xlu0 %4045
        %4047 = vrot.lane.b32.xlu0 %v4024, 64
        %v4048 = vpop.permute.xlu0 %4047
        %4049 = vrot.lane.b32.xlu0 %v4026, 64
        %v4050 = vpop.permute.xlu0 %4049
        %4051 = vrot.lane.b32.xlu0 %v4028, 64
        %v4052 = vpop.permute.xlu0 %4051
        %4053 = vrot.lane.b32.xlu0 %v4030, 64
        %v4054 = vpop.permute.xlu0 %4053
        %4055 = vrot.lane.b32.xlu0 %v4032, 64
        %v4056 = vpop.permute.xlu0 %4055
        %v4065 = vsel %vm1528, %v4042, 0.0
        %4066 = vadd.xlane.f32.xlu0 %v4065
        %v4067 = vpop.xlane.xlu0 %4066
        %v4068 = vsel %vm1528, %v4044, 0.0
        %4069 = vadd.xlane.f32.xlu0 %v4068
        %v4070 = vpop.xlane.xlu0 %4069
        %v4071 = vsel %vm1528, %v4046, 0.0
        %4072 = vadd.xlane.f32.xlu0 %v4071
        %v4073 = vpop.xlane.xlu0 %4072
        %v4074 = vsel %vm1528, %v4048, 0.0
        %4075 = vadd.xlane.f32.xlu0 %v4074
        %v4076 = vpop.xlane.xlu0 %4075
        %v4077 = vsel %vm1528, %v4050, 0.0
        %4078 = vadd.xlane.f32.xlu0 %v4077
        %v4079 = vpop.xlane.xlu0 %4078
        %v4080 = vsel %vm1528, %v4052, 0.0
        %4081 = vadd.xlane.f32.xlu0 %v4080
        %v4082 = vpop.xlane.xlu0 %4081
        %v4083 = vsel %vm1528, %v4054, 0.0
        %4084 = vadd.xlane.f32.xlu0 %v4083
        %v4085 = vpop.xlane.xlu0 %4084
        %v4086 = vsel %vm1528, %v4056, 0.0
        %4087 = vadd.xlane.f32.xlu0 %v4086
        %v4088 = vpop.xlane.xlu0 %4087
        %v4089 = vrcp.pop %v4067
        %v4090 = vrcp.pop %v4070
        %v4091 = vrcp.pop %v4073
        %v4092 = vrcp.pop %v4076
        %v4093 = vrcp.pop %v4079
        %v4094 = vrcp.pop %v4082
        %v4095 = vrcp.pop %v4085
        %v4096 = vrcp.pop %v4088
        %v4097 = vmul.f32 %v4018, %v4089
        %v4098 = vmul.f32 %v4020, %v4090
        %v4099 = vmul.f32 %v4022, %v4091
        %v4100 = vmul.f32 %v4024, %v4092
        %v4101 = vmul.f32 %v4026, %v4093
        %v4102 = vmul.f32 %v4028, %v4094
        %v4103 = vmul.f32 %v4030, %v4095
        %v4104 = vmul.f32 %v4032, %v4096
        %v4105 = vsel %vm1528, %v3713, %v3873
        %v4106 = vsel %vm1528, %v3714, %v3874
        %v4107 = vsel %vm1528, %v3715, %v3875
        %v4108 = vsel %vm1528, %v3716, %v3876
        %v4109 = vsel %vm1528, %v3717, %v3877
        %v4110 = vsel %vm1528, %v3718, %v3878
        %v4111 = vsel %vm1528, %v3719, %v3879
        %v4112 = vsel %vm1528, %v3720, %v3880
        %v4113 = vsel %vm1528, %v3969, %v4097
        %v4114 = vsel %vm1528, %v3970, %v4098
        %v4115 = vsel %vm1528, %v3971, %v4099
        %v4116 = vsel %vm1528, %v3972, %v4100
        %v4117 = vsel %vm1528, %v3973, %v4101
        %v4118 = vsel %vm1528, %v3974, %v4102
        %v4119 = vsel %vm1528, %v3975, %v4103
        %v4120 = vsel %vm1528, %v3976, %v4104
        %4153 = vrot.lane.b32.xlu0 %v3296, 64
        %v4154 = vpop.permute.xlu0 %4153
        %4155 = vrot.lane.b32.xlu0 %v3297, 64
        %v4156 = vpop.permute.xlu0 %4155
        %4157 = vrot.lane.b32.xlu0 %v3298, 64
        %v4158 = vpop.permute.xlu0 %4157
        %4159 = vrot.lane.b32.xlu0 %v3299, 64
        %v4160 = vpop.permute.xlu0 %4159
        %4161 = vrot.lane.b32.xlu0 %v3300, 64
        %v4162 = vpop.permute.xlu0 %4161
        %4163 = vrot.lane.b32.xlu0 %v3301, 64
        %v4164 = vpop.permute.xlu0 %4163
        %4165 = vrot.lane.b32.xlu0 %v3302, 64
        %v4166 = vpop.permute.xlu0 %4165
        %4167 = vrot.lane.b32.xlu0 %v3303, 64
        %v4168 = vpop.permute.xlu0 %4167
        %4169 = vrot.lane.b32.xlu0 %v3304, 64
        %v4170 = vpop.permute.xlu0 %4169
        %4171 = vrot.lane.b32.xlu0 %v3305, 64
        %v4172 = vpop.permute.xlu0 %4171
        %4173 = vrot.lane.b32.xlu0 %v3306, 64
        %v4174 = vpop.permute.xlu0 %4173
        %4175 = vrot.lane.b32.xlu0 %v3307, 64
        %v4176 = vpop.permute.xlu0 %4175
        %4177 = vrot.lane.b32.xlu0 %v3308, 64
        %v4178 = vpop.permute.xlu0 %4177
        %4179 = vrot.lane.b32.xlu0 %v3309, 64
        %v4180 = vpop.permute.xlu0 %4179
        %4181 = vrot.lane.b32.xlu0 %v3310, 64
        %v4182 = vpop.permute.xlu0 %4181
        %4183 = vrot.lane.b32.xlu0 %v3311, 64
        %v4184 = vpop.permute.xlu0 %4183
        %4185 = vrot.lane.b32.xlu0 %v3312, 64
        %v4186 = vpop.permute.xlu0 %4185
        %4187 = vrot.lane.b32.xlu0 %v3313, 64
        %v4188 = vpop.permute.xlu0 %4187
        %4189 = vrot.lane.b32.xlu0 %v3314, 64
        %v4190 = vpop.permute.xlu0 %4189
        %4191 = vrot.lane.b32.xlu0 %v3315, 64
        %v4192 = vpop.permute.xlu0 %4191
        %4193 = vrot.lane.b32.xlu0 %v3316, 64
        %v4194 = vpop.permute.xlu0 %4193
        %4195 = vrot.lane.b32.xlu0 %v3317, 64
        %v4196 = vpop.permute.xlu0 %4195
        %4197 = vrot.lane.b32.xlu0 %v3318, 64
        %v4198 = vpop.permute.xlu0 %4197
        %4199 = vrot.lane.b32.xlu0 %v3319, 64
        %v4200 = vpop.permute.xlu0 %4199
        %4201 = vrot.lane.b32.xlu0 %v3320, 64
        %v4202 = vpop.permute.xlu0 %4201
        %4203 = vrot.lane.b32.xlu0 %v3321, 64
        %v4204 = vpop.permute.xlu0 %4203
        %4205 = vrot.lane.b32.xlu0 %v3322, 64
        %v4206 = vpop.permute.xlu0 %4205
        %4207 = vrot.lane.b32.xlu0 %v3323, 64
        %v4208 = vpop.permute.xlu0 %4207
        %4209 = vrot.lane.b32.xlu0 %v3324, 64
        %v4210 = vpop.permute.xlu0 %4209
        %4211 = vrot.lane.b32.xlu0 %v3325, 64
        %v4212 = vpop.permute.xlu0 %4211
        %4213 = vrot.lane.b32.xlu0 %v3326, 64
        %v4214 = vpop.permute.xlu0 %4213
        %4215 = vrot.lane.b32.xlu0 %v3327, 64
        %v4216 = vpop.permute.xlu0 %4215
        %v4217 = vsel %vm830, %v4154, 0
        %v4219 = vsel %vm830, %v4156, 0
        %v4221 = vsel %vm830, %v4158, 0
        %v4223 = vsel %vm830, %v4160, 0
        %v4225 = vsel %vm830, %v4162, 0
        %v4227 = vsel %vm830, %v4164, 0
        %v4229 = vsel %vm830, %v4166, 0
        %v4231 = vsel %vm830, %v4168, 0
        %v4233 = vsel %vm830, %v4170, 0
        %v4235 = vsel %vm830, %v4172, 0
        %v4237 = vsel %vm830, %v4174, 0
        %v4239 = vsel %vm830, %v4176, 0
        %v4241 = vsel %vm830, %v4178, 0
        %v4243 = vsel %vm830, %v4180, 0
        %v4245 = vsel %vm830, %v4182, 0
        %v4247 = vsel %vm830, %v4184, 0
        %v4249 = vsel %vm830, %v4186, 0
        %v4251 = vsel %vm830, %v4188, 0
        %v4253 = vsel %vm830, %v4190, 0
        %v4255 = vsel %vm830, %v4192, 0
        %v4257 = vsel %vm830, %v4194, 0
        %v4259 = vsel %vm830, %v4196, 0
        %v4261 = vsel %vm830, %v4198, 0
        %v4263 = vsel %vm830, %v4200, 0
        %v4265 = vsel %vm830, %v4202, 0
        %v4267 = vsel %vm830, %v4204, 0
        %v4269 = vsel %vm830, %v4206, 0
        %v4271 = vsel %vm830, %v4208, 0
        %v4273 = vsel %vm830, %v4210, 0
        %v4275 = vsel %vm830, %v4212, 0
        %v4277 = vsel %vm830, %v4214, 0
        %v4279 = vsel %vm830, %v4216, 0
        %4281 = vmatprep.subr.mxu0 0.0
        %4282 = vmatpush1.msra.mxu0 %v3260
        %4283 = vmatprep.subr.mxu0 0.0
        %4284 = vmatpush1.msra.mxu0 %v3261
        %4285 = vmatprep.subr.mxu0 0.0
        %4286 = vmatpush1.msra.mxu0 %v3262
        %4287 = vmatprep.subr.mxu0 0.0
        %4288 = vmatpush1.msra.mxu0 %v3263
        %4289 = vmatprep.subr.mxu0 0.0
        %4290 = vmatpush1.msra.mxu0 0.0
        %4291 = vmatprep.subr.mxu0 0.0
        %4292 = vmatpush1.msra.mxu0 0.0
        %4293 = vmatprep.subr.mxu0 0.0
        %4294 = vmatpush1.msra.mxu0 0.0
        %4295 = vmatprep.subr.mxu0 0.0
        %4296 = vmatpush1.msra.mxu0 0.0
        %4297 = vmatprep.subr.mxu0 0.0
        %4298 = vmatpush1.msra.mxu0 0.0
        %4299 = vmatprep.subr.mxu0 0.0
        %4300 = vmatpush1.msra.mxu0 0.0
        %4301 = vmatprep.subr.mxu0 0.0
        %4302 = vmatpush1.msra.mxu0 0.0
        %4303 = vmatprep.subr.mxu0 0.0
        %4304 = vmatpush1.msra.mxu0 0.0
        %4305 = vmatprep.subr.mxu0 0.0
        %4306 = vmatpush1.msra.mxu0 0.0
        %4307 = vmatprep.subr.mxu0 0.0
        %4308 = vmatpush1.msra.mxu0 0.0
        %4309 = vmatprep.subr.mxu0 0.0
        %4310 = vmatpush1.msra.mxu0 0.0
        %4311 = vmatprep.subr.mxu0 0.0
        %4312 = vmatpush1.msra.mxu0 0.0
        %4313 = vmatprep.subr.mxu0 0.0
        %4314 = vmatpush1.msra.mxu0 0.0
        %4315 = vmatprep.subr.mxu0 0.0
        %4316 = vmatpush1.msra.mxu0 0.0
        %4317 = vmatprep.subr.mxu0 0.0
        %4318 = vmatpush1.msra.mxu0 0.0
        %4319 = vmatprep.subr.mxu0 0.0
        %4320 = vmatpush1.msra.mxu0 0.0
        %4321 = vmatprep.subr.mxu0 0.0
        %4322 = vmatpush1.msra.mxu0 0.0
        %4323 = vmatprep.subr.mxu0 0.0
        %4324 = vmatpush1.msra.mxu0 0.0
        %4325 = vmatprep.subr.mxu0 0.0
        %4326 = vmatpush1.msra.mxu0 0.0
        %4327 = vmatprep.subr.mxu0 0.0
        %4328 = vmatpush1.msra.mxu0 0.0
        %4329 = vmatprep.subr.mxu0 0.0
        %4330 = vmatpush1.msra.mxu0 0.0
        %4331 = vmatprep.subr.mxu0 0.0
        %4332 = vmatpush1.msra.mxu0 0.0
        %4333 = vmatprep.subr.mxu0 0.0
        %4334 = vmatpush1.msra.mxu0 0.0
        %4335 = vmatprep.subr.mxu0 0.0
        %4336 = vmatpush1.msra.mxu0 0.0
        %4337 = vmatprep.subr.mxu0 0.0
        %4338 = vmatpush1.msra.mxu0 0.0
        %4339 = vmatprep.subr.mxu0 0.0
        %4340 = vmatpush1.msra.mxu0 0.0
        %4341 = vmatprep.subr.mxu0 0.0
        %4342 = vmatpush1.msra.mxu0 0.0
        %4343 = vmatprep.subr.mxu0 0.0
        %4344 = vmatpush1.msra.mxu0 0.0
        %4345 = vmatprep.mubr.f32.mxu0 0.0
        %4346 = vmatmul.mubr.f32.gmra.mrb[0].mxu0 %v4217
        %v4347 = vpop.f32.mrb[0].mxu0
        %v4348 = vadd.f32 0.0, %v4347
        %v4349 = vpop.f32.mrb[0].mxu0
        %4350 = vmatprep.mubr.f32.mxu0 0.0
        %4351 = vmatmul.mubr.f32.gmra.mrb[0].mxu0 %v4219
        %v4352 = vpop.f32.mrb[0].mxu0
        %v4353 = vadd.f32 0.0, %v4352
        %v4354 = vpop.f32.mrb[0].mxu0
        %4355 = vmatprep.mubr.f32.mxu0 0.0
        %4356 = vmatmul.mubr.f32.gmra.mrb[0].mxu0 %v4221
        %v4357 = vpop.f32.mrb[0].mxu0
        %v4358 = vadd.f32 0.0, %v4357
        %v4359 = vpop.f32.mrb[0].mxu0
        %4360 = vmatprep.mubr.f32.mxu0 0.0
        %4361 = vmatmul.mubr.f32.gmra.mrb[0].mxu0 %v4223
        %v4362 = vpop.f32.mrb[0].mxu0
        %v4363 = vadd.f32 0.0, %v4362
        %v4364 = vpop.f32.mrb[0].mxu0
        %4365 = vmatprep.mubr.f32.mxu0 0.0
        %4366 = vmatmul.mubr.f32.gmra.mrb[0].mxu0 %v4225
        %v4367 = vpop.f32.mrb[0].mxu0
        %v4368 = vadd.f32 0.0, %v4367
        %v4369 = vpop.f32.mrb[0].mxu0
        %4370 = vmatprep.mubr.f32.mxu0 0.0
        %4371 = vmatmul.mubr.f32.gmra.mrb[0].mxu0 %v4227
        %v4372 = vpop.f32.mrb[0].mxu0
        %v4373 = vadd.f32 0.0, %v4372
        %v4374 = vpop.f32.mrb[0].mxu0
        %4375 = vmatprep.mubr.f32.mxu0 0.0
        %4376 = vmatmul.mubr.f32.gmra.mrb[0].mxu0 %v4229
        %v4377 = vpop.f32.mrb[0].mxu0
        %v4378 = vadd.f32 0.0, %v4377
        %v4379 = vpop.f32.mrb[0].mxu0
        %4380 = vmatprep.mubr.f32.mxu0 0.0
        %4381 = vmatmul.mubr.f32.gmra.mrb[0].mxu0 %v4231
        %v4382 = vpop.f32.mrb[0].mxu0
        %v4383 = vadd.f32 0.0, %v4382
        %v4384 = vpop.f32.mrb[0].mxu0
        %4385 = vmatprep.mubr.f32.mxu0 0.0
        %4386 = vmatmul.mubr.f32.gmra.mrb[0].mxu0 %v4233
        %v4387 = vpop.f32.mrb[0].mxu0
        %v4388 = vadd.f32 0.0, %v4387
        %v4389 = vpop.f32.mrb[0].mxu0
        %4390 = vmatprep.mubr.f32.mxu0 0.0
        %4391 = vmatmul.mubr.f32.gmra.mrb[0].mxu0 %v4235
        %v4392 = vpop.f32.mrb[0].mxu0
        %v4393 = vadd.f32 0.0, %v4392
        %v4394 = vpop.f32.mrb[0].mxu0
        %4395 = vmatprep.mubr.f32.mxu0 0.0
        %4396 = vmatmul.mubr.f32.gmra.mrb[0].mxu0 %v4237
        %v4397 = vpop.f32.mrb[0].mxu0
        %v4398 = vadd.f32 0.0, %v4397
        %v4399 = vpop.f32.mrb[0].mxu0
        %4400 = vmatprep.mubr.f32.mxu0 0.0
        %4401 = vmatmul.mubr.f32.gmra.mrb[0].mxu0 %v4239
        %v4402 = vpop.f32.mrb[0].mxu0
        %v4403 = vadd.f32 0.0, %v4402
        %v4404 = vpop.f32.mrb[0].mxu0
        %4405 = vmatprep.mubr.f32.mxu0 0.0
        %4406 = vmatmul.mubr.f32.gmra.mrb[0].mxu0 %v4241
        %v4407 = vpop.f32.mrb[0].mxu0
        %v4408 = vadd.f32 0.0, %v4407
        %v4409 = vpop.f32.mrb[0].mxu0
        %4410 = vmatprep.mubr.f32.mxu0 0.0
        %4411 = vmatmul.mubr.f32.gmra.mrb[0].mxu0 %v4243
        %v4412 = vpop.f32.mrb[0].mxu0
        %v4413 = vadd.f32 0.0, %v4412
        %v4414 = vpop.f32.mrb[0].mxu0
        %4415 = vmatprep.mubr.f32.mxu0 0.0
        %4416 = vmatmul.mubr.f32.gmra.mrb[0].mxu0 %v4245
        %v4417 = vpop.f32.mrb[0].mxu0
        %v4418 = vadd.f32 0.0, %v4417
        %v4419 = vpop.f32.mrb[0].mxu0
        %4420 = vmatprep.mubr.f32.mxu0 0.0
        %4421 = vmatmul.mubr.f32.gmra.mrb[0].mxu0 %v4247
        %v4422 = vpop.f32.mrb[0].mxu0
        %v4423 = vadd.f32 0.0, %v4422
        %v4424 = vpop.f32.mrb[0].mxu0
        %4425 = vmatprep.mubr.f32.mxu0 0.0
        %4426 = vmatmul.mubr.f32.gmra.mrb[0].mxu0 %v4249
        %v4427 = vpop.f32.mrb[0].mxu0
        %v4428 = vadd.f32 0.0, %v4427
        %v4429 = vpop.f32.mrb[0].mxu0
        %4430 = vmatprep.mubr.f32.mxu0 0.0
        %4431 = vmatmul.mubr.f32.gmra.mrb[0].mxu0 %v4251
        %v4432 = vpop.f32.mrb[0].mxu0
        %v4433 = vadd.f32 0.0, %v4432
        %v4434 = vpop.f32.mrb[0].mxu0
        %4435 = vmatprep.mubr.f32.mxu0 0.0
        %4436 = vmatmul.mubr.f32.gmra.mrb[0].mxu0 %v4253
        %v4437 = vpop.f32.mrb[0].mxu0
        %v4438 = vadd.f32 0.0, %v4437
        %v4439 = vpop.f32.mrb[0].mxu0
        %4440 = vmatprep.mubr.f32.mxu0 0.0
        %4441 = vmatmul.mubr.f32.gmra.mrb[0].mxu0 %v4255
        %v4442 = vpop.f32.mrb[0].mxu0
        %v4443 = vadd.f32 0.0, %v4442
        %v4444 = vpop.f32.mrb[0].mxu0
        %4445 = vmatprep.mubr.f32.mxu0 0.0
        %4446 = vmatmul.mubr.f32.gmra.mrb[0].mxu0 %v4257
        %v4447 = vpop.f32.mrb[0].mxu0
        %v4448 = vadd.f32 0.0, %v4447
        %v4449 = vpop.f32.mrb[0].mxu0
        %4450 = vmatprep.mubr.f32.mxu0 0.0
        %4451 = vmatmul.mubr.f32.gmra.mrb[0].mxu0 %v4259
        %v4452 = vpop.f32.mrb[0].mxu0
        %v4453 = vadd.f32 0.0, %v4452
        %v4454 = vpop.f32.mrb[0].mxu0
        %4455 = vmatprep.mubr.f32.mxu0 0.0
        %4456 = vmatmul.mubr.f32.gmra.mrb[0].mxu0 %v4261
        %v4457 = vpop.f32.mrb[0].mxu0
        %v4458 = vadd.f32 0.0, %v4457
        %v4459 = vpop.f32.mrb[0].mxu0
        %4460 = vmatprep.mubr.f32.mxu0 0.0
        %4461 = vmatmul.mubr.f32.gmra.mrb[0].mxu0 %v4263
        %v4462 = vpop.f32.mrb[0].mxu0
        %v4463 = vadd.f32 0.0, %v4462
        %v4464 = vpop.f32.mrb[0].mxu0
        %4465 = vmatprep.mubr.f32.mxu0 0.0
        %4466 = vmatmul.mubr.f32.gmra.mrb[0].mxu0 %v4265
        %v4467 = vpop.f32.mrb[0].mxu0
        %v4468 = vadd.f32 0.0, %v4467
        %v4469 = vpop.f32.mrb[0].mxu0
        %4470 = vmatprep.mubr.f32.mxu0 0.0
        %4471 = vmatmul.mubr.f32.gmra.mrb[0].mxu0 %v4267
        %v4472 = vpop.f32.mrb[0].mxu0
        %v4473 = vadd.f32 0.0, %v4472
        %v4474 = vpop.f32.mrb[0].mxu0
        %4475 = vmatprep.mubr.f32.mxu0 0.0
        %4476 = vmatmul.mubr.f32.gmra.mrb[0].mxu0 %v4269
        %v4477 = vpop.f32.mrb[0].mxu0
        %v4478 = vadd.f32 0.0, %v4477
        %v4479 = vpop.f32.mrb[0].mxu0
        %4480 = vmatprep.mubr.f32.mxu0 0.0
        %4481 = vmatmul.mubr.f32.gmra.mrb[0].mxu0 %v4271
        %v4482 = vpop.f32.mrb[0].mxu0
        %v4483 = vadd.f32 0.0, %v4482
        %v4484 = vpop.f32.mrb[0].mxu0
        %4485 = vmatprep.mubr.f32.mxu0 0.0
        %4486 = vmatmul.mubr.f32.gmra.mrb[0].mxu0 %v4273
        %v4487 = vpop.f32.mrb[0].mxu0
        %v4488 = vadd.f32 0.0, %v4487
        %v4489 = vpop.f32.mrb[0].mxu0
        %4490 = vmatprep.mubr.f32.mxu0 0.0
        %4491 = vmatmul.mubr.f32.gmra.mrb[0].mxu0 %v4275
        %v4492 = vpop.f32.mrb[0].mxu0
        %v4493 = vadd.f32 0.0, %v4492
        %v4494 = vpop.f32.mrb[0].mxu0
        %4495 = vmatprep.mubr.f32.mxu0 0.0
        %4496 = vmatmul.mubr.f32.gmra.mrb[0].mxu0 %v4277
        %v4497 = vpop.f32.mrb[0].mxu0
        %v4498 = vadd.f32 0.0, %v4497
        %v4499 = vpop.f32.mrb[0].mxu0
        %4500 = vmatprep.mubr.f32.mxu0 0.0
        %4501 = vmatmul.mubr.f32.gmra.mrb[0].mxu0 %v4279
        %v4502 = vpop.f32.mrb[0].mxu0
        %v4503 = vadd.f32 0.0, %v4502
        %v4504 = vpop.f32.mrb[0].mxu0
        %4505 = vdwg.mxu0
        %4506 = vmatprep.subr.mxu0 0.0
        %4507 = vmatpush1.msra.mxu0 %v4348
        %4508 = vmatprep.subr.mxu0 0.0
        %4509 = vmatpush1.msra.mxu0 %v4353
        %4510 = vmatprep.subr.mxu0 0.0
        %4511 = vmatpush1.msra.mxu0 %v4358
        %4512 = vmatprep.subr.mxu0 0.0
        %4513 = vmatpush1.msra.mxu0 %v4363
        %4514 = vmatprep.subr.mxu0 0.0
        %4515 = vmatpush1.msra.mxu0 %v4368
        %4516 = vmatprep.subr.mxu0 0.0
        %4517 = vmatpush1.msra.mxu0 %v4373
        %4518 = vmatprep.subr.mxu0 0.0
        %4519 = vmatpush1.msra.mxu0 %v4378
        %4520 = vmatprep.subr.mxu0 0.0
        %4521 = vmatpush1.msra.mxu0 %v4383
        %4522 = vmatprep.subr.mxu0 0.0
        %4523 = vmatpush1.msra.mxu0 %v4388
        %4524 = vmatprep.subr.mxu0 0.0
        %4525 = vmatpush1.msra.mxu0 %v4393
        %4526 = vmatprep.subr.mxu0 0.0
        %4527 = vmatpush1.msra.mxu0 %v4398
        %4528 = vmatprep.subr.mxu0 0.0
        %4529 = vmatpush1.msra.mxu0 %v4403
        %4530 = vmatprep.subr.mxu0 0.0
        %4531 = vmatpush1.msra.mxu0 %v4408
        %4532 = vmatprep.subr.mxu0 0.0
        %4533 = vmatpush1.msra.mxu0 %v4413
        %4534 = vmatprep.subr.mxu0 0.0
        %4535 = vmatpush1.msra.mxu0 %v4418
        %4536 = vmatprep.subr.mxu0 0.0
        %4537 = vmatpush1.msra.mxu0 %v4423
        %4538 = vmatprep.subr.mxu0 0.0
        %4539 = vmatpush1.msra.mxu0 %v4428
        %4540 = vmatprep.subr.mxu0 0.0
        %4541 = vmatpush1.msra.mxu0 %v4433
        %4542 = vmatprep.subr.mxu0 0.0
        %4543 = vmatpush1.msra.mxu0 %v4438
        %4544 = vmatprep.subr.mxu0 0.0
        %4545 = vmatpush1.msra.mxu0 %v4443
        %4546 = vmatprep.subr.mxu0 0.0
        %4547 = vmatpush1.msra.mxu0 %v4448
        %4548 = vmatprep.subr.mxu0 0.0
        %4549 = vmatpush1.msra.mxu0 %v4453
        %4550 = vmatprep.subr.mxu0 0.0
        %4551 = vmatpush1.msra.mxu0 %v4458
        %4552 = vmatprep.subr.mxu0 0.0
        %4553 = vmatpush1.msra.mxu0 %v4463
        %4554 = vmatprep.subr.mxu0 0.0
        %4555 = vmatpush1.msra.mxu0 %v4468
        %4556 = vmatprep.subr.mxu0 0.0
        %4557 = vmatpush1.msra.mxu0 %v4473
        %4558 = vmatprep.subr.mxu0 0.0
        %4559 = vmatpush1.msra.mxu0 %v4478
        %4560 = vmatprep.subr.mxu0 0.0
        %4561 = vmatpush1.msra.mxu0 %v4483
        %4562 = vmatprep.subr.mxu0 0.0
        %4563 = vmatpush1.msra.mxu0 %v4488
        %4564 = vmatprep.subr.mxu0 0.0
        %4565 = vmatpush1.msra.mxu0 %v4493
        %4566 = vmatprep.subr.mxu0 0.0
        %4567 = vmatpush1.msra.mxu0 %v4498
        %4568 = vmatprep.subr.mxu0 0.0
        %4569 = vmatpush1.msra.mxu0 %v4503
        %4570 = vmatprep.mubr.f32.mxu0 %v4113
        %4571 = vmatmul.mubr.f32.gmra.mrb[0].mxu0 %v4105
        %v4572 = vpop.f32.mrb[0].mxu0
        %v4573 = vadd.f32 0.0, %v4572
        %v4574 = vpop.f32.mrb[0].mxu0
        %4575 = vmatprep.mubr.f32.mxu0 %v4114
        %4576 = vmatmul.mubr.f32.gmra.mrb[0].mxu0 %v4106
        %v4577 = vpop.f32.mrb[0].mxu0
        %v4578 = vadd.f32 0.0, %v4577
        %v4579 = vpop.f32.mrb[0].mxu0
        %4580 = vmatprep.mubr.f32.mxu0 %v4115
        %4581 = vmatmul.mubr.f32.gmra.mrb[0].mxu0 %v4107
        %v4582 = vpop.f32.mrb[0].mxu0
        %v4583 = vadd.f32 0.0, %v4582
        %v4584 = vpop.f32.mrb[0].mxu0
        %4585 = vmatprep.mubr.f32.mxu0 %v4116
        %4586 = vmatmul.mubr.f32.gmra.mrb[0].mxu0 %v4108
        %v4587 = vpop.f32.mrb[0].mxu0
        %v4588 = vadd.f32 0.0, %v4587
        %v4589 = vpop.f32.mrb[0].mxu0
        %4590 = vmatprep.mubr.f32.mxu0 %v4117
        %4591 = vmatmul.mubr.f32.gmra.mrb[0].mxu0 %v4109
        %v4592 = vpop.f32.mrb[0].mxu0
        %v4593 = vadd.f32 0.0, %v4592
        %v4594 = vpop.f32.mrb[0].mxu0
        %4595 = vmatprep.mubr.f32.mxu0 %v4118
        %4596 = vmatmul.mubr.f32.gmra.mrb[0].mxu0 %v4110
        %v4597 = vpop.f32.mrb[0].mxu0
        %v4598 = vadd.f32 0.0, %v4597
        %v4599 = vpop.f32.mrb[0].mxu0
        %4600 = vmatprep.mubr.f32.mxu0 %v4119
        %4601 = vmatmul.mubr.f32.gmra.mrb[0].mxu0 %v4111
        %v4602 = vpop.f32.mrb[0].mxu0
        %v4603 = vadd.f32 0.0, %v4602
        %v4604 = vpop.f32.mrb[0].mxu0
        %4605 = vmatprep.mubr.f32.mxu0 %v4120
        %4606 = vmatmul.mubr.f32.gmra.mrb[0].mxu0 %v4112
        %v4607 = vpop.f32.mrb[0].mxu0
        %v4608 = vadd.f32 0.0, %v4607
        %v4609 = vpop.f32.mrb[0].mxu0
        %4610 = vdwg.mxu0
        %v4611 = vadd.f32 %v2965, %v4573
        %v4612 = vadd.f32 %v2966, %v4578
        %v4613 = vadd.f32 %v2967, %v4583
        %v4614 = vadd.f32 %v2968, %v4588
        %v4615 = vadd.f32 %v2969, %v4593
        %v4616 = vadd.f32 %v2970, %v4598
        %v4617 = vadd.f32 %v2971, %v4603
        %v4618 = vadd.f32 %v2972, %v4608
        %s4619 = scalar_lea.vmem %s14, 1
        %v4620 = vld [vmem:[%s4619] sm:$0x1]
        %v4622 = vlaneseq
        %v4623 = vshrl.u32 %v4622, 7
        %v4624 = vsub.s32 0, %v4623
        %v4625 = vrot.slane %v4620, %v4624
        %v4627 = vadd.f32 %v4611, %v4625
        %v4628 = vadd.f32 %v4612, %v4625
        %v4629 = vadd.f32 %v4613, %v4625
        %v4630 = vadd.f32 %v4614, %v4625
        %v4631 = vadd.f32 %v4615, %v4625
        %v4632 = vadd.f32 %v4616, %v4625
        %v4633 = vadd.f32 %v4617, %v4625
        %v4634 = vadd.f32 %v4618, %v4625
        %s4635 = scalar_lea.vmem %s15, 1
        %v4636 = vld [vmem:[%s4635] sm:$0x1]
        %s4637 = scalar_lea.vmem %s16, 1
        %v4638 = vld [vmem:[%s4637] sm:$0x1]
        %v4639 = vsel %vm830, %v4627, 0.0
        %4640 = vadd.xlane.f32.xlu0 %v4639
        %v4641 = vpop.xlane.xlu0 %4640
        %v4642 = vsel %vm830, %v4628, 0.0
        %4643 = vadd.xlane.f32.xlu0 %v4642
        %v4644 = vpop.xlane.xlu0 %4643
        %v4645 = vsel %vm830, %v4629, 0.0
        %4646 = vadd.xlane.f32.xlu0 %v4645
        %v4647 = vpop.xlane.xlu0 %4646
        %v4648 = vsel %vm830, %v4630, 0.0
        %4649 = vadd.xlane.f32.xlu0 %v4648
        %v4650 = vpop.xlane.xlu0 %4649
        %v4651 = vsel %vm830, %v4631, 0.0
        %4652 = vadd.xlane.f32.xlu0 %v4651
        %v4653 = vpop.xlane.xlu0 %4652
        %v4654 = vsel %vm830, %v4632, 0.0
        %4655 = vadd.xlane.f32.xlu0 %v4654
        %v4656 = vpop.xlane.xlu0 %4655
        %v4657 = vsel %vm830, %v4633, 0.0
        %4658 = vadd.xlane.f32.xlu0 %v4657
        %v4659 = vpop.xlane.xlu0 %4658
        %v4660 = vsel %vm830, %v4634, 0.0
        %4661 = vadd.xlane.f32.xlu0 %v4660
        %v4662 = vpop.xlane.xlu0 %4661
        %v4663 = vmul.f32 %v4641, %v855
        %v4664 = vmul.f32 %v4644, %v855
        %v4665 = vmul.f32 %v4647, %v855
        %v4666 = vmul.f32 %v4650, %v855
        %v4667 = vmul.f32 %v4653, %v855
        %v4668 = vmul.f32 %v4656, %v855
        %v4669 = vmul.f32 %v4659, %v855
        %v4670 = vmul.f32 %v4662, %v855
        %v4671 = vsub.f32 %v4627, %v4663
        %v4672 = vsub.f32 %v4628, %v4664
        %v4673 = vsub.f32 %v4629, %v4665
        %v4674 = vsub.f32 %v4630, %v4666
        %v4675 = vsub.f32 %v4631, %v4667
        %v4676 = vsub.f32 %v4632, %v4668
        %v4677 = vsub.f32 %v4633, %v4669
        %v4678 = vsub.f32 %v4634, %v4670
        %v4679 = vmul.f32 %v4671, %v4671
        %v4680 = vmul.f32 %v4672, %v4672
        %v4681 = vmul.f32 %v4673, %v4673
        %v4682 = vmul.f32 %v4674, %v4674
        %v4683 = vmul.f32 %v4675, %v4675
        %v4684 = vmul.f32 %v4676, %v4676
        %v4685 = vmul.f32 %v4677, %v4677
        %v4686 = vmul.f32 %v4678, %v4678
        %v4687 = vsel %vm830, %v4679, 0.0
        %4688 = vadd.xlane.f32.xlu0 %v4687
        %v4689 = vpop.xlane.xlu0 %4688
        %v4690 = vsel %vm830, %v4680, 0.0
        %4691 = vadd.xlane.f32.xlu0 %v4690
        %v4692 = vpop.xlane.xlu0 %4691
        %v4693 = vsel %vm830, %v4681, 0.0
        %4694 = vadd.xlane.f32.xlu0 %v4693
        %v4695 = vpop.xlane.xlu0 %4694
        %v4696 = vsel %vm830, %v4682, 0.0
        %4697 = vadd.xlane.f32.xlu0 %v4696
        %v4698 = vpop.xlane.xlu0 %4697
        %v4699 = vsel %vm830, %v4683, 0.0
        %4700 = vadd.xlane.f32.xlu0 %v4699
        %v4701 = vpop.xlane.xlu0 %4700
        %v4702 = vsel %vm830, %v4684, 0.0
        %4703 = vadd.xlane.f32.xlu0 %v4702
        %v4704 = vpop.xlane.xlu0 %4703
        %v4705 = vsel %vm830, %v4685, 0.0
        %4706 = vadd.xlane.f32.xlu0 %v4705
        %v4707 = vpop.xlane.xlu0 %4706
        %v4708 = vsel %vm830, %v4686, 0.0
        %4709 = vadd.xlane.f32.xlu0 %v4708
        %v4710 = vpop.xlane.xlu0 %4709
        %v4711 = vmul.f32 %v4689, %v855
        %v4712 = vmul.f32 %v4692, %v855
        %v4713 = vmul.f32 %v4695, %v855
        %v4714 = vmul.f32 %v4698, %v855
        %v4715 = vmul.f32 %v4701, %v855
        %v4716 = vmul.f32 %v4704, %v855
        %v4717 = vmul.f32 %v4707, %v855
        %v4718 = vmul.f32 %v4710, %v855
        %v4719 = vadd.f32 %v4711, 1e-05
        %v4720 = vadd.f32 %v4712, 1e-05
        %v4721 = vadd.f32 %v4713, 1e-05
        %v4722 = vadd.f32 %v4714, 1e-05
        %v4723 = vadd.f32 %v4715, 1e-05
        %v4724 = vadd.f32 %v4716, 1e-05
        %v4725 = vadd.f32 %v4717, 1e-05
        %v4726 = vadd.f32 %v4718, 1e-05
        %v4727 = vrsqrt.pop %v4719
        %v4728 = vrsqrt.pop %v4720
        %v4729 = vrsqrt.pop %v4721
        %v4730 = vrsqrt.pop %v4722
        %v4731 = vrsqrt.pop %v4723
        %v4732 = vrsqrt.pop %v4724
        %v4733 = vrsqrt.pop %v4725
        %v4734 = vrsqrt.pop %v4726
        %v4735 = vmul.f32 %v4671, %v4727
        %v4736 = vmul.f32 %v4672, %v4728
        %v4737 = vmul.f32 %v4673, %v4729
        %v4738 = vmul.f32 %v4674, %v4730
        %v4739 = vmul.f32 %v4675, %v4731
        %v4740 = vmul.f32 %v4676, %v4732
        %v4741 = vmul.f32 %v4677, %v4733
        %v4742 = vmul.f32 %v4678, %v4734
        %v4744 = vlaneseq
        %v4745 = vshrl.u32 %v4744, 7
        %v4746 = vsub.s32 0, %v4745
        %v4747 = vrot.slane %v4636, %v4746
        %v4749 = vmul.f32 %v4735, %v4747
        %v4750 = vmul.f32 %v4736, %v4747
        %v4751 = vmul.f32 %v4737, %v4747
        %v4752 = vmul.f32 %v4738, %v4747
        %v4753 = vmul.f32 %v4739, %v4747
        %v4754 = vmul.f32 %v4740, %v4747
        %v4755 = vmul.f32 %v4741, %v4747
        %v4756 = vmul.f32 %v4742, %v4747
        %v4758 = vlaneseq
        %v4759 = vshrl.u32 %v4758, 7
        %v4760 = vsub.s32 0, %v4759
        %v4761 = vrot.slane %v4638, %v4760
        %v4763 = vadd.f32 %v4749, %v4761
        %v4764 = vadd.f32 %v4750, %v4761
        %v4765 = vadd.f32 %v4751, %v4761
        %v4766 = vadd.f32 %v4752, %v4761
        %v4767 = vadd.f32 %v4753, %v4761
        %v4768 = vadd.f32 %v4754, %v4761
        %v4769 = vadd.f32 %v4755, %v4761
        %v4770 = vadd.f32 %v4756, %v4761
        %s4771 = scalar_lea.vmem %s17, 32
        %v4772 = vld [vmem:[%s4771] sm:$0xff]
        %v4773 = vld [vmem:[%s4771 + $0x8] sm:$0xff]
        %v4774 = vld [vmem:[%s4771 + $0x10] sm:$0xff]
        %v4775 = vld [vmem:[%s4771 + $0x18] sm:$0xff]
        %s4776 = scalar_lea.vmem %s18, 1
        %v4777 = vld [vmem:[%s4776] sm:$0x1]
        %v4779 = vlaneseq
        %v4780 = vshrl.u32 %v4779, 7
        %v4781 = vsub.s32 0, %v4780
        %v4782 = vrot.slane %v4777, %v4781
        %v4785 = vsel %vm830, %v4763, 0
        %v4788 = vsel %vm830, %v4764, 0
        %v4791 = vsel %vm830, %v4765, 0
        %v4794 = vsel %vm830, %v4766, 0
        %v4797 = vsel %vm830, %v4767, 0
        %v4800 = vsel %vm830, %v4768, 0
        %v4803 = vsel %vm830, %v4769, 0
        %v4806 = vsel %vm830, %v4770, 0
        %4808 = vmatprep.subr.mxu0 0.0
        %4809 = vmatpush1.msra.mxu0 %v4772
        %4810 = vmatprep.subr.mxu0 0.0
        %4811 = vmatpush1.msra.mxu0 %v4773
        %4812 = vmatprep.subr.mxu0 0.0
        %4813 = vmatpush1.msra.mxu0 %v4774
        %4814 = vmatprep.subr.mxu0 0.0
        %4815 = vmatpush1.msra.mxu0 %v4775
        %4816 = vmatprep.subr.mxu0 0.0
        %4817 = vmatpush1.msra.mxu0 0.0
        %4818 = vmatprep.subr.mxu0 0.0
        %4819 = vmatpush1.msra.mxu0 0.0
        %4820 = vmatprep.subr.mxu0 0.0
        %4821 = vmatpush1.msra.mxu0 0.0
        %4822 = vmatprep.subr.mxu0 0.0
        %4823 = vmatpush1.msra.mxu0 0.0
        %4824 = vmatprep.subr.mxu0 0.0
        %4825 = vmatpush1.msra.mxu0 0.0
        %4826 = vmatprep.subr.mxu0 0.0
        %4827 = vmatpush1.msra.mxu0 0.0
        %4828 = vmatprep.subr.mxu0 0.0
        %4829 = vmatpush1.msra.mxu0 0.0
        %4830 = vmatprep.subr.mxu0 0.0
        %4831 = vmatpush1.msra.mxu0 0.0
        %4832 = vmatprep.subr.mxu0 0.0
        %4833 = vmatpush1.msra.mxu0 0.0
        %4834 = vmatprep.subr.mxu0 0.0
        %4835 = vmatpush1.msra.mxu0 0.0
        %4836 = vmatprep.subr.mxu0 0.0
        %4837 = vmatpush1.msra.mxu0 0.0
        %4838 = vmatprep.subr.mxu0 0.0
        %4839 = vmatpush1.msra.mxu0 0.0
        %4840 = vmatprep.subr.mxu0 0.0
        %4841 = vmatpush1.msra.mxu0 0.0
        %4842 = vmatprep.subr.mxu0 0.0
        %4843 = vmatpush1.msra.mxu0 0.0
        %4844 = vmatprep.subr.mxu0 0.0
        %4845 = vmatpush1.msra.mxu0 0.0
        %4846 = vmatprep.subr.mxu0 0.0
        %4847 = vmatpush1.msra.mxu0 0.0
        %4848 = vmatprep.subr.mxu0 0.0
        %4849 = vmatpush1.msra.mxu0 0.0
        %4850 = vmatprep.subr.mxu0 0.0
        %4851 = vmatpush1.msra.mxu0 0.0
        %4852 = vmatprep.subr.mxu0 0.0
        %4853 = vmatpush1.msra.mxu0 0.0
        %4854 = vmatprep.subr.mxu0 0.0
        %4855 = vmatpush1.msra.mxu0 0.0
        %4856 = vmatprep.subr.mxu0 0.0
        %4857 = vmatpush1.msra.mxu0 0.0
        %4858 = vmatprep.subr.mxu0 0.0
        %4859 = vmatpush1.msra.mxu0 0.0
        %4860 = vmatprep.subr.mxu0 0.0
        %4861 = vmatpush1.msra.mxu0 0.0
        %4862 = vmatprep.subr.mxu0 0.0
        %4863 = vmatpush1.msra.mxu0 0.0
        %4864 = vmatprep.subr.mxu0 0.0
        %4865 = vmatpush1.msra.mxu0 0.0
        %4866 = vmatprep.subr.mxu0 0.0
        %4867 = vmatpush1.msra.mxu0 0.0
        %4868 = vmatprep.subr.mxu0 0.0
        %4869 = vmatpush1.msra.mxu0 0.0
        %4870 = vmatprep.subr.mxu0 0.0
        %4871 = vmatpush1.msra.mxu0 0.0
        %4872 = vmatprep.mubr.f32.mxu0 0.0
        %4873 = vmatmul.mubr.f32.gmra.mrb[0].mxu0 %v4785
        %v4874 = vpop.f32.mrb[0].mxu0
        %v4875 = vadd.f32 %v4782, %v4874
        %v4876 = vpop.f32.mrb[0].mxu0
        %4877 = vmatprep.mubr.f32.mxu0 0.0
        %4878 = vmatmul.mubr.f32.gmra.mrb[0].mxu0 %v4788
        %v4879 = vpop.f32.mrb[0].mxu0
        %v4880 = vadd.f32 %v4782, %v4879
        %v4881 = vpop.f32.mrb[0].mxu0
        %4882 = vmatprep.mubr.f32.mxu0 0.0
        %4883 = vmatmul.mubr.f32.gmra.mrb[0].mxu0 %v4791
        %v4884 = vpop.f32.mrb[0].mxu0
        %v4885 = vadd.f32 %v4782, %v4884
        %v4886 = vpop.f32.mrb[0].mxu0
        %4887 = vmatprep.mubr.f32.mxu0 0.0
        %4888 = vmatmul.mubr.f32.gmra.mrb[0].mxu0 %v4794
        %v4889 = vpop.f32.mrb[0].mxu0
        %v4890 = vadd.f32 %v4782, %v4889
        %v4891 = vpop.f32.mrb[0].mxu0
        %4892 = vmatprep.mubr.f32.mxu0 0.0
        %4893 = vmatmul.mubr.f32.gmra.mrb[0].mxu0 %v4797
        %v4894 = vpop.f32.mrb[0].mxu0
        %v4895 = vadd.f32 %v4782, %v4894
        %v4896 = vpop.f32.mrb[0].mxu0
        %4897 = vmatprep.mubr.f32.mxu0 0.0
        %4898 = vmatmul.mubr.f32.gmra.mrb[0].mxu0 %v4800
        %v4899 = vpop.f32.mrb[0].mxu0
        %v4900 = vadd.f32 %v4782, %v4899
        %v4901 = vpop.f32.mrb[0].mxu0
        %4902 = vmatprep.mubr.f32.mxu0 0.0
        %4903 = vmatmul.mubr.f32.gmra.mrb[0].mxu0 %v4803
        %v4904 = vpop.f32.mrb[0].mxu0
        %v4905 = vadd.f32 %v4782, %v4904
        %v4906 = vpop.f32.mrb[0].mxu0
        %4907 = vmatprep.mubr.f32.mxu0 0.0
        %4908 = vmatmul.mubr.f32.gmra.mrb[0].mxu0 %v4806
        %v4909 = vpop.f32.mrb[0].mxu0
        %v4910 = vadd.f32 %v4782, %v4909
        %v4911 = vpop.f32.mrb[0].mxu0
        %4912 = vdwg.mxu0
        %v4913 = vmax.f32 %v4875, 0.0
        %v4914 = vmax.f32 %v4880, 0.0
        %v4915 = vmax.f32 %v4885, 0.0
        %v4916 = vmax.f32 %v4890, 0.0
        %v4917 = vmax.f32 %v4895, 0.0
        %v4918 = vmax.f32 %v4900, 0.0
        %v4919 = vmax.f32 %v4905, 0.0
        %v4920 = vmax.f32 %v4910, 0.0
        %s4921 = scalar_lea.vmem %s19, 64
        %v4922 = vld [vmem:[%s4921] sm:$0xff]
        %v4923 = vld [vmem:[%s4921 + $0x8] sm:$0xff]
        %v4924 = vld [vmem:[%s4921 + $0x10] sm:$0xff]
        %v4925 = vld [vmem:[%s4921 + $0x18] sm:$0xff]
        %v4926 = vld [vmem:[%s4921 + $0x20] sm:$0xff]
        %v4927 = vld [vmem:[%s4921 + $0x28] sm:$0xff]
        %v4928 = vld [vmem:[%s4921 + $0x30] sm:$0xff]
        %v4929 = vld [vmem:[%s4921 + $0x38] sm:$0xff]
        %v4931 = vsel %vm1528, %v4913, 0
        %v4934 = vsel %vm1528, %v4914, 0
        %v4937 = vsel %vm1528, %v4915, 0
        %v4940 = vsel %vm1528, %v4916, 0
        %v4943 = vsel %vm1528, %v4917, 0
        %v4946 = vsel %vm1528, %v4918, 0
        %v4949 = vsel %vm1528, %v4919, 0
        %v4952 = vsel %vm1528, %v4920, 0
        %4954 = vmatprep.subr.mxu0 0.0
        %4955 = vmatpush1.msra.mxu0 %v4922
        %4956 = vmatprep.subr.mxu0 0.0
        %4957 = vmatpush1.msra.mxu0 %v4923
        %4958 = vmatprep.subr.mxu0 0.0
        %4959 = vmatpush1.msra.mxu0 %v4924
        %4960 = vmatprep.subr.mxu0 0.0
        %4961 = vmatpush1.msra.mxu0 %v4925
        %4962 = vmatprep.subr.mxu0 0.0
        %4963 = vmatpush1.msra.mxu0 %v4926
        %4964 = vmatprep.subr.mxu0 0.0
        %4965 = vmatpush1.msra.mxu0 %v4927
        %4966 = vmatprep.subr.mxu0 0.0
        %4967 = vmatpush1.msra.mxu0 %v4928
        %4968 = vmatprep.subr.mxu0 0.0
        %4969 = vmatpush1.msra.mxu0 %v4929
        %4970 = vmatprep.subr.mxu0 0.0
        %4971 = vmatpush1.msra.mxu0 0.0
        %4972 = vmatprep.subr.mxu0 0.0
        %4973 = vmatpush1.msra.mxu0 0.0
        %4974 = vmatprep.subr.mxu0 0.0
        %4975 = vmatpush1.msra.mxu0 0.0
        %4976 = vmatprep.subr.mxu0 0.0
        %4977 = vmatpush1.msra.mxu0 0.0
        %4978 = vmatprep.subr.mxu0 0.0
        %4979 = vmatpush1.msra.mxu0 0.0
        %4980 = vmatprep.subr.mxu0 0.0
        %4981 = vmatpush1.msra.mxu0 0.0
        %4982 = vmatprep.subr.mxu0 0.0
        %4983 = vmatpush1.msra.mxu0 0.0
        %4984 = vmatprep.subr.mxu0 0.0
        %4985 = vmatpush1.msra.mxu0 0.0
        %4986 = vmatprep.subr.mxu0 0.0
        %4987 = vmatpush1.msra.mxu0 0.0
        %4988 = vmatprep.subr.mxu0 0.0
        %4989 = vmatpush1.msra.mxu0 0.0
        %4990 = vmatprep.subr.mxu0 0.0
        %4991 = vmatpush1.msra.mxu0 0.0
        %4992 = vmatprep.subr.mxu0 0.0
        %4993 = vmatpush1.msra.mxu0 0.0
        %4994 = vmatprep.subr.mxu0 0.0
        %4995 = vmatpush1.msra.mxu0 0.0
        %4996 = vmatprep.subr.mxu0 0.0
        %4997 = vmatpush1.msra.mxu0 0.0
        %4998 = vmatprep.subr.mxu0 0.0
        %4999 = vmatpush1.msra.mxu0 0.0
        %5000 = vmatprep.subr.mxu0 0.0
        %5001 = vmatpush1.msra.mxu0 0.0
        %5002 = vmatprep.subr.mxu0 0.0
        %5003 = vmatpush1.msra.mxu0 0.0
        %5004 = vmatprep.subr.mxu0 0.0
        %5005 = vmatpush1.msra.mxu0 0.0
        %5006 = vmatprep.subr.mxu0 0.0
        %5007 = vmatpush1.msra.mxu0 0.0
        %5008 = vmatprep.subr.mxu0 0.0
        %5009 = vmatpush1.msra.mxu0 0.0
        %5010 = vmatprep.subr.mxu0 0.0
        %5011 = vmatpush1.msra.mxu0 0.0
        %5012 = vmatprep.subr.mxu0 0.0
        %5013 = vmatpush1.msra.mxu0 0.0
        %5014 = vmatprep.subr.mxu0 0.0
        %5015 = vmatpush1.msra.mxu0 0.0
        %5016 = vmatprep.subr.mxu0 0.0
        %5017 = vmatpush1.msra.mxu0 0.0
        %5018 = vmatprep.mubr.f32.mxu0 0.0
        %5019 = vmatmul.mubr.f32.gmra.mrb[0].mxu0 %v4931
        %v5020 = vpop.f32.mrb[0].mxu0
        %v5021 = vadd.f32 0.0, %v5020
        %v5022 = vpop.f32.mrb[0].mxu0
        %5023 = vmatprep.mubr.f32.mxu0 0.0
        %5024 = vmatmul.mubr.f32.gmra.mrb[0].mxu0 %v4934
        %v5025 = vpop.f32.mrb[0].mxu0
        %v5026 = vadd.f32 0.0, %v5025
        %v5027 = vpop.f32.mrb[0].mxu0
        %5028 = vmatprep.mubr.f32.mxu0 0.0
        %5029 = vmatmul.mubr.f32.gmra.mrb[0].mxu0 %v4937
        %v5030 = vpop.f32.mrb[0].mxu0
        %v5031 = vadd.f32 0.0, %v5030
        %v5032 = vpop.f32.mrb[0].mxu0
        %5033 = vmatprep.mubr.f32.mxu0 0.0
        %5034 = vmatmul.mubr.f32.gmra.mrb[0].mxu0 %v4940
        %v5035 = vpop.f32.mrb[0].mxu0
        %v5036 = vadd.f32 0.0, %v5035
        %v5037 = vpop.f32.mrb[0].mxu0
        %5038 = vmatprep.mubr.f32.mxu0 0.0
        %5039 = vmatmul.mubr.f32.gmra.mrb[0].mxu0 %v4943
        %v5040 = vpop.f32.mrb[0].mxu0
        %v5041 = vadd.f32 0.0, %v5040
        %v5042 = vpop.f32.mrb[0].mxu0
        %5043 = vmatprep.mubr.f32.mxu0 0.0
        %5044 = vmatmul.mubr.f32.gmra.mrb[0].mxu0 %v4946
        %v5045 = vpop.f32.mrb[0].mxu0
        %v5046 = vadd.f32 0.0, %v5045
        %v5047 = vpop.f32.mrb[0].mxu0
        %5048 = vmatprep.mubr.f32.mxu0 0.0
        %5049 = vmatmul.mubr.f32.gmra.mrb[0].mxu0 %v4949
        %v5050 = vpop.f32.mrb[0].mxu0
        %v5051 = vadd.f32 0.0, %v5050
        %v5052 = vpop.f32.mrb[0].mxu0
        %5053 = vmatprep.mubr.f32.mxu0 0.0
        %5054 = vmatmul.mubr.f32.gmra.mrb[0].mxu0 %v4952
        %v5055 = vpop.f32.mrb[0].mxu0
        %v5056 = vadd.f32 0.0, %v5055
        %v5057 = vpop.f32.mrb[0].mxu0
        %5058 = vdwg.mxu0
        %v5059 = vadd.f32 %v4627, %v5021
        %v5060 = vadd.f32 %v4628, %v5026
        %v5061 = vadd.f32 %v4629, %v5031
        %v5062 = vadd.f32 %v4630, %v5036
        %v5063 = vadd.f32 %v4631, %v5041
        %v5064 = vadd.f32 %v4632, %v5046
        %v5065 = vadd.f32 %v4633, %v5051
        %v5066 = vadd.f32 %v4634, %v5056
        %s5067 = scalar_lea.vmem %s20, 1
        %v5068 = vld [vmem:[%s5067] sm:$0x1]
        %v5070 = vlaneseq
        %v5071 = vshrl.u32 %v5070, 7
        %v5072 = vsub.s32 0, %v5071
        %v5073 = vrot.slane %v5068, %v5072
        %v5075 = vadd.f32 %v5059, %v5073
        %v5076 = vadd.f32 %v5060, %v5073
        %v5077 = vadd.f32 %v5061, %v5073
        %v5078 = vadd.f32 %v5062, %v5073
        %v5079 = vadd.f32 %v5063, %v5073
        %v5080 = vadd.f32 %v5064, %v5073
        %v5081 = vadd.f32 %v5065, %v5073
        %v5082 = vadd.f32 %v5066, %v5073
        %s5083 = scalar_lea.vmem %s9, 2
        %v5084 = vld [vmem:[%s5083] sm:$0x1]
        %s5085 = scalar_lea.vmem %s10, 2
        %v5086 = vld [vmem:[%s5085] sm:$0x1]
        %v5087 = vsel %vm830, %v5075, 0.0
        %5088 = vadd.xlane.f32.xlu0 %v5087
        %v5089 = vpop.xlane.xlu0 %5088
        %v5090 = vsel %vm830, %v5076, 0.0
        %5091 = vadd.xlane.f32.xlu0 %v5090
        %v5092 = vpop.xlane.xlu0 %5091
        %v5093 = vsel %vm830, %v5077, 0.0
        %5094 = vadd.xlane.f32.xlu0 %v5093
        %v5095 = vpop.xlane.xlu0 %5094
        %v5096 = vsel %vm830, %v5078, 0.0
        %5097 = vadd.xlane.f32.xlu0 %v5096
        %v5098 = vpop.xlane.xlu0 %5097
        %v5099 = vsel %vm830, %v5079, 0.0
        %5100 = vadd.xlane.f32.xlu0 %v5099
        %v5101 = vpop.xlane.xlu0 %5100
        %v5102 = vsel %vm830, %v5080, 0.0
        %5103 = vadd.xlane.f32.xlu0 %v5102
        %v5104 = vpop.xlane.xlu0 %5103
        %v5105 = vsel %vm830, %v5081, 0.0
        %5106 = vadd.xlane.f32.xlu0 %v5105
        %v5107 = vpop.xlane.xlu0 %5106
        %v5108 = vsel %vm830, %v5082, 0.0
        %5109 = vadd.xlane.f32.xlu0 %v5108
        %v5110 = vpop.xlane.xlu0 %5109
        %v5111 = vmul.f32 %v5089, %v855
        %v5112 = vmul.f32 %v5092, %v855
        %v5113 = vmul.f32 %v5095, %v855
        %v5114 = vmul.f32 %v5098, %v855
        %v5115 = vmul.f32 %v5101, %v855
        %v5116 = vmul.f32 %v5104, %v855
        %v5117 = vmul.f32 %v5107, %v855
        %v5118 = vmul.f32 %v5110, %v855
        %v5119 = vsub.f32 %v5075, %v5111
        %v5120 = vsub.f32 %v5076, %v5112
        %v5121 = vsub.f32 %v5077, %v5113
        %v5122 = vsub.f32 %v5078, %v5114
        %v5123 = vsub.f32 %v5079, %v5115
        %v5124 = vsub.f32 %v5080, %v5116
        %v5125 = vsub.f32 %v5081, %v5117
        %v5126 = vsub.f32 %v5082, %v5118
        %v5127 = vmul.f32 %v5119, %v5119
        %v5128 = vmul.f32 %v5120, %v5120
        %v5129 = vmul.f32 %v5121, %v5121
        %v5130 = vmul.f32 %v5122, %v5122
        %v5131 = vmul.f32 %v5123, %v5123
        %v5132 = vmul.f32 %v5124, %v5124
        %v5133 = vmul.f32 %v5125, %v5125
        %v5134 = vmul.f32 %v5126, %v5126
        %v5135 = vsel %vm830, %v5127, 0.0
        %5136 = vadd.xlane.f32.xlu0 %v5135
        %v5137 = vpop.xlane.xlu0 %5136
        %v5138 = vsel %vm830, %v5128, 0.0
        %5139 = vadd.xlane.f32.xlu0 %v5138
        %v5140 = vpop.xlane.xlu0 %5139
        %v5141 = vsel %vm830, %v5129, 0.0
        %5142 = vadd.xlane.f32.xlu0 %v5141
        %v5143 = vpop.xlane.xlu0 %5142
        %v5144 = vsel %vm830, %v5130, 0.0
        %5145 = vadd.xlane.f32.xlu0 %v5144
        %v5146 = vpop.xlane.xlu0 %5145
        %v5147 = vsel %vm830, %v5131, 0.0
        %5148 = vadd.xlane.f32.xlu0 %v5147
        %v5149 = vpop.xlane.xlu0 %5148
        %v5150 = vsel %vm830, %v5132, 0.0
        %5151 = vadd.xlane.f32.xlu0 %v5150
        %v5152 = vpop.xlane.xlu0 %5151
        %v5153 = vsel %vm830, %v5133, 0.0
        %5154 = vadd.xlane.f32.xlu0 %v5153
        %v5155 = vpop.xlane.xlu0 %5154
        %v5156 = vsel %vm830, %v5134, 0.0
        %5157 = vadd.xlane.f32.xlu0 %v5156
        %v5158 = vpop.xlane.xlu0 %5157
        %v5159 = vmul.f32 %v5137, %v855
        %v5160 = vmul.f32 %v5140, %v855
        %v5161 = vmul.f32 %v5143, %v855
        %v5162 = vmul.f32 %v5146, %v855
        %v5163 = vmul.f32 %v5149, %v855
        %v5164 = vmul.f32 %v5152, %v855
        %v5165 = vmul.f32 %v5155, %v855
        %v5166 = vmul.f32 %v5158, %v855
        %v5167 = vadd.f32 %v5159, 1e-05
        %v5168 = vadd.f32 %v5160, 1e-05
        %v5169 = vadd.f32 %v5161, 1e-05
        %v5170 = vadd.f32 %v5162, 1e-05
        %v5171 = vadd.f32 %v5163, 1e-05
        %v5172 = vadd.f32 %v5164, 1e-05
        %v5173 = vadd.f32 %v5165, 1e-05
        %v5174 = vadd.f32 %v5166, 1e-05
        %v5175 = vrsqrt.pop %v5167
        %v5176 = vrsqrt.pop %v5168
        %v5177 = vrsqrt.pop %v5169
        %v5178 = vrsqrt.pop %v5170
        %v5179 = vrsqrt.pop %v5171
        %v5180 = vrsqrt.pop %v5172
        %v5181 = vrsqrt.pop %v5173
        %v5182 = vrsqrt.pop %v5174
        %v5183 = vmul.f32 %v5119, %v5175
        %v5184 = vmul.f32 %v5120, %v5176
        %v5185 = vmul.f32 %v5121, %v5177
        %v5186 = vmul.f32 %v5122, %v5178
        %v5187 = vmul.f32 %v5123, %v5179
        %v5188 = vmul.f32 %v5124, %v5180
        %v5189 = vmul.f32 %v5125, %v5181
        %v5190 = vmul.f32 %v5126, %v5182
        %v5192 = vlaneseq
        %v5193 = vshrl.u32 %v5192, 7
        %v5194 = vsub.s32 0, %v5193
        %v5195 = vrot.slane %v5084, %v5194
        %v5197 = vmul.f32 %v5183, %v5195
        %v5198 = vmul.f32 %v5184, %v5195
        %v5199 = vmul.f32 %v5185, %v5195
        %v5200 = vmul.f32 %v5186, %v5195
        %v5201 = vmul.f32 %v5187, %v5195
        %v5202 = vmul.f32 %v5188, %v5195
        %v5203 = vmul.f32 %v5189, %v5195
        %v5204 = vmul.f32 %v5190, %v5195
        %v5206 = vlaneseq
        %v5207 = vshrl.u32 %v5206, 7
        %v5208 = vsub.s32 0, %v5207
        %v5209 = vrot.slane %v5086, %v5208
        %v5211 = vadd.f32 %v5197, %v5209
        %v5212 = vadd.f32 %v5198, %v5209
        %v5213 = vadd.f32 %v5199, %v5209
        %v5214 = vadd.f32 %v5200, %v5209
        %v5215 = vadd.f32 %v5201, %v5209
        %v5216 = vadd.f32 %v5202, %v5209
        %v5217 = vadd.f32 %v5203, %v5209
        %v5218 = vadd.f32 %v5204, %v5209
        %s5219 = scalar_lea.vmem %s11, 64
        %v5220 = vld [vmem:[%s5219] sm:$0xff]
        %v5221 = vld [vmem:[%s5219 + $0x8] sm:$0xff]
        %v5222 = vld [vmem:[%s5219 + $0x10] sm:$0xff]
        %v5223 = vld [vmem:[%s5219 + $0x18] sm:$0xff]
        %s5224 = scalar_lea.vmem %s12, 2
        %v5225 = vld [vmem:[%s5224] sm:$0x1]
        %v5227 = vlaneseq
        %v5228 = vshrl.u32 %v5227, 7
        %v5229 = vsub.s32 0, %v5228
        %v5230 = vrot.slane %v5225, %v5229
        %v5233 = vsel %vm830, %v5211, 0
        %v5236 = vsel %vm830, %v5212, 0
        %v5239 = vsel %vm830, %v5213, 0
        %v5242 = vsel %vm830, %v5214, 0
        %v5245 = vsel %vm830, %v5215, 0
        %v5248 = vsel %vm830, %v5216, 0
        %v5251 = vsel %vm830, %v5217, 0
        %v5254 = vsel %vm830, %v5218, 0
        %5256 = vmatprep.subr.mxu0 0.0
        %5257 = vmatpush1.msra.mxu0 %v5220
        %5258 = vmatprep.subr.mxu0 0.0
        %5259 = vmatpush1.msra.mxu0 %v5221
        %5260 = vmatprep.subr.mxu0 0.0
        %5261 = vmatpush1.msra.mxu0 %v5222
        %5262 = vmatprep.subr.mxu0 0.0
        %5263 = vmatpush1.msra.mxu0 %v5223
        %5264 = vmatprep.subr.mxu0 0.0
        %5265 = vmatpush1.msra.mxu0 0.0
        %5266 = vmatprep.subr.mxu0 0.0
        %5267 = vmatpush1.msra.mxu0 0.0
        %5268 = vmatprep.subr.mxu0 0.0
        %5269 = vmatpush1.msra.mxu0 0.0
        %5270 = vmatprep.subr.mxu0 0.0
        %5271 = vmatpush1.msra.mxu0 0.0
        %5272 = vmatprep.subr.mxu0 0.0
        %5273 = vmatpush1.msra.mxu0 0.0
        %5274 = vmatprep.subr.mxu0 0.0
        %5275 = vmatpush1.msra.mxu0 0.0
        %5276 = vmatprep.subr.mxu0 0.0
        %5277 = vmatpush1.msra.mxu0 0.0
        %5278 = vmatprep.subr.mxu0 0.0
        %5279 = vmatpush1.msra.mxu0 0.0
        %5280 = vmatprep.subr.mxu0 0.0
        %5281 = vmatpush1.msra.mxu0 0.0
        %5282 = vmatprep.subr.mxu0 0.0
        %5283 = vmatpush1.msra.mxu0 0.0
        %5284 = vmatprep.subr.mxu0 0.0
        %5285 = vmatpush1.msra.mxu0 0.0
        %5286 = vmatprep.subr.mxu0 0.0
        %5287 = vmatpush1.msra.mxu0 0.0
        %5288 = vmatprep.subr.mxu0 0.0
        %5289 = vmatpush1.msra.mxu0 0.0
        %5290 = vmatprep.subr.mxu0 0.0
        %5291 = vmatpush1.msra.mxu0 0.0
        %5292 = vmatprep.subr.mxu0 0.0
        %5293 = vmatpush1.msra.mxu0 0.0
        %5294 = vmatprep.subr.mxu0 0.0
        %5295 = vmatpush1.msra.mxu0 0.0
        %5296 = vmatprep.subr.mxu0 0.0
        %5297 = vmatpush1.msra.mxu0 0.0
        %5298 = vmatprep.subr.mxu0 0.0
        %5299 = vmatpush1.msra.mxu0 0.0
        %5300 = vmatprep.subr.mxu0 0.0
        %5301 = vmatpush1.msra.mxu0 0.0
        %5302 = vmatprep.subr.mxu0 0.0
        %5303 = vmatpush1.msra.mxu0 0.0
        %5304 = vmatprep.subr.mxu0 0.0
        %5305 = vmatpush1.msra.mxu0 0.0
        %5306 = vmatprep.subr.mxu0 0.0
        %5307 = vmatpush1.msra.mxu0 0.0
        %5308 = vmatprep.subr.mxu0 0.0
        %5309 = vmatpush1.msra.mxu0 0.0
        %5310 = vmatprep.subr.mxu0 0.0
        %5311 = vmatpush1.msra.mxu0 0.0
        %5312 = vmatprep.subr.mxu0 0.0
        %5313 = vmatpush1.msra.mxu0 0.0
        %5314 = vmatprep.subr.mxu0 0.0
        %5315 = vmatpush1.msra.mxu0 0.0
        %5316 = vmatprep.subr.mxu0 0.0
        %5317 = vmatpush1.msra.mxu0 0.0
        %5318 = vmatprep.subr.mxu0 0.0
        %5319 = vmatpush1.msra.mxu0 0.0
        %5320 = vmatprep.mubr.f32.mxu0 0.0
        %5321 = vmatmul.mubr.f32.gmra.mrb[0].mxu0 %v5233
        %v5322 = vpop.f32.mrb[0].mxu0
        %v5323 = vadd.f32 %v5230, %v5322
        %v5324 = vpop.f32.mrb[0].mxu0
        %5325 = vmatprep.mubr.f32.mxu0 0.0
        %5326 = vmatmul.mubr.f32.gmra.mrb[0].mxu0 %v5236
        %v5327 = vpop.f32.mrb[0].mxu0
        %v5328 = vadd.f32 %v5230, %v5327
        %v5329 = vpop.f32.mrb[0].mxu0
        %5330 = vmatprep.mubr.f32.mxu0 0.0
        %5331 = vmatmul.mubr.f32.gmra.mrb[0].mxu0 %v5239
        %v5332 = vpop.f32.mrb[0].mxu0
        %v5333 = vadd.f32 %v5230, %v5332
        %v5334 = vpop.f32.mrb[0].mxu0
        %5335 = vmatprep.mubr.f32.mxu0 0.0
        %5336 = vmatmul.mubr.f32.gmra.mrb[0].mxu0 %v5242
        %v5337 = vpop.f32.mrb[0].mxu0
        %v5338 = vadd.f32 %v5230, %v5337
        %v5339 = vpop.f32.mrb[0].mxu0
        %5340 = vmatprep.mubr.f32.mxu0 0.0
        %5341 = vmatmul.mubr.f32.gmra.mrb[0].mxu0 %v5245
        %v5342 = vpop.f32.mrb[0].mxu0
        %v5343 = vadd.f32 %v5230, %v5342
        %v5344 = vpop.f32.mrb[0].mxu0
        %5345 = vmatprep.mubr.f32.mxu0 0.0
        %5346 = vmatmul.mubr.f32.gmra.mrb[0].mxu0 %v5248
        %v5347 = vpop.f32.mrb[0].mxu0
        %v5348 = vadd.f32 %v5230, %v5347
        %v5349 = vpop.f32.mrb[0].mxu0
        %5350 = vmatprep.mubr.f32.mxu0 0.0
        %5351 = vmatmul.mubr.f32.gmra.mrb[0].mxu0 %v5251
        %v5352 = vpop.f32.mrb[0].mxu0
        %v5353 = vadd.f32 %v5230, %v5352
        %v5354 = vpop.f32.mrb[0].mxu0
        %5355 = vmatprep.mubr.f32.mxu0 0.0
        %5356 = vmatmul.mubr.f32.gmra.mrb[0].mxu0 %v5254
        %v5357 = vpop.f32.mrb[0].mxu0
        %v5358 = vadd.f32 %v5230, %v5357
        %v5359 = vpop.f32.mrb[0].mxu0
        %5360 = vdwg.mxu0
        %s5361 = scalar_lea.vmem %s13, 64
        %v5362 = vld [vmem:[%s5361] sm:$0xff]
        %v5363 = vld [vmem:[%s5361 + $0x8] sm:$0xff]
        %v5364 = vld [vmem:[%s5361 + $0x10] sm:$0xff]
        %v5365 = vld [vmem:[%s5361 + $0x18] sm:$0xff]
        %v5366 = vmul.f32 %v5323, %v1115
        %v5367 = vmul.f32 %v5328, %v1115
        %v5368 = vmul.f32 %v5333, %v1115
        %v5369 = vmul.f32 %v5338, %v1115
        %v5370 = vmul.f32 %v5343, %v1115
        %v5371 = vmul.f32 %v5348, %v1115
        %v5372 = vmul.f32 %v5353, %v1115
        %v5373 = vmul.f32 %v5358, %v1115
        %v5374 = vmul.f32 %v5323, %v1133
        %v5375 = vmul.f32 %v5328, %v1133
        %v5376 = vmul.f32 %v5333, %v1133
        %v5377 = vmul.f32 %v5338, %v1133
        %v5378 = vmul.f32 %v5343, %v1133
        %v5379 = vmul.f32 %v5348, %v1133
        %v5380 = vmul.f32 %v5353, %v1133
        %v5381 = vmul.f32 %v5358, %v1133
        %v5382 = vmul.f32 %v5323, %v1151
        %v5383 = vmul.f32 %v5328, %v1151
        %v5384 = vmul.f32 %v5333, %v1151
        %v5385 = vmul.f32 %v5338, %v1151
        %v5386 = vmul.f32 %v5343, %v1151
        %v5387 = vmul.f32 %v5348, %v1151
        %v5388 = vmul.f32 %v5353, %v1151
        %v5389 = vmul.f32 %v5358, %v1151
        %v5390 = vmul.f32 %v5323, %v1169
        %v5391 = vmul.f32 %v5328, %v1169
        %v5392 = vmul.f32 %v5333, %v1169
        %v5393 = vmul.f32 %v5338, %v1169
        %v5394 = vmul.f32 %v5343, %v1169
        %v5395 = vmul.f32 %v5348, %v1169
        %v5396 = vmul.f32 %v5353, %v1169
        %v5397 = vmul.f32 %v5358, %v1169
        %v5398 = vmul.f32 %v5323, %v1180
        %v5399 = vmul.f32 %v5328, %v1180
        %v5400 = vmul.f32 %v5333, %v1180
        %v5401 = vmul.f32 %v5338, %v1180
        %v5402 = vmul.f32 %v5343, %v1180
        %v5403 = vmul.f32 %v5348, %v1180
        %v5404 = vmul.f32 %v5353, %v1180
        %v5405 = vmul.f32 %v5358, %v1180
        %v5406 = vmul.f32 %v5323, %v1191
        %v5407 = vmul.f32 %v5328, %v1191
        %v5408 = vmul.f32 %v5333, %v1191
        %v5409 = vmul.f32 %v5338, %v1191
        %v5410 = vmul.f32 %v5343, %v1191
        %v5411 = vmul.f32 %v5348, %v1191
        %v5412 = vmul.f32 %v5353, %v1191
        %v5413 = vmul.f32 %v5358, %v1191
        %v5414 = vmul.f32 %v5323, %v1202
        %v5415 = vmul.f32 %v5328, %v1202
        %v5416 = vmul.f32 %v5333, %v1202
        %v5417 = vmul.f32 %v5338, %v1202
        %v5418 = vmul.f32 %v5343, %v1202
        %v5419 = vmul.f32 %v5348, %v1202
        %v5420 = vmul.f32 %v5353, %v1202
        %v5421 = vmul.f32 %v5358, %v1202
        %v5422 = vmul.f32 %v5323, %v1213
        %v5423 = vmul.f32 %v5328, %v1213
        %v5424 = vmul.f32 %v5333, %v1213
        %v5425 = vmul.f32 %v5338, %v1213
        %v5426 = vmul.f32 %v5343, %v1213
        %v5427 = vmul.f32 %v5348, %v1213
        %v5428 = vmul.f32 %v5353, %v1213
        %v5429 = vmul.f32 %v5358, %v1213
        %5462 = vrot.lane.b32.xlu0 %v5366, 96
        %v5463 = vpop.permute.xlu0 %5462
        %5464 = vrot.lane.b32.xlu0 %v5367, 96
        %v5465 = vpop.permute.xlu0 %5464
        %5466 = vrot.lane.b32.xlu0 %v5368, 96
        %v5467 = vpop.permute.xlu0 %5466
        %5468 = vrot.lane.b32.xlu0 %v5369, 96
        %v5469 = vpop.permute.xlu0 %5468
        %5470 = vrot.lane.b32.xlu0 %v5370, 96
        %v5471 = vpop.permute.xlu0 %5470
        %5472 = vrot.lane.b32.xlu0 %v5371, 96
        %v5473 = vpop.permute.xlu0 %5472
        %5474 = vrot.lane.b32.xlu0 %v5372, 96
        %v5475 = vpop.permute.xlu0 %5474
        %5476 = vrot.lane.b32.xlu0 %v5373, 96
        %v5477 = vpop.permute.xlu0 %5476
        %5478 = vrot.lane.b32.xlu0 %v5374, 96
        %v5479 = vpop.permute.xlu0 %5478
        %5480 = vrot.lane.b32.xlu0 %v5375, 96
        %v5481 = vpop.permute.xlu0 %5480
        %5482 = vrot.lane.b32.xlu0 %v5376, 96
        %v5483 = vpop.permute.xlu0 %5482
        %5484 = vrot.lane.b32.xlu0 %v5377, 96
        %v5485 = vpop.permute.xlu0 %5484
        %5486 = vrot.lane.b32.xlu0 %v5378, 96
        %v5487 = vpop.permute.xlu0 %5486
        %5488 = vrot.lane.b32.xlu0 %v5379, 96
        %v5489 = vpop.permute.xlu0 %5488
        %5490 = vrot.lane.b32.xlu0 %v5380, 96
        %v5491 = vpop.permute.xlu0 %5490
        %5492 = vrot.lane.b32.xlu0 %v5381, 96
        %v5493 = vpop.permute.xlu0 %5492
        %5494 = vrot.lane.b32.xlu0 %v5382, 96
        %v5495 = vpop.permute.xlu0 %5494
        %5496 = vrot.lane.b32.xlu0 %v5383, 96
        %v5497 = vpop.permute.xlu0 %5496
        %5498 = vrot.lane.b32.xlu0 %v5384, 96
        %v5499 = vpop.permute.xlu0 %5498
        %5500 = vrot.lane.b32.xlu0 %v5385, 96
        %v5501 = vpop.permute.xlu0 %5500
        %5502 = vrot.lane.b32.xlu0 %v5386, 96
        %v5503 = vpop.permute.xlu0 %5502
        %5504 = vrot.lane.b32.xlu0 %v5387, 96
        %v5505 = vpop.permute.xlu0 %5504
        %5506 = vrot.lane.b32.xlu0 %v5388, 96
        %v5507 = vpop.permute.xlu0 %5506
        %5508 = vrot.lane.b32.xlu0 %v5389, 96
        %v5509 = vpop.permute.xlu0 %5508
        %5510 = vrot.lane.b32.xlu0 %v5390, 96
        %v5511 = vpop.permute.xlu0 %5510
        %5512 = vrot.lane.b32.xlu0 %v5391, 96
        %v5513 = vpop.permute.xlu0 %5512
        %5514 = vrot.lane.b32.xlu0 %v5392, 96
        %v5515 = vpop.permute.xlu0 %5514
        %5516 = vrot.lane.b32.xlu0 %v5393, 96
        %v5517 = vpop.permute.xlu0 %5516
        %5518 = vrot.lane.b32.xlu0 %v5394, 96
        %v5519 = vpop.permute.xlu0 %5518
        %5520 = vrot.lane.b32.xlu0 %v5395, 96
        %v5521 = vpop.permute.xlu0 %5520
        %5522 = vrot.lane.b32.xlu0 %v5396, 96
        %v5523 = vpop.permute.xlu0 %5522
        %5524 = vrot.lane.b32.xlu0 %v5397, 96
        %v5525 = vpop.permute.xlu0 %5524
        %v5527 = vsel %vm830, %v5323, 0
        %v5530 = vsel %vm830, %v5328, 0
        %v5533 = vsel %vm830, %v5333, 0
        %v5536 = vsel %vm830, %v5338, 0
        %v5539 = vsel %vm830, %v5343, 0
        %v5542 = vsel %vm830, %v5348, 0
        %v5545 = vsel %vm830, %v5353, 0
        %v5548 = vsel %vm830, %v5358, 0
        %v5550 = vsel %vm830, %v5463, 0
        %v5552 = vsel %vm830, %v5465, 0
        %v5554 = vsel %vm830, %v5467, 0
        %v5556 = vsel %vm830, %v5469, 0
        %v5558 = vsel %vm830, %v5471, 0
        %v5560 = vsel %vm830, %v5473, 0
        %v5562 = vsel %vm830, %v5475, 0
        %v5564 = vsel %vm830, %v5477, 0
        %v5566 = vsel %vm830, %v5479, 0
        %v5568 = vsel %vm830, %v5481, 0
        %v5570 = vsel %vm830, %v5483, 0
        %v5572 = vsel %vm830, %v5485, 0
        %v5574 = vsel %vm830, %v5487, 0
        %v5576 = vsel %vm830, %v5489, 0
        %v5578 = vsel %vm830, %v5491, 0
        %v5580 = vsel %vm830, %v5493, 0
        %v5582 = vsel %vm830, %v5495, 0
        %v5584 = vsel %vm830, %v5497, 0
        %v5586 = vsel %vm830, %v5499, 0
        %v5588 = vsel %vm830, %v5501, 0
        %v5590 = vsel %vm830, %v5503, 0
        %v5592 = vsel %vm830, %v5505, 0
        %v5594 = vsel %vm830, %v5507, 0
        %v5596 = vsel %vm830, %v5509, 0
        %v5598 = vsel %vm830, %v5511, 0
        %v5600 = vsel %vm830, %v5513, 0
        %v5602 = vsel %vm830, %v5515, 0
        %v5604 = vsel %vm830, %v5517, 0
        %v5606 = vsel %vm830, %v5519, 0
        %v5608 = vsel %vm830, %v5521, 0
        %v5610 = vsel %vm830, %v5523, 0
        %v5612 = vsel %vm830, %v5525, 0
        %5614 = vmatprep.subr.mxu0 0.0
        %5615 = vmatpush1.xpose.msra.mxu0 %v5550
        %5616 = vmatprep.subr.mxu0 0.0
        %5617 = vmatpush1.xpose.msra.mxu0 %v5552
        %5618 = vmatprep.subr.mxu0 0.0
        %5619 = vmatpush1.xpose.msra.mxu0 %v5554
        %5620 = vmatprep.subr.mxu0 0.0
        %5621 = vmatpush1.xpose.msra.mxu0 %v5556
        %5622 = vmatprep.subr.mxu0 0.0
        %5623 = vmatpush1.xpose.msra.mxu0 %v5558
        %5624 = vmatprep.subr.mxu0 0.0
        %5625 = vmatpush1.xpose.msra.mxu0 %v5560
        %5626 = vmatprep.subr.mxu0 0.0
        %5627 = vmatpush1.xpose.msra.mxu0 %v5562
        %5628 = vmatprep.subr.mxu0 0.0
        %5629 = vmatpush1.xpose.msra.mxu0 %v5564
        %5630 = vmatprep.subr.mxu0 0.0
        %5631 = vmatpush1.xpose.msra.mxu0 %v5566
        %5632 = vmatprep.subr.mxu0 0.0
        %5633 = vmatpush1.xpose.msra.mxu0 %v5568
        %5634 = vmatprep.subr.mxu0 0.0
        %5635 = vmatpush1.xpose.msra.mxu0 %v5570
        %5636 = vmatprep.subr.mxu0 0.0
        %5637 = vmatpush1.xpose.msra.mxu0 %v5572
        %5638 = vmatprep.subr.mxu0 0.0
        %5639 = vmatpush1.xpose.msra.mxu0 %v5574
        %5640 = vmatprep.subr.mxu0 0.0
        %5641 = vmatpush1.xpose.msra.mxu0 %v5576
        %5642 = vmatprep.subr.mxu0 0.0
        %5643 = vmatpush1.xpose.msra.mxu0 %v5578
        %5644 = vmatprep.subr.mxu0 0.0
        %5645 = vmatpush1.xpose.msra.mxu0 %v5580
        %5646 = vmatprep.subr.mxu0 0.0
        %5647 = vmatpush1.xpose.msra.mxu0 %v5582
        %5648 = vmatprep.subr.mxu0 0.0
        %5649 = vmatpush1.xpose.msra.mxu0 %v5584
        %5650 = vmatprep.subr.mxu0 0.0
        %5651 = vmatpush1.xpose.msra.mxu0 %v5586
        %5652 = vmatprep.subr.mxu0 0.0
        %5653 = vmatpush1.xpose.msra.mxu0 %v5588
        %5654 = vmatprep.subr.mxu0 0.0
        %5655 = vmatpush1.xpose.msra.mxu0 %v5590
        %5656 = vmatprep.subr.mxu0 0.0
        %5657 = vmatpush1.xpose.msra.mxu0 %v5592
        %5658 = vmatprep.subr.mxu0 0.0
        %5659 = vmatpush1.xpose.msra.mxu0 %v5594
        %5660 = vmatprep.subr.mxu0 0.0
        %5661 = vmatpush1.xpose.msra.mxu0 %v5596
        %5662 = vmatprep.subr.mxu0 0.0
        %5663 = vmatpush1.xpose.msra.mxu0 %v5598
        %5664 = vmatprep.subr.mxu0 0.0
        %5665 = vmatpush1.xpose.msra.mxu0 %v5600
        %5666 = vmatprep.subr.mxu0 0.0
        %5667 = vmatpush1.xpose.msra.mxu0 %v5602
        %5668 = vmatprep.subr.mxu0 0.0
        %5669 = vmatpush1.xpose.msra.mxu0 %v5604
        %5670 = vmatprep.subr.mxu0 0.0
        %5671 = vmatpush1.xpose.msra.mxu0 %v5606
        %5672 = vmatprep.subr.mxu0 0.0
        %5673 = vmatpush1.xpose.msra.mxu0 %v5608
        %5674 = vmatprep.subr.mxu0 0.0
        %5675 = vmatpush1.xpose.msra.mxu0 %v5610
        %5676 = vmatprep.subr.mxu0 0.0
        %5677 = vmatpush1.xpose.msra.mxu0 %v5612
        %5678 = vmatprep.mubr.f32.mxu0 0.0
        %5679 = vmatmul.mubr.f32.gmra.mrb[0].mxu0 %v5527
        %v5680 = vpop.f32.mrb[0].mxu0
        %v5681 = vadd.f32 0.0, %v5680
        %v5682 = vpop.f32.mrb[0].mxu0
        %v5683 = vadd.f32 0.0, %v5682
        %5684 = vmatprep.mubr.f32.mxu0 0.0
        %5685 = vmatmul.mubr.f32.gmra.mrb[0].mxu0 %v5530
        %v5686 = vpop.f32.mrb[0].mxu0
        %v5687 = vadd.f32 0.0, %v5686
        %v5688 = vpop.f32.mrb[0].mxu0
        %v5689 = vadd.f32 0.0, %v5688
        %5690 = vmatprep.mubr.f32.mxu0 0.0
        %5691 = vmatmul.mubr.f32.gmra.mrb[0].mxu0 %v5533
        %v5692 = vpop.f32.mrb[0].mxu0
        %v5693 = vadd.f32 0.0, %v5692
        %v5694 = vpop.f32.mrb[0].mxu0
        %v5695 = vadd.f32 0.0, %v5694
        %5696 = vmatprep.mubr.f32.mxu0 0.0
        %5697 = vmatmul.mubr.f32.gmra.mrb[0].mxu0 %v5536
        %v5698 = vpop.f32.mrb[0].mxu0
        %v5699 = vadd.f32 0.0, %v5698
        %v5700 = vpop.f32.mrb[0].mxu0
        %v5701 = vadd.f32 0.0, %v5700
        %5702 = vmatprep.mubr.f32.mxu0 0.0
        %5703 = vmatmul.mubr.f32.gmra.mrb[0].mxu0 %v5539
        %v5704 = vpop.f32.mrb[0].mxu0
        %v5705 = vadd.f32 0.0, %v5704
        %v5706 = vpop.f32.mrb[0].mxu0
        %v5707 = vadd.f32 0.0, %v5706
        %5708 = vmatprep.mubr.f32.mxu0 0.0
        %5709 = vmatmul.mubr.f32.gmra.mrb[0].mxu0 %v5542
        %v5710 = vpop.f32.mrb[0].mxu0
        %v5711 = vadd.f32 0.0, %v5710
        %v5712 = vpop.f32.mrb[0].mxu0
        %v5713 = vadd.f32 0.0, %v5712
        %5714 = vmatprep.mubr.f32.mxu0 0.0
        %5715 = vmatmul.mubr.f32.gmra.mrb[0].mxu0 %v5545
        %v5716 = vpop.f32.mrb[0].mxu0
        %v5717 = vadd.f32 0.0, %v5716
        %v5718 = vpop.f32.mrb[0].mxu0
        %v5719 = vadd.f32 0.0, %v5718
        %5720 = vmatprep.mubr.f32.mxu0 0.0
        %5721 = vmatmul.mubr.f32.gmra.mrb[0].mxu0 %v5548
        %v5722 = vpop.f32.mrb[0].mxu0
        %v5723 = vadd.f32 0.0, %v5722
        %v5724 = vpop.f32.mrb[0].mxu0
        %v5725 = vadd.f32 0.0, %v5724
        %5726 = vdwg.mxu0
        %v5727 = vadd.f32 %v5681, %v820
        %v5728 = vadd.f32 %v5687, %v821
        %v5729 = vadd.f32 %v5693, %v822
        %v5730 = vadd.f32 %v5699, %v823
        %v5731 = vadd.f32 %v5705, %v824
        %v5732 = vadd.f32 %v5711, %v825
        %v5733 = vadd.f32 %v5717, %v826
        %v5734 = vadd.f32 %v5723, %v827
        %v5735 = vsel %vm1528, %v5727, -inf
        %5736 = vmax.xlane.f32.xlu0 %v5735
        %v5737 = vpop.xlane.xlu0 %5736
        %v5738 = vsel %vm1528, %v5728, -inf
        %5739 = vmax.xlane.f32.xlu0 %v5738
        %v5740 = vpop.xlane.xlu0 %5739
        %v5741 = vsel %vm1528, %v5729, -inf
        %5742 = vmax.xlane.f32.xlu0 %v5741
        %v5743 = vpop.xlane.xlu0 %5742
        %v5744 = vsel %vm1528, %v5730, -inf
        %5745 = vmax.xlane.f32.xlu0 %v5744
        %v5746 = vpop.xlane.xlu0 %5745
        %v5747 = vsel %vm1528, %v5731, -inf
        %5748 = vmax.xlane.f32.xlu0 %v5747
        %v5749 = vpop.xlane.xlu0 %5748
        %v5750 = vsel %vm1528, %v5732, -inf
        %5751 = vmax.xlane.f32.xlu0 %v5750
        %v5752 = vpop.xlane.xlu0 %5751
        %v5753 = vsel %vm1528, %v5733, -inf
        %5754 = vmax.xlane.f32.xlu0 %v5753
        %v5755 = vpop.xlane.xlu0 %5754
        %v5756 = vsel %vm1528, %v5734, -inf
        %5757 = vmax.xlane.f32.xlu0 %v5756
        %v5758 = vpop.xlane.xlu0 %5757
        %v5759 = vsub.f32 %v5727, %v5737
        %v5760 = vsub.f32 %v5728, %v5740
        %v5761 = vsub.f32 %v5729, %v5743
        %v5762 = vsub.f32 %v5730, %v5746
        %v5763 = vsub.f32 %v5731, %v5749
        %v5764 = vsub.f32 %v5732, %v5752
        %v5765 = vsub.f32 %v5733, %v5755
        %v5766 = vsub.f32 %v5734, %v5758
        %v5767 = vmul.f32 %v5759, 1.442695
        %v5768 = vpow.pop %v5767
        %v5769 = vmul.f32 %v5760, 1.442695
        %v5770 = vpow.pop %v5769
        %v5771 = vmul.f32 %v5761, 1.442695
        %v5772 = vpow.pop %v5771
        %v5773 = vmul.f32 %v5762, 1.442695
        %v5774 = vpow.pop %v5773
        %v5775 = vmul.f32 %v5763, 1.442695
        %v5776 = vpow.pop %v5775
        %v5777 = vmul.f32 %v5764, 1.442695
        %v5778 = vpow.pop %v5777
        %v5779 = vmul.f32 %v5765, 1.442695
        %v5780 = vpow.pop %v5779
        %v5781 = vmul.f32 %v5766, 1.442695
        %v5782 = vpow.pop %v5781
        %v5783 = vsel %vm1528, %v5768, 0.0
        %5784 = vadd.xlane.f32.xlu0 %v5783
        %v5785 = vpop.xlane.xlu0 %5784
        %v5786 = vsel %vm1528, %v5770, 0.0
        %5787 = vadd.xlane.f32.xlu0 %v5786
        %v5788 = vpop.xlane.xlu0 %5787
        %v5789 = vsel %vm1528, %v5772, 0.0
        %5790 = vadd.xlane.f32.xlu0 %v5789
        %v5791 = vpop.xlane.xlu0 %5790
        %v5792 = vsel %vm1528, %v5774, 0.0
        %5793 = vadd.xlane.f32.xlu0 %v5792
        %v5794 = vpop.xlane.xlu0 %5793
        %v5795 = vsel %vm1528, %v5776, 0.0
        %5796 = vadd.xlane.f32.xlu0 %v5795
        %v5797 = vpop.xlane.xlu0 %5796
        %v5798 = vsel %vm1528, %v5778, 0.0
        %5799 = vadd.xlane.f32.xlu0 %v5798
        %v5800 = vpop.xlane.xlu0 %5799
        %v5801 = vsel %vm1528, %v5780, 0.0
        %5802 = vadd.xlane.f32.xlu0 %v5801
        %v5803 = vpop.xlane.xlu0 %5802
        %v5804 = vsel %vm1528, %v5782, 0.0
        %5805 = vadd.xlane.f32.xlu0 %v5804
        %v5806 = vpop.xlane.xlu0 %5805
        %v5807 = vrcp.pop %v5785
        %v5808 = vrcp.pop %v5788
        %v5809 = vrcp.pop %v5791
        %v5810 = vrcp.pop %v5794
        %v5811 = vrcp.pop %v5797
        %v5812 = vrcp.pop %v5800
        %v5813 = vrcp.pop %v5803
        %v5814 = vrcp.pop %v5806
        %v5815 = vmul.f32 %v5768, %v5807
        %v5816 = vmul.f32 %v5770, %v5808
        %v5817 = vmul.f32 %v5772, %v5809
        %v5818 = vmul.f32 %v5774, %v5810
        %v5819 = vmul.f32 %v5776, %v5811
        %v5820 = vmul.f32 %v5778, %v5812
        %v5821 = vmul.f32 %v5780, %v5813
        %v5822 = vmul.f32 %v5782, %v5814
        %v5823 = vadd.f32 %v5681, %v1626
        %v5824 = vadd.f32 %v5687, %v1628
        %v5825 = vadd.f32 %v5693, %v1630
        %v5826 = vadd.f32 %v5699, %v1632
        %v5827 = vadd.f32 %v5705, %v1634
        %v5828 = vadd.f32 %v5711, %v1636
        %v5829 = vadd.f32 %v5717, %v1638
        %v5830 = vadd.f32 %v5723, %v1640
        %v5831 = vsel %vm1657, %v5823, -inf
        %5832 = vmax.xlane.f32.xlu0 %v5831
        %v5833 = vpop.xlane.xlu0 %5832
        %v5834 = vsel %vm1657, %v5824, -inf
        %5835 = vmax.xlane.f32.xlu0 %v5834
        %v5836 = vpop.xlane.xlu0 %5835
        %v5837 = vsel %vm1657, %v5825, -inf
        %5838 = vmax.xlane.f32.xlu0 %v5837
        %v5839 = vpop.xlane.xlu0 %5838
        %v5840 = vsel %vm1657, %v5826, -inf
        %5841 = vmax.xlane.f32.xlu0 %v5840
        %v5842 = vpop.xlane.xlu0 %5841
        %v5843 = vsel %vm1657, %v5827, -inf
        %5844 = vmax.xlane.f32.xlu0 %v5843
        %v5845 = vpop.xlane.xlu0 %5844
        %v5846 = vsel %vm1657, %v5828, -inf
        %5847 = vmax.xlane.f32.xlu0 %v5846
        %v5848 = vpop.xlane.xlu0 %5847
        %v5849 = vsel %vm1657, %v5829, -inf
        %5850 = vmax.xlane.f32.xlu0 %v5849
        %v5851 = vpop.xlane.xlu0 %5850
        %v5852 = vsel %vm1657, %v5830, -inf
        %5853 = vmax.xlane.f32.xlu0 %v5852
        %v5854 = vpop.xlane.xlu0 %5853
        %v5855 = vsub.f32 %v5823, %v5833
        %v5856 = vsub.f32 %v5824, %v5836
        %v5857 = vsub.f32 %v5825, %v5839
        %v5858 = vsub.f32 %v5826, %v5842
        %v5859 = vsub.f32 %v5827, %v5845
        %v5860 = vsub.f32 %v5828, %v5848
        %v5861 = vsub.f32 %v5829, %v5851
        %v5862 = vsub.f32 %v5830, %v5854
        %v5863 = vmul.f32 %v5855, 1.442695
        %v5864 = vpow.pop %v5863
        %v5865 = vmul.f32 %v5856, 1.442695
        %v5866 = vpow.pop %v5865
        %v5867 = vmul.f32 %v5857, 1.442695
        %v5868 = vpow.pop %v5867
        %v5869 = vmul.f32 %v5858, 1.442695
        %v5870 = vpow.pop %v5869
        %v5871 = vmul.f32 %v5859, 1.442695
        %v5872 = vpow.pop %v5871
        %v5873 = vmul.f32 %v5860, 1.442695
        %v5874 = vpow.pop %v5873
        %v5875 = vmul.f32 %v5861, 1.442695
        %v5876 = vpow.pop %v5875
        %v5877 = vmul.f32 %v5862, 1.442695
        %v5878 = vpow.pop %v5877
        %5887 = vrot.lane.b32.xlu0 %v5864, 64
        %v5888 = vpop.permute.xlu0 %5887
        %5889 = vrot.lane.b32.xlu0 %v5866, 64
        %v5890 = vpop.permute.xlu0 %5889
        %5891 = vrot.lane.b32.xlu0 %v5868, 64
        %v5892 = vpop.permute.xlu0 %5891
        %5893 = vrot.lane.b32.xlu0 %v5870, 64
        %v5894 = vpop.permute.xlu0 %5893
        %5895 = vrot.lane.b32.xlu0 %v5872, 64
        %v5896 = vpop.permute.xlu0 %5895
        %5897 = vrot.lane.b32.xlu0 %v5874, 64
        %v5898 = vpop.permute.xlu0 %5897
        %5899 = vrot.lane.b32.xlu0 %v5876, 64
        %v5900 = vpop.permute.xlu0 %5899
        %5901 = vrot.lane.b32.xlu0 %v5878, 64
        %v5902 = vpop.permute.xlu0 %5901
        %v5911 = vsel %vm1528, %v5888, 0.0
        %5912 = vadd.xlane.f32.xlu0 %v5911
        %v5913 = vpop.xlane.xlu0 %5912
        %v5914 = vsel %vm1528, %v5890, 0.0
        %5915 = vadd.xlane.f32.xlu0 %v5914
        %v5916 = vpop.xlane.xlu0 %5915
        %v5917 = vsel %vm1528, %v5892, 0.0
        %5918 = vadd.xlane.f32.xlu0 %v5917
        %v5919 = vpop.xlane.xlu0 %5918
        %v5920 = vsel %vm1528, %v5894, 0.0
        %5921 = vadd.xlane.f32.xlu0 %v5920
        %v5922 = vpop.xlane.xlu0 %5921
        %v5923 = vsel %vm1528, %v5896, 0.0
        %5924 = vadd.xlane.f32.xlu0 %v5923
        %v5925 = vpop.xlane.xlu0 %5924
        %v5926 = vsel %vm1528, %v5898, 0.0
        %5927 = vadd.xlane.f32.xlu0 %v5926
        %v5928 = vpop.xlane.xlu0 %5927
        %v5929 = vsel %vm1528, %v5900, 0.0
        %5930 = vadd.xlane.f32.xlu0 %v5929
        %v5931 = vpop.xlane.xlu0 %5930
        %v5932 = vsel %vm1528, %v5902, 0.0
        %5933 = vadd.xlane.f32.xlu0 %v5932
        %v5934 = vpop.xlane.xlu0 %5933
        %v5935 = vrcp.pop %v5913
        %v5936 = vrcp.pop %v5916
        %v5937 = vrcp.pop %v5919
        %v5938 = vrcp.pop %v5922
        %v5939 = vrcp.pop %v5925
        %v5940 = vrcp.pop %v5928
        %v5941 = vrcp.pop %v5931
        %v5942 = vrcp.pop %v5934
        %v5943 = vmul.f32 %v5864, %v5935
        %v5944 = vmul.f32 %v5866, %v5936
        %v5945 = vmul.f32 %v5868, %v5937
        %v5946 = vmul.f32 %v5870, %v5938
        %v5947 = vmul.f32 %v5872, %v5939
        %v5948 = vmul.f32 %v5874, %v5940
        %v5949 = vmul.f32 %v5876, %v5941
        %v5950 = vmul.f32 %v5878, %v5942
        %v5951 = vadd.f32 %v5683, %v820
        %v5952 = vadd.f32 %v5689, %v821
        %v5953 = vadd.f32 %v5695, %v822
        %v5954 = vadd.f32 %v5701, %v823
        %v5955 = vadd.f32 %v5707, %v824
        %v5956 = vadd.f32 %v5713, %v825
        %v5957 = vadd.f32 %v5719, %v826
        %v5958 = vadd.f32 %v5725, %v827
        %v5959 = vsel %vm1528, %v5951, -inf
        %5960 = vmax.xlane.f32.xlu0 %v5959
        %v5961 = vpop.xlane.xlu0 %5960
        %v5962 = vsel %vm1528, %v5952, -inf
        %5963 = vmax.xlane.f32.xlu0 %v5962
        %v5964 = vpop.xlane.xlu0 %5963
        %v5965 = vsel %vm1528, %v5953, -inf
        %5966 = vmax.xlane.f32.xlu0 %v5965
        %v5967 = vpop.xlane.xlu0 %5966
        %v5968 = vsel %vm1528, %v5954, -inf
        %5969 = vmax.xlane.f32.xlu0 %v5968
        %v5970 = vpop.xlane.xlu0 %5969
        %v5971 = vsel %vm1528, %v5955, -inf
        %5972 = vmax.xlane.f32.xlu0 %v5971
        %v5973 = vpop.xlane.xlu0 %5972
        %v5974 = vsel %vm1528, %v5956, -inf
        %5975 = vmax.xlane.f32.xlu0 %v5974
        %v5976 = vpop.xlane.xlu0 %5975
        %v5977 = vsel %vm1528, %v5957, -inf
        %5978 = vmax.xlane.f32.xlu0 %v5977
        %v5979 = vpop.xlane.xlu0 %5978
        %v5980 = vsel %vm1528, %v5958, -inf
        %5981 = vmax.xlane.f32.xlu0 %v5980
        %v5982 = vpop.xlane.xlu0 %5981
        %v5983 = vsub.f32 %v5951, %v5961
        %v5984 = vsub.f32 %v5952, %v5964
        %v5985 = vsub.f32 %v5953, %v5967
        %v5986 = vsub.f32 %v5954, %v5970
        %v5987 = vsub.f32 %v5955, %v5973
        %v5988 = vsub.f32 %v5956, %v5976
        %v5989 = vsub.f32 %v5957, %v5979
        %v5990 = vsub.f32 %v5958, %v5982
        %v5991 = vmul.f32 %v5983, 1.442695
        %v5992 = vpow.pop %v5991
        %v5993 = vmul.f32 %v5984, 1.442695
        %v5994 = vpow.pop %v5993
        %v5995 = vmul.f32 %v5985, 1.442695
        %v5996 = vpow.pop %v5995
        %v5997 = vmul.f32 %v5986, 1.442695
        %v5998 = vpow.pop %v5997
        %v5999 = vmul.f32 %v5987, 1.442695
        %v6000 = vpow.pop %v5999
        %v6001 = vmul.f32 %v5988, 1.442695
        %v6002 = vpow.pop %v6001
        %v6003 = vmul.f32 %v5989, 1.442695
        %v6004 = vpow.pop %v6003
        %v6005 = vmul.f32 %v5990, 1.442695
        %v6006 = vpow.pop %v6005
        %v6007 = vsel %vm1528, %v5992, 0.0
        %6008 = vadd.xlane.f32.xlu0 %v6007
        %v6009 = vpop.xlane.xlu0 %6008
        %v6010 = vsel %vm1528, %v5994, 0.0
        %6011 = vadd.xlane.f32.xlu0 %v6010
        %v6012 = vpop.xlane.xlu0 %6011
        %v6013 = vsel %vm1528, %v5996, 0.0
        %6014 = vadd.xlane.f32.xlu0 %v6013
        %v6015 = vpop.xlane.xlu0 %6014
        %v6016 = vsel %vm1528, %v5998, 0.0
        %6017 = vadd.xlane.f32.xlu0 %v6016
        %v6018 = vpop.xlane.xlu0 %6017
        %v6019 = vsel %vm1528, %v6000, 0.0
        %6020 = vadd.xlane.f32.xlu0 %v6019
        %v6021 = vpop.xlane.xlu0 %6020
        %v6022 = vsel %vm1528, %v6002, 0.0
        %6023 = vadd.xlane.f32.xlu0 %v6022
        %v6024 = vpop.xlane.xlu0 %6023
        %v6025 = vsel %vm1528, %v6004, 0.0
        %6026 = vadd.xlane.f32.xlu0 %v6025
        %v6027 = vpop.xlane.xlu0 %6026
        %v6028 = vsel %vm1528, %v6006, 0.0
        %6029 = vadd.xlane.f32.xlu0 %v6028
        %v6030 = vpop.xlane.xlu0 %6029
        %v6031 = vrcp.pop %v6009
        %v6032 = vrcp.pop %v6012
        %v6033 = vrcp.pop %v6015
        %v6034 = vrcp.pop %v6018
        %v6035 = vrcp.pop %v6021
        %v6036 = vrcp.pop %v6024
        %v6037 = vrcp.pop %v6027
        %v6038 = vrcp.pop %v6030
        %v6039 = vmul.f32 %v5992, %v6031
        %v6040 = vmul.f32 %v5994, %v6032
        %v6041 = vmul.f32 %v5996, %v6033
        %v6042 = vmul.f32 %v5998, %v6034
        %v6043 = vmul.f32 %v6000, %v6035
        %v6044 = vmul.f32 %v6002, %v6036
        %v6045 = vmul.f32 %v6004, %v6037
        %v6046 = vmul.f32 %v6006, %v6038
        %v6047 = vadd.f32 %v5683, %v1626
        %v6048 = vadd.f32 %v5689, %v1628
        %v6049 = vadd.f32 %v5695, %v1630
        %v6050 = vadd.f32 %v5701, %v1632
        %v6051 = vadd.f32 %v5707, %v1634
        %v6052 = vadd.f32 %v5713, %v1636
        %v6053 = vadd.f32 %v5719, %v1638
        %v6054 = vadd.f32 %v5725, %v1640
        %v6055 = vsel %vm1657, %v6047, -inf
        %6056 = vmax.xlane.f32.xlu0 %v6055
        %v6057 = vpop.xlane.xlu0 %6056
        %v6058 = vsel %vm1657, %v6048, -inf
        %6059 = vmax.xlane.f32.xlu0 %v6058
        %v6060 = vpop.xlane.xlu0 %6059
        %v6061 = vsel %vm1657, %v6049, -inf
        %6062 = vmax.xlane.f32.xlu0 %v6061
        %v6063 = vpop.xlane.xlu0 %6062
        %v6064 = vsel %vm1657, %v6050, -inf
        %6065 = vmax.xlane.f32.xlu0 %v6064
        %v6066 = vpop.xlane.xlu0 %6065
        %v6067 = vsel %vm1657, %v6051, -inf
        %6068 = vmax.xlane.f32.xlu0 %v6067
        %v6069 = vpop.xlane.xlu0 %6068
        %v6070 = vsel %vm1657, %v6052, -inf
        %6071 = vmax.xlane.f32.xlu0 %v6070
        %v6072 = vpop.xlane.xlu0 %6071
        %v6073 = vsel %vm1657, %v6053, -inf
        %6074 = vmax.xlane.f32.xlu0 %v6073
        %v6075 = vpop.xlane.xlu0 %6074
        %v6076 = vsel %vm1657, %v6054, -inf
        %6077 = vmax.xlane.f32.xlu0 %v6076
        %v6078 = vpop.xlane.xlu0 %6077
        %v6079 = vsub.f32 %v6047, %v6057
        %v6080 = vsub.f32 %v6048, %v6060
        %v6081 = vsub.f32 %v6049, %v6063
        %v6082 = vsub.f32 %v6050, %v6066
        %v6083 = vsub.f32 %v6051, %v6069
        %v6084 = vsub.f32 %v6052, %v6072
        %v6085 = vsub.f32 %v6053, %v6075
        %v6086 = vsub.f32 %v6054, %v6078
        %v6087 = vmul.f32 %v6079, 1.442695
        %v6088 = vpow.pop %v6087
        %v6089 = vmul.f32 %v6080, 1.442695
        %v6090 = vpow.pop %v6089
        %v6091 = vmul.f32 %v6081, 1.442695
        %v6092 = vpow.pop %v6091
        %v6093 = vmul.f32 %v6082, 1.442695
        %v6094 = vpow.pop %v6093
        %v6095 = vmul.f32 %v6083, 1.442695
        %v6096 = vpow.pop %v6095
        %v6097 = vmul.f32 %v6084, 1.442695
        %v6098 = vpow.pop %v6097
        %v6099 = vmul.f32 %v6085, 1.442695
        %v6100 = vpow.pop %v6099
        %v6101 = vmul.f32 %v6086, 1.442695
        %v6102 = vpow.pop %v6101
        %6111 = vrot.lane.b32.xlu0 %v6088, 64
        %v6112 = vpop.permute.xlu0 %6111
        %6113 = vrot.lane.b32.xlu0 %v6090, 64
        %v6114 = vpop.permute.xlu0 %6113
        %6115 = vrot.lane.b32.xlu0 %v6092, 64
        %v6116 = vpop.permute.xlu0 %6115
        %6117 = vrot.lane.b32.xlu0 %v6094, 64
        %v6118 = vpop.permute.xlu0 %6117
        %6119 = vrot.lane.b32.xlu0 %v6096, 64
        %v6120 = vpop.permute.xlu0 %6119
        %6121 = vrot.lane.b32.xlu0 %v6098, 64
        %v6122 = vpop.permute.xlu0 %6121
        %6123 = vrot.lane.b32.xlu0 %v6100, 64
        %v6124 = vpop.permute.xlu0 %6123
        %6125 = vrot.lane.b32.xlu0 %v6102, 64
        %v6126 = vpop.permute.xlu0 %6125
        %v6135 = vsel %vm1528, %v6112, 0.0
        %6136 = vadd.xlane.f32.xlu0 %v6135
        %v6137 = vpop.xlane.xlu0 %6136
        %v6138 = vsel %vm1528, %v6114, 0.0
        %6139 = vadd.xlane.f32.xlu0 %v6138
        %v6140 = vpop.xlane.xlu0 %6139
        %v6141 = vsel %vm1528, %v6116, 0.0
        %6142 = vadd.xlane.f32.xlu0 %v6141
        %v6143 = vpop.xlane.xlu0 %6142
        %v6144 = vsel %vm1528, %v6118, 0.0
        %6145 = vadd.xlane.f32.xlu0 %v6144
        %v6146 = vpop.xlane.xlu0 %6145
        %v6147 = vsel %vm1528, %v6120, 0.0
        %6148 = vadd.xlane.f32.xlu0 %v6147
        %v6149 = vpop.xlane.xlu0 %6148
        %v6150 = vsel %vm1528, %v6122, 0.0
        %6151 = vadd.xlane.f32.xlu0 %v6150
        %v6152 = vpop.xlane.xlu0 %6151
        %v6153 = vsel %vm1528, %v6124, 0.0
        %6154 = vadd.xlane.f32.xlu0 %v6153
        %v6155 = vpop.xlane.xlu0 %6154
        %v6156 = vsel %vm1528, %v6126, 0.0
        %6157 = vadd.xlane.f32.xlu0 %v6156
        %v6158 = vpop.xlane.xlu0 %6157
        %v6159 = vrcp.pop %v6137
        %v6160 = vrcp.pop %v6140
        %v6161 = vrcp.pop %v6143
        %v6162 = vrcp.pop %v6146
        %v6163 = vrcp.pop %v6149
        %v6164 = vrcp.pop %v6152
        %v6165 = vrcp.pop %v6155
        %v6166 = vrcp.pop %v6158
        %v6167 = vmul.f32 %v6088, %v6159
        %v6168 = vmul.f32 %v6090, %v6160
        %v6169 = vmul.f32 %v6092, %v6161
        %v6170 = vmul.f32 %v6094, %v6162
        %v6171 = vmul.f32 %v6096, %v6163
        %v6172 = vmul.f32 %v6098, %v6164
        %v6173 = vmul.f32 %v6100, %v6165
        %v6174 = vmul.f32 %v6102, %v6166
        %v6175 = vsel %vm1528, %v5815, %v5943
        %v6176 = vsel %vm1528, %v5816, %v5944
        %v6177 = vsel %vm1528, %v5817, %v5945
        %v6178 = vsel %vm1528, %v5818, %v5946
        %v6179 = vsel %vm1528, %v5819, %v5947
        %v6180 = vsel %vm1528, %v5820, %v5948
        %v6181 = vsel %vm1528, %v5821, %v5949
        %v6182 = vsel %vm1528, %v5822, %v5950
        %v6183 = vsel %vm1528, %v6039, %v6167
        %v6184 = vsel %vm1528, %v6040, %v6168
        %v6185 = vsel %vm1528, %v6041, %v6169
        %v6186 = vsel %vm1528, %v6042, %v6170
        %v6187 = vsel %vm1528, %v6043, %v6171
        %v6188 = vsel %vm1528, %v6044, %v6172
        %v6189 = vsel %vm1528, %v6045, %v6173
        %v6190 = vsel %vm1528, %v6046, %v6174
        %6223 = vrot.lane.b32.xlu0 %v5398, 64
        %v6224 = vpop.permute.xlu0 %6223
        %6225 = vrot.lane.b32.xlu0 %v5399, 64
        %v6226 = vpop.permute.xlu0 %6225
        %6227 = vrot.lane.b32.xlu0 %v5400, 64
        %v6228 = vpop.permute.xlu0 %6227
        %6229 = vrot.lane.b32.xlu0 %v5401, 64
        %v6230 = vpop.permute.xlu0 %6229
        %6231 = vrot.lane.b32.xlu0 %v5402, 64
        %v6232 = vpop.permute.xlu0 %6231
        %6233 = vrot.lane.b32.xlu0 %v5403, 64
        %v6234 = vpop.permute.xlu0 %6233
        %6235 = vrot.lane.b32.xlu0 %v5404, 64
        %v6236 = vpop.permute.xlu0 %6235
        %6237 = vrot.lane.b32.xlu0 %v5405, 64
        %v6238 = vpop.permute.xlu0 %6237
        %6239 = vrot.lane.b32.xlu0 %v5406, 64
        %v6240 = vpop.permute.xlu0 %6239
        %6241 = vrot.lane.b32.xlu0 %v5407, 64
        %v6242 = vpop.permute.xlu0 %6241
        %6243 = vrot.lane.b32.xlu0 %v5408, 64
        %v6244 = vpop.permute.xlu0 %6243
        %6245 = vrot.lane.b32.xlu0 %v5409, 64
        %v6246 = vpop.permute.xlu0 %6245
        %6247 = vrot.lane.b32.xlu0 %v5410, 64
        %v6248 = vpop.permute.xlu0 %6247
        %6249 = vrot.lane.b32.xlu0 %v5411, 64
        %v6250 = vpop.permute.xlu0 %6249
        %6251 = vrot.lane.b32.xlu0 %v5412, 64
        %v6252 = vpop.permute.xlu0 %6251
        %6253 = vrot.lane.b32.xlu0 %v5413, 64
        %v6254 = vpop.permute.xlu0 %6253
        %6255 = vrot.lane.b32.xlu0 %v5414, 64
        %v6256 = vpop.permute.xlu0 %6255
        %6257 = vrot.lane.b32.xlu0 %v5415, 64
        %v6258 = vpop.permute.xlu0 %6257
        %6259 = vrot.lane.b32.xlu0 %v5416, 64
        %v6260 = vpop.permute.xlu0 %6259
        %6261 = vrot.lane.b32.xlu0 %v5417, 64
        %v6262 = vpop.permute.xlu0 %6261
        %6263 = vrot.lane.b32.xlu0 %v5418, 64
        %v6264 = vpop.permute.xlu0 %6263
        %6265 = vrot.lane.b32.xlu0 %v5419, 64
        %v6266 = vpop.permute.xlu0 %6265
        %6267 = vrot.lane.b32.xlu0 %v5420, 64
        %v6268 = vpop.permute.xlu0 %6267
        %6269 = vrot.lane.b32.xlu0 %v5421, 64
        %v6270 = vpop.permute.xlu0 %6269
        %6271 = vrot.lane.b32.xlu0 %v5422, 64
        %v6272 = vpop.permute.xlu0 %6271
        %6273 = vrot.lane.b32.xlu0 %v5423, 64
        %v6274 = vpop.permute.xlu0 %6273
        %6275 = vrot.lane.b32.xlu0 %v5424, 64
        %v6276 = vpop.permute.xlu0 %6275
        %6277 = vrot.lane.b32.xlu0 %v5425, 64
        %v6278 = vpop.permute.xlu0 %6277
        %6279 = vrot.lane.b32.xlu0 %v5426, 64
        %v6280 = vpop.permute.xlu0 %6279
        %6281 = vrot.lane.b32.xlu0 %v5427, 64
        %v6282 = vpop.permute.xlu0 %6281
        %6283 = vrot.lane.b32.xlu0 %v5428, 64
        %v6284 = vpop.permute.xlu0 %6283
        %6285 = vrot.lane.b32.xlu0 %v5429, 64
        %v6286 = vpop.permute.xlu0 %6285
        %v6287 = vsel %vm830, %v6224, 0
        %v6289 = vsel %vm830, %v6226, 0
        %v6291 = vsel %vm830, %v6228, 0
        %v6293 = vsel %vm830, %v6230, 0
        %v6295 = vsel %vm830, %v6232, 0
        %v6297 = vsel %vm830, %v6234, 0
        %v6299 = vsel %vm830, %v6236, 0
        %v6301 = vsel %vm830, %v6238, 0
        %v6303 = vsel %vm830, %v6240, 0
        %v6305 = vsel %vm830, %v6242, 0
        %v6307 = vsel %vm830, %v6244, 0
        %v6309 = vsel %vm830, %v6246, 0
        %v6311 = vsel %vm830, %v6248, 0
        %v6313 = vsel %vm830, %v6250, 0
        %v6315 = vsel %vm830, %v6252, 0
        %v6317 = vsel %vm830, %v6254, 0
        %v6319 = vsel %vm830, %v6256, 0
        %v6321 = vsel %vm830, %v6258, 0
        %v6323 = vsel %vm830, %v6260, 0
        %v6325 = vsel %vm830, %v6262, 0
        %v6327 = vsel %vm830, %v6264, 0
        %v6329 = vsel %vm830, %v6266, 0
        %v6331 = vsel %vm830, %v6268, 0
        %v6333 = vsel %vm830, %v6270, 0
        %v6335 = vsel %vm830, %v6272, 0
        %v6337 = vsel %vm830, %v6274, 0
        %v6339 = vsel %vm830, %v6276, 0
        %v6341 = vsel %vm830, %v6278, 0
        %v6343 = vsel %vm830, %v6280, 0
        %v6345 = vsel %vm830, %v6282, 0
        %v6347 = vsel %vm830, %v6284, 0
        %v6349 = vsel %vm830, %v6286, 0
        %6351 = vmatprep.subr.mxu0 0.0
        %6352 = vmatpush1.msra.mxu0 %v5362
        %6353 = vmatprep.subr.mxu0 0.0
        %6354 = vmatpush1.msra.mxu0 %v5363
        %6355 = vmatprep.subr.mxu0 0.0
        %6356 = vmatpush1.msra.mxu0 %v5364
        %6357 = vmatprep.subr.mxu0 0.0
        %6358 = vmatpush1.msra.mxu0 %v5365
        %6359 = vmatprep.subr.mxu0 0.0
        %6360 = vmatpush1.msra.mxu0 0.0
        %6361 = vmatprep.subr.mxu0 0.0
        %6362 = vmatpush1.msra.mxu0 0.0
        %6363 = vmatprep.subr.mxu0 0.0
        %6364 = vmatpush1.msra.mxu0 0.0
        %6365 = vmatprep.subr.mxu0 0.0
        %6366 = vmatpush1.msra.mxu0 0.0
        %6367 = vmatprep.subr.mxu0 0.0
        %6368 = vmatpush1.msra.mxu0 0.0
        %6369 = vmatprep.subr.mxu0 0.0
        %6370 = vmatpush1.msra.mxu0 0.0
        %6371 = vmatprep.subr.mxu0 0.0
        %6372 = vmatpush1.msra.mxu0 0.0
        %6373 = vmatprep.subr.mxu0 0.0
        %6374 = vmatpush1.msra.mxu0 0.0
        %6375 = vmatprep.subr.mxu0 0.0
        %6376 = vmatpush1.msra.mxu0 0.0
        %6377 = vmatprep.subr.mxu0 0.0
        %6378 = vmatpush1.msra.mxu0 0.0
        %6379 = vmatprep.subr.mxu0 0.0
        %6380 = vmatpush1.msra.mxu0 0.0
        %6381 = vmatprep.subr.mxu0 0.0
        %6382 = vmatpush1.msra.mxu0 0.0
        %6383 = vmatprep.subr.mxu0 0.0
        %6384 = vmatpush1.msra.mxu0 0.0
        %6385 = vmatprep.subr.mxu0 0.0
        %6386 = vmatpush1.msra.mxu0 0.0
        %6387 = vmatprep.subr.mxu0 0.0
        %6388 = vmatpush1.msra.mxu0 0.0
        %6389 = vmatprep.subr.mxu0 0.0
        %6390 = vmatpush1.msra.mxu0 0.0
        %6391 = vmatprep.subr.mxu0 0.0
        %6392 = vmatpush1.msra.mxu0 0.0
        %6393 = vmatprep.subr.mxu0 0.0
        %6394 = vmatpush1.msra.mxu0 0.0
        %6395 = vmatprep.subr.mxu0 0.0
        %6396 = vmatpush1.msra.mxu0 0.0
        %6397 = vmatprep.subr.mxu0 0.0
        %6398 = vmatpush1.msra.mxu0 0.0
        %6399 = vmatprep.subr.mxu0 0.0
        %6400 = vmatpush1.msra.mxu0 0.0
        %6401 = vmatprep.subr.mxu0 0.0
        %6402 = vmatpush1.msra.mxu0 0.0
        %6403 = vmatprep.subr.mxu0 0.0
        %6404 = vmatpush1.msra.mxu0 0.0
        %6405 = vmatprep.subr.mxu0 0.0
        %6406 = vmatpush1.msra.mxu0 0.0
        %6407 = vmatprep.subr.mxu0 0.0
        %6408 = vmatpush1.msra.mxu0 0.0
        %6409 = vmatprep.subr.mxu0 0.0
        %6410 = vmatpush1.msra.mxu0 0.0
        %6411 = vmatprep.subr.mxu0 0.0
        %6412 = vmatpush1.msra.mxu0 0.0
        %6413 = vmatprep.subr.mxu0 0.0
        %6414 = vmatpush1.msra.mxu0 0.0
        %6415 = vmatprep.mubr.f32.mxu0 0.0
        %6416 = vmatmul.mubr.f32.gmra.mrb[0].mxu0 %v6287
        %v6417 = vpop.f32.mrb[0].mxu0
        %v6418 = vadd.f32 0.0, %v6417
        %v6419 = vpop.f32.mrb[0].mxu0
        %6420 = vmatprep.mubr.f32.mxu0 0.0
        %6421 = vmatmul.mubr.f32.gmra.mrb[0].mxu0 %v6289
        %v6422 = vpop.f32.mrb[0].mxu0
        %v6423 = vadd.f32 0.0, %v6422
        %v6424 = vpop.f32.mrb[0].mxu0
        %6425 = vmatprep.mubr.f32.mxu0 0.0
        %6426 = vmatmul.mubr.f32.gmra.mrb[0].mxu0 %v6291
        %v6427 = vpop.f32.mrb[0].mxu0
        %v6428 = vadd.f32 0.0, %v6427
        %v6429 = vpop.f32.mrb[0].mxu0
        %6430 = vmatprep.mubr.f32.mxu0 0.0
        %6431 = vmatmul.mubr.f32.gmra.mrb[0].mxu0 %v6293
        %v6432 = vpop.f32.mrb[0].mxu0
        %v6433 = vadd.f32 0.0, %v6432
        %v6434 = vpop.f32.mrb[0].mxu0
        %6435 = vmatprep.mubr.f32.mxu0 0.0
        %6436 = vmatmul.mubr.f32.gmra.mrb[0].mxu0 %v6295
        %v6437 = vpop.f32.mrb[0].mxu0
        %v6438 = vadd.f32 0.0, %v6437
        %v6439 = vpop.f32.mrb[0].mxu0
        %6440 = vmatprep.mubr.f32.mxu0 0.0
        %6441 = vmatmul.mubr.f32.gmra.mrb[0].mxu0 %v6297
        %v6442 = vpop.f32.mrb[0].mxu0
        %v6443 = vadd.f32 0.0, %v6442
        %v6444 = vpop.f32.mrb[0].mxu0
        %6445 = vmatprep.mubr.f32.mxu0 0.0
        %6446 = vmatmul.mubr.f32.gmra.mrb[0].mxu0 %v6299
        %v6447 = vpop.f32.mrb[0].mxu0
        %v6448 = vadd.f32 0.0, %v6447
        %v6449 = vpop.f32.mrb[0].mxu0
        %6450 = vmatprep.mubr.f32.mxu0 0.0
        %6451 = vmatmul.mubr.f32.gmra.mrb[0].mxu0 %v6301
        %v6452 = vpop.f32.mrb[0].mxu0
        %v6453 = vadd.f32 0.0, %v6452
        %v6454 = vpop.f32.mrb[0].mxu0
        %6455 = vmatprep.mubr.f32.mxu0 0.0
        %6456 = vmatmul.mubr.f32.gmra.mrb[0].mxu0 %v6303
        %v6457 = vpop.f32.mrb[0].mxu0
        %v6458 = vadd.f32 0.0, %v6457
        %v6459 = vpop.f32.mrb[0].mxu0
        %6460 = vmatprep.mubr.f32.mxu0 0.0
        %6461 = vmatmul.mubr.f32.gmra.mrb[0].mxu0 %v6305
        %v6462 = vpop.f32.mrb[0].mxu0
        %v6463 = vadd.f32 0.0, %v6462
        %v6464 = vpop.f32.mrb[0].mxu0
        %6465 = vmatprep.mubr.f32.mxu0 0.0
        %6466 = vmatmul.mubr.f32.gmra.mrb[0].mxu0 %v6307
        %v6467 = vpop.f32.mrb[0].mxu0
        %v6468 = vadd.f32 0.0, %v6467
        %v6469 = vpop.f32.mrb[0].mxu0
        %6470 = vmatprep.mubr.f32.mxu0 0.0
        %6471 = vmatmul.mubr.f32.gmra.mrb[0].mxu0 %v6309
        %v6472 = vpop.f32.mrb[0].mxu0
        %v6473 = vadd.f32 0.0, %v6472
        %v6474 = vpop.f32.mrb[0].mxu0
        %6475 = vmatprep.mubr.f32.mxu0 0.0
        %6476 = vmatmul.mubr.f32.gmra.mrb[0].mxu0 %v6311
        %v6477 = vpop.f32.mrb[0].mxu0
        %v6478 = vadd.f32 0.0, %v6477
        %v6479 = vpop.f32.mrb[0].mxu0
        %6480 = vmatprep.mubr.f32.mxu0 0.0
        %6481 = vmatmul.mubr.f32.gmra.mrb[0].mxu0 %v6313
        %v6482 = vpop.f32.mrb[0].mxu0
        %v6483 = vadd.f32 0.0, %v6482
        %v6484 = vpop.f32.mrb[0].mxu0
        %6485 = vmatprep.mubr.f32.mxu0 0.0
        %6486 = vmatmul.mubr.f32.gmra.mrb[0].mxu0 %v6315
        %v6487 = vpop.f32.mrb[0].mxu0
        %v6488 = vadd.f32 0.0, %v6487
        %v6489 = vpop.f32.mrb[0].mxu0
        %6490 = vmatprep.mubr.f32.mxu0 0.0
        %6491 = vmatmul.mubr.f32.gmra.mrb[0].mxu0 %v6317
        %v6492 = vpop.f32.mrb[0].mxu0
        %v6493 = vadd.f32 0.0, %v6492
        %v6494 = vpop.f32.mrb[0].mxu0
        %6495 = vmatprep.mubr.f32.mxu0 0.0
        %6496 = vmatmul.mubr.f32.gmra.mrb[0].mxu0 %v6319
        %v6497 = vpop.f32.mrb[0].mxu0
        %v6498 = vadd.f32 0.0, %v6497
        %v6499 = vpop.f32.mrb[0].mxu0
        %6500 = vmatprep.mubr.f32.mxu0 0.0
        %6501 = vmatmul.mubr.f32.gmra.mrb[0].mxu0 %v6321
        %v6502 = vpop.f32.mrb[0].mxu0
        %v6503 = vadd.f32 0.0, %v6502
        %v6504 = vpop.f32.mrb[0].mxu0
        %6505 = vmatprep.mubr.f32.mxu0 0.0
        %6506 = vmatmul.mubr.f32.gmra.mrb[0].mxu0 %v6323
        %v6507 = vpop.f32.mrb[0].mxu0
        %v6508 = vadd.f32 0.0, %v6507
        %v6509 = vpop.f32.mrb[0].mxu0
        %6510 = vmatprep.mubr.f32.mxu0 0.0
        %6511 = vmatmul.mubr.f32.gmra.mrb[0].mxu0 %v6325
        %v6512 = vpop.f32.mrb[0].mxu0
        %v6513 = vadd.f32 0.0, %v6512
        %v6514 = vpop.f32.mrb[0].mxu0
        %6515 = vmatprep.mubr.f32.mxu0 0.0
        %6516 = vmatmul.mubr.f32.gmra.mrb[0].mxu0 %v6327
        %v6517 = vpop.f32.mrb[0].mxu0
        %v6518 = vadd.f32 0.0, %v6517
        %v6519 = vpop.f32.mrb[0].mxu0
        %6520 = vmatprep.mubr.f32.mxu0 0.0
        %6521 = vmatmul.mubr.f32.gmra.mrb[0].mxu0 %v6329
        %v6522 = vpop.f32.mrb[0].mxu0
        %v6523 = vadd.f32 0.0, %v6522
        %v6524 = vpop.f32.mrb[0].mxu0
        %6525 = vmatprep.mubr.f32.mxu0 0.0
        %6526 = vmatmul.mubr.f32.gmra.mrb[0].mxu0 %v6331
        %v6527 = vpop.f32.mrb[0].mxu0
        %v6528 = vadd.f32 0.0, %v6527
        %v6529 = vpop.f32.mrb[0].mxu0
        %6530 = vmatprep.mubr.f32.mxu0 0.0
        %6531 = vmatmul.mubr.f32.gmra.mrb[0].mxu0 %v6333
        %v6532 = vpop.f32.mrb[0].mxu0
        %v6533 = vadd.f32 0.0, %v6532
        %v6534 = vpop.f32.mrb[0].mxu0
        %6535 = vmatprep.mubr.f32.mxu0 0.0
        %6536 = vmatmul.mubr.f32.gmra.mrb[0].mxu0 %v6335
        %v6537 = vpop.f32.mrb[0].mxu0
        %v6538 = vadd.f32 0.0, %v6537
        %v6539 = vpop.f32.mrb[0].mxu0
        %6540 = vmatprep.mubr.f32.mxu0 0.0
        %6541 = vmatmul.mubr.f32.gmra.mrb[0].mxu0 %v6337
        %v6542 = vpop.f32.mrb[0].mxu0
        %v6543 = vadd.f32 0.0, %v6542
        %v6544 = vpop.f32.mrb[0].mxu0
        %6545 = vmatprep.mubr.f32.mxu0 0.0
        %6546 = vmatmul.mubr.f32.gmra.mrb[0].mxu0 %v6339
        %v6547 = vpop.f32.mrb[0].mxu0
        %v6548 = vadd.f32 0.0, %v6547
        %v6549 = vpop.f32.mrb[0].mxu0
        %6550 = vmatprep.mubr.f32.mxu0 0.0
        %6551 = vmatmul.mubr.f32.gmra.mrb[0].mxu0 %v6341
        %v6552 = vpop.f32.mrb[0].mxu0
        %v6553 = vadd.f32 0.0, %v6552
        %v6554 = vpop.f32.mrb[0].mxu0
        %6555 = vmatprep.mubr.f32.mxu0 0.0
        %6556 = vmatmul.mubr.f32.gmra.mrb[0].mxu0 %v6343
        %v6557 = vpop.f32.mrb[0].mxu0
        %v6558 = vadd.f32 0.0, %v6557
        %v6559 = vpop.f32.mrb[0].mxu0
        %6560 = vmatprep.mubr.f32.mxu0 0.0
        %6561 = vmatmul.mubr.f32.gmra.mrb[0].mxu0 %v6345
        %v6562 = vpop.f32.mrb[0].mxu0
        %v6563 = vadd.f32 0.0, %v6562
        %v6564 = vpop.f32.mrb[0].mxu0
        %6565 = vmatprep.mubr.f32.mxu0 0.0
        %6566 = vmatmul.mubr.f32.gmra.mrb[0].mxu0 %v6347
        %v6567 = vpop.f32.mrb[0].mxu0
        %v6568 = vadd.f32 0.0, %v6567
        %v6569 = vpop.f32.mrb[0].mxu0
        %6570 = vmatprep.mubr.f32.mxu0 0.0
        %6571 = vmatmul.mubr.f32.gmra.mrb[0].mxu0 %v6349
        %v6572 = vpop.f32.mrb[0].mxu0
        %v6573 = vadd.f32 0.0, %v6572
        %v6574 = vpop.f32.mrb[0].mxu0
        %6575 = vdwg.mxu0
        %6576 = vmatprep.subr.mxu0 0.0
        %6577 = vmatpush1.msra.mxu0 %v6418
        %6578 = vmatprep.subr.mxu0 0.0
        %6579 = vmatpush1.msra.mxu0 %v6423
        %6580 = vmatprep.subr.mxu0 0.0
        %6581 = vmatpush1.msra.mxu0 %v6428
        %6582 = vmatprep.subr.mxu0 0.0
        %6583 = vmatpush1.msra.mxu0 %v6433
        %6584 = vmatprep.subr.mxu0 0.0
        %6585 = vmatpush1.msra.mxu0 %v6438
        %6586 = vmatprep.subr.mxu0 0.0
        %6587 = vmatpush1.msra.mxu0 %v6443
        %6588 = vmatprep.subr.mxu0 0.0
        %6589 = vmatpush1.msra.mxu0 %v6448
        %6590 = vmatprep.subr.mxu0 0.0
        %6591 = vmatpush1.msra.mxu0 %v6453
        %6592 = vmatprep.subr.mxu0 0.0
        %6593 = vmatpush1.msra.mxu0 %v6458
        %6594 = vmatprep.subr.mxu0 0.0
        %6595 = vmatpush1.msra.mxu0 %v6463
        %6596 = vmatprep.subr.mxu0 0.0
        %6597 = vmatpush1.msra.mxu0 %v6468
        %6598 = vmatprep.subr.mxu0 0.0
        %6599 = vmatpush1.msra.mxu0 %v6473
        %6600 = vmatprep.subr.mxu0 0.0
        %6601 = vmatpush1.msra.mxu0 %v6478
        %6602 = vmatprep.subr.mxu0 0.0
        %6603 = vmatpush1.msra.mxu0 %v6483
        %6604 = vmatprep.subr.mxu0 0.0
        %6605 = vmatpush1.msra.mxu0 %v6488
        %6606 = vmatprep.subr.mxu0 0.0
        %6607 = vmatpush1.msra.mxu0 %v6493
        %6608 = vmatprep.subr.mxu0 0.0
        %6609 = vmatpush1.msra.mxu0 %v6498
        %6610 = vmatprep.subr.mxu0 0.0
        %6611 = vmatpush1.msra.mxu0 %v6503
        %6612 = vmatprep.subr.mxu0 0.0
        %6613 = vmatpush1.msra.mxu0 %v6508
        %6614 = vmatprep.subr.mxu0 0.0
        %6615 = vmatpush1.msra.mxu0 %v6513
        %6616 = vmatprep.subr.mxu0 0.0
        %6617 = vmatpush1.msra.mxu0 %v6518
        %6618 = vmatprep.subr.mxu0 0.0
        %6619 = vmatpush1.msra.mxu0 %v6523
        %6620 = vmatprep.subr.mxu0 0.0
        %6621 = vmatpush1.msra.mxu0 %v6528
        %6622 = vmatprep.subr.mxu0 0.0
        %6623 = vmatpush1.msra.mxu0 %v6533
        %6624 = vmatprep.subr.mxu0 0.0
        %6625 = vmatpush1.msra.mxu0 %v6538
        %6626 = vmatprep.subr.mxu0 0.0
        %6627 = vmatpush1.msra.mxu0 %v6543
        %6628 = vmatprep.subr.mxu0 0.0
        %6629 = vmatpush1.msra.mxu0 %v6548
        %6630 = vmatprep.subr.mxu0 0.0
        %6631 = vmatpush1.msra.mxu0 %v6553
        %6632 = vmatprep.subr.mxu0 0.0
        %6633 = vmatpush1.msra.mxu0 %v6558
        %6634 = vmatprep.subr.mxu0 0.0
        %6635 = vmatpush1.msra.mxu0 %v6563
        %6636 = vmatprep.subr.mxu0 0.0
        %6637 = vmatpush1.msra.mxu0 %v6568
        %6638 = vmatprep.subr.mxu0 0.0
        %6639 = vmatpush1.msra.mxu0 %v6573
        %6640 = vmatprep.mubr.f32.mxu0 %v6183
        %6641 = vmatmul.mubr.f32.gmra.mrb[0].mxu0 %v6175
        %v6642 = vpop.f32.mrb[0].mxu0
        %v6643 = vadd.f32 0.0, %v6642
        %v6644 = vpop.f32.mrb[0].mxu0
        %6645 = vmatprep.mubr.f32.mxu0 %v6184
        %6646 = vmatmul.mubr.f32.gmra.mrb[0].mxu0 %v6176
        %v6647 = vpop.f32.mrb[0].mxu0
        %v6648 = vadd.f32 0.0, %v6647
        %v6649 = vpop.f32.mrb[0].mxu0
        %6650 = vmatprep.mubr.f32.mxu0 %v6185
        %6651 = vmatmul.mubr.f32.gmra.mrb[0].mxu0 %v6177
        %v6652 = vpop.f32.mrb[0].mxu0
        %v6653 = vadd.f32 0.0, %v6652
        %v6654 = vpop.f32.mrb[0].mxu0
        %6655 = vmatprep.mubr.f32.mxu0 %v6186
        %6656 = vmatmul.mubr.f32.gmra.mrb[0].mxu0 %v6178
        %v6657 = vpop.f32.mrb[0].mxu0
        %v6658 = vadd.f32 0.0, %v6657
        %v6659 = vpop.f32.mrb[0].mxu0
        %6660 = vmatprep.mubr.f32.mxu0 %v6187
        %6661 = vmatmul.mubr.f32.gmra.mrb[0].mxu0 %v6179
        %v6662 = vpop.f32.mrb[0].mxu0
        %v6663 = vadd.f32 0.0, %v6662
        %v6664 = vpop.f32.mrb[0].mxu0
        %6665 = vmatprep.mubr.f32.mxu0 %v6188
        %6666 = vmatmul.mubr.f32.gmra.mrb[0].mxu0 %v6180
        %v6667 = vpop.f32.mrb[0].mxu0
        %v6668 = vadd.f32 0.0, %v6667
        %v6669 = vpop.f32.mrb[0].mxu0
        %6670 = vmatprep.mubr.f32.mxu0 %v6189
        %6671 = vmatmul.mubr.f32.gmra.mrb[0].mxu0 %v6181
        %v6672 = vpop.f32.mrb[0].mxu0
        %v6673 = vadd.f32 0.0, %v6672
        %v6674 = vpop.f32.mrb[0].mxu0
        %6675 = vmatprep.mubr.f32.mxu0 %v6190
        %6676 = vmatmul.mubr.f32.gmra.mrb[0].mxu0 %v6182
        %v6677 = vpop.f32.mrb[0].mxu0
        %v6678 = vadd.f32 0.0, %v6677
        %v6679 = vpop.f32.mrb[0].mxu0
        %6680 = vdwg.mxu0
        %v6681 = vadd.f32 %v5075, %v6643
        %v6682 = vadd.f32 %v5076, %v6648
        %v6683 = vadd.f32 %v5077, %v6653
        %v6684 = vadd.f32 %v5078, %v6658
        %v6685 = vadd.f32 %v5079, %v6663
        %v6686 = vadd.f32 %v5080, %v6668
        %v6687 = vadd.f32 %v5081, %v6673
        %v6688 = vadd.f32 %v5082, %v6678
        %s6689 = scalar_lea.vmem %s14, 2
        %v6690 = vld [vmem:[%s6689] sm:$0x1]
        %v6692 = vlaneseq
        %v6693 = vshrl.u32 %v6692, 7
        %v6694 = vsub.s32 0, %v6693
        %v6695 = vrot.slane %v6690, %v6694
        %v6697 = vadd.f32 %v6681, %v6695
        %v6698 = vadd.f32 %v6682, %v6695
        %v6699 = vadd.f32 %v6683, %v6695
        %v6700 = vadd.f32 %v6684, %v6695
        %v6701 = vadd.f32 %v6685, %v6695
        %v6702 = vadd.f32 %v6686, %v6695
        %v6703 = vadd.f32 %v6687, %v6695
        %v6704 = vadd.f32 %v6688, %v6695
        %s6705 = scalar_lea.vmem %s15, 2
        %v6706 = vld [vmem:[%s6705] sm:$0x1]
        %s6707 = scalar_lea.vmem %s16, 2
        %v6708 = vld [vmem:[%s6707] sm:$0x1]
        %v6709 = vsel %vm830, %v6697, 0.0
        %6710 = vadd.xlane.f32.xlu0 %v6709
        %v6711 = vpop.xlane.xlu0 %6710
        %v6712 = vsel %vm830, %v6698, 0.0
        %6713 = vadd.xlane.f32.xlu0 %v6712
        %v6714 = vpop.xlane.xlu0 %6713
        %v6715 = vsel %vm830, %v6699, 0.0
        %6716 = vadd.xlane.f32.xlu0 %v6715
        %v6717 = vpop.xlane.xlu0 %6716
        %v6718 = vsel %vm830, %v6700, 0.0
        %6719 = vadd.xlane.f32.xlu0 %v6718
        %v6720 = vpop.xlane.xlu0 %6719
        %v6721 = vsel %vm830, %v6701, 0.0
        %6722 = vadd.xlane.f32.xlu0 %v6721
        %v6723 = vpop.xlane.xlu0 %6722
        %v6724 = vsel %vm830, %v6702, 0.0
        %6725 = vadd.xlane.f32.xlu0 %v6724
        %v6726 = vpop.xlane.xlu0 %6725
        %v6727 = vsel %vm830, %v6703, 0.0
        %6728 = vadd.xlane.f32.xlu0 %v6727
        %v6729 = vpop.xlane.xlu0 %6728
        %v6730 = vsel %vm830, %v6704, 0.0
        %6731 = vadd.xlane.f32.xlu0 %v6730
        %v6732 = vpop.xlane.xlu0 %6731
        %v6733 = vmul.f32 %v6711, %v855
        %v6734 = vmul.f32 %v6714, %v855
        %v6735 = vmul.f32 %v6717, %v855
        %v6736 = vmul.f32 %v6720, %v855
        %v6737 = vmul.f32 %v6723, %v855
        %v6738 = vmul.f32 %v6726, %v855
        %v6739 = vmul.f32 %v6729, %v855
        %v6740 = vmul.f32 %v6732, %v855
        %v6741 = vsub.f32 %v6697, %v6733
        %v6742 = vsub.f32 %v6698, %v6734
        %v6743 = vsub.f32 %v6699, %v6735
        %v6744 = vsub.f32 %v6700, %v6736
        %v6745 = vsub.f32 %v6701, %v6737
        %v6746 = vsub.f32 %v6702, %v6738
        %v6747 = vsub.f32 %v6703, %v6739
        %v6748 = vsub.f32 %v6704, %v6740
        %v6749 = vmul.f32 %v6741, %v6741
        %v6750 = vmul.f32 %v6742, %v6742
        %v6751 = vmul.f32 %v6743, %v6743
        %v6752 = vmul.f32 %v6744, %v6744
        %v6753 = vmul.f32 %v6745, %v6745
        %v6754 = vmul.f32 %v6746, %v6746
        %v6755 = vmul.f32 %v6747, %v6747
        %v6756 = vmul.f32 %v6748, %v6748
        %v6757 = vsel %vm830, %v6749, 0.0
        %6758 = vadd.xlane.f32.xlu0 %v6757
        %v6759 = vpop.xlane.xlu0 %6758
        %v6760 = vsel %vm830, %v6750, 0.0
        %6761 = vadd.xlane.f32.xlu0 %v6760
        %v6762 = vpop.xlane.xlu0 %6761
        %v6763 = vsel %vm830, %v6751, 0.0
        %6764 = vadd.xlane.f32.xlu0 %v6763
        %v6765 = vpop.xlane.xlu0 %6764
        %v6766 = vsel %vm830, %v6752, 0.0
        %6767 = vadd.xlane.f32.xlu0 %v6766
        %v6768 = vpop.xlane.xlu0 %6767
        %v6769 = vsel %vm830, %v6753, 0.0
        %6770 = vadd.xlane.f32.xlu0 %v6769
        %v6771 = vpop.xlane.xlu0 %6770
        %v6772 = vsel %vm830, %v6754, 0.0
        %6773 = vadd.xlane.f32.xlu0 %v6772
        %v6774 = vpop.xlane.xlu0 %6773
        %v6775 = vsel %vm830, %v6755, 0.0
        %6776 = vadd.xlane.f32.xlu0 %v6775
        %v6777 = vpop.xlane.xlu0 %6776
        %v6778 = vsel %vm830, %v6756, 0.0
        %6779 = vadd.xlane.f32.xlu0 %v6778
        %v6780 = vpop.xlane.xlu0 %6779
        %v6781 = vmul.f32 %v6759, %v855
        %v6782 = vmul.f32 %v6762, %v855
        %v6783 = vmul.f32 %v6765, %v855
        %v6784 = vmul.f32 %v6768, %v855
        %v6785 = vmul.f32 %v6771, %v855
        %v6786 = vmul.f32 %v6774, %v855
        %v6787 = vmul.f32 %v6777, %v855
        %v6788 = vmul.f32 %v6780, %v855
        %v6789 = vadd.f32 %v6781, 1e-05
        %v6790 = vadd.f32 %v6782, 1e-05
        %v6791 = vadd.f32 %v6783, 1e-05
        %v6792 = vadd.f32 %v6784, 1e-05
        %v6793 = vadd.f32 %v6785, 1e-05
        %v6794 = vadd.f32 %v6786, 1e-05
        %v6795 = vadd.f32 %v6787, 1e-05
        %v6796 = vadd.f32 %v6788, 1e-05
        %v6797 = vrsqrt.pop %v6789
        %v6798 = vrsqrt.pop %v6790
        %v6799 = vrsqrt.pop %v6791
        %v6800 = vrsqrt.pop %v6792
        %v6801 = vrsqrt.pop %v6793
        %v6802 = vrsqrt.pop %v6794
        %v6803 = vrsqrt.pop %v6795
        %v6804 = vrsqrt.pop %v6796
        %v6805 = vmul.f32 %v6741, %v6797
        %v6806 = vmul.f32 %v6742, %v6798
        %v6807 = vmul.f32 %v6743, %v6799
        %v6808 = vmul.f32 %v6744, %v6800
        %v6809 = vmul.f32 %v6745, %v6801
        %v6810 = vmul.f32 %v6746, %v6802
        %v6811 = vmul.f32 %v6747, %v6803
        %v6812 = vmul.f32 %v6748, %v6804
        %v6814 = vlaneseq
        %v6815 = vshrl.u32 %v6814, 7
        %v6816 = vsub.s32 0, %v6815
        %v6817 = vrot.slane %v6706, %v6816
        %v6819 = vmul.f32 %v6805, %v6817
        %v6820 = vmul.f32 %v6806, %v6817
        %v6821 = vmul.f32 %v6807, %v6817
        %v6822 = vmul.f32 %v6808, %v6817
        %v6823 = vmul.f32 %v6809, %v6817
        %v6824 = vmul.f32 %v6810, %v6817
        %v6825 = vmul.f32 %v6811, %v6817
        %v6826 = vmul.f32 %v6812, %v6817
        %v6828 = vlaneseq
        %v6829 = vshrl.u32 %v6828, 7
        %v6830 = vsub.s32 0, %v6829
        %v6831 = vrot.slane %v6708, %v6830
        %v6833 = vadd.f32 %v6819, %v6831
        %v6834 = vadd.f32 %v6820, %v6831
        %v6835 = vadd.f32 %v6821, %v6831
        %v6836 = vadd.f32 %v6822, %v6831
        %v6837 = vadd.f32 %v6823, %v6831
        %v6838 = vadd.f32 %v6824, %v6831
        %v6839 = vadd.f32 %v6825, %v6831
        %v6840 = vadd.f32 %v6826, %v6831
        %s6841 = scalar_lea.vmem %s17, 64
        %v6842 = vld [vmem:[%s6841] sm:$0xff]
        %v6843 = vld [vmem:[%s6841 + $0x8] sm:$0xff]
        %v6844 = vld [vmem:[%s6841 + $0x10] sm:$0xff]
        %v6845 = vld [vmem:[%s6841 + $0x18] sm:$0xff]
        %s6846 = scalar_lea.vmem %s18, 2
        %v6847 = vld [vmem:[%s6846] sm:$0x1]
        %v6849 = vlaneseq
        %v6850 = vshrl.u32 %v6849, 7
        %v6851 = vsub.s32 0, %v6850
        %v6852 = vrot.slane %v6847, %v6851
        %v6855 = vsel %vm830, %v6833, 0
        %v6858 = vsel %vm830, %v6834, 0
        %v6861 = vsel %vm830, %v6835, 0
        %v6864 = vsel %vm830, %v6836, 0
        %v6867 = vsel %vm830, %v6837, 0
        %v6870 = vsel %vm830, %v6838, 0
        %v6873 = vsel %vm830, %v6839, 0
        %v6876 = vsel %vm830, %v6840, 0
        %6878 = vmatprep.subr.mxu0 0.0
        %6879 = vmatpush1.msra.mxu0 %v6842
        %6880 = vmatprep.subr.mxu0 0.0
        %6881 = vmatpush1.msra.mxu0 %v6843
        %6882 = vmatprep.subr.mxu0 0.0
        %6883 = vmatpush1.msra.mxu0 %v6844
        %6884 = vmatprep.subr.mxu0 0.0
        %6885 = vmatpush1.msra.mxu0 %v6845
        %6886 = vmatprep.subr.mxu0 0.0
        %6887 = vmatpush1.msra.mxu0 0.0
        %6888 = vmatprep.subr.mxu0 0.0
        %6889 = vmatpush1.msra.mxu0 0.0
        %6890 = vmatprep.subr.mxu0 0.0
        %6891 = vmatpush1.msra.mxu0 0.0
        %6892 = vmatprep.subr.mxu0 0.0
        %6893 = vmatpush1.msra.mxu0 0.0
        %6894 = vmatprep.subr.mxu0 0.0
        %6895 = vmatpush1.msra.mxu0 0.0
        %6896 = vmatprep.subr.mxu0 0.0
        %6897 = vmatpush1.msra.mxu0 0.0
        %6898 = vmatprep.subr.mxu0 0.0
        %6899 = vmatpush1.msra.mxu0 0.0
        %6900 = vmatprep.subr.mxu0 0.0
        %6901 = vmatpush1.msra.mxu0 0.0
        %6902 = vmatprep.subr.mxu0 0.0
        %6903 = vmatpush1.msra.mxu0 0.0
        %6904 = vmatprep.subr.mxu0 0.0
        %6905 = vmatpush1.msra.mxu0 0.0
        %6906 = vmatprep.subr.mxu0 0.0
        %6907 = vmatpush1.msra.mxu0 0.0
        %6908 = vmatprep.subr.mxu0 0.0
        %6909 = vmatpush1.msra.mxu0 0.0
        %6910 = vmatprep.subr.mxu0 0.0
        %6911 = vmatpush1.msra.mxu0 0.0
        %6912 = vmatprep.subr.mxu0 0.0
        %6913 = vmatpush1.msra.mxu0 0.0
        %6914 = vmatprep.subr.mxu0 0.0
        %6915 = vmatpush1.msra.mxu0 0.0
        %6916 = vmatprep.subr.mxu0 0.0
        %6917 = vmatpush1.msra.mxu0 0.0
        %6918 = vmatprep.subr.mxu0 0.0
        %6919 = vmatpush1.msra.mxu0 0.0
        %6920 = vmatprep.subr.mxu0 0.0
        %6921 = vmatpush1.msra.mxu0 0.0
        %6922 = vmatprep.subr.mxu0 0.0
        %6923 = vmatpush1.msra.mxu0 0.0
        %6924 = vmatprep.subr.mxu0 0.0
        %6925 = vmatpush1.msra.mxu0 0.0
        %6926 = vmatprep.subr.mxu0 0.0
        %6927 = vmatpush1.msra.mxu0 0.0
        %6928 = vmatprep.subr.mxu0 0.0
        %6929 = vmatpush1.msra.mxu0 0.0
        %6930 = vmatprep.subr.mxu0 0.0
        %6931 = vmatpush1.msra.mxu0 0.0
        %6932 = vmatprep.subr.mxu0 0.0
        %6933 = vmatpush1.msra.mxu0 0.0
        %6934 = vmatprep.subr.mxu0 0.0
        %6935 = vmatpush1.msra.mxu0 0.0
        %6936 = vmatprep.subr.mxu0 0.0
        %6937 = vmatpush1.msra.mxu0 0.0
        %6938 = vmatprep.subr.mxu0 0.0
        %6939 = vmatpush1.msra.mxu0 0.0
        %6940 = vmatprep.subr.mxu0 0.0
        %6941 = vmatpush1.msra.mxu0 0.0
        %6942 = vmatprep.mubr.f32.mxu0 0.0
        %6943 = vmatmul.mubr.f32.gmra.mrb[0].mxu0 %v6855
        %v6944 = vpop.f32.mrb[0].mxu0
        %v6945 = vadd.f32 %v6852, %v6944
        %v6946 = vpop.f32.mrb[0].mxu0
        %6947 = vmatprep.mubr.f32.mxu0 0.0
        %6948 = vmatmul.mubr.f32.gmra.mrb[0].mxu0 %v6858
        %v6949 = vpop.f32.mrb[0].mxu0
        %v6950 = vadd.f32 %v6852, %v6949
        %v6951 = vpop.f32.mrb[0].mxu0
        %6952 = vmatprep.mubr.f32.mxu0 0.0
        %6953 = vmatmul.mubr.f32.gmra.mrb[0].mxu0 %v6861
        %v6954 = vpop.f32.mrb[0].mxu0
        %v6955 = vadd.f32 %v6852, %v6954
        %v6956 = vpop.f32.mrb[0].mxu0
        %6957 = vmatprep.mubr.f32.mxu0 0.0
        %6958 = vmatmul.mubr.f32.gmra.mrb[0].mxu0 %v6864
        %v6959 = vpop.f32.mrb[0].mxu0
        %v6960 = vadd.f32 %v6852, %v6959
        %v6961 = vpop.f32.mrb[0].mxu0
        %6962 = vmatprep.mubr.f32.mxu0 0.0
        %6963 = vmatmul.mubr.f32.gmra.mrb[0].mxu0 %v6867
        %v6964 = vpop.f32.mrb[0].mxu0
        %v6965 = vadd.f32 %v6852, %v6964
        %v6966 = vpop.f32.mrb[0].mxu0
        %6967 = vmatprep.mubr.f32.mxu0 0.0
        %6968 = vmatmul.mubr.f32.gmra.mrb[0].mxu0 %v6870
        %v6969 = vpop.f32.mrb[0].mxu0
        %v6970 = vadd.f32 %v6852, %v6969
        %v6971 = vpop.f32.mrb[0].mxu0
        %6972 = vmatprep.mubr.f32.mxu0 0.0
        %6973 = vmatmul.mubr.f32.gmra.mrb[0].mxu0 %v6873
        %v6974 = vpop.f32.mrb[0].mxu0
        %v6975 = vadd.f32 %v6852, %v6974
        %v6976 = vpop.f32.mrb[0].mxu0
        %6977 = vmatprep.mubr.f32.mxu0 0.0
        %6978 = vmatmul.mubr.f32.gmra.mrb[0].mxu0 %v6876
        %v6979 = vpop.f32.mrb[0].mxu0
        %v6980 = vadd.f32 %v6852, %v6979
        %v6981 = vpop.f32.mrb[0].mxu0
        %6982 = vdwg.mxu0
        %v6983 = vmax.f32 %v6945, 0.0
        %v6984 = vmax.f32 %v6950, 0.0
        %v6985 = vmax.f32 %v6955, 0.0
        %v6986 = vmax.f32 %v6960, 0.0
        %v6987 = vmax.f32 %v6965, 0.0
        %v6988 = vmax.f32 %v6970, 0.0
        %v6989 = vmax.f32 %v6975, 0.0
        %v6990 = vmax.f32 %v6980, 0.0
        %s6991 = scalar_lea.vmem %s19, 128
        %v6992 = vld [vmem:[%s6991] sm:$0xff]
        %v6993 = vld [vmem:[%s6991 + $0x8] sm:$0xff]
        %v6994 = vld [vmem:[%s6991 + $0x10] sm:$0xff]
        %v6995 = vld [vmem:[%s6991 + $0x18] sm:$0xff]
        %v6996 = vld [vmem:[%s6991 + $0x20] sm:$0xff]
        %v6997 = vld [vmem:[%s6991 + $0x28] sm:$0xff]
        %v6998 = vld [vmem:[%s6991 + $0x30] sm:$0xff]
        %v6999 = vld [vmem:[%s6991 + $0x38] sm:$0xff]
        %v7001 = vsel %vm1528, %v6983, 0
        %v7004 = vsel %vm1528, %v6984, 0
        %v7007 = vsel %vm1528, %v6985, 0
        %v7010 = vsel %vm1528, %v6986, 0
        %v7013 = vsel %vm1528, %v6987, 0
        %v7016 = vsel %vm1528, %v6988, 0
        %v7019 = vsel %vm1528, %v6989, 0
        %v7022 = vsel %vm1528, %v6990, 0
        %7024 = vmatprep.subr.mxu0 0.0
        %7025 = vmatpush1.msra.mxu0 %v6992
        %7026 = vmatprep.subr.mxu0 0.0
        %7027 = vmatpush1.msra.mxu0 %v6993
        %7028 = vmatprep.subr.mxu0 0.0
        %7029 = vmatpush1.msra.mxu0 %v6994
        %7030 = vmatprep.subr.mxu0 0.0
        %7031 = vmatpush1.msra.mxu0 %v6995
        %7032 = vmatprep.subr.mxu0 0.0
        %7033 = vmatpush1.msra.mxu0 %v6996
        %7034 = vmatprep.subr.mxu0 0.0
        %7035 = vmatpush1.msra.mxu0 %v6997
        %7036 = vmatprep.subr.mxu0 0.0
        %7037 = vmatpush1.msra.mxu0 %v6998
        %7038 = vmatprep.subr.mxu0 0.0
        %7039 = vmatpush1.msra.mxu0 %v6999
        %7040 = vmatprep.subr.mxu0 0.0
        %7041 = vmatpush1.msra.mxu0 0.0
        %7042 = vmatprep.subr.mxu0 0.0
        %7043 = vmatpush1.msra.mxu0 0.0
        %7044 = vmatprep.subr.mxu0 0.0
        %7045 = vmatpush1.msra.mxu0 0.0
        %7046 = vmatprep.subr.mxu0 0.0
        %7047 = vmatpush1.msra.mxu0 0.0
        %7048 = vmatprep.subr.mxu0 0.0
        %7049 = vmatpush1.msra.mxu0 0.0
        %7050 = vmatprep.subr.mxu0 0.0
        %7051 = vmatpush1.msra.mxu0 0.0
        %7052 = vmatprep.subr.mxu0 0.0
        %7053 = vmatpush1.msra.mxu0 0.0
        %7054 = vmatprep.subr.mxu0 0.0
        %7055 = vmatpush1.msra.mxu0 0.0
        %7056 = vmatprep.subr.mxu0 0.0
        %7057 = vmatpush1.msra.mxu0 0.0
        %7058 = vmatprep.subr.mxu0 0.0
        %7059 = vmatpush1.msra.mxu0 0.0
        %7060 = vmatprep.subr.mxu0 0.0
        %7061 = vmatpush1.msra.mxu0 0.0
        %7062 = vmatprep.subr.mxu0 0.0
        %7063 = vmatpush1.msra.mxu0 0.0
        %7064 = vmatprep.subr.mxu0 0.0
        %7065 = vmatpush1.msra.mxu0 0.0
        %7066 = vmatprep.subr.mxu0 0.0
        %7067 = vmatpush1.msra.mxu0 0.0
        %7068 = vmatprep.subr.mxu0 0.0
        %7069 = vmatpush1.msra.mxu0 0.0
        %7070 = vmatprep.subr.mxu0 0.0
        %7071 = vmatpush1.msra.mxu0 0.0
        %7072 = vmatprep.subr.mxu0 0.0
        %7073 = vmatpush1.msra.mxu0 0.0
        %7074 = vmatprep.subr.mxu0 0.0
        %7075 = vmatpush1.msra.mxu0 0.0
        %7076 = vmatprep.subr.mxu0 0.0
        %7077 = vmatpush1.msra.mxu0 0.0
        %7078 = vmatprep.subr.mxu0 0.0
        %7079 = vmatpush1.msra.mxu0 0.0
        %7080 = vmatprep.subr.mxu0 0.0
        %7081 = vmatpush1.msra.mxu0 0.0
        %7082 = vmatprep.subr.mxu0 0.0
        %7083 = vmatpush1.msra.mxu0 0.0
        %7084 = vmatprep.subr.mxu0 0.0
        %7085 = vmatpush1.msra.mxu0 0.0
        %7086 = vmatprep.subr.mxu0 0.0
        %7087 = vmatpush1.msra.mxu0 0.0
        %7088 = vmatprep.mubr.f32.mxu0 0.0
        %7089 = vmatmul.mubr.f32.gmra.mrb[0].mxu0 %v7001
        %v7090 = vpop.f32.mrb[0].mxu0
        %v7091 = vadd.f32 0.0, %v7090
        %v7092 = vpop.f32.mrb[0].mxu0
        %7093 = vmatprep.mubr.f32.mxu0 0.0
        %7094 = vmatmul.mubr.f32.gmra.mrb[0].mxu0 %v7004
        %v7095 = vpop.f32.mrb[0].mxu0
        %v7096 = vadd.f32 0.0, %v7095
        %v7097 = vpop.f32.mrb[0].mxu0
        %7098 = vmatprep.mubr.f32.mxu0 0.0
        %7099 = vmatmul.mubr.f32.gmra.mrb[0].mxu0 %v7007
        %v7100 = vpop.f32.mrb[0].mxu0
        %v7101 = vadd.f32 0.0, %v7100
        %v7102 = vpop.f32.mrb[0].mxu0
        %7103 = vmatprep.mubr.f32.mxu0 0.0
        %7104 = vmatmul.mubr.f32.gmra.mrb[0].mxu0 %v7010
        %v7105 = vpop.f32.mrb[0].mxu0
        %v7106 = vadd.f32 0.0, %v7105
        %v7107 = vpop.f32.mrb[0].mxu0
        %7108 = vmatprep.mubr.f32.mxu0 0.0
        %7109 = vmatmul.mubr.f32.gmra.mrb[0].mxu0 %v7013
        %v7110 = vpop.f32.mrb[0].mxu0
        %v7111 = vadd.f32 0.0, %v7110
        %v7112 = vpop.f32.mrb[0].mxu0
        %7113 = vmatprep.mubr.f32.mxu0 0.0
        %7114 = vmatmul.mubr.f32.gmra.mrb[0].mxu0 %v7016
        %v7115 = vpop.f32.mrb[0].mxu0
        %v7116 = vadd.f32 0.0, %v7115
        %v7117 = vpop.f32.mrb[0].mxu0
        %7118 = vmatprep.mubr.f32.mxu0 0.0
        %7119 = vmatmul.mubr.f32.gmra.mrb[0].mxu0 %v7019
        %v7120 = vpop.f32.mrb[0].mxu0
        %v7121 = vadd.f32 0.0, %v7120
        %v7122 = vpop.f32.mrb[0].mxu0
        %7123 = vmatprep.mubr.f32.mxu0 0.0
        %7124 = vmatmul.mubr.f32.gmra.mrb[0].mxu0 %v7022
        %v7125 = vpop.f32.mrb[0].mxu0
        %v7126 = vadd.f32 0.0, %v7125
        %v7127 = vpop.f32.mrb[0].mxu0
        %7128 = vdwg.mxu0
        %v7129 = vadd.f32 %v6697, %v7091
        %v7130 = vadd.f32 %v6698, %v7096
        %v7131 = vadd.f32 %v6699, %v7101
        %v7132 = vadd.f32 %v6700, %v7106
        %v7133 = vadd.f32 %v6701, %v7111
        %v7134 = vadd.f32 %v6702, %v7116
        %v7135 = vadd.f32 %v6703, %v7121
        %v7136 = vadd.f32 %v6704, %v7126
        %s7137 = scalar_lea.vmem %s20, 2
        %v7138 = vld [vmem:[%s7137] sm:$0x1]
        %v7140 = vlaneseq
        %v7141 = vshrl.u32 %v7140, 7
        %v7142 = vsub.s32 0, %v7141
        %v7143 = vrot.slane %v7138, %v7142
        %v7145 = vadd.f32 %v7129, %v7143
        %v7146 = vadd.f32 %v7130, %v7143
        %v7147 = vadd.f32 %v7131, %v7143
        %v7148 = vadd.f32 %v7132, %v7143
        %v7149 = vadd.f32 %v7133, %v7143
        %v7150 = vadd.f32 %v7134, %v7143
        %v7151 = vadd.f32 %v7135, %v7143
        %v7152 = vadd.f32 %v7136, %v7143
        %s7153 = scalar_lea.vmem %s9, 3
        %v7154 = vld [vmem:[%s7153] sm:$0x1]
        %s7155 = scalar_lea.vmem %s10, 3
        %v7156 = vld [vmem:[%s7155] sm:$0x1]
        %v7157 = vsel %vm830, %v7145, 0.0
        %7158 = vadd.xlane.f32.xlu0 %v7157
        %v7159 = vpop.xlane.xlu0 %7158
        %v7160 = vsel %vm830, %v7146, 0.0
        %7161 = vadd.xlane.f32.xlu0 %v7160
        %v7162 = vpop.xlane.xlu0 %7161
        %v7163 = vsel %vm830, %v7147, 0.0
        %7164 = vadd.xlane.f32.xlu0 %v7163
        %v7165 = vpop.xlane.xlu0 %7164
        %v7166 = vsel %vm830, %v7148, 0.0
        %7167 = vadd.xlane.f32.xlu0 %v7166
        %v7168 = vpop.xlane.xlu0 %7167
        %v7169 = vsel %vm830, %v7149, 0.0
        %7170 = vadd.xlane.f32.xlu0 %v7169
        %v7171 = vpop.xlane.xlu0 %7170
        %v7172 = vsel %vm830, %v7150, 0.0
        %7173 = vadd.xlane.f32.xlu0 %v7172
        %v7174 = vpop.xlane.xlu0 %7173
        %v7175 = vsel %vm830, %v7151, 0.0
        %7176 = vadd.xlane.f32.xlu0 %v7175
        %v7177 = vpop.xlane.xlu0 %7176
        %v7178 = vsel %vm830, %v7152, 0.0
        %7179 = vadd.xlane.f32.xlu0 %v7178
        %v7180 = vpop.xlane.xlu0 %7179
        %v7181 = vmul.f32 %v7159, %v855
        %v7182 = vmul.f32 %v7162, %v855
        %v7183 = vmul.f32 %v7165, %v855
        %v7184 = vmul.f32 %v7168, %v855
        %v7185 = vmul.f32 %v7171, %v855
        %v7186 = vmul.f32 %v7174, %v855
        %v7187 = vmul.f32 %v7177, %v855
        %v7188 = vmul.f32 %v7180, %v855
        %v7189 = vsub.f32 %v7145, %v7181
        %v7190 = vsub.f32 %v7146, %v7182
        %v7191 = vsub.f32 %v7147, %v7183
        %v7192 = vsub.f32 %v7148, %v7184
        %v7193 = vsub.f32 %v7149, %v7185
        %v7194 = vsub.f32 %v7150, %v7186
        %v7195 = vsub.f32 %v7151, %v7187
        %v7196 = vsub.f32 %v7152, %v7188
        %v7197 = vmul.f32 %v7189, %v7189
        %v7198 = vmul.f32 %v7190, %v7190
        %v7199 = vmul.f32 %v7191, %v7191
        %v7200 = vmul.f32 %v7192, %v7192
        %v7201 = vmul.f32 %v7193, %v7193
        %v7202 = vmul.f32 %v7194, %v7194
        %v7203 = vmul.f32 %v7195, %v7195
        %v7204 = vmul.f32 %v7196, %v7196
        %v7205 = vsel %vm830, %v7197, 0.0
        %7206 = vadd.xlane.f32.xlu0 %v7205
        %v7207 = vpop.xlane.xlu0 %7206
        %v7208 = vsel %vm830, %v7198, 0.0
        %7209 = vadd.xlane.f32.xlu0 %v7208
        %v7210 = vpop.xlane.xlu0 %7209
        %v7211 = vsel %vm830, %v7199, 0.0
        %7212 = vadd.xlane.f32.xlu0 %v7211
        %v7213 = vpop.xlane.xlu0 %7212
        %v7214 = vsel %vm830, %v7200, 0.0
        %7215 = vadd.xlane.f32.xlu0 %v7214
        %v7216 = vpop.xlane.xlu0 %7215
        %v7217 = vsel %vm830, %v7201, 0.0
        %7218 = vadd.xlane.f32.xlu0 %v7217
        %v7219 = vpop.xlane.xlu0 %7218
        %v7220 = vsel %vm830, %v7202, 0.0
        %7221 = vadd.xlane.f32.xlu0 %v7220
        %v7222 = vpop.xlane.xlu0 %7221
        %v7223 = vsel %vm830, %v7203, 0.0
        %7224 = vadd.xlane.f32.xlu0 %v7223
        %v7225 = vpop.xlane.xlu0 %7224
        %v7226 = vsel %vm830, %v7204, 0.0
        %7227 = vadd.xlane.f32.xlu0 %v7226
        %v7228 = vpop.xlane.xlu0 %7227
        %v7229 = vmul.f32 %v7207, %v855
        %v7230 = vmul.f32 %v7210, %v855
        %v7231 = vmul.f32 %v7213, %v855
        %v7232 = vmul.f32 %v7216, %v855
        %v7233 = vmul.f32 %v7219, %v855
        %v7234 = vmul.f32 %v7222, %v855
        %v7235 = vmul.f32 %v7225, %v855
        %v7236 = vmul.f32 %v7228, %v855
        %v7237 = vadd.f32 %v7229, 1e-05
        %v7238 = vadd.f32 %v7230, 1e-05
        %v7239 = vadd.f32 %v7231, 1e-05
        %v7240 = vadd.f32 %v7232, 1e-05
        %v7241 = vadd.f32 %v7233, 1e-05
        %v7242 = vadd.f32 %v7234, 1e-05
        %v7243 = vadd.f32 %v7235, 1e-05
        %v7244 = vadd.f32 %v7236, 1e-05
        %v7245 = vrsqrt.pop %v7237
        %v7246 = vrsqrt.pop %v7238
        %v7247 = vrsqrt.pop %v7239
        %v7248 = vrsqrt.pop %v7240
        %v7249 = vrsqrt.pop %v7241
        %v7250 = vrsqrt.pop %v7242
        %v7251 = vrsqrt.pop %v7243
        %v7252 = vrsqrt.pop %v7244
        %v7253 = vmul.f32 %v7189, %v7245
        %v7254 = vmul.f32 %v7190, %v7246
        %v7255 = vmul.f32 %v7191, %v7247
        %v7256 = vmul.f32 %v7192, %v7248
        %v7257 = vmul.f32 %v7193, %v7249
        %v7258 = vmul.f32 %v7194, %v7250
        %v7259 = vmul.f32 %v7195, %v7251
        %v7260 = vmul.f32 %v7196, %v7252
        %v7262 = vlaneseq
        %v7263 = vshrl.u32 %v7262, 7
        %v7264 = vsub.s32 0, %v7263
        %v7265 = vrot.slane %v7154, %v7264
        %v7267 = vmul.f32 %v7253, %v7265
        %v7268 = vmul.f32 %v7254, %v7265
        %v7269 = vmul.f32 %v7255, %v7265
        %v7270 = vmul.f32 %v7256, %v7265
        %v7271 = vmul.f32 %v7257, %v7265
        %v7272 = vmul.f32 %v7258, %v7265
        %v7273 = vmul.f32 %v7259, %v7265
        %v7274 = vmul.f32 %v7260, %v7265
        %v7276 = vlaneseq
        %v7277 = vshrl.u32 %v7276, 7
        %v7278 = vsub.s32 0, %v7277
        %v7279 = vrot.slane %v7156, %v7278
        %v7281 = vadd.f32 %v7267, %v7279
        %v7282 = vadd.f32 %v7268, %v7279
        %v7283 = vadd.f32 %v7269, %v7279
        %v7284 = vadd.f32 %v7270, %v7279
        %v7285 = vadd.f32 %v7271, %v7279
        %v7286 = vadd.f32 %v7272, %v7279
        %v7287 = vadd.f32 %v7273, %v7279
        %v7288 = vadd.f32 %v7274, %v7279
        %s7289 = scalar_lea.vmem %s11, 96
        %v7290 = vld [vmem:[%s7289] sm:$0xff]
        %v7291 = vld [vmem:[%s7289 + $0x8] sm:$0xff]
        %v7292 = vld [vmem:[%s7289 + $0x10] sm:$0xff]
        %v7293 = vld [vmem:[%s7289 + $0x18] sm:$0xff]
        %s7294 = scalar_lea.vmem %s12, 3
        %v7295 = vld [vmem:[%s7294] sm:$0x1]
        %v7297 = vlaneseq
        %v7298 = vshrl.u32 %v7297, 7
        %v7299 = vsub.s32 0, %v7298
        %v7300 = vrot.slane %v7295, %v7299
        %v7303 = vsel %vm830, %v7281, 0
        %v7306 = vsel %vm830, %v7282, 0
        %v7309 = vsel %vm830, %v7283, 0
        %v7312 = vsel %vm830, %v7284, 0
        %v7315 = vsel %vm830, %v7285, 0
        %v7318 = vsel %vm830, %v7286, 0
        %v7321 = vsel %vm830, %v7287, 0
        %v7324 = vsel %vm830, %v7288, 0
        %7326 = vmatprep.subr.mxu0 0.0
        %7327 = vmatpush1.msra.mxu0 %v7290
        %7328 = vmatprep.subr.mxu0 0.0
        %7329 = vmatpush1.msra.mxu0 %v7291
        %7330 = vmatprep.subr.mxu0 0.0
        %7331 = vmatpush1.msra.mxu0 %v7292
        %7332 = vmatprep.subr.mxu0 0.0
        %7333 = vmatpush1.msra.mxu0 %v7293
        %7334 = vmatprep.subr.mxu0 0.0
        %7335 = vmatpush1.msra.mxu0 0.0
        %7336 = vmatprep.subr.mxu0 0.0
        %7337 = vmatpush1.msra.mxu0 0.0
        %7338 = vmatprep.subr.mxu0 0.0
        %7339 = vmatpush1.msra.mxu0 0.0
        %7340 = vmatprep.subr.mxu0 0.0
        %7341 = vmatpush1.msra.mxu0 0.0
        %7342 = vmatprep.subr.mxu0 0.0
        %7343 = vmatpush1.msra.mxu0 0.0
        %7344 = vmatprep.subr.mxu0 0.0
        %7345 = vmatpush1.msra.mxu0 0.0
        %7346 = vmatprep.subr.mxu0 0.0
        %7347 = vmatpush1.msra.mxu0 0.0
        %7348 = vmatprep.subr.mxu0 0.0
        %7349 = vmatpush1.msra.mxu0 0.0
        %7350 = vmatprep.subr.mxu0 0.0
        %7351 = vmatpush1.msra.mxu0 0.0
        %7352 = vmatprep.subr.mxu0 0.0
        %7353 = vmatpush1.msra.mxu0 0.0
        %7354 = vmatprep.subr.mxu0 0.0
        %7355 = vmatpush1.msra.mxu0 0.0
        %7356 = vmatprep.subr.mxu0 0.0
        %7357 = vmatpush1.msra.mxu0 0.0
        %7358 = vmatprep.subr.mxu0 0.0
        %7359 = vmatpush1.msra.mxu0 0.0
        %7360 = vmatprep.subr.mxu0 0.0
        %7361 = vmatpush1.msra.mxu0 0.0
        %7362 = vmatprep.subr.mxu0 0.0
        %7363 = vmatpush1.msra.mxu0 0.0
        %7364 = vmatprep.subr.mxu0 0.0
        %7365 = vmatpush1.msra.mxu0 0.0
        %7366 = vmatprep.subr.mxu0 0.0
        %7367 = vmatpush1.msra.mxu0 0.0
        %7368 = vmatprep.subr.mxu0 0.0
        %7369 = vmatpush1.msra.mxu0 0.0
        %7370 = vmatprep.subr.mxu0 0.0
        %7371 = vmatpush1.msra.mxu0 0.0
        %7372 = vmatprep.subr.mxu0 0.0
        %7373 = vmatpush1.msra.mxu0 0.0
        %7374 = vmatprep.subr.mxu0 0.0
        %7375 = vmatpush1.msra.mxu0 0.0
        %7376 = vmatprep.subr.mxu0 0.0
        %7377 = vmatpush1.msra.mxu0 0.0
        %7378 = vmatprep.subr.mxu0 0.0
        %7379 = vmatpush1.msra.mxu0 0.0
        %7380 = vmatprep.subr.mxu0 0.0
        %7381 = vmatpush1.msra.mxu0 0.0
        %7382 = vmatprep.subr.mxu0 0.0
        %7383 = vmatpush1.msra.mxu0 0.0
        %7384 = vmatprep.subr.mxu0 0.0
        %7385 = vmatpush1.msra.mxu0 0.0
        %7386 = vmatprep.subr.mxu0 0.0
        %7387 = vmatpush1.msra.mxu0 0.0
        %7388 = vmatprep.subr.mxu0 0.0
        %7389 = vmatpush1.msra.mxu0 0.0
        %7390 = vmatprep.mubr.f32.mxu0 0.0
        %7391 = vmatmul.mubr.f32.gmra.mrb[0].mxu0 %v7303
        %v7392 = vpop.f32.mrb[0].mxu0
        %v7393 = vadd.f32 %v7300, %v7392
        %v7394 = vpop.f32.mrb[0].mxu0
        %7395 = vmatprep.mubr.f32.mxu0 0.0
        %7396 = vmatmul.mubr.f32.gmra.mrb[0].mxu0 %v7306
        %v7397 = vpop.f32.mrb[0].mxu0
        %v7398 = vadd.f32 %v7300, %v7397
        %v7399 = vpop.f32.mrb[0].mxu0
        %7400 = vmatprep.mubr.f32.mxu0 0.0
        %7401 = vmatmul.mubr.f32.gmra.mrb[0].mxu0 %v7309
        %v7402 = vpop.f32.mrb[0].mxu0
        %v7403 = vadd.f32 %v7300, %v7402
        %v7404 = vpop.f32.mrb[0].mxu0
        %7405 = vmatprep.mubr.f32.mxu0 0.0
        %7406 = vmatmul.mubr.f32.gmra.mrb[0].mxu0 %v7312
        %v7407 = vpop.f32.mrb[0].mxu0
        %v7408 = vadd.f32 %v7300, %v7407
        %v7409 = vpop.f32.mrb[0].mxu0
        %7410 = vmatprep.mubr.f32.mxu0 0.0
        %7411 = vmatmul.mubr.f32.gmra.mrb[0].mxu0 %v7315
        %v7412 = vpop.f32.mrb[0].mxu0
        %v7413 = vadd.f32 %v7300, %v7412
        %v7414 = vpop.f32.mrb[0].mxu0
        %7415 = vmatprep.mubr.f32.mxu0 0.0
        %7416 = vmatmul.mubr.f32.gmra.mrb[0].mxu0 %v7318
        %v7417 = vpop.f32.mrb[0].mxu0
        %v7418 = vadd.f32 %v7300, %v7417
        %v7419 = vpop.f32.mrb[0].mxu0
        %7420 = vmatprep.mubr.f32.mxu0 0.0
        %7421 = vmatmul.mubr.f32.gmra.mrb[0].mxu0 %v7321
        %v7422 = vpop.f32.mrb[0].mxu0
        %v7423 = vadd.f32 %v7300, %v7422
        %v7424 = vpop.f32.mrb[0].mxu0
        %7425 = vmatprep.mubr.f32.mxu0 0.0
        %7426 = vmatmul.mubr.f32.gmra.mrb[0].mxu0 %v7324
        %v7427 = vpop.f32.mrb[0].mxu0
        %v7428 = vadd.f32 %v7300, %v7427
        %v7429 = vpop.f32.mrb[0].mxu0
        %7430 = vdwg.mxu0
        %s7431 = scalar_lea.vmem %s13, 96
        %v7432 = vld [vmem:[%s7431] sm:$0xff]
        %v7433 = vld [vmem:[%s7431 + $0x8] sm:$0xff]
        %v7434 = vld [vmem:[%s7431 + $0x10] sm:$0xff]
        %v7435 = vld [vmem:[%s7431 + $0x18] sm:$0xff]
        %v7436 = vmul.f32 %v7393, %v1115
        %v7437 = vmul.f32 %v7398, %v1115
        %v7438 = vmul.f32 %v7403, %v1115
        %v7439 = vmul.f32 %v7408, %v1115
        %v7440 = vmul.f32 %v7413, %v1115
        %v7441 = vmul.f32 %v7418, %v1115
        %v7442 = vmul.f32 %v7423, %v1115
        %v7443 = vmul.f32 %v7428, %v1115
        %v7444 = vmul.f32 %v7393, %v1133
        %v7445 = vmul.f32 %v7398, %v1133
        %v7446 = vmul.f32 %v7403, %v1133
        %v7447 = vmul.f32 %v7408, %v1133
        %v7448 = vmul.f32 %v7413, %v1133
        %v7449 = vmul.f32 %v7418, %v1133
        %v7450 = vmul.f32 %v7423, %v1133
        %v7451 = vmul.f32 %v7428, %v1133
        %v7452 = vmul.f32 %v7393, %v1151
        %v7453 = vmul.f32 %v7398, %v1151
        %v7454 = vmul.f32 %v7403, %v1151
        %v7455 = vmul.f32 %v7408, %v1151
        %v7456 = vmul.f32 %v7413, %v1151
        %v7457 = vmul.f32 %v7418, %v1151
        %v7458 = vmul.f32 %v7423, %v1151
        %v7459 = vmul.f32 %v7428, %v1151
        %v7460 = vmul.f32 %v7393, %v1169
        %v7461 = vmul.f32 %v7398, %v1169
        %v7462 = vmul.f32 %v7403, %v1169
        %v7463 = vmul.f32 %v7408, %v1169
        %v7464 = vmul.f32 %v7413, %v1169
        %v7465 = vmul.f32 %v7418, %v1169
        %v7466 = vmul.f32 %v7423, %v1169
        %v7467 = vmul.f32 %v7428, %v1169
        %v7468 = vmul.f32 %v7393, %v1180
        %v7469 = vmul.f32 %v7398, %v1180
        %v7470 = vmul.f32 %v7403, %v1180
        %v7471 = vmul.f32 %v7408, %v1180
        %v7472 = vmul.f32 %v7413, %v1180
        %v7473 = vmul.f32 %v7418, %v1180
        %v7474 = vmul.f32 %v7423, %v1180
        %v7475 = vmul.f32 %v7428, %v1180
        %v7476 = vmul.f32 %v7393, %v1191
        %v7477 = vmul.f32 %v7398, %v1191
        %v7478 = vmul.f32 %v7403, %v1191
        %v7479 = vmul.f32 %v7408, %v1191
        %v7480 = vmul.f32 %v7413, %v1191
        %v7481 = vmul.f32 %v7418, %v1191
        %v7482 = vmul.f32 %v7423, %v1191
        %v7483 = vmul.f32 %v7428, %v1191
        %v7484 = vmul.f32 %v7393, %v1202
        %v7485 = vmul.f32 %v7398, %v1202
        %v7486 = vmul.f32 %v7403, %v1202
        %v7487 = vmul.f32 %v7408, %v1202
        %v7488 = vmul.f32 %v7413, %v1202
        %v7489 = vmul.f32 %v7418, %v1202
        %v7490 = vmul.f32 %v7423, %v1202
        %v7491 = vmul.f32 %v7428, %v1202
        %v7492 = vmul.f32 %v7393, %v1213
        %v7493 = vmul.f32 %v7398, %v1213
        %v7494 = vmul.f32 %v7403, %v1213
        %v7495 = vmul.f32 %v7408, %v1213
        %v7496 = vmul.f32 %v7413, %v1213
        %v7497 = vmul.f32 %v7418, %v1213
        %v7498 = vmul.f32 %v7423, %v1213
        %v7499 = vmul.f32 %v7428, %v1213
        %7532 = vrot.lane.b32.xlu0 %v7436, 96
        %v7533 = vpop.permute.xlu0 %7532
        %7534 = vrot.lane.b32.xlu0 %v7437, 96
        %v7535 = vpop.permute.xlu0 %7534
        %7536 = vrot.lane.b32.xlu0 %v7438, 96
        %v7537 = vpop.permute.xlu0 %7536
        %7538 = vrot.lane.b32.xlu0 %v7439, 96
        %v7539 = vpop.permute.xlu0 %7538
        %7540 = vrot.lane.b32.xlu0 %v7440, 96
        %v7541 = vpop.permute.xlu0 %7540
        %7542 = vrot.lane.b32.xlu0 %v7441, 96
        %v7543 = vpop.permute.xlu0 %7542
        %7544 = vrot.lane.b32.xlu0 %v7442, 96
        %v7545 = vpop.permute.xlu0 %7544
        %7546 = vrot.lane.b32.xlu0 %v7443, 96
        %v7547 = vpop.permute.xlu0 %7546
        %7548 = vrot.lane.b32.xlu0 %v7444, 96
        %v7549 = vpop.permute.xlu0 %7548
        %7550 = vrot.lane.b32.xlu0 %v7445, 96
        %v7551 = vpop.permute.xlu0 %7550
        %7552 = vrot.lane.b32.xlu0 %v7446, 96
        %v7553 = vpop.permute.xlu0 %7552
        %7554 = vrot.lane.b32.xlu0 %v7447, 96
        %v7555 = vpop.permute.xlu0 %7554
        %7556 = vrot.lane.b32.xlu0 %v7448, 96
        %v7557 = vpop.permute.xlu0 %7556
        %7558 = vrot.lane.b32.xlu0 %v7449, 96
        %v7559 = vpop.permute.xlu0 %7558
        %7560 = vrot.lane.b32.xlu0 %v7450, 96
        %v7561 = vpop.permute.xlu0 %7560
        %7562 = vrot.lane.b32.xlu0 %v7451, 96
        %v7563 = vpop.permute.xlu0 %7562
        %7564 = vrot.lane.b32.xlu0 %v7452, 96
        %v7565 = vpop.permute.xlu0 %7564
        %7566 = vrot.lane.b32.xlu0 %v7453, 96
        %v7567 = vpop.permute.xlu0 %7566
        %7568 = vrot.lane.b32.xlu0 %v7454, 96
        %v7569 = vpop.permute.xlu0 %7568
        %7570 = vrot.lane.b32.xlu0 %v7455, 96
        %v7571 = vpop.permute.xlu0 %7570
        %7572 = vrot.lane.b32.xlu0 %v7456, 96
        %v7573 = vpop.permute.xlu0 %7572
        %7574 = vrot.lane.b32.xlu0 %v7457, 96
        %v7575 = vpop.permute.xlu0 %7574
        %7576 = vrot.lane.b32.xlu0 %v7458, 96
        %v7577 = vpop.permute.xlu0 %7576
        %7578 = vrot.lane.b32.xlu0 %v7459, 96
        %v7579 = vpop.permute.xlu0 %7578
        %7580 = vrot.lane.b32.xlu0 %v7460, 96
        %v7581 = vpop.permute.xlu0 %7580
        %7582 = vrot.lane.b32.xlu0 %v7461, 96
        %v7583 = vpop.permute.xlu0 %7582
        %7584 = vrot.lane.b32.xlu0 %v7462, 96
        %v7585 = vpop.permute.xlu0 %7584
        %7586 = vrot.lane.b32.xlu0 %v7463, 96
        %v7587 = vpop.permute.xlu0 %7586
        %7588 = vrot.lane.b32.xlu0 %v7464, 96
        %v7589 = vpop.permute.xlu0 %7588
        %7590 = vrot.lane.b32.xlu0 %v7465, 96
        %v7591 = vpop.permute.xlu0 %7590
        %7592 = vrot.lane.b32.xlu0 %v7466, 96
        %v7593 = vpop.permute.xlu0 %7592
        %7594 = vrot.lane.b32.xlu0 %v7467, 96
        %v7595 = vpop.permute.xlu0 %7594
        %v7597 = vsel %vm830, %v7393, 0
        %v7600 = vsel %vm830, %v7398, 0
        %v7603 = vsel %vm830, %v7403, 0
        %v7606 = vsel %vm830, %v7408, 0
        %v7609 = vsel %vm830, %v7413, 0
        %v7612 = vsel %vm830, %v7418, 0
        %v7615 = vsel %vm830, %v7423, 0
        %v7618 = vsel %vm830, %v7428, 0
        %v7620 = vsel %vm830, %v7533, 0
        %v7622 = vsel %vm830, %v7535, 0
        %v7624 = vsel %vm830, %v7537, 0
        %v7626 = vsel %vm830, %v7539, 0
        %v7628 = vsel %vm830, %v7541, 0
        %v7630 = vsel %vm830, %v7543, 0
        %v7632 = vsel %vm830, %v7545, 0
        %v7634 = vsel %vm830, %v7547, 0
        %v7636 = vsel %vm830, %v7549, 0
        %v7638 = vsel %vm830, %v7551, 0
        %v7640 = vsel %vm830, %v7553, 0
        %v7642 = vsel %vm830, %v7555, 0
        %v7644 = vsel %vm830, %v7557, 0
        %v7646 = vsel %vm830, %v7559, 0
        %v7648 = vsel %vm830, %v7561, 0
        %v7650 = vsel %vm830, %v7563, 0
        %v7652 = vsel %vm830, %v7565, 0
        %v7654 = vsel %vm830, %v7567, 0
        %v7656 = vsel %vm830, %v7569, 0
        %v7658 = vsel %vm830, %v7571, 0
        %v7660 = vsel %vm830, %v7573, 0
        %v7662 = vsel %vm830, %v7575, 0
        %v7664 = vsel %vm830, %v7577, 0
        %v7666 = vsel %vm830, %v7579, 0
        %v7668 = vsel %vm830, %v7581, 0
        %v7670 = vsel %vm830, %v7583, 0
        %v7672 = vsel %vm830, %v7585, 0
        %v7674 = vsel %vm830, %v7587, 0
        %v7676 = vsel %vm830, %v7589, 0
        %v7678 = vsel %vm830, %v7591, 0
        %v7680 = vsel %vm830, %v7593, 0
        %v7682 = vsel %vm830, %v7595, 0
        %7684 = vmatprep.subr.mxu0 0.0
        %7685 = vmatpush1.xpose.msra.mxu0 %v7620
        %7686 = vmatprep.subr.mxu0 0.0
        %7687 = vmatpush1.xpose.msra.mxu0 %v7622
        %7688 = vmatprep.subr.mxu0 0.0
        %7689 = vmatpush1.xpose.msra.mxu0 %v7624
        %7690 = vmatprep.subr.mxu0 0.0
        %7691 = vmatpush1.xpose.msra.mxu0 %v7626
        %7692 = vmatprep.subr.mxu0 0.0
        %7693 = vmatpush1.xpose.msra.mxu0 %v7628
        %7694 = vmatprep.subr.mxu0 0.0
        %7695 = vmatpush1.xpose.msra.mxu0 %v7630
        %7696 = vmatprep.subr.mxu0 0.0
        %7697 = vmatpush1.xpose.msra.mxu0 %v7632
        %7698 = vmatprep.subr.mxu0 0.0
        %7699 = vmatpush1.xpose.msra.mxu0 %v7634
        %7700 = vmatprep.subr.mxu0 0.0
        %7701 = vmatpush1.xpose.msra.mxu0 %v7636
        %7702 = vmatprep.subr.mxu0 0.0
        %7703 = vmatpush1.xpose.msra.mxu0 %v7638
        %7704 = vmatprep.subr.mxu0 0.0
        %7705 = vmatpush1.xpose.msra.mxu0 %v7640
        %7706 = vmatprep.subr.mxu0 0.0
        %7707 = vmatpush1.xpose.msra.mxu0 %v7642
        %7708 = vmatprep.subr.mxu0 0.0
        %7709 = vmatpush1.xpose.msra.mxu0 %v7644
        %7710 = vmatprep.subr.mxu0 0.0
        %7711 = vmatpush1.xpose.msra.mxu0 %v7646
        %7712 = vmatprep.subr.mxu0 0.0
        %7713 = vmatpush1.xpose.msra.mxu0 %v7648
        %7714 = vmatprep.subr.mxu0 0.0
        %7715 = vmatpush1.xpose.msra.mxu0 %v7650
        %7716 = vmatprep.subr.mxu0 0.0
        %7717 = vmatpush1.xpose.msra.mxu0 %v7652
        %7718 = vmatprep.subr.mxu0 0.0
        %7719 = vmatpush1.xpose.msra.mxu0 %v7654
        %7720 = vmatprep.subr.mxu0 0.0
        %7721 = vmatpush1.xpose.msra.mxu0 %v7656
        %7722 = vmatprep.subr.mxu0 0.0
        %7723 = vmatpush1.xpose.msra.mxu0 %v7658
        %7724 = vmatprep.subr.mxu0 0.0
        %7725 = vmatpush1.xpose.msra.mxu0 %v7660
        %7726 = vmatprep.subr.mxu0 0.0
        %7727 = vmatpush1.xpose.msra.mxu0 %v7662
        %7728 = vmatprep.subr.mxu0 0.0
        %7729 = vmatpush1.xpose.msra.mxu0 %v7664
        %7730 = vmatprep.subr.mxu0 0.0
        %7731 = vmatpush1.xpose.msra.mxu0 %v7666
        %7732 = vmatprep.subr.mxu0 0.0
        %7733 = vmatpush1.xpose.msra.mxu0 %v7668
        %7734 = vmatprep.subr.mxu0 0.0
        %7735 = vmatpush1.xpose.msra.mxu0 %v7670
        %7736 = vmatprep.subr.mxu0 0.0
        %7737 = vmatpush1.xpose.msra.mxu0 %v7672
        %7738 = vmatprep.subr.mxu0 0.0
        %7739 = vmatpush1.xpose.msra.mxu0 %v7674
        %7740 = vmatprep.subr.mxu0 0.0
        %7741 = vmatpush1.xpose.msra.mxu0 %v7676
        %7742 = vmatprep.subr.mxu0 0.0
        %7743 = vmatpush1.xpose.msra.mxu0 %v7678
        %7744 = vmatprep.subr.mxu0 0.0
        %7745 = vmatpush1.xpose.msra.mxu0 %v7680
        %7746 = vmatprep.subr.mxu0 0.0
        %7747 = vmatpush1.xpose.msra.mxu0 %v7682
        %7748 = vmatprep.mubr.f32.mxu0 0.0
        %7749 = vmatmul.mubr.f32.gmra.mrb[0].mxu0 %v7597
        %v7750 = vpop.f32.mrb[0].mxu0
        %v7751 = vadd.f32 0.0, %v7750
        %v7752 = vpop.f32.mrb[0].mxu0
        %v7753 = vadd.f32 0.0, %v7752
        %7754 = vmatprep.mubr.f32.mxu0 0.0
        %7755 = vmatmul.mubr.f32.gmra.mrb[0].mxu0 %v7600
        %v7756 = vpop.f32.mrb[0].mxu0
        %v7757 = vadd.f32 0.0, %v7756
        %v7758 = vpop.f32.mrb[0].mxu0
        %v7759 = vadd.f32 0.0, %v7758
        %7760 = vmatprep.mubr.f32.mxu0 0.0
        %7761 = vmatmul.mubr.f32.gmra.mrb[0].mxu0 %v7603
        %v7762 = vpop.f32.mrb[0].mxu0
        %v7763 = vadd.f32 0.0, %v7762
        %v7764 = vpop.f32.mrb[0].mxu0
        %v7765 = vadd.f32 0.0, %v7764
        %7766 = vmatprep.mubr.f32.mxu0 0.0
        %7767 = vmatmul.mubr.f32.gmra.mrb[0].mxu0 %v7606
        %v7768 = vpop.f32.mrb[0].mxu0
        %v7769 = vadd.f32 0.0, %v7768
        %v7770 = vpop.f32.mrb[0].mxu0
        %v7771 = vadd.f32 0.0, %v7770
        %7772 = vmatprep.mubr.f32.mxu0 0.0
        %7773 = vmatmul.mubr.f32.gmra.mrb[0].mxu0 %v7609
        %v7774 = vpop.f32.mrb[0].mxu0
        %v7775 = vadd.f32 0.0, %v7774
        %v7776 = vpop.f32.mrb[0].mxu0
        %v7777 = vadd.f32 0.0, %v7776
        %7778 = vmatprep.mubr.f32.mxu0 0.0
        %7779 = vmatmul.mubr.f32.gmra.mrb[0].mxu0 %v7612
        %v7780 = vpop.f32.mrb[0].mxu0
        %v7781 = vadd.f32 0.0, %v7780
        %v7782 = vpop.f32.mrb[0].mxu0
        %v7783 = vadd.f32 0.0, %v7782
        %7784 = vmatprep.mubr.f32.mxu0 0.0
        %7785 = vmatmul.mubr.f32.gmra.mrb[0].mxu0 %v7615
        %v7786 = vpop.f32.mrb[0].mxu0
        %v7787 = vadd.f32 0.0, %v7786
        %v7788 = vpop.f32.mrb[0].mxu0
        %v7789 = vadd.f32 0.0, %v7788
        %7790 = vmatprep.mubr.f32.mxu0 0.0
        %7791 = vmatmul.mubr.f32.gmra.mrb[0].mxu0 %v7618
        %v7792 = vpop.f32.mrb[0].mxu0
        %v7793 = vadd.f32 0.0, %v7792
        %v7794 = vpop.f32.mrb[0].mxu0
        %v7795 = vadd.f32 0.0, %v7794
        %7796 = vdwg.mxu0
        %v7797 = vadd.f32 %v7751, %v2973
        %v7798 = vadd.f32 %v7757, %v2974
        %v7799 = vadd.f32 %v7763, %v2975
        %v7800 = vadd.f32 %v7769, %v2976
        %v7801 = vadd.f32 %v7775, %v2977
        %v7802 = vadd.f32 %v7781, %v2978
        %v7803 = vadd.f32 %v7787, %v2979
        %v7804 = vadd.f32 %v7793, %v2980
        %v7805 = vsel %vm1528, %v7797, -inf
        %7806 = vmax.xlane.f32.xlu0 %v7805
        %v7807 = vpop.xlane.xlu0 %7806
        %v7808 = vsel %vm1528, %v7798, -inf
        %7809 = vmax.xlane.f32.xlu0 %v7808
        %v7810 = vpop.xlane.xlu0 %7809
        %v7811 = vsel %vm1528, %v7799, -inf
        %7812 = vmax.xlane.f32.xlu0 %v7811
        %v7813 = vpop.xlane.xlu0 %7812
        %v7814 = vsel %vm1528, %v7800, -inf
        %7815 = vmax.xlane.f32.xlu0 %v7814
        %v7816 = vpop.xlane.xlu0 %7815
        %v7817 = vsel %vm1528, %v7801, -inf
        %7818 = vmax.xlane.f32.xlu0 %v7817
        %v7819 = vpop.xlane.xlu0 %7818
        %v7820 = vsel %vm1528, %v7802, -inf
        %7821 = vmax.xlane.f32.xlu0 %v7820
        %v7822 = vpop.xlane.xlu0 %7821
        %v7823 = vsel %vm1528, %v7803, -inf
        %7824 = vmax.xlane.f32.xlu0 %v7823
        %v7825 = vpop.xlane.xlu0 %7824
        %v7826 = vsel %vm1528, %v7804, -inf
        %7827 = vmax.xlane.f32.xlu0 %v7826
        %v7828 = vpop.xlane.xlu0 %7827
        %v7829 = vsub.f32 %v7797, %v7807
        %v7830 = vsub.f32 %v7798, %v7810
        %v7831 = vsub.f32 %v7799, %v7813
        %v7832 = vsub.f32 %v7800, %v7816
        %v7833 = vsub.f32 %v7801, %v7819
        %v7834 = vsub.f32 %v7802, %v7822
        %v7835 = vsub.f32 %v7803, %v7825
        %v7836 = vsub.f32 %v7804, %v7828
        %v7837 = vmul.f32 %v7829, 1.442695
        %v7838 = vpow.pop %v7837
        %v7839 = vmul.f32 %v7830, 1.442695
        %v7840 = vpow.pop %v7839
        %v7841 = vmul.f32 %v7831, 1.442695
        %v7842 = vpow.pop %v7841
        %v7843 = vmul.f32 %v7832, 1.442695
        %v7844 = vpow.pop %v7843
        %v7845 = vmul.f32 %v7833, 1.442695
        %v7846 = vpow.pop %v7845
        %v7847 = vmul.f32 %v7834, 1.442695
        %v7848 = vpow.pop %v7847
        %v7849 = vmul.f32 %v7835, 1.442695
        %v7850 = vpow.pop %v7849
        %v7851 = vmul.f32 %v7836, 1.442695
        %v7852 = vpow.pop %v7851
        %v7853 = vsel %vm1528, %v7838, 0.0
        %7854 = vadd.xlane.f32.xlu0 %v7853
        %v7855 = vpop.xlane.xlu0 %7854
        %v7856 = vsel %vm1528, %v7840, 0.0
        %7857 = vadd.xlane.f32.xlu0 %v7856
        %v7858 = vpop.xlane.xlu0 %7857
        %v7859 = vsel %vm1528, %v7842, 0.0
        %7860 = vadd.xlane.f32.xlu0 %v7859
        %v7861 = vpop.xlane.xlu0 %7860
        %v7862 = vsel %vm1528, %v7844, 0.0
        %7863 = vadd.xlane.f32.xlu0 %v7862
        %v7864 = vpop.xlane.xlu0 %7863
        %v7865 = vsel %vm1528, %v7846, 0.0
        %7866 = vadd.xlane.f32.xlu0 %v7865
        %v7867 = vpop.xlane.xlu0 %7866
        %v7868 = vsel %vm1528, %v7848, 0.0
        %7869 = vadd.xlane.f32.xlu0 %v7868
        %v7870 = vpop.xlane.xlu0 %7869
        %v7871 = vsel %vm1528, %v7850, 0.0
        %7872 = vadd.xlane.f32.xlu0 %v7871
        %v7873 = vpop.xlane.xlu0 %7872
        %v7874 = vsel %vm1528, %v7852, 0.0
        %7875 = vadd.xlane.f32.xlu0 %v7874
        %v7876 = vpop.xlane.xlu0 %7875
        %v7877 = vrcp.pop %v7855
        %v7878 = vrcp.pop %v7858
        %v7879 = vrcp.pop %v7861
        %v7880 = vrcp.pop %v7864
        %v7881 = vrcp.pop %v7867
        %v7882 = vrcp.pop %v7870
        %v7883 = vrcp.pop %v7873
        %v7884 = vrcp.pop %v7876
        %v7885 = vmul.f32 %v7838, %v7877
        %v7886 = vmul.f32 %v7840, %v7878
        %v7887 = vmul.f32 %v7842, %v7879
        %v7888 = vmul.f32 %v7844, %v7880
        %v7889 = vmul.f32 %v7846, %v7881
        %v7890 = vmul.f32 %v7848, %v7882
        %v7891 = vmul.f32 %v7850, %v7883
        %v7892 = vmul.f32 %v7852, %v7884
        %v7893 = vadd.f32 %v7751, %v3730
        %v7894 = vadd.f32 %v7757, %v3732
        %v7895 = vadd.f32 %v7763, %v3734
        %v7896 = vadd.f32 %v7769, %v3736
        %v7897 = vadd.f32 %v7775, %v3738
        %v7898 = vadd.f32 %v7781, %v3740
        %v7899 = vadd.f32 %v7787, %v3742
        %v7900 = vadd.f32 %v7793, %v3744
        %v7901 = vsel %vm1657, %v7893, -inf
        %7902 = vmax.xlane.f32.xlu0 %v7901
        %v7903 = vpop.xlane.xlu0 %7902
        %v7904 = vsel %vm1657, %v7894, -inf
        %7905 = vmax.xlane.f32.xlu0 %v7904
        %v7906 = vpop.xlane.xlu0 %7905
        %v7907 = vsel %vm1657, %v7895, -inf
        %7908 = vmax.xlane.f32.xlu0 %v7907
        %v7909 = vpop.xlane.xlu0 %7908
        %v7910 = vsel %vm1657, %v7896, -inf
        %7911 = vmax.xlane.f32.xlu0 %v7910
        %v7912 = vpop.xlane.xlu0 %7911
        %v7913 = vsel %vm1657, %v7897, -inf
        %7914 = vmax.xlane.f32.xlu0 %v7913
        %v7915 = vpop.xlane.xlu0 %7914
        %v7916 = vsel %vm1657, %v7898, -inf
        %7917 = vmax.xlane.f32.xlu0 %v7916
        %v7918 = vpop.xlane.xlu0 %7917
        %v7919 = vsel %vm1657, %v7899, -inf
        %7920 = vmax.xlane.f32.xlu0 %v7919
        %v7921 = vpop.xlane.xlu0 %7920
        %v7922 = vsel %vm1657, %v7900, -inf
        %7923 = vmax.xlane.f32.xlu0 %v7922
        %v7924 = vpop.xlane.xlu0 %7923
        %v7925 = vsub.f32 %v7893, %v7903
        %v7926 = vsub.f32 %v7894, %v7906
        %v7927 = vsub.f32 %v7895, %v7909
        %v7928 = vsub.f32 %v7896, %v7912
        %v7929 = vsub.f32 %v7897, %v7915
        %v7930 = vsub.f32 %v7898, %v7918
        %v7931 = vsub.f32 %v7899, %v7921
        %v7932 = vsub.f32 %v7900, %v7924
        %v7933 = vmul.f32 %v7925, 1.442695
        %v7934 = vpow.pop %v7933
        %v7935 = vmul.f32 %v7926, 1.442695
        %v7936 = vpow.pop %v7935
        %v7937 = vmul.f32 %v7927, 1.442695
        %v7938 = vpow.pop %v7937
        %v7939 = vmul.f32 %v7928, 1.442695
        %v7940 = vpow.pop %v7939
        %v7941 = vmul.f32 %v7929, 1.442695
        %v7942 = vpow.pop %v7941
        %v7943 = vmul.f32 %v7930, 1.442695
        %v7944 = vpow.pop %v7943
        %v7945 = vmul.f32 %v7931, 1.442695
        %v7946 = vpow.pop %v7945
        %v7947 = vmul.f32 %v7932, 1.442695
        %v7948 = vpow.pop %v7947
        %7957 = vrot.lane.b32.xlu0 %v7934, 64
        %v7958 = vpop.permute.xlu0 %7957
        %7959 = vrot.lane.b32.xlu0 %v7936, 64
        %v7960 = vpop.permute.xlu0 %7959
        %7961 = vrot.lane.b32.xlu0 %v7938, 64
        %v7962 = vpop.permute.xlu0 %7961
        %7963 = vrot.lane.b32.xlu0 %v7940, 64
        %v7964 = vpop.permute.xlu0 %7963
        %7965 = vrot.lane.b32.xlu0 %v7942, 64
        %v7966 = vpop.permute.xlu0 %7965
        %7967 = vrot.lane.b32.xlu0 %v7944, 64
        %v7968 = vpop.permute.xlu0 %7967
        %7969 = vrot.lane.b32.xlu0 %v7946, 64
        %v7970 = vpop.permute.xlu0 %7969
        %7971 = vrot.lane.b32.xlu0 %v7948, 64
        %v7972 = vpop.permute.xlu0 %7971
        %v7981 = vsel %vm1528, %v7958, 0.0
        %7982 = vadd.xlane.f32.xlu0 %v7981
        %v7983 = vpop.xlane.xlu0 %7982
        %v7984 = vsel %vm1528, %v7960, 0.0
        %7985 = vadd.xlane.f32.xlu0 %v7984
        %v7986 = vpop.xlane.xlu0 %7985
        %v7987 = vsel %vm1528, %v7962, 0.0
        %7988 = vadd.xlane.f32.xlu0 %v7987
        %v7989 = vpop.xlane.xlu0 %7988
        %v7990 = vsel %vm1528, %v7964, 0.0
        %7991 = vadd.xlane.f32.xlu0 %v7990
        %v7992 = vpop.xlane.xlu0 %7991
        %v7993 = vsel %vm1528, %v7966, 0.0
        %7994 = vadd.xlane.f32.xlu0 %v7993
        %v7995 = vpop.xlane.xlu0 %7994
        %v7996 = vsel %vm1528, %v7968, 0.0
        %7997 = vadd.xlane.f32.xlu0 %v7996
        %v7998 = vpop.xlane.xlu0 %7997
        %v7999 = vsel %vm1528, %v7970, 0.0
        %8000 = vadd.xlane.f32.xlu0 %v7999
        %v8001 = vpop.xlane.xlu0 %8000
        %v8002 = vsel %vm1528, %v7972, 0.0
        %8003 = vadd.xlane.f32.xlu0 %v8002
        %v8004 = vpop.xlane.xlu0 %8003
        %v8005 = vrcp.pop %v7983
        %v8006 = vrcp.pop %v7986
        %v8007 = vrcp.pop %v7989
        %v8008 = vrcp.pop %v7992
        %v8009 = vrcp.pop %v7995
        %v8010 = vrcp.pop %v7998
        %v8011 = vrcp.pop %v8001
        %v8012 = vrcp.pop %v8004
        %v8013 = vmul.f32 %v7934, %v8005
        %v8014 = vmul.f32 %v7936, %v8006
        %v8015 = vmul.f32 %v7938, %v8007
        %v8016 = vmul.f32 %v7940, %v8008
        %v8017 = vmul.f32 %v7942, %v8009
        %v8018 = vmul.f32 %v7944, %v8010
        %v8019 = vmul.f32 %v7946, %v8011
        %v8020 = vmul.f32 %v7948, %v8012
        %v8021 = vadd.f32 %v7753, %v2973
        %v8022 = vadd.f32 %v7759, %v2974
        %v8023 = vadd.f32 %v7765, %v2975
        %v8024 = vadd.f32 %v7771, %v2976
        %v8025 = vadd.f32 %v7777, %v2977
        %v8026 = vadd.f32 %v7783, %v2978
        %v8027 = vadd.f32 %v7789, %v2979
        %v8028 = vadd.f32 %v7795, %v2980
        %v8029 = vsel %vm1528, %v8021, -inf
        %8030 = vmax.xlane.f32.xlu0 %v8029
        %v8031 = vpop.xlane.xlu0 %8030
        %v8032 = vsel %vm1528, %v8022, -inf
        %8033 = vmax.xlane.f32.xlu0 %v8032
        %v8034 = vpop.xlane.xlu0 %8033
        %v8035 = vsel %vm1528, %v8023, -inf
        %8036 = vmax.xlane.f32.xlu0 %v8035
        %v8037 = vpop.xlane.xlu0 %8036
        %v8038 = vsel %vm1528, %v8024, -inf
        %8039 = vmax.xlane.f32.xlu0 %v8038
        %v8040 = vpop.xlane.xlu0 %8039
        %v8041 = vsel %vm1528, %v8025, -inf
        %8042 = vmax.xlane.f32.xlu0 %v8041
        %v8043 = vpop.xlane.xlu0 %8042
        %v8044 = vsel %vm1528, %v8026, -inf
        %8045 = vmax.xlane.f32.xlu0 %v8044
        %v8046 = vpop.xlane.xlu0 %8045
        %v8047 = vsel %vm1528, %v8027, -inf
        %8048 = vmax.xlane.f32.xlu0 %v8047
        %v8049 = vpop.xlane.xlu0 %8048
        %v8050 = vsel %vm1528, %v8028, -inf
        %8051 = vmax.xlane.f32.xlu0 %v8050
        %v8052 = vpop.xlane.xlu0 %8051
        %v8053 = vsub.f32 %v8021, %v8031
        %v8054 = vsub.f32 %v8022, %v8034
        %v8055 = vsub.f32 %v8023, %v8037
        %v8056 = vsub.f32 %v8024, %v8040
        %v8057 = vsub.f32 %v8025, %v8043
        %v8058 = vsub.f32 %v8026, %v8046
        %v8059 = vsub.f32 %v8027, %v8049
        %v8060 = vsub.f32 %v8028, %v8052
        %v8061 = vmul.f32 %v8053, 1.442695
        %v8062 = vpow.pop %v8061
        %v8063 = vmul.f32 %v8054, 1.442695
        %v8064 = vpow.pop %v8063
        %v8065 = vmul.f32 %v8055, 1.442695
        %v8066 = vpow.pop %v8065
        %v8067 = vmul.f32 %v8056, 1.442695
        %v8068 = vpow.pop %v8067
        %v8069 = vmul.f32 %v8057, 1.442695
        %v8070 = vpow.pop %v8069
        %v8071 = vmul.f32 %v8058, 1.442695
        %v8072 = vpow.pop %v8071
        %v8073 = vmul.f32 %v8059, 1.442695
        %v8074 = vpow.pop %v8073
        %v8075 = vmul.f32 %v8060, 1.442695
        %v8076 = vpow.pop %v8075
        %v8077 = vsel %vm1528, %v8062, 0.0
        %8078 = vadd.xlane.f32.xlu0 %v8077
        %v8079 = vpop.xlane.xlu0 %8078
        %v8080 = vsel %vm1528, %v8064, 0.0
        %8081 = vadd.xlane.f32.xlu0 %v8080
        %v8082 = vpop.xlane.xlu0 %8081
        %v8083 = vsel %vm1528, %v8066, 0.0
        %8084 = vadd.xlane.f32.xlu0 %v8083
        %v8085 = vpop.xlane.xlu0 %8084
        %v8086 = vsel %vm1528, %v8068, 0.0
        %8087 = vadd.xlane.f32.xlu0 %v8086
        %v8088 = vpop.xlane.xlu0 %8087
        %v8089 = vsel %vm1528, %v8070, 0.0
        %8090 = vadd.xlane.f32.xlu0 %v8089
        %v8091 = vpop.xlane.xlu0 %8090
        %v8092 = vsel %vm1528, %v8072, 0.0
        %8093 = vadd.xlane.f32.xlu0 %v8092
        %v8094 = vpop.xlane.xlu0 %8093
        %v8095 = vsel %vm1528, %v8074, 0.0
        %8096 = vadd.xlane.f32.xlu0 %v8095
        %v8097 = vpop.xlane.xlu0 %8096
        %v8098 = vsel %vm1528, %v8076, 0.0
        %8099 = vadd.xlane.f32.xlu0 %v8098
        %v8100 = vpop.xlane.xlu0 %8099
        %v8101 = vrcp.pop %v8079
        %v8102 = vrcp.pop %v8082
        %v8103 = vrcp.pop %v8085
        %v8104 = vrcp.pop %v8088
        %v8105 = vrcp.pop %v8091
        %v8106 = vrcp.pop %v8094
        %v8107 = vrcp.pop %v8097
        %v8108 = vrcp.pop %v8100
        %v8109 = vmul.f32 %v8062, %v8101
        %v8110 = vmul.f32 %v8064, %v8102
        %v8111 = vmul.f32 %v8066, %v8103
        %v8112 = vmul.f32 %v8068, %v8104
        %v8113 = vmul.f32 %v8070, %v8105
        %v8114 = vmul.f32 %v8072, %v8106
        %v8115 = vmul.f32 %v8074, %v8107
        %v8116 = vmul.f32 %v8076, %v8108
        %v8117 = vadd.f32 %v7753, %v3730
        %v8118 = vadd.f32 %v7759, %v3732
        %v8119 = vadd.f32 %v7765, %v3734
        %v8120 = vadd.f32 %v7771, %v3736
        %v8121 = vadd.f32 %v7777, %v3738
        %v8122 = vadd.f32 %v7783, %v3740
        %v8123 = vadd.f32 %v7789, %v3742
        %v8124 = vadd.f32 %v7795, %v3744
        %v8125 = vsel %vm1657, %v8117, -inf
        %8126 = vmax.xlane.f32.xlu0 %v8125
        %v8127 = vpop.xlane.xlu0 %8126
        %v8128 = vsel %vm1657, %v8118, -inf
        %8129 = vmax.xlane.f32.xlu0 %v8128
        %v8130 = vpop.xlane.xlu0 %8129
        %v8131 = vsel %vm1657, %v8119, -inf
        %8132 = vmax.xlane.f32.xlu0 %v8131
        %v8133 = vpop.xlane.xlu0 %8132
        %v8134 = vsel %vm1657, %v8120, -inf
        %8135 = vmax.xlane.f32.xlu0 %v8134
        %v8136 = vpop.xlane.xlu0 %8135
        %v8137 = vsel %vm1657, %v8121, -inf
        %8138 = vmax.xlane.f32.xlu0 %v8137
        %v8139 = vpop.xlane.xlu0 %8138
        %v8140 = vsel %vm1657, %v8122, -inf
        %8141 = vmax.xlane.f32.xlu0 %v8140
        %v8142 = vpop.xlane.xlu0 %8141
        %v8143 = vsel %vm1657, %v8123, -inf
        %8144 = vmax.xlane.f32.xlu0 %v8143
        %v8145 = vpop.xlane.xlu0 %8144
        %v8146 = vsel %vm1657, %v8124, -inf
        %8147 = vmax.xlane.f32.xlu0 %v8146
        %v8148 = vpop.xlane.xlu0 %8147
        %v8149 = vsub.f32 %v8117, %v8127
        %v8150 = vsub.f32 %v8118, %v8130
        %v8151 = vsub.f32 %v8119, %v8133
        %v8152 = vsub.f32 %v8120, %v8136
        %v8153 = vsub.f32 %v8121, %v8139
        %v8154 = vsub.f32 %v8122, %v8142
        %v8155 = vsub.f32 %v8123, %v8145
        %v8156 = vsub.f32 %v8124, %v8148
        %v8157 = vmul.f32 %v8149, 1.442695
        %v8158 = vpow.pop %v8157
        %v8159 = vmul.f32 %v8150, 1.442695
        %v8160 = vpow.pop %v8159
        %v8161 = vmul.f32 %v8151, 1.442695
        %v8162 = vpow.pop %v8161
        %v8163 = vmul.f32 %v8152, 1.442695
        %v8164 = vpow.pop %v8163
        %v8165 = vmul.f32 %v8153, 1.442695
        %v8166 = vpow.pop %v8165
        %v8167 = vmul.f32 %v8154, 1.442695
        %v8168 = vpow.pop %v8167
        %v8169 = vmul.f32 %v8155, 1.442695
        %v8170 = vpow.pop %v8169
        %v8171 = vmul.f32 %v8156, 1.442695
        %v8172 = vpow.pop %v8171
        %8181 = vrot.lane.b32.xlu0 %v8158, 64
        %v8182 = vpop.permute.xlu0 %8181
        %8183 = vrot.lane.b32.xlu0 %v8160, 64
        %v8184 = vpop.permute.xlu0 %8183
        %8185 = vrot.lane.b32.xlu0 %v8162, 64
        %v8186 = vpop.permute.xlu0 %8185
        %8187 = vrot.lane.b32.xlu0 %v8164, 64
        %v8188 = vpop.permute.xlu0 %8187
        %8189 = vrot.lane.b32.xlu0 %v8166, 64
        %v8190 = vpop.permute.xlu0 %8189
        %8191 = vrot.lane.b32.xlu0 %v8168, 64
        %v8192 = vpop.permute.xlu0 %8191
        %8193 = vrot.lane.b32.xlu0 %v8170, 64
        %v8194 = vpop.permute.xlu0 %8193
        %8195 = vrot.lane.b32.xlu0 %v8172, 64
        %v8196 = vpop.permute.xlu0 %8195
        %v8205 = vsel %vm1528, %v8182, 0.0
        %8206 = vadd.xlane.f32.xlu0 %v8205
        %v8207 = vpop.xlane.xlu0 %8206
        %v8208 = vsel %vm1528, %v8184, 0.0
        %8209 = vadd.xlane.f32.xlu0 %v8208
        %v8210 = vpop.xlane.xlu0 %8209
        %v8211 = vsel %vm1528, %v8186, 0.0
        %8212 = vadd.xlane.f32.xlu0 %v8211
        %v8213 = vpop.xlane.xlu0 %8212
        %v8214 = vsel %vm1528, %v8188, 0.0
        %8215 = vadd.xlane.f32.xlu0 %v8214
        %v8216 = vpop.xlane.xlu0 %8215
        %v8217 = vsel %vm1528, %v8190, 0.0
        %8218 = vadd.xlane.f32.xlu0 %v8217
        %v8219 = vpop.xlane.xlu0 %8218
        %v8220 = vsel %vm1528, %v8192, 0.0
        %8221 = vadd.xlane.f32.xlu0 %v8220
        %v8222 = vpop.xlane.xlu0 %8221
        %v8223 = vsel %vm1528, %v8194, 0.0
        %8224 = vadd.xlane.f32.xlu0 %v8223
        %v8225 = vpop.xlane.xlu0 %8224
        %v8226 = vsel %vm1528, %v8196, 0.0
        %8227 = vadd.xlane.f32.xlu0 %v8226
        %v8228 = vpop.xlane.xlu0 %8227
        %v8229 = vrcp.pop %v8207
        %v8230 = vrcp.pop %v8210
        %v8231 = vrcp.pop %v8213
        %v8232 = vrcp.pop %v8216
        %v8233 = vrcp.pop %v8219
        %v8234 = vrcp.pop %v8222
        %v8235 = vrcp.pop %v8225
        %v8236 = vrcp.pop %v8228
        %v8237 = vmul.f32 %v8158, %v8229
        %v8238 = vmul.f32 %v8160, %v8230
        %v8239 = vmul.f32 %v8162, %v8231
        %v8240 = vmul.f32 %v8164, %v8232
        %v8241 = vmul.f32 %v8166, %v8233
        %v8242 = vmul.f32 %v8168, %v8234
        %v8243 = vmul.f32 %v8170, %v8235
        %v8244 = vmul.f32 %v8172, %v8236
        %v8245 = vsel %vm1528, %v7885, %v8013
        %v8246 = vsel %vm1528, %v7886, %v8014
        %v8247 = vsel %vm1528, %v7887, %v8015
        %v8248 = vsel %vm1528, %v7888, %v8016
        %v8249 = vsel %vm1528, %v7889, %v8017
        %v8250 = vsel %vm1528, %v7890, %v8018
        %v8251 = vsel %vm1528, %v7891, %v8019
        %v8252 = vsel %vm1528, %v7892, %v8020
        %v8253 = vsel %vm1528, %v8109, %v8237
        %v8254 = vsel %vm1528, %v8110, %v8238
        %v8255 = vsel %vm1528, %v8111, %v8239
        %v8256 = vsel %vm1528, %v8112, %v8240
        %v8257 = vsel %vm1528, %v8113, %v8241
        %v8258 = vsel %vm1528, %v8114, %v8242
        %v8259 = vsel %vm1528, %v8115, %v8243
        %v8260 = vsel %vm1528, %v8116, %v8244
        %8293 = vrot.lane.b32.xlu0 %v7468, 64
        %v8294 = vpop.permute.xlu0 %8293
        %8295 = vrot.lane.b32.xlu0 %v7469, 64
        %v8296 = vpop.permute.xlu0 %8295
        %8297 = vrot.lane.b32.xlu0 %v7470, 64
        %v8298 = vpop.permute.xlu0 %8297
        %8299 = vrot.lane.b32.xlu0 %v7471, 64
        %v8300 = vpop.permute.xlu0 %8299
        %8301 = vrot.lane.b32.xlu0 %v7472, 64
        %v8302 = vpop.permute.xlu0 %8301
        %8303 = vrot.lane.b32.xlu0 %v7473, 64
        %v8304 = vpop.permute.xlu0 %8303
        %8305 = vrot.lane.b32.xlu0 %v7474, 64
        %v8306 = vpop.permute.xlu0 %8305
        %8307 = vrot.lane.b32.xlu0 %v7475, 64
        %v8308 = vpop.permute.xlu0 %8307
        %8309 = vrot.lane.b32.xlu0 %v7476, 64
        %v8310 = vpop.permute.xlu0 %8309
        %8311 = vrot.lane.b32.xlu0 %v7477, 64
        %v8312 = vpop.permute.xlu0 %8311
        %8313 = vrot.lane.b32.xlu0 %v7478, 64
        %v8314 = vpop.permute.xlu0 %8313
        %8315 = vrot.lane.b32.xlu0 %v7479, 64
        %v8316 = vpop.permute.xlu0 %8315
        %8317 = vrot.lane.b32.xlu0 %v7480, 64
        %v8318 = vpop.permute.xlu0 %8317
        %8319 = vrot.lane.b32.xlu0 %v7481, 64
        %v8320 = vpop.permute.xlu0 %8319
        %8321 = vrot.lane.b32.xlu0 %v7482, 64
        %v8322 = vpop.permute.xlu0 %8321
        %8323 = vrot.lane.b32.xlu0 %v7483, 64
        %v8324 = vpop.permute.xlu0 %8323
        %8325 = vrot.lane.b32.xlu0 %v7484, 64
        %v8326 = vpop.permute.xlu0 %8325
        %8327 = vrot.lane.b32.xlu0 %v7485, 64
        %v8328 = vpop.permute.xlu0 %8327
        %8329 = vrot.lane.b32.xlu0 %v7486, 64
        %v8330 = vpop.permute.xlu0 %8329
        %8331 = vrot.lane.b32.xlu0 %v7487, 64
        %v8332 = vpop.permute.xlu0 %8331
        %8333 = vrot.lane.b32.xlu0 %v7488, 64
        %v8334 = vpop.permute.xlu0 %8333
        %8335 = vrot.lane.b32.xlu0 %v7489, 64
        %v8336 = vpop.permute.xlu0 %8335
        %8337 = vrot.lane.b32.xlu0 %v7490, 64
        %v8338 = vpop.permute.xlu0 %8337
        %8339 = vrot.lane.b32.xlu0 %v7491, 64
        %v8340 = vpop.permute.xlu0 %8339
        %8341 = vrot.lane.b32.xlu0 %v7492, 64
        %v8342 = vpop.permute.xlu0 %8341
        %8343 = vrot.lane.b32.xlu0 %v7493, 64
        %v8344 = vpop.permute.xlu0 %8343
        %8345 = vrot.lane.b32.xlu0 %v7494, 64
        %v8346 = vpop.permute.xlu0 %8345
        %8347 = vrot.lane.b32.xlu0 %v7495, 64
        %v8348 = vpop.permute.xlu0 %8347
        %8349 = vrot.lane.b32.xlu0 %v7496, 64
        %v8350 = vpop.permute.xlu0 %8349
        %8351 = vrot.lane.b32.xlu0 %v7497, 64
        %v8352 = vpop.permute.xlu0 %8351
        %8353 = vrot.lane.b32.xlu0 %v7498, 64
        %v8354 = vpop.permute.xlu0 %8353
        %8355 = vrot.lane.b32.xlu0 %v7499, 64
        %v8356 = vpop.permute.xlu0 %8355
        %v8357 = vsel %vm830, %v8294, 0
        %v8359 = vsel %vm830, %v8296, 0
        %v8361 = vsel %vm830, %v8298, 0
        %v8363 = vsel %vm830, %v8300, 0
        %v8365 = vsel %vm830, %v8302, 0
        %v8367 = vsel %vm830, %v8304, 0
        %v8369 = vsel %vm830, %v8306, 0
        %v8371 = vsel %vm830, %v8308, 0
        %v8373 = vsel %vm830, %v8310, 0
        %v8375 = vsel %vm830, %v8312, 0
        %v8377 = vsel %vm830, %v8314, 0
        %v8379 = vsel %vm830, %v8316, 0
        %v8381 = vsel %vm830, %v8318, 0
        %v8383 = vsel %vm830, %v8320, 0
        %v8385 = vsel %vm830, %v8322, 0
        %v8387 = vsel %vm830, %v8324, 0
        %v8389 = vsel %vm830, %v8326, 0
        %v8391 = vsel %vm830, %v8328, 0
        %v8393 = vsel %vm830, %v8330, 0
        %v8395 = vsel %vm830, %v8332, 0
        %v8397 = vsel %vm830, %v8334, 0
        %v8399 = vsel %vm830, %v8336, 0
        %v8401 = vsel %vm830, %v8338, 0
        %v8403 = vsel %vm830, %v8340, 0
        %v8405 = vsel %vm830, %v8342, 0
        %v8407 = vsel %vm830, %v8344, 0
        %v8409 = vsel %vm830, %v8346, 0
        %v8411 = vsel %vm830, %v8348, 0
        %v8413 = vsel %vm830, %v8350, 0
        %v8415 = vsel %vm830, %v8352, 0
        %v8417 = vsel %vm830, %v8354, 0
        %v8419 = vsel %vm830, %v8356, 0
        %8421 = vmatprep.subr.mxu0 0.0
        %8422 = vmatpush1.msra.mxu0 %v7432
        %8423 = vmatprep.subr.mxu0 0.0
        %8424 = vmatpush1.msra.mxu0 %v7433
        %8425 = vmatprep.subr.mxu0 0.0
        %8426 = vmatpush1.msra.mxu0 %v7434
        %8427 = vmatprep.subr.mxu0 0.0
        %8428 = vmatpush1.msra.mxu0 %v7435
        %8429 = vmatprep.subr.mxu0 0.0
        %8430 = vmatpush1.msra.mxu0 0.0
        %8431 = vmatprep.subr.mxu0 0.0
        %8432 = vmatpush1.msra.mxu0 0.0
        %8433 = vmatprep.subr.mxu0 0.0
        %8434 = vmatpush1.msra.mxu0 0.0
        %8435 = vmatprep.subr.mxu0 0.0
        %8436 = vmatpush1.msra.mxu0 0.0
        %8437 = vmatprep.subr.mxu0 0.0
        %8438 = vmatpush1.msra.mxu0 0.0
        %8439 = vmatprep.subr.mxu0 0.0
        %8440 = vmatpush1.msra.mxu0 0.0
        %8441 = vmatprep.subr.mxu0 0.0
        %8442 = vmatpush1.msra.mxu0 0.0
        %8443 = vmatprep.subr.mxu0 0.0
        %8444 = vmatpush1.msra.mxu0 0.0
        %8445 = vmatprep.subr.mxu0 0.0
        %8446 = vmatpush1.msra.mxu0 0.0
        %8447 = vmatprep.subr.mxu0 0.0
        %8448 = vmatpush1.msra.mxu0 0.0
        %8449 = vmatprep.subr.mxu0 0.0
        %8450 = vmatpush1.msra.mxu0 0.0
        %8451 = vmatprep.subr.mxu0 0.0
        %8452 = vmatpush1.msra.mxu0 0.0
        %8453 = vmatprep.subr.mxu0 0.0
        %8454 = vmatpush1.msra.mxu0 0.0
        %8455 = vmatprep.subr.mxu0 0.0
        %8456 = vmatpush1.msra.mxu0 0.0
        %8457 = vmatprep.subr.mxu0 0.0
        %8458 = vmatpush1.msra.mxu0 0.0
        %8459 = vmatprep.subr.mxu0 0.0
        %8460 = vmatpush1.msra.mxu0 0.0
        %8461 = vmatprep.subr.mxu0 0.0
        %8462 = vmatpush1.msra.mxu0 0.0
        %8463 = vmatprep.subr.mxu0 0.0
        %8464 = vmatpush1.msra.mxu0 0.0
        %8465 = vmatprep.subr.mxu0 0.0
        %8466 = vmatpush1.msra.mxu0 0.0
        %8467 = vmatprep.subr.mxu0 0.0
        %8468 = vmatpush1.msra.mxu0 0.0
        %8469 = vmatprep.subr.mxu0 0.0
        %8470 = vmatpush1.msra.mxu0 0.0
        %8471 = vmatprep.subr.mxu0 0.0
        %8472 = vmatpush1.msra.mxu0 0.0
        %8473 = vmatprep.subr.mxu0 0.0
        %8474 = vmatpush1.msra.mxu0 0.0
        %8475 = vmatprep.subr.mxu0 0.0
        %8476 = vmatpush1.msra.mxu0 0.0
        %8477 = vmatprep.subr.mxu0 0.0
        %8478 = vmatpush1.msra.mxu0 0.0
        %8479 = vmatprep.subr.mxu0 0.0
        %8480 = vmatpush1.msra.mxu0 0.0
        %8481 = vmatprep.subr.mxu0 0.0
        %8482 = vmatpush1.msra.mxu0 0.0
        %8483 = vmatprep.subr.mxu0 0.0
        %8484 = vmatpush1.msra.mxu0 0.0
        %8485 = vmatprep.mubr.f32.mxu0 0.0
        %8486 = vmatmul.mubr.f32.gmra.mrb[0].mxu0 %v8357
        %v8487 = vpop.f32.mrb[0].mxu0
        %v8488 = vadd.f32 0.0, %v8487
        %v8489 = vpop.f32.mrb[0].mxu0
        %8490 = vmatprep.mubr.f32.mxu0 0.0
        %8491 = vmatmul.mubr.f32.gmra.mrb[0].mxu0 %v8359
        %v8492 = vpop.f32.mrb[0].mxu0
        %v8493 = vadd.f32 0.0, %v8492
        %v8494 = vpop.f32.mrb[0].mxu0
        %8495 = vmatprep.mubr.f32.mxu0 0.0
        %8496 = vmatmul.mubr.f32.gmra.mrb[0].mxu0 %v8361
        %v8497 = vpop.f32.mrb[0].mxu0
        %v8498 = vadd.f32 0.0, %v8497
        %v8499 = vpop.f32.mrb[0].mxu0
        %8500 = vmatprep.mubr.f32.mxu0 0.0
        %8501 = vmatmul.mubr.f32.gmra.mrb[0].mxu0 %v8363
        %v8502 = vpop.f32.mrb[0].mxu0
        %v8503 = vadd.f32 0.0, %v8502
        %v8504 = vpop.f32.mrb[0].mxu0
        %8505 = vmatprep.mubr.f32.mxu0 0.0
        %8506 = vmatmul.mubr.f32.gmra.mrb[0].mxu0 %v8365
        %v8507 = vpop.f32.mrb[0].mxu0
        %v8508 = vadd.f32 0.0, %v8507
        %v8509 = vpop.f32.mrb[0].mxu0
        %8510 = vmatprep.mubr.f32.mxu0 0.0
        %8511 = vmatmul.mubr.f32.gmra.mrb[0].mxu0 %v8367
        %v8512 = vpop.f32.mrb[0].mxu0
        %v8513 = vadd.f32 0.0, %v8512
        %v8514 = vpop.f32.mrb[0].mxu0
        %8515 = vmatprep.mubr.f32.mxu0 0.0
        %8516 = vmatmul.mubr.f32.gmra.mrb[0].mxu0 %v8369
        %v8517 = vpop.f32.mrb[0].mxu0
        %v8518 = vadd.f32 0.0, %v8517
        %v8519 = vpop.f32.mrb[0].mxu0
        %8520 = vmatprep.mubr.f32.mxu0 0.0
        %8521 = vmatmul.mubr.f32.gmra.mrb[0].mxu0 %v8371
        %v8522 = vpop.f32.mrb[0].mxu0
        %v8523 = vadd.f32 0.0, %v8522
        %v8524 = vpop.f32.mrb[0].mxu0
        %8525 = vmatprep.mubr.f32.mxu0 0.0
        %8526 = vmatmul.mubr.f32.gmra.mrb[0].mxu0 %v8373
        %v8527 = vpop.f32.mrb[0].mxu0
        %v8528 = vadd.f32 0.0, %v8527
        %v8529 = vpop.f32.mrb[0].mxu0
        %8530 = vmatprep.mubr.f32.mxu0 0.0
        %8531 = vmatmul.mubr.f32.gmra.mrb[0].mxu0 %v8375
        %v8532 = vpop.f32.mrb[0].mxu0
        %v8533 = vadd.f32 0.0, %v8532
        %v8534 = vpop.f32.mrb[0].mxu0
        %8535 = vmatprep.mubr.f32.mxu0 0.0
        %8536 = vmatmul.mubr.f32.gmra.mrb[0].mxu0 %v8377
        %v8537 = vpop.f32.mrb[0].mxu0
        %v8538 = vadd.f32 0.0, %v8537
        %v8539 = vpop.f32.mrb[0].mxu0
        %8540 = vmatprep.mubr.f32.mxu0 0.0
        %8541 = vmatmul.mubr.f32.gmra.mrb[0].mxu0 %v8379
        %v8542 = vpop.f32.mrb[0].mxu0
        %v8543 = vadd.f32 0.0, %v8542
        %v8544 = vpop.f32.mrb[0].mxu0
        %8545 = vmatprep.mubr.f32.mxu0 0.0
        %8546 = vmatmul.mubr.f32.gmra.mrb[0].mxu0 %v8381
        %v8547 = vpop.f32.mrb[0].mxu0
        %v8548 = vadd.f32 0.0, %v8547
        %v8549 = vpop.f32.mrb[0].mxu0
        %8550 = vmatprep.mubr.f32.mxu0 0.0
        %8551 = vmatmul.mubr.f32.gmra.mrb[0].mxu0 %v8383
        %v8552 = vpop.f32.mrb[0].mxu0
        %v8553 = vadd.f32 0.0, %v8552
        %v8554 = vpop.f32.mrb[0].mxu0
        %8555 = vmatprep.mubr.f32.mxu0 0.0
        %8556 = vmatmul.mubr.f32.gmra.mrb[0].mxu0 %v8385
        %v8557 = vpop.f32.mrb[0].mxu0
        %v8558 = vadd.f32 0.0, %v8557
        %v8559 = vpop.f32.mrb[0].mxu0
        %8560 = vmatprep.mubr.f32.mxu0 0.0
        %8561 = vmatmul.mubr.f32.gmra.mrb[0].mxu0 %v8387
        %v8562 = vpop.f32.mrb[0].mxu0
        %v8563 = vadd.f32 0.0, %v8562
        %v8564 = vpop.f32.mrb[0].mxu0
        %8565 = vmatprep.mubr.f32.mxu0 0.0
        %8566 = vmatmul.mubr.f32.gmra.mrb[0].mxu0 %v8389
        %v8567 = vpop.f32.mrb[0].mxu0
        %v8568 = vadd.f32 0.0, %v8567
        %v8569 = vpop.f32.mrb[0].mxu0
        %8570 = vmatprep.mubr.f32.mxu0 0.0
        %8571 = vmatmul.mubr.f32.gmra.mrb[0].mxu0 %v8391
        %v8572 = vpop.f32.mrb[0].mxu0
        %v8573 = vadd.f32 0.0, %v8572
        %v8574 = vpop.f32.mrb[0].mxu0
        %8575 = vmatprep.mubr.f32.mxu0 0.0
        %8576 = vmatmul.mubr.f32.gmra.mrb[0].mxu0 %v8393
        %v8577 = vpop.f32.mrb[0].mxu0
        %v8578 = vadd.f32 0.0, %v8577
        %v8579 = vpop.f32.mrb[0].mxu0
        %8580 = vmatprep.mubr.f32.mxu0 0.0
        %8581 = vmatmul.mubr.f32.gmra.mrb[0].mxu0 %v8395
        %v8582 = vpop.f32.mrb[0].mxu0
        %v8583 = vadd.f32 0.0, %v8582
        %v8584 = vpop.f32.mrb[0].mxu0
        %8585 = vmatprep.mubr.f32.mxu0 0.0
        %8586 = vmatmul.mubr.f32.gmra.mrb[0].mxu0 %v8397
        %v8587 = vpop.f32.mrb[0].mxu0
        %v8588 = vadd.f32 0.0, %v8587
        %v8589 = vpop.f32.mrb[0].mxu0
        %8590 = vmatprep.mubr.f32.mxu0 0.0
        %8591 = vmatmul.mubr.f32.gmra.mrb[0].mxu0 %v8399
        %v8592 = vpop.f32.mrb[0].mxu0
        %v8593 = vadd.f32 0.0, %v8592
        %v8594 = vpop.f32.mrb[0].mxu0
        %8595 = vmatprep.mubr.f32.mxu0 0.0
        %8596 = vmatmul.mubr.f32.gmra.mrb[0].mxu0 %v8401
        %v8597 = vpop.f32.mrb[0].mxu0
        %v8598 = vadd.f32 0.0, %v8597
        %v8599 = vpop.f32.mrb[0].mxu0
        %8600 = vmatprep.mubr.f32.mxu0 0.0
        %8601 = vmatmul.mubr.f32.gmra.mrb[0].mxu0 %v8403
        %v8602 = vpop.f32.mrb[0].mxu0
        %v8603 = vadd.f32 0.0, %v8602
        %v8604 = vpop.f32.mrb[0].mxu0
        %8605 = vmatprep.mubr.f32.mxu0 0.0
        %8606 = vmatmul.mubr.f32.gmra.mrb[0].mxu0 %v8405
        %v8607 = vpop.f32.mrb[0].mxu0
        %v8608 = vadd.f32 0.0, %v8607
        %v8609 = vpop.f32.mrb[0].mxu0
        %8610 = vmatprep.mubr.f32.mxu0 0.0
        %8611 = vmatmul.mubr.f32.gmra.mrb[0].mxu0 %v8407
        %v8612 = vpop.f32.mrb[0].mxu0
        %v8613 = vadd.f32 0.0, %v8612
        %v8614 = vpop.f32.mrb[0].mxu0
        %8615 = vmatprep.mubr.f32.mxu0 0.0
        %8616 = vmatmul.mubr.f32.gmra.mrb[0].mxu0 %v8409
        %v8617 = vpop.f32.mrb[0].mxu0
        %v8618 = vadd.f32 0.0, %v8617
        %v8619 = vpop.f32.mrb[0].mxu0
        %8620 = vmatprep.mubr.f32.mxu0 0.0
        %8621 = vmatmul.mubr.f32.gmra.mrb[0].mxu0 %v8411
        %v8622 = vpop.f32.mrb[0].mxu0
        %v8623 = vadd.f32 0.0, %v8622
        %v8624 = vpop.f32.mrb[0].mxu0
        %8625 = vmatprep.mubr.f32.mxu0 0.0
        %8626 = vmatmul.mubr.f32.gmra.mrb[0].mxu0 %v8413
        %v8627 = vpop.f32.mrb[0].mxu0
        %v8628 = vadd.f32 0.0, %v8627
        %v8629 = vpop.f32.mrb[0].mxu0
        %8630 = vmatprep.mubr.f32.mxu0 0.0
        %8631 = vmatmul.mubr.f32.gmra.mrb[0].mxu0 %v8415
        %v8632 = vpop.f32.mrb[0].mxu0
        %v8633 = vadd.f32 0.0, %v8632
        %v8634 = vpop.f32.mrb[0].mxu0
        %8635 = vmatprep.mubr.f32.mxu0 0.0
        %8636 = vmatmul.mubr.f32.gmra.mrb[0].mxu0 %v8417
        %v8637 = vpop.f32.mrb[0].mxu0
        %v8638 = vadd.f32 0.0, %v8637
        %v8639 = vpop.f32.mrb[0].mxu0
        %8640 = vmatprep.mubr.f32.mxu0 0.0
        %8641 = vmatmul.mubr.f32.gmra.mrb[0].mxu0 %v8419
        %v8642 = vpop.f32.mrb[0].mxu0
        %v8643 = vadd.f32 0.0, %v8642
        %v8644 = vpop.f32.mrb[0].mxu0
        %8645 = vdwg.mxu0
        %8646 = vmatprep.subr.mxu0 0.0
        %8647 = vmatpush1.msra.mxu0 %v8488
        %8648 = vmatprep.subr.mxu0 0.0
        %8649 = vmatpush1.msra.mxu0 %v8493
        %8650 = vmatprep.subr.mxu0 0.0
        %8651 = vmatpush1.msra.mxu0 %v8498
        %8652 = vmatprep.subr.mxu0 0.0
        %8653 = vmatpush1.msra.mxu0 %v8503
        %8654 = vmatprep.subr.mxu0 0.0
        %8655 = vmatpush1.msra.mxu0 %v8508
        %8656 = vmatprep.subr.mxu0 0.0
        %8657 = vmatpush1.msra.mxu0 %v8513
        %8658 = vmatprep.subr.mxu0 0.0
        %8659 = vmatpush1.msra.mxu0 %v8518
        %8660 = vmatprep.subr.mxu0 0.0
        %8661 = vmatpush1.msra.mxu0 %v8523
        %8662 = vmatprep.subr.mxu0 0.0
        %8663 = vmatpush1.msra.mxu0 %v8528
        %8664 = vmatprep.subr.mxu0 0.0
        %8665 = vmatpush1.msra.mxu0 %v8533
        %8666 = vmatprep.subr.mxu0 0.0
        %8667 = vmatpush1.msra.mxu0 %v8538
        %8668 = vmatprep.subr.mxu0 0.0
        %8669 = vmatpush1.msra.mxu0 %v8543
        %8670 = vmatprep.subr.mxu0 0.0
        %8671 = vmatpush1.msra.mxu0 %v8548
        %8672 = vmatprep.subr.mxu0 0.0
        %8673 = vmatpush1.msra.mxu0 %v8553
        %8674 = vmatprep.subr.mxu0 0.0
        %8675 = vmatpush1.msra.mxu0 %v8558
        %8676 = vmatprep.subr.mxu0 0.0
        %8677 = vmatpush1.msra.mxu0 %v8563
        %8678 = vmatprep.subr.mxu0 0.0
        %8679 = vmatpush1.msra.mxu0 %v8568
        %8680 = vmatprep.subr.mxu0 0.0
        %8681 = vmatpush1.msra.mxu0 %v8573
        %8682 = vmatprep.subr.mxu0 0.0
        %8683 = vmatpush1.msra.mxu0 %v8578
        %8684 = vmatprep.subr.mxu0 0.0
        %8685 = vmatpush1.msra.mxu0 %v8583
        %8686 = vmatprep.subr.mxu0 0.0
        %8687 = vmatpush1.msra.mxu0 %v8588
        %8688 = vmatprep.subr.mxu0 0.0
        %8689 = vmatpush1.msra.mxu0 %v8593
        %8690 = vmatprep.subr.mxu0 0.0
        %8691 = vmatpush1.msra.mxu0 %v8598
        %8692 = vmatprep.subr.mxu0 0.0
        %8693 = vmatpush1.msra.mxu0 %v8603
        %8694 = vmatprep.subr.mxu0 0.0
        %8695 = vmatpush1.msra.mxu0 %v8608
        %8696 = vmatprep.subr.mxu0 0.0
        %8697 = vmatpush1.msra.mxu0 %v8613
        %8698 = vmatprep.subr.mxu0 0.0
        %8699 = vmatpush1.msra.mxu0 %v8618
        %8700 = vmatprep.subr.mxu0 0.0
        %8701 = vmatpush1.msra.mxu0 %v8623
        %8702 = vmatprep.subr.mxu0 0.0
        %8703 = vmatpush1.msra.mxu0 %v8628
        %8704 = vmatprep.subr.mxu0 0.0
        %8705 = vmatpush1.msra.mxu0 %v8633
        %8706 = vmatprep.subr.mxu0 0.0
        %8707 = vmatpush1.msra.mxu0 %v8638
        %8708 = vmatprep.subr.mxu0 0.0
        %8709 = vmatpush1.msra.mxu0 %v8643
        %8710 = vmatprep.mubr.f32.mxu0 %v8253
        %8711 = vmatmul.mubr.f32.gmra.mrb[0].mxu0 %v8245
        %v8712 = vpop.f32.mrb[0].mxu0
        %v8713 = vadd.f32 0.0, %v8712
        %v8714 = vpop.f32.mrb[0].mxu0
        %8715 = vmatprep.mubr.f32.mxu0 %v8254
        %8716 = vmatmul.mubr.f32.gmra.mrb[0].mxu0 %v8246
        %v8717 = vpop.f32.mrb[0].mxu0
        %v8718 = vadd.f32 0.0, %v8717
        %v8719 = vpop.f32.mrb[0].mxu0
        %8720 = vmatprep.mubr.f32.mxu0 %v8255
        %8721 = vmatmul.mubr.f32.gmra.mrb[0].mxu0 %v8247
        %v8722 = vpop.f32.mrb[0].mxu0
        %v8723 = vadd.f32 0.0, %v8722
        %v8724 = vpop.f32.mrb[0].mxu0
        %8725 = vmatprep.mubr.f32.mxu0 %v8256
        %8726 = vmatmul.mubr.f32.gmra.mrb[0].mxu0 %v8248
        %v8727 = vpop.f32.mrb[0].mxu0
        %v8728 = vadd.f32 0.0, %v8727
        %v8729 = vpop.f32.mrb[0].mxu0
        %8730 = vmatprep.mubr.f32.mxu0 %v8257
        %8731 = vmatmul.mubr.f32.gmra.mrb[0].mxu0 %v8249
        %v8732 = vpop.f32.mrb[0].mxu0
        %v8733 = vadd.f32 0.0, %v8732
        %v8734 = vpop.f32.mrb[0].mxu0
        %8735 = vmatprep.mubr.f32.mxu0 %v8258
        %8736 = vmatmul.mubr.f32.gmra.mrb[0].mxu0 %v8250
        %v8737 = vpop.f32.mrb[0].mxu0
        %v8738 = vadd.f32 0.0, %v8737
        %v8739 = vpop.f32.mrb[0].mxu0
        %8740 = vmatprep.mubr.f32.mxu0 %v8259
        %8741 = vmatmul.mubr.f32.gmra.mrb[0].mxu0 %v8251
        %v8742 = vpop.f32.mrb[0].mxu0
        %v8743 = vadd.f32 0.0, %v8742
        %v8744 = vpop.f32.mrb[0].mxu0
        %8745 = vmatprep.mubr.f32.mxu0 %v8260
        %8746 = vmatmul.mubr.f32.gmra.mrb[0].mxu0 %v8252
        %v8747 = vpop.f32.mrb[0].mxu0
        %v8748 = vadd.f32 0.0, %v8747
        %v8749 = vpop.f32.mrb[0].mxu0
        %8750 = vdwg.mxu0
        %v8751 = vadd.f32 %v7145, %v8713
        %v8752 = vadd.f32 %v7146, %v8718
        %v8753 = vadd.f32 %v7147, %v8723
        %v8754 = vadd.f32 %v7148, %v8728
        %v8755 = vadd.f32 %v7149, %v8733
        %v8756 = vadd.f32 %v7150, %v8738
        %v8757 = vadd.f32 %v7151, %v8743
        %v8758 = vadd.f32 %v7152, %v8748
        %s8759 = scalar_lea.vmem %s14, 3
        %v8760 = vld [vmem:[%s8759] sm:$0x1]
        %v8762 = vlaneseq
        %v8763 = vshrl.u32 %v8762, 7
        %v8764 = vsub.s32 0, %v8763
        %v8765 = vrot.slane %v8760, %v8764
        %v8767 = vadd.f32 %v8751, %v8765
        %v8768 = vadd.f32 %v8752, %v8765
        %v8769 = vadd.f32 %v8753, %v8765
        %v8770 = vadd.f32 %v8754, %v8765
        %v8771 = vadd.f32 %v8755, %v8765
        %v8772 = vadd.f32 %v8756, %v8765
        %v8773 = vadd.f32 %v8757, %v8765
        %v8774 = vadd.f32 %v8758, %v8765
        %s8775 = scalar_lea.vmem %s15, 3
        %v8776 = vld [vmem:[%s8775] sm:$0x1]
        %s8777 = scalar_lea.vmem %s16, 3
        %v8778 = vld [vmem:[%s8777] sm:$0x1]
        %v8779 = vsel %vm830, %v8767, 0.0
        %8780 = vadd.xlane.f32.xlu0 %v8779
        %v8781 = vpop.xlane.xlu0 %8780
        %v8782 = vsel %vm830, %v8768, 0.0
        %8783 = vadd.xlane.f32.xlu0 %v8782
        %v8784 = vpop.xlane.xlu0 %8783
        %v8785 = vsel %vm830, %v8769, 0.0
        %8786 = vadd.xlane.f32.xlu0 %v8785
        %v8787 = vpop.xlane.xlu0 %8786
        %v8788 = vsel %vm830, %v8770, 0.0
        %8789 = vadd.xlane.f32.xlu0 %v8788
        %v8790 = vpop.xlane.xlu0 %8789
        %v8791 = vsel %vm830, %v8771, 0.0
        %8792 = vadd.xlane.f32.xlu0 %v8791
        %v8793 = vpop.xlane.xlu0 %8792
        %v8794 = vsel %vm830, %v8772, 0.0
        %8795 = vadd.xlane.f32.xlu0 %v8794
        %v8796 = vpop.xlane.xlu0 %8795
        %v8797 = vsel %vm830, %v8773, 0.0
        %8798 = vadd.xlane.f32.xlu0 %v8797
        %v8799 = vpop.xlane.xlu0 %8798
        %v8800 = vsel %vm830, %v8774, 0.0
        %8801 = vadd.xlane.f32.xlu0 %v8800
        %v8802 = vpop.xlane.xlu0 %8801
        %v8803 = vmul.f32 %v8781, %v855
        %v8804 = vmul.f32 %v8784, %v855
        %v8805 = vmul.f32 %v8787, %v855
        %v8806 = vmul.f32 %v8790, %v855
        %v8807 = vmul.f32 %v8793, %v855
        %v8808 = vmul.f32 %v8796, %v855
        %v8809 = vmul.f32 %v8799, %v855
        %v8810 = vmul.f32 %v8802, %v855
        %v8811 = vsub.f32 %v8767, %v8803
        %v8812 = vsub.f32 %v8768, %v8804
        %v8813 = vsub.f32 %v8769, %v8805
        %v8814 = vsub.f32 %v8770, %v8806
        %v8815 = vsub.f32 %v8771, %v8807
        %v8816 = vsub.f32 %v8772, %v8808
        %v8817 = vsub.f32 %v8773, %v8809
        %v8818 = vsub.f32 %v8774, %v8810
        %v8819 = vmul.f32 %v8811, %v8811
        %v8820 = vmul.f32 %v8812, %v8812
        %v8821 = vmul.f32 %v8813, %v8813
        %v8822 = vmul.f32 %v8814, %v8814
        %v8823 = vmul.f32 %v8815, %v8815
        %v8824 = vmul.f32 %v8816, %v8816
        %v8825 = vmul.f32 %v8817, %v8817
        %v8826 = vmul.f32 %v8818, %v8818
        %v8827 = vsel %vm830, %v8819, 0.0
        %8828 = vadd.xlane.f32.xlu0 %v8827
        %v8829 = vpop.xlane.xlu0 %8828
        %v8830 = vsel %vm830, %v8820, 0.0
        %8831 = vadd.xlane.f32.xlu0 %v8830
        %v8832 = vpop.xlane.xlu0 %8831
        %v8833 = vsel %vm830, %v8821, 0.0
        %8834 = vadd.xlane.f32.xlu0 %v8833
        %v8835 = vpop.xlane.xlu0 %8834
        %v8836 = vsel %vm830, %v8822, 0.0
        %8837 = vadd.xlane.f32.xlu0 %v8836
        %v8838 = vpop.xlane.xlu0 %8837
        %v8839 = vsel %vm830, %v8823, 0.0
        %8840 = vadd.xlane.f32.xlu0 %v8839
        %v8841 = vpop.xlane.xlu0 %8840
        %v8842 = vsel %vm830, %v8824, 0.0
        %8843 = vadd.xlane.f32.xlu0 %v8842
        %v8844 = vpop.xlane.xlu0 %8843
        %v8845 = vsel %vm830, %v8825, 0.0
        %8846 = vadd.xlane.f32.xlu0 %v8845
        %v8847 = vpop.xlane.xlu0 %8846
        %v8848 = vsel %vm830, %v8826, 0.0
        %8849 = vadd.xlane.f32.xlu0 %v8848
        %v8850 = vpop.xlane.xlu0 %8849
        %v8851 = vmul.f32 %v8829, %v855
        %v8852 = vmul.f32 %v8832, %v855
        %v8853 = vmul.f32 %v8835, %v855
        %v8854 = vmul.f32 %v8838, %v855
        %v8855 = vmul.f32 %v8841, %v855
        %v8856 = vmul.f32 %v8844, %v855
        %v8857 = vmul.f32 %v8847, %v855
        %v8858 = vmul.f32 %v8850, %v855
        %v8859 = vadd.f32 %v8851, 1e-05
        %v8860 = vadd.f32 %v8852, 1e-05
        %v8861 = vadd.f32 %v8853, 1e-05
        %v8862 = vadd.f32 %v8854, 1e-05
        %v8863 = vadd.f32 %v8855, 1e-05
        %v8864 = vadd.f32 %v8856, 1e-05
        %v8865 = vadd.f32 %v8857, 1e-05
        %v8866 = vadd.f32 %v8858, 1e-05
        %v8867 = vrsqrt.pop %v8859
        %v8868 = vrsqrt.pop %v8860
        %v8869 = vrsqrt.pop %v8861
        %v8870 = vrsqrt.pop %v8862
        %v8871 = vrsqrt.pop %v8863
        %v8872 = vrsqrt.pop %v8864
        %v8873 = vrsqrt.pop %v8865
        %v8874 = vrsqrt.pop %v8866
        %v8875 = vmul.f32 %v8811, %v8867
        %v8876 = vmul.f32 %v8812, %v8868
        %v8877 = vmul.f32 %v8813, %v8869
        %v8878 = vmul.f32 %v8814, %v8870
        %v8879 = vmul.f32 %v8815, %v8871
        %v8880 = vmul.f32 %v8816, %v8872
        %v8881 = vmul.f32 %v8817, %v8873
        %v8882 = vmul.f32 %v8818, %v8874
        %v8884 = vlaneseq
        %v8885 = vshrl.u32 %v8884, 7
        %v8886 = vsub.s32 0, %v8885
        %v8887 = vrot.slane %v8776, %v8886
        %v8889 = vmul.f32 %v8875, %v8887
        %v8890 = vmul.f32 %v8876, %v8887
        %v8891 = vmul.f32 %v8877, %v8887
        %v8892 = vmul.f32 %v8878, %v8887
        %v8893 = vmul.f32 %v8879, %v8887
        %v8894 = vmul.f32 %v8880, %v8887
        %v8895 = vmul.f32 %v8881, %v8887
        %v8896 = vmul.f32 %v8882, %v8887
        %v8898 = vlaneseq
        %v8899 = vshrl.u32 %v8898, 7
        %v8900 = vsub.s32 0, %v8899
        %v8901 = vrot.slane %v8778, %v8900
        %v8903 = vadd.f32 %v8889, %v8901
        %v8904 = vadd.f32 %v8890, %v8901
        %v8905 = vadd.f32 %v8891, %v8901
        %v8906 = vadd.f32 %v8892, %v8901
        %v8907 = vadd.f32 %v8893, %v8901
        %v8908 = vadd.f32 %v8894, %v8901
        %v8909 = vadd.f32 %v8895, %v8901
        %v8910 = vadd.f32 %v8896, %v8901
        %s8911 = scalar_lea.vmem %s17, 96
        %v8912 = vld [vmem:[%s8911] sm:$0xff]
        %v8913 = vld [vmem:[%s8911 + $0x8] sm:$0xff]
        %v8914 = vld [vmem:[%s8911 + $0x10] sm:$0xff]
        %v8915 = vld [vmem:[%s8911 + $0x18] sm:$0xff]
        %s8916 = scalar_lea.vmem %s18, 3
        %v8917 = vld [vmem:[%s8916] sm:$0x1]
        %v8919 = vlaneseq
        %v8920 = vshrl.u32 %v8919, 7
        %v8921 = vsub.s32 0, %v8920
        %v8922 = vrot.slane %v8917, %v8921
        %v8925 = vsel %vm830, %v8903, 0
        %v8928 = vsel %vm830, %v8904, 0
        %v8931 = vsel %vm830, %v8905, 0
        %v8934 = vsel %vm830, %v8906, 0
        %v8937 = vsel %vm830, %v8907, 0
        %v8940 = vsel %vm830, %v8908, 0
        %v8943 = vsel %vm830, %v8909, 0
        %v8946 = vsel %vm830, %v8910, 0
        %8948 = vmatprep.subr.mxu0 0.0
        %8949 = vmatpush1.msra.mxu0 %v8912
        %8950 = vmatprep.subr.mxu0 0.0
        %8951 = vmatpush1.msra.mxu0 %v8913
        %8952 = vmatprep.subr.mxu0 0.0
        %8953 = vmatpush1.msra.mxu0 %v8914
        %8954 = vmatprep.subr.mxu0 0.0
        %8955 = vmatpush1.msra.mxu0 %v8915
        %8956 = vmatprep.subr.mxu0 0.0
        %8957 = vmatpush1.msra.mxu0 0.0
        %8958 = vmatprep.subr.mxu0 0.0
        %8959 = vmatpush1.msra.mxu0 0.0
        %8960 = vmatprep.subr.mxu0 0.0
        %8961 = vmatpush1.msra.mxu0 0.0
        %8962 = vmatprep.subr.mxu0 0.0
        %8963 = vmatpush1.msra.mxu0 0.0
        %8964 = vmatprep.subr.mxu0 0.0
        %8965 = vmatpush1.msra.mxu0 0.0
        %8966 = vmatprep.subr.mxu0 0.0
        %8967 = vmatpush1.msra.mxu0 0.0
        %8968 = vmatprep.subr.mxu0 0.0
        %8969 = vmatpush1.msra.mxu0 0.0
        %8970 = vmatprep.subr.mxu0 0.0
        %8971 = vmatpush1.msra.mxu0 0.0
        %8972 = vmatprep.subr.mxu0 0.0
        %8973 = vmatpush1.msra.mxu0 0.0
        %8974 = vmatprep.subr.mxu0 0.0
        %8975 = vmatpush1.msra.mxu0 0.0
        %8976 = vmatprep.subr.mxu0 0.0
        %8977 = vmatpush1.msra.mxu0 0.0
        %8978 = vmatprep.subr.mxu0 0.0
        %8979 = vmatpush1.msra.mxu0 0.0
        %8980 = vmatprep.subr.mxu0 0.0
        %8981 = vmatpush1.msra.mxu0 0.0
        %8982 = vmatprep.subr.mxu0 0.0
        %8983 = vmatpush1.msra.mxu0 0.0
        %8984 = vmatprep.subr.mxu0 0.0
        %8985 = vmatpush1.msra.mxu0 0.0
        %8986 = vmatprep.subr.mxu0 0.0
        %8987 = vmatpush1.msra.mxu0 0.0
        %8988 = vmatprep.subr.mxu0 0.0
        %8989 = vmatpush1.msra.mxu0 0.0
        %8990 = vmatprep.subr.mxu0 0.0
        %8991 = vmatpush1.msra.mxu0 0.0
        %8992 = vmatprep.subr.mxu0 0.0
        %8993 = vmatpush1.msra.mxu0 0.0
        %8994 = vmatprep.subr.mxu0 0.0
        %8995 = vmatpush1.msra.mxu0 0.0
        %8996 = vmatprep.subr.mxu0 0.0
        %8997 = vmatpush1.msra.mxu0 0.0
        %8998 = vmatprep.subr.mxu0 0.0
        %8999 = vmatpush1.msra.mxu0 0.0
        %9000 = vmatprep.subr.mxu0 0.0
        %9001 = vmatpush1.msra.mxu0 0.0
        %9002 = vmatprep.subr.mxu0 0.0
        %9003 = vmatpush1.msra.mxu0 0.0
        %9004 = vmatprep.subr.mxu0 0.0
        %9005 = vmatpush1.msra.mxu0 0.0
        %9006 = vmatprep.subr.mxu0 0.0
        %9007 = vmatpush1.msra.mxu0 0.0
        %9008 = vmatprep.subr.mxu0 0.0
        %9009 = vmatpush1.msra.mxu0 0.0
        %9010 = vmatprep.subr.mxu0 0.0
        %9011 = vmatpush1.msra.mxu0 0.0
        %9012 = vmatprep.mubr.f32.mxu0 0.0
        %9013 = vmatmul.mubr.f32.gmra.mrb[0].mxu0 %v8925
        %v9014 = vpop.f32.mrb[0].mxu0
        %v9015 = vadd.f32 %v8922, %v9014
        %v9016 = vpop.f32.mrb[0].mxu0
        %9017 = vmatprep.mubr.f32.mxu0 0.0
        %9018 = vmatmul.mubr.f32.gmra.mrb[0].mxu0 %v8928
        %v9019 = vpop.f32.mrb[0].mxu0
        %v9020 = vadd.f32 %v8922, %v9019
        %v9021 = vpop.f32.mrb[0].mxu0
        %9022 = vmatprep.mubr.f32.mxu0 0.0
        %9023 = vmatmul.mubr.f32.gmra.mrb[0].mxu0 %v8931
        %v9024 = vpop.f32.mrb[0].mxu0
        %v9025 = vadd.f32 %v8922, %v9024
        %v9026 = vpop.f32.mrb[0].mxu0
        %9027 = vmatprep.mubr.f32.mxu0 0.0
        %9028 = vmatmul.mubr.f32.gmra.mrb[0].mxu0 %v8934
        %v9029 = vpop.f32.mrb[0].mxu0
        %v9030 = vadd.f32 %v8922, %v9029
        %v9031 = vpop.f32.mrb[0].mxu0
        %9032 = vmatprep.mubr.f32.mxu0 0.0
        %9033 = vmatmul.mubr.f32.gmra.mrb[0].mxu0 %v8937
        %v9034 = vpop.f32.mrb[0].mxu0
        %v9035 = vadd.f32 %v8922, %v9034
        %v9036 = vpop.f32.mrb[0].mxu0
        %9037 = vmatprep.mubr.f32.mxu0 0.0
        %9038 = vmatmul.mubr.f32.gmra.mrb[0].mxu0 %v8940
        %v9039 = vpop.f32.mrb[0].mxu0
        %v9040 = vadd.f32 %v8922, %v9039
        %v9041 = vpop.f32.mrb[0].mxu0
        %9042 = vmatprep.mubr.f32.mxu0 0.0
        %9043 = vmatmul.mubr.f32.gmra.mrb[0].mxu0 %v8943
        %v9044 = vpop.f32.mrb[0].mxu0
        %v9045 = vadd.f32 %v8922, %v9044
        %v9046 = vpop.f32.mrb[0].mxu0
        %9047 = vmatprep.mubr.f32.mxu0 0.0
        %9048 = vmatmul.mubr.f32.gmra.mrb[0].mxu0 %v8946
        %v9049 = vpop.f32.mrb[0].mxu0
        %v9050 = vadd.f32 %v8922, %v9049
        %v9051 = vpop.f32.mrb[0].mxu0
        %9052 = vdwg.mxu0
        %v9053 = vmax.f32 %v9015, 0.0
        %v9054 = vmax.f32 %v9020, 0.0
        %v9055 = vmax.f32 %v9025, 0.0
        %v9056 = vmax.f32 %v9030, 0.0
        %v9057 = vmax.f32 %v9035, 0.0
        %v9058 = vmax.f32 %v9040, 0.0
        %v9059 = vmax.f32 %v9045, 0.0
        %v9060 = vmax.f32 %v9050, 0.0
        %s9061 = scalar_lea.vmem %s19, 192
        %v9062 = vld [vmem:[%s9061] sm:$0xff]
        %v9063 = vld [vmem:[%s9061 + $0x8] sm:$0xff]
        %v9064 = vld [vmem:[%s9061 + $0x10] sm:$0xff]
        %v9065 = vld [vmem:[%s9061 + $0x18] sm:$0xff]
        %v9066 = vld [vmem:[%s9061 + $0x20] sm:$0xff]
        %v9067 = vld [vmem:[%s9061 + $0x28] sm:$0xff]
        %v9068 = vld [vmem:[%s9061 + $0x30] sm:$0xff]
        %v9069 = vld [vmem:[%s9061 + $0x38] sm:$0xff]
        %v9071 = vsel %vm1528, %v9053, 0
        %v9074 = vsel %vm1528, %v9054, 0
        %v9077 = vsel %vm1528, %v9055, 0
        %v9080 = vsel %vm1528, %v9056, 0
        %v9083 = vsel %vm1528, %v9057, 0
        %v9086 = vsel %vm1528, %v9058, 0
        %v9089 = vsel %vm1528, %v9059, 0
        %v9092 = vsel %vm1528, %v9060, 0
        %9094 = vmatprep.subr.mxu0 0.0
        %9095 = vmatpush1.msra.mxu0 %v9062
        %9096 = vmatprep.subr.mxu0 0.0
        %9097 = vmatpush1.msra.mxu0 %v9063
        %9098 = vmatprep.subr.mxu0 0.0
        %9099 = vmatpush1.msra.mxu0 %v9064
        %9100 = vmatprep.subr.mxu0 0.0
        %9101 = vmatpush1.msra.mxu0 %v9065
        %9102 = vmatprep.subr.mxu0 0.0
        %9103 = vmatpush1.msra.mxu0 %v9066
        %9104 = vmatprep.subr.mxu0 0.0
        %9105 = vmatpush1.msra.mxu0 %v9067
        %9106 = vmatprep.subr.mxu0 0.0
        %9107 = vmatpush1.msra.mxu0 %v9068
        %9108 = vmatprep.subr.mxu0 0.0
        %9109 = vmatpush1.msra.mxu0 %v9069
        %9110 = vmatprep.subr.mxu0 0.0
        %9111 = vmatpush1.msra.mxu0 0.0
        %9112 = vmatprep.subr.mxu0 0.0
        %9113 = vmatpush1.msra.mxu0 0.0
        %9114 = vmatprep.subr.mxu0 0.0
        %9115 = vmatpush1.msra.mxu0 0.0
        %9116 = vmatprep.subr.mxu0 0.0
        %9117 = vmatpush1.msra.mxu0 0.0
        %9118 = vmatprep.subr.mxu0 0.0
        %9119 = vmatpush1.msra.mxu0 0.0
        %9120 = vmatprep.subr.mxu0 0.0
        %9121 = vmatpush1.msra.mxu0 0.0
        %9122 = vmatprep.subr.mxu0 0.0
        %9123 = vmatpush1.msra.mxu0 0.0
        %9124 = vmatprep.subr.mxu0 0.0
        %9125 = vmatpush1.msra.mxu0 0.0
        %9126 = vmatprep.subr.mxu0 0.0
        %9127 = vmatpush1.msra.mxu0 0.0
        %9128 = vmatprep.subr.mxu0 0.0
        %9129 = vmatpush1.msra.mxu0 0.0
        %9130 = vmatprep.subr.mxu0 0.0
        %9131 = vmatpush1.msra.mxu0 0.0
        %9132 = vmatprep.subr.mxu0 0.0
        %9133 = vmatpush1.msra.mxu0 0.0
        %9134 = vmatprep.subr.mxu0 0.0
        %9135 = vmatpush1.msra.mxu0 0.0
        %9136 = vmatprep.subr.mxu0 0.0
        %9137 = vmatpush1.msra.mxu0 0.0
        %9138 = vmatprep.subr.mxu0 0.0
        %9139 = vmatpush1.msra.mxu0 0.0
        %9140 = vmatprep.subr.mxu0 0.0
        %9141 = vmatpush1.msra.mxu0 0.0
        %9142 = vmatprep.subr.mxu0 0.0
        %9143 = vmatpush1.msra.mxu0 0.0
        %9144 = vmatprep.subr.mxu0 0.0
        %9145 = vmatpush1.msra.mxu0 0.0
        %9146 = vmatprep.subr.mxu0 0.0
        %9147 = vmatpush1.msra.mxu0 0.0
        %9148 = vmatprep.subr.mxu0 0.0
        %9149 = vmatpush1.msra.mxu0 0.0
        %9150 = vmatprep.subr.mxu0 0.0
        %9151 = vmatpush1.msra.mxu0 0.0
        %9152 = vmatprep.subr.mxu0 0.0
        %9153 = vmatpush1.msra.mxu0 0.0
        %9154 = vmatprep.subr.mxu0 0.0
        %9155 = vmatpush1.msra.mxu0 0.0
        %9156 = vmatprep.subr.mxu0 0.0
        %9157 = vmatpush1.msra.mxu0 0.0
        %9158 = vmatprep.mubr.f32.mxu0 0.0
        %9159 = vmatmul.mubr.f32.gmra.mrb[0].mxu0 %v9071
        %v9160 = vpop.f32.mrb[0].mxu0
        %v9161 = vpop.f32.mrb[0].mxu0
        %9162 = vmatprep.mubr.f32.mxu0 0.0
        %9163 = vmatmul.mubr.f32.gmra.mrb[0].mxu0 %v9074
        %v9164 = vpop.f32.mrb[0].mxu0
        %v9165 = vpop.f32.mrb[0].mxu0
        %9166 = vmatprep.mubr.f32.mxu0 0.0
        %9167 = vmatmul.mubr.f32.gmra.mrb[0].mxu0 %v9077
        %v9168 = vpop.f32.mrb[0].mxu0
        %v9169 = vpop.f32.mrb[0].mxu0
        %9170 = vmatprep.mubr.f32.mxu0 0.0
        %9171 = vmatmul.mubr.f32.gmra.mrb[0].mxu0 %v9080
        %v9172 = vpop.f32.mrb[0].mxu0
        %v9173 = vpop.f32.mrb[0].mxu0
        %9174 = vmatprep.mubr.f32.mxu0 0.0
        %9175 = vmatmul.mubr.f32.gmra.mrb[0].mxu0 %v9083
        %v9176 = vpop.f32.mrb[0].mxu0
        %v9177 = vpop.f32.mrb[0].mxu0
        %9178 = vmatprep.mubr.f32.mxu0 0.0
        %9179 = vmatmul.mubr.f32.gmra.mrb[0].mxu0 %v9086
        %v9180 = vpop.f32.mrb[0].mxu0
        %v9181 = vpop.f32.mrb[0].mxu0
        %9182 = vmatprep.mubr.f32.mxu0 0.0
        %9183 = vmatmul.mubr.f32.gmra.mrb[0].mxu0 %v9089
        %v9184 = vpop.f32.mrb[0].mxu0
        %v9185 = vpop.f32.mrb[0].mxu0
        %9186 = vmatprep.mubr.f32.mxu0 0.0
        %9187 = vmatmul.mubr.f32.gmra.mrb[0].mxu0 %v9092
        %v9188 = vpop.f32.mrb[0].mxu0
        %v9189 = vadd.f32 0.0, %v9188
        %v9190 = vpop.f32.mrb[0].mxu0
        %9191 = vdwg.mxu0
        %v9192 = vadd.f32 %v8774, %v9189
        %s9193 = scalar_lea.vmem %s20, 3
        %v9194 = vld [vmem:[%s9193] sm:$0x1]
        %v9196 = vlaneseq
        %v9197 = vshrl.u32 %v9196, 7
        %v9198 = vsub.s32 0, %v9197
        %v9199 = vrot.slane %v9194, %v9198
        %v9201 = vadd.f32 %v9192, %v9199
        %v9202 = vld [vmem:[%s7] sm:$0xff]
        %v9203 = vld [vmem:[%s7 + $0x8] sm:$0xff]
        %v9204 = vld [vmem:[%s7 + $0x10] sm:$0xff]
        %v9205 = vld [vmem:[%s7 + $0x18] sm:$0xff]
        %v9206 = vld [vmem:[%s8] sm:$0x1]
        %v9208 = vlaneseq
        %v9209 = vshrl.u32 %v9208, 7
        %v9210 = vsub.s32 0, %v9209
        %v9211 = vrot.slane %v9206, %v9210
        %v9214 = vsel %vm830, %v9201, 0
        %9216 = vmatprep.subr.mxu0 0.0
        %9217 = vmatpush1.msra.mxu0 %v9202
        %9218 = vmatprep.subr.mxu0 0.0
        %9219 = vmatpush1.msra.mxu0 %v9203
        %9220 = vmatprep.subr.mxu0 0.0
        %9221 = vmatpush1.msra.mxu0 %v9204
        %9222 = vmatprep.subr.mxu0 0.0
        %9223 = vmatpush1.msra.mxu0 %v9205
        %9224 = vmatprep.subr.mxu0 0.0
        %9225 = vmatpush1.msra.mxu0 0.0
        %9226 = vmatprep.subr.mxu0 0.0
        %9227 = vmatpush1.msra.mxu0 0.0
        %9228 = vmatprep.subr.mxu0 0.0
        %9229 = vmatpush1.msra.mxu0 0.0
        %9230 = vmatprep.subr.mxu0 0.0
        %9231 = vmatpush1.msra.mxu0 0.0
        %9232 = vmatprep.subr.mxu0 0.0
        %9233 = vmatpush1.msra.mxu0 0.0
        %9234 = vmatprep.subr.mxu0 0.0
        %9235 = vmatpush1.msra.mxu0 0.0
        %9236 = vmatprep.subr.mxu0 0.0
        %9237 = vmatpush1.msra.mxu0 0.0
        %9238 = vmatprep.subr.mxu0 0.0
        %9239 = vmatpush1.msra.mxu0 0.0
        %9240 = vmatprep.subr.mxu0 0.0
        %9241 = vmatpush1.msra.mxu0 0.0
        %9242 = vmatprep.subr.mxu0 0.0
        %9243 = vmatpush1.msra.mxu0 0.0
        %9244 = vmatprep.subr.mxu0 0.0
        %9245 = vmatpush1.msra.mxu0 0.0
        %9246 = vmatprep.subr.mxu0 0.0
        %9247 = vmatpush1.msra.mxu0 0.0
        %9248 = vmatprep.subr.mxu0 0.0
        %9249 = vmatpush1.msra.mxu0 0.0
        %9250 = vmatprep.subr.mxu0 0.0
        %9251 = vmatpush1.msra.mxu0 0.0
        %9252 = vmatprep.subr.mxu0 0.0
        %9253 = vmatpush1.msra.mxu0 0.0
        %9254 = vmatprep.subr.mxu0 0.0
        %9255 = vmatpush1.msra.mxu0 0.0
        %9256 = vmatprep.subr.mxu0 0.0
        %9257 = vmatpush1.msra.mxu0 0.0
        %9258 = vmatprep.subr.mxu0 0.0
        %9259 = vmatpush1.msra.mxu0 0.0
        %9260 = vmatprep.subr.mxu0 0.0
        %9261 = vmatpush1.msra.mxu0 0.0
        %9262 = vmatprep.subr.mxu0 0.0
        %9263 = vmatpush1.msra.mxu0 0.0
        %9264 = vmatprep.subr.mxu0 0.0
        %9265 = vmatpush1.msra.mxu0 0.0
        %9266 = vmatprep.subr.mxu0 0.0
        %9267 = vmatpush1.msra.mxu0 0.0
        %9268 = vmatprep.subr.mxu0 0.0
        %9269 = vmatpush1.msra.mxu0 0.0
        %9270 = vmatprep.subr.mxu0 0.0
        %9271 = vmatpush1.msra.mxu0 0.0
        %9272 = vmatprep.subr.mxu0 0.0
        %9273 = vmatpush1.msra.mxu0 0.0
        %9274 = vmatprep.subr.mxu0 0.0
        %9275 = vmatpush1.msra.mxu0 0.0
        %9276 = vmatprep.subr.mxu0 0.0
        %9277 = vmatpush1.msra.mxu0 0.0
        %9278 = vmatprep.subr.mxu0 0.0
        %9279 = vmatpush1.msra.mxu0 0.0
        %9280 = vmatprep.mubr.f32.mxu0 0.0
        %9281 = vmatmul.mubr.f32.gmra.mrb[0].mxu0 %v9214
        %v9282 = vpop.f32.mrb[0].mxu0
        %v9283 = vadd.f32 %v9211, %v9282
        %v9284 = vpop.f32.mrb[0].mxu0
        %9285 = vdwg.mxu0
        %9286 = vst.msk [vmem:[%s650] sm:$0xff] %vm674, %v9283
        %s9287 = sand.u32 %s489, 1
        %s9288 = scalar_lea.sflag [#allocation3], %s9287
        %s9289 = sand.u32 %s489, 1
        %s9290 = smul.addr %s9289, 8
        %s9291 = scalar_lea.vmem [#allocation2], %s9290
        // Predicated region
        $region105: #{ocvp_seq_forward.1} parent=103 // pred_check
          %p9292 = pneg %p499
        $region106: #{ocvp_seq_forward.1} parent=103 // pred_check_branch
          %9294 = sbr.rel (%p9292) target = $region108
        $region107: #{ocvp_seq_forward.1} parent=103 // pred_region
          %s9296 = ssub.s32 128, 128
          %9297 = vsyncadd %s9288, %s9296
          %s9298 = smul.addr %s35, 128
          %s9299 = scalar_lea.hbm %s21, %s9298
          %s9301 = sshll.u32 %s9291, 4
          %s9302 = int_to_ptr.vmem [resolvable:$true] %s9301
          %9304 = dma.vmem_to_hbm [thread:$0]  %s9302, 128, %s9299, %s9288
        $region108: #{ocvp_seq_forward.1} parent=103 // pred_fallthru
          _
      $region104: #{ocvp_seq_forward.1} parent=5 // pred_fallthru
        _
      %p9305 = scmp.le.s32.totalorder 2, %s30
      // Predicated region
      $region109: #{ocvp_seq_forward.1} parent=5 // pred_check
        %p9306 = pneg %p9305
      $region110: #{ocvp_seq_forward.1} parent=5 // pred_check_branch
        %9308 = sbr.rel (%p9306) target = $region112
      $region111: #{ocvp_seq_forward.1} parent=5 // pred_region
        %s9309 = ssub.s32 %s30, 2
        // Predicated region
        $region113: #{ocvp_seq_forward.1} parent=111 // pred_check
          %p9310 = pneg %p505
        $region114: #{ocvp_seq_forward.1} parent=111 // pred_check_branch
          %9312 = sbr.rel (%p9310) target = $region116
        $region115: #{ocvp_seq_forward.1} parent=111 // pred_region
          %s9313 = sand.u32 %s490, 1
          %s9314 = scalar_lea.sflag [#allocation3], %s9313
          %s9315 = sand.u32 %s490, 1
          %s9316 = smul.addr %s9315, 8
          %s9317 = scalar_lea.vmem [#allocation2], %s9316
          %9318 = dma.done %s9314, 128
        $region116: #{ocvp_seq_forward.1} parent=111 // pred_fallthru
          _
      $region112: #{ocvp_seq_forward.1} parent=5 // pred_fallthru
        _
    $region6: #{ocvp_seq_forward.1} parent=1 // loop_footer
      %s34 = sadd.s32 1, %s30
    $region7: #{ocvp_seq_forward.1} parent=1 // loop_footer_branch
      %29 = sbr.rel target = $region3
    $region8: #{ocvp_seq_forward.1} parent=1 // loop_exit
      _
    %9319 = vsyncpa [#allocation3], 1
    %s9320 = scalar_lea.sflag [#allocation3], 1
    %9321 = vsyncpa %s9320, 1

</llo_original>
